<compile_context>
chip_gen: v6e
topology: v6e:2x2x1
jax: 0.10.0
libtpu: 0.0.40
codegen_flags: <defaults>
</compile_context>

<pallas_src>
import functools

import jax
import jax.numpy as jnp
from jax.experimental import pallas as pl
from jax.experimental.pallas import tpu as pltpu


# ---------------------------------------------------------------------------
# Small helpers
# ---------------------------------------------------------------------------
def _round_up(x, m):
    return (x + m - 1) // m * m


def _pick_tm(m_pad):
    for t in (512, 256, 128, 64, 32, 16, 8):
        if m_pad % t == 0:
            return t
    return m_pad


# ---------------------------------------------------------------------------
# Pallas kernel 1: fused (patches @ W + b) with optional activation.
#   a:(tm, K) bf16, w:(K, Np) bf16 (resident), b:(1, Np) f32 -> out:(tm, Np)
# ---------------------------------------------------------------------------
def _matmul_bias_act_kernel(a_ref, w_ref, b_ref, o_ref, *, act):
    y = jnp.dot(a_ref[...], w_ref[...], preferred_element_type=jnp.float32)
    y = y + b_ref[...]
    if act == "relu":
        y = jnp.maximum(y, 0.0)
    elif act == "sigmoid":
        y = jax.nn.sigmoid(y)
    o_ref[...] = y.astype(o_ref.dtype)


def matmul_bias_act(a, w, b, *, act, out_dtype):
    """a:(M,K) @ w:(K,Np) + b:(1,Np) with fused activation (Pallas).

    Only the activation (a) is padded per call; w/b are pre-padded at init.
    Output lane dim Np is a multiple of 128 -> dense, unmasked stores.
    """
    M, K = a.shape
    Kw, Np = w.shape
    assert K == Kw

    a = a.astype(jnp.bfloat16)
    Mp = _round_up(M, 8)
    if Mp != M:
        a = jnp.zeros((Mp, K), jnp.bfloat16).at[:M].set(a)

    tm = _pick_tm(Mp)
    out = pl.pallas_call(
        functools.partial(_matmul_bias_act_kernel, act=act),
        out_shape=jax.ShapeDtypeStruct((Mp, Np), out_dtype),
        grid=(Mp // tm,),
        in_specs=[
            pl.BlockSpec((tm, K), lambda i: (i, 0)),
            pl.BlockSpec((K, Np), lambda i: (0, 0)),   # weight stays resident
            pl.BlockSpec((1, Np), lambda i: (0, 0)),
        ],
        out_specs=pl.BlockSpec((tm, Np), lambda i: (i, 0)),
        compiler_params=pltpu.CompilerParams(
            dimension_semantics=("parallel",)),        # no cross-step reduction
    )(a, w, b)
    return out[:M] if Mp != M else out


# ---------------------------------------------------------------------------
# Pallas kernel 2: fused Linear(L,256)+ReLU -> Linear(256,4096).
# Both weight matrices are resident in VMEM; one launch for both layers.
# ---------------------------------------------------------------------------
def _fc_fused_kernel(x_ref, w0_ref, b0_ref, w1_ref, b1_ref, o_ref):
    h = jnp.dot(x_ref[...], w0_ref[...], preferred_element_type=jnp.float32)
    h = jnp.maximum(h + b0_ref[...], 0.0)
    y = jnp.dot(h.astype(w1_ref.dtype), w1_ref[...],
                preferred_element_type=jnp.float32)
    o_ref[...] = (y + b1_ref[...]).astype(o_ref.dtype)


def fc_fused(x, w0, b0, w1, b1):
    B, L = x.shape
    H0 = w0.shape[1]
    F = w1.shape[1]
    Bp = _round_up(B, 8)
    x_p = jnp.zeros((Bp, L), jnp.bfloat16).at[:B].set(x.astype(jnp.bfloat16))

    out = pl.pallas_call(
        _fc_fused_kernel,
        out_shape=jax.ShapeDtypeStruct((Bp, F), jnp.float32),
        grid=(1,),
        in_specs=[
            pl.BlockSpec((Bp, L), lambda i: (0, 0)),
            pl.BlockSpec((L, H0), lambda i: (0, 0)),
            pl.BlockSpec((1, H0), lambda i: (0, 0)),
            pl.BlockSpec((H0, F), lambda i: (0, 0)),
            pl.BlockSpec((1, F), lambda i: (0, 0)),
        ],
        out_specs=pl.BlockSpec((Bp, F), lambda i: (0, 0)),
        compiler_params=pltpu.CompilerParams(
            dimension_semantics=("arbitrary",)),
    )(x_p, w0, b0, w1, b1)
    return out[:B]


# ---------------------------------------------------------------------------
# ConvTranspose2d(k=4, s=2, p=1) via sub-pixel decomposition (NHWC).
#
# Math: y[b, 2m+r, 2n+c, co] = sum_{iy,ky: 2*iy+ky = 2m+r+1} (same in x)
#       x[b, iy, ix, ci] * w[ci, co, ky, kx].
# With padded coords p = iy+1 (1-pixel zero border), the taps for parity r are
#   r=0: window offset u=0 <-> ky=3, u=1 <-> ky=1
#   r=1: window offset u=1 <-> ky=2, u=2 <-> ky=0
# i.e. all 4 phases read a 3x3 window of the padded input starting at (m, n).
# The phase weights are packed into one (9*Cin, 4*Cout) matrix at init.
# ---------------------------------------------------------------------------
def deconv_subpixel_nhwc(x, w_big, b_big, cout, *, act, out_dtype):
    B, H, W, Cin = x.shape
    xp = jnp.pad(x, ((0, 0), (1, 1), (1, 1), (0, 0)))
    # 3x3 dense im2col over the non-dilated input: tap index = u*3 + v.
    taps = [xp[:, u:u + H, v:v + W, :] for u in range(3) for v in range(3)]
    patches = jnp.stack(taps, axis=3).reshape(B * H * W, 9 * Cin)
    # TODO(synk): the 9-tap gather could be folded into the kernel with pl.ds
    # taps over an NHWC input block to skip the im2col intermediate entirely.

    y = matmul_bias_act(patches, w_big, b_big, act=act, out_dtype=out_dtype)
    # Pixel shuffle: columns ordered (r, c, co) -> (B, 2H, 2W, Cout) NHWC.
    y = y[:, :4 * cout].reshape(B, H, W, 2, 2, cout)
    y = y.transpose(0, 1, 3, 2, 4, 5).reshape(B, 2 * H, 2 * W, cout)
    return y


# ---------------------------------------------------------------------------
# One-time weight prep (runs eagerly at init, outside jit).
# ---------------------------------------------------------------------------
def _convt_to_subpixel(w, b):
    """w:(Cin,Cout,4,4) PyTorch ConvTranspose2d layout -> (9*Cin, Np) bf16."""
    Cin, Cout = int(w.shape[0]), int(w.shape[1])
    K, N = 9 * Cin, 4 * Cout
    Np = _round_up(N, 128)
    # (parity, window offset) -> kernel tap; other (parity, offset) combos are 0.
    tap_k = {(0, 0): 3, (0, 1): 1, (1, 1): 2, (1, 2): 0}
    wb = jnp.zeros((3, 3, Cin, 2, 2, Cout), jnp.float32)
    for (r, u), ky in tap_k.items():
        for (c, v), kx in tap_k.items():
            wb = wb.at[u, v, :, r, c, :].set(w[:, :, ky, kx])
    w_big = wb.reshape(K, N).astype(jnp.bfloat16)
    w_pad = jnp.zeros((K, Np), jnp.bfloat16).at[:, :N].set(w_big)
    b_pad = jnp.zeros((1, Np), jnp.float32).at[0, :N].set(jnp.tile(b, 4))
    return w_pad, b_pad


def init_params(key, latent_dim):
    """Deterministic synthetic parameters (no checkpoint), pre-transformed."""
    ks = jax.random.split(key, 10)
    s = 0.05

    def n(k, shape):
        return jax.random.normal(k, shape, jnp.float32) * s

    fc0_w = n(ks[0], (latent_dim, 256));  fc0_b = n(ks[1], (256,))
    fc1_w = n(ks[2], (256, 64 * 8 * 8));  fc1_b = n(ks[3], (64 * 8 * 8,))
    dc1_w = n(ks[4], (64, 32, 4, 4));     dc1_b = n(ks[5], (32,))
    dc2_w = n(ks[6], (32, 16, 4, 4));     dc2_b = n(ks[7], (16,))
    dc3_w = n(ks[8], (16, 3, 4, 4));      dc3_b = n(ks[9], (3,))

    # Permute fc1 output columns (c,h,w) -> (h,w,c) so (B,4096) reshapes to NHWC.
    fc1_w_nhwc = fc1_w.reshape(256, 64, 8, 8).transpose(0, 2, 3, 1).reshape(256, 4096)
    fc1_b_nhwc = fc1_b.reshape(64, 8, 8).transpose(1, 2, 0).reshape(4096)

    d1w, d1b = _convt_to_subpixel(dc1_w, dc1_b)
    d2w, d2b = _convt_to_subpixel(dc2_w, dc2_b)
    d3w, d3b = _convt_to_subpixel(dc3_w, dc3_b)

    return {
        "fc0_w": fc0_w.astype(jnp.bfloat16), "fc0_b": fc0_b.reshape(1, -1),
        "fc1_w": fc1_w_nhwc.astype(jnp.bfloat16), "fc1_b": fc1_b_nhwc.reshape(1, -1),
        "dc1_w": d1w, "dc1_b": d1b,
        "dc2_w": d2w, "dc2_b": d2b,
        "dc3_w": d3w, "dc3_b": d3b,
    }


# ---------------------------------------------------------------------------
# Full Decoder forward (NHWC internally, NCHW result).
# ---------------------------------------------------------------------------
def decoder_forward(params, x):
    B = x.shape[0]
    # Fused: Linear(L,256)+ReLU -> Linear(256,4096)   (single pallas_call)
    h = fc_fused(x, params["fc0_w"], params["fc0_b"],
                 params["fc1_w"], params["fc1_b"])                 # (B,4096)
    h = h.reshape(B, 8, 8, 64)                                     # NHWC
    # deconv1 + ReLU -> (B,16,16,32)
    h = deconv_subpixel_nhwc(h, params["dc1_w"], params["dc1_b"], 32,
                             act="relu", out_dtype=jnp.bfloat16)
    # deconv2 + ReLU -> (B,32,32,16)
    h = deconv_subpixel_nhwc(h, params["dc2_w"], params["dc2_b"], 16,
                             act="relu", out_dtype=jnp.bfloat16)
    # deconv3 + Sigmoid -> (B,64,64,3)
    h = deconv_subpixel_nhwc(h, params["dc3_w"], params["dc3_b"], 3,
                             act="sigmoid", out_dtype=jnp.float32)
    # Single layout conversion at the very end to match PyTorch NCHW.
    return h.transpose(0, 3, 1, 2)                                 # (B,3,64,64)


if __name__ == "__main__":
    latent_dim = 32
    batch = 2

    key = jax.random.PRNGKey(0)
    k_param, k_x = jax.random.split(key)
    params = init_params(k_param, latent_dim)
    x = jax.random.normal(k_x, (batch, latent_dim), jnp.float32)

    recon = jax.jit(decoder_forward)(params, x)
    recon = jax.block_until_ready(recon)

    assert recon.shape == (batch, 3, 64, 64), recon.shape
    assert recon.dtype == jnp.float32
    assert bool(jnp.all(jnp.isfinite(recon)))
    assert bool(jnp.all((recon >= 0.0) & (recon <= 1.0)))  # sigmoid output
    print("KERNEL_OK")
</pallas_src>

<mosaic_0001>
module attributes {stable_mosaic.version = 11 : i64} {
  func.func @_fc_fused_kernel(%arg0: i32, %arg1: memref<8x32xbf16, #tpu.memory_space<vmem>>, %arg2: memref<32x256xbf16, #tpu.memory_space<vmem>>, %arg3: memref<1x256xf32, #tpu.memory_space<vmem>>, %arg4: memref<256x4096xbf16, #tpu.memory_space<vmem>>, %arg5: memref<1x4096xf32, #tpu.memory_space<vmem>>, %arg6: memref<8x4096xf32, #tpu.memory_space<vmem>>) attributes {dimension_semantics = [#tpu.dimension_semantics<arbitrary>], iteration_bounds = array<i64: 1>, scalar_prefetch = 0 : i64, scratch_operands = 0 : i64, tpu.core_type = #tpu.core_type<tc>, window_params = [{pipeline_mode = #tpu.pipeline_mode<synchronous>, transform_indices = @transform_0, window_bounds = array<i64: 8, 32>}, {pipeline_mode = #tpu.pipeline_mode<synchronous>, transform_indices = @transform_1, window_bounds = array<i64: 32, 256>}, {pipeline_mode = #tpu.pipeline_mode<synchronous>, transform_indices = @transform_2, window_bounds = array<i64: 1, 256>}, {pipeline_mode = #tpu.pipeline_mode<synchronous>, transform_indices = @transform_3, window_bounds = array<i64: 256, 4096>}, {pipeline_mode = #tpu.pipeline_mode<synchronous>, transform_indices = @transform_4, window_bounds = array<i64: 1, 4096>}, {pipeline_mode = #tpu.pipeline_mode<synchronous>, transform_indices = @transform_5, window_bounds = array<i64: 8, 4096>}]} {
    %c0 = arith.constant 0 : index
    %c0_0 = arith.constant 0 : index
    %0 = vector.load %arg1[%c0, %c0_0] : memref<8x32xbf16, #tpu.memory_space<vmem>>, vector<8x32xbf16>
    %c0_1 = arith.constant 0 : index
    %c0_2 = arith.constant 0 : index
    %1 = vector.load %arg2[%c0_1, %c0_2] : memref<32x256xbf16, #tpu.memory_space<vmem>>, vector<32x256xbf16>
    %cst = arith.constant dense<0.000000e+00> : vector<8x256xf32>
    %2 = tpu.matmul %0, %1, %cst {dimension_numbers = #tpu.dot_dimension_numbers<[1], [0], [0], [1], [0, 0, 1, 1], [], []>} : vector<8x32xbf16>, vector<32x256xbf16>, vector<8x256xf32> -> vector<8x256xf32>
    %c0_3 = arith.constant 0 : index
    %c0_4 = arith.constant 0 : index
    %3 = vector.load %arg3[%c0_3, %c0_4] : memref<1x256xf32, #tpu.memory_space<vmem>>, vector<1x256xf32>
    %4 = vector.broadcast %3 : vector<1x256xf32> to vector<8x256xf32>
    %5 = arith.addf %2, %4 : vector<8x256xf32>
    %cst_5 = arith.constant 0.000000e+00 : f32
    %6 = vector.broadcast %cst_5 : f32 to vector<8x256xf32>
    %7 = arith.maximumf %5, %6 : vector<8x256xf32>
    %8 = arith.truncf %7 : vector<8x256xf32> to vector<8x256xbf16>
    %c0_6 = arith.constant 0 : index
    %c0_7 = arith.constant 0 : index
    %9 = vector.load %arg4[%c0_6, %c0_7] : memref<256x4096xbf16, #tpu.memory_space<vmem>>, vector<256x4096xbf16>
    %cst_8 = arith.constant dense<0.000000e+00> : vector<8x4096xf32>
    %10 = tpu.matmul %8, %9, %cst_8 {dimension_numbers = #tpu.dot_dimension_numbers<[1], [0], [0], [1], [0, 0, 1, 1], [], []>} : vector<8x256xbf16>, vector<256x4096xbf16>, vector<8x4096xf32> -> vector<8x4096xf32>
    %c0_9 = arith.constant 0 : index
    %c0_10 = arith.constant 0 : index
    %11 = vector.load %arg5[%c0_9, %c0_10] : memref<1x4096xf32, #tpu.memory_space<vmem>>, vector<1x4096xf32>
    %12 = vector.broadcast %11 : vector<1x4096xf32> to vector<8x4096xf32>
    %13 = arith.addf %10, %12 : vector<8x4096xf32>
    %c0_11 = arith.constant 0 : index
    %c0_12 = arith.constant 0 : index
    %14 = vector.load %arg6[%c0_11, %c0_12] : memref<8x4096xf32, #tpu.memory_space<vmem>>, vector<8x4096xf32>
    tpu.vector_store %arg6[%c0_11, %c0_12], %13 {strides = array<i32>} : memref<8x4096xf32, #tpu.memory_space<vmem>>, vector<8x4096xf32>,
    return
  }
  func.func @transform_0(%arg0: i32) -> (i32, i32) {
    %c0_i32 = arith.constant 0 : i32
    %c0_i32_0 = arith.constant 0 : i32
    %c0_i32_1 = arith.constant 0 : i32
    return %c0_i32, %c0_i32_0 : i32, i32
  }
  func.func @transform_1(%arg0: i32) -> (i32, i32) {
    %c0_i32 = arith.constant 0 : i32
    %c0_i32_0 = arith.constant 0 : i32
    %c0_i32_1 = arith.constant 0 : i32
    return %c0_i32, %c0_i32_0 : i32, i32
  }
  func.func @transform_2(%arg0: i32) -> (i32, i32) {
    %c0_i32 = arith.constant 0 : i32
    %c0_i32_0 = arith.constant 0 : i32
    %c0_i32_1 = arith.constant 0 : i32
    return %c0_i32, %c0_i32_0 : i32, i32
  }
  func.func @transform_3(%arg0: i32) -> (i32, i32) {
    %c0_i32 = arith.constant 0 : i32
    %c0_i32_0 = arith.constant 0 : i32
    %c0_i32_1 = arith.constant 0 : i32
    return %c0_i32, %c0_i32_0 : i32, i32
  }
  func.func @transform_4(%arg0: i32) -> (i32, i32) {
    %c0_i32 = arith.constant 0 : i32
    %c0_i32_0 = arith.constant 0 : i32
    %c0_i32_1 = arith.constant 0 : i32
    return %c0_i32, %c0_i32_0 : i32, i32
  }
  func.func @transform_5(%arg0: i32) -> (i32, i32) {
    %c0_i32 = arith.constant 0 : i32
    %c0_i32_0 = arith.constant 0 : i32
    %c0_i32_1 = arith.constant 0 : i32
    return %c0_i32, %c0_i32_0 : i32, i32
  }
}

module attributes {stable_mosaic.version = 11 : i64} {
  func.func @_matmul_bias_act_kernel(%arg0: i32, %arg1: memref<128x576xbf16, #tpu.memory_space<vmem>>, %arg2: memref<576x128xbf16, #tpu.memory_space<vmem>>, %arg3: memref<1x128xf32, #tpu.memory_space<vmem>>, %arg4: memref<128x128xbf16, #tpu.memory_space<vmem>>) attributes {dimension_semantics = [#tpu.dimension_semantics<parallel>], iteration_bounds = array<i64: 1>, scalar_prefetch = 0 : i64, scratch_operands = 0 : i64, tpu.core_type = #tpu.core_type<tc>, window_params = [{transform_indices = @transform_0, window_bounds = array<i64: 128, 576>}, {pipeline_mode = #tpu.pipeline_mode<synchronous>, transform_indices = @transform_1, window_bounds = array<i64: 576, 128>}, {pipeline_mode = #tpu.pipeline_mode<synchronous>, transform_indices = @transform_2, window_bounds = array<i64: 1, 128>}, {transform_indices = @transform_3, window_bounds = array<i64: 128, 128>}]} {
    %c0 = arith.constant 0 : index
    %c0_0 = arith.constant 0 : index
    %0 = vector.load %arg1[%c0, %c0_0] : memref<128x576xbf16, #tpu.memory_space<vmem>>, vector<128x576xbf16>
    %c0_1 = arith.constant 0 : index
    %c0_2 = arith.constant 0 : index
    %1 = vector.load %arg2[%c0_1, %c0_2] : memref<576x128xbf16, #tpu.memory_space<vmem>>, vector<576x128xbf16>
    %cst = arith.constant dense<0.000000e+00> : vector<128x128xf32>
    %2 = tpu.matmul %0, %1, %cst {dimension_numbers = #tpu.dot_dimension_numbers<[1], [0], [0], [1], [0, 0, 1, 1], [], []>} : vector<128x576xbf16>, vector<576x128xbf16>, vector<128x128xf32> -> vector<128x128xf32>
    %c0_3 = arith.constant 0 : index
    %c0_4 = arith.constant 0 : index
    %3 = vector.load %arg3[%c0_3, %c0_4] : memref<1x128xf32, #tpu.memory_space<vmem>>, vector<1x128xf32>
    %4 = vector.broadcast %3 : vector<1x128xf32> to vector<128x128xf32>
    %5 = arith.addf %2, %4 : vector<128x128xf32>
    %cst_5 = arith.constant 0.000000e+00 : f32
    %6 = vector.broadcast %cst_5 : f32 to vector<128x128xf32>
    %7 = arith.maximumf %5, %6 : vector<128x128xf32>
    %8 = arith.truncf %7 : vector<128x128xf32> to vector<128x128xbf16>
    %c0_6 = arith.constant 0 : index
    %c0_7 = arith.constant 0 : index
    %9 = vector.load %arg4[%c0_6, %c0_7] : memref<128x128xbf16, #tpu.memory_space<vmem>>, vector<128x128xbf16>
    tpu.vector_store %arg4[%c0_6, %c0_7], %8 {strides = array<i32>} : memref<128x128xbf16, #tpu.memory_space<vmem>>, vector<128x128xbf16>,
    return
  }
  func.func @transform_0(%arg0: i32) -> (i32, i32) {
    %c0_i32 = arith.constant 0 : i32
    %c0_i32_0 = arith.constant 0 : i32
    return %arg0, %c0_i32 : i32, i32
  }
  func.func @transform_1(%arg0: i32) -> (i32, i32) {
    %c0_i32 = arith.constant 0 : i32
    %c0_i32_0 = arith.constant 0 : i32
    %c0_i32_1 = arith.constant 0 : i32
    return %c0_i32, %c0_i32_0 : i32, i32
  }
  func.func @transform_2(%arg0: i32) -> (i32, i32) {
    %c0_i32 = arith.constant 0 : i32
    %c0_i32_0 = arith.constant 0 : i32
    %c0_i32_1 = arith.constant 0 : i32
    return %c0_i32, %c0_i32_0 : i32, i32
  }
  func.func @transform_3(%arg0: i32) -> (i32, i32) {
    %c0_i32 = arith.constant 0 : i32
    %c0_i32_0 = arith.constant 0 : i32
    return %arg0, %c0_i32 : i32, i32
  }
}

module attributes {stable_mosaic.version = 11 : i64} {
  func.func @_matmul_bias_act_kernel(%arg0: i32, %arg1: memref<512x288xbf16, #tpu.memory_space<vmem>>, %arg2: memref<288x128xbf16, #tpu.memory_space<vmem>>, %arg3: memref<1x128xf32, #tpu.memory_space<vmem>>, %arg4: memref<512x128xbf16, #tpu.memory_space<vmem>>) attributes {dimension_semantics = [#tpu.dimension_semantics<parallel>], iteration_bounds = array<i64: 1>, scalar_prefetch = 0 : i64, scratch_operands = 0 : i64, tpu.core_type = #tpu.core_type<tc>, window_params = [{transform_indices = @transform_0, window_bounds = array<i64: 512, 288>}, {pipeline_mode = #tpu.pipeline_mode<synchronous>, transform_indices = @transform_1, window_bounds = array<i64: 288, 128>}, {pipeline_mode = #tpu.pipeline_mode<synchronous>, transform_indices = @transform_2, window_bounds = array<i64: 1, 128>}, {transform_indices = @transform_3, window_bounds = array<i64: 512, 128>}]} {
    %c0 = arith.constant 0 : index
    %c0_0 = arith.constant 0 : index
    %0 = vector.load %arg1[%c0, %c0_0] : memref<512x288xbf16, #tpu.memory_space<vmem>>, vector<512x288xbf16>
    %c0_1 = arith.constant 0 : index
    %c0_2 = arith.constant 0 : index
    %1 = vector.load %arg2[%c0_1, %c0_2] : memref<288x128xbf16, #tpu.memory_space<vmem>>, vector<288x128xbf16>
    %cst = arith.constant dense<0.000000e+00> : vector<512x128xf32>
    %2 = tpu.matmul %0, %1, %cst {dimension_numbers = #tpu.dot_dimension_numbers<[1], [0], [0], [1], [0, 0, 1, 1], [], []>} : vector<512x288xbf16>, vector<288x128xbf16>, vector<512x128xf32> -> vector<512x128xf32>
    %c0_3 = arith.constant 0 : index
    %c0_4 = arith.constant 0 : index
    %3 = vector.load %arg3[%c0_3, %c0_4] : memref<1x128xf32, #tpu.memory_space<vmem>>, vector<1x128xf32>
    %4 = vector.broadcast %3 : vector<1x128xf32> to vector<512x128xf32>
    %5 = arith.addf %2, %4 : vector<512x128xf32>
    %cst_5 = arith.constant 0.000000e+00 : f32
    %6 = vector.broadcast %cst_5 : f32 to vector<512x128xf32>
    %7 = arith.maximumf %5, %6 : vector<512x128xf32>
    %8 = arith.truncf %7 : vector<512x128xf32> to vector<512x128xbf16>
    %c0_6 = arith.constant 0 : index
    %c0_7 = arith.constant 0 : index
    %9 = vector.load %arg4[%c0_6, %c0_7] : memref<512x128xbf16, #tpu.memory_space<vmem>>, vector<512x128xbf16>
    tpu.vector_store %arg4[%c0_6, %c0_7], %8 {strides = array<i32>} : memref<512x128xbf16, #tpu.memory_space<vmem>>, vector<512x128xbf16>,
    return
  }
  func.func @transform_0(%arg0: i32) -> (i32, i32) {
    %c0_i32 = arith.constant 0 : i32
    %c0_i32_0 = arith.constant 0 : i32
    return %arg0, %c0_i32 : i32, i32
  }
  func.func @transform_1(%arg0: i32) -> (i32, i32) {
    %c0_i32 = arith.constant 0 : i32
    %c0_i32_0 = arith.constant 0 : i32
    %c0_i32_1 = arith.constant 0 : i32
    return %c0_i32, %c0_i32_0 : i32, i32
  }
  func.func @transform_2(%arg0: i32) -> (i32, i32) {
    %c0_i32 = arith.constant 0 : i32
    %c0_i32_0 = arith.constant 0 : i32
    %c0_i32_1 = arith.constant 0 : i32
    return %c0_i32, %c0_i32_0 : i32, i32
  }
  func.func @transform_3(%arg0: i32) -> (i32, i32) {
    %c0_i32 = arith.constant 0 : i32
    %c0_i32_0 = arith.constant 0 : i32
    return %arg0, %c0_i32 : i32, i32
  }
}

module attributes {stable_mosaic.version = 11 : i64} {
  func.func @_matmul_bias_act_kernel(%arg0: i32, %arg1: memref<512x144xbf16, #tpu.memory_space<vmem>>, %arg2: memref<144x128xbf16, #tpu.memory_space<vmem>>, %arg3: memref<1x128xf32, #tpu.memory_space<vmem>>, %arg4: memref<512x128xf32, #tpu.memory_space<vmem>>) attributes {dimension_semantics = [#tpu.dimension_semantics<parallel>], iteration_bounds = array<i64: 4>, scalar_prefetch = 0 : i64, scratch_operands = 0 : i64, tpu.core_type = #tpu.core_type<tc>, window_params = [{transform_indices = @transform_0, window_bounds = array<i64: 512, 144>}, {pipeline_mode = #tpu.pipeline_mode<synchronous>, transform_indices = @transform_1, window_bounds = array<i64: 144, 128>}, {pipeline_mode = #tpu.pipeline_mode<synchronous>, transform_indices = @transform_2, window_bounds = array<i64: 1, 128>}, {transform_indices = @transform_3, window_bounds = array<i64: 512, 128>}]} {
    %c0 = arith.constant 0 : index
    %c0_0 = arith.constant 0 : index
    %0 = vector.load %arg1[%c0, %c0_0] : memref<512x144xbf16, #tpu.memory_space<vmem>>, vector<512x144xbf16>
    %c0_1 = arith.constant 0 : index
    %c0_2 = arith.constant 0 : index
    %1 = vector.load %arg2[%c0_1, %c0_2] : memref<144x128xbf16, #tpu.memory_space<vmem>>, vector<144x128xbf16>
    %cst = arith.constant dense<0.000000e+00> : vector<512x128xf32>
    %2 = tpu.matmul %0, %1, %cst {dimension_numbers = #tpu.dot_dimension_numbers<[1], [0], [0], [1], [0, 0, 1, 1], [], []>} : vector<512x144xbf16>, vector<144x128xbf16>, vector<512x128xf32> -> vector<512x128xf32>
    %c0_3 = arith.constant 0 : index
    %c0_4 = arith.constant 0 : index
    %3 = vector.load %arg3[%c0_3, %c0_4] : memref<1x128xf32, #tpu.memory_space<vmem>>, vector<1x128xf32>
    %4 = vector.broadcast %3 : vector<1x128xf32> to vector<512x128xf32>
    %5 = arith.addf %2, %4 : vector<512x128xf32>
    %6 = arith.negf %5 : vector<512x128xf32>
    %7 = math.exp %6 : vector<512x128xf32>
    %cst_5 = arith.constant 1.000000e+00 : f32
    %8 = vector.broadcast %cst_5 : f32 to vector<512x128xf32>
    %9 = arith.addf %8, %7 : vector<512x128xf32>
    %10 = arith.divf %8, %9 : vector<512x128xf32>
    %c0_6 = arith.constant 0 : index
    %c0_7 = arith.constant 0 : index
    %11 = vector.load %arg4[%c0_6, %c0_7] : memref<512x128xf32, #tpu.memory_space<vmem>>, vector<512x128xf32>
    tpu.vector_store %arg4[%c0_6, %c0_7], %10 {strides = array<i32>} : memref<512x128xf32, #tpu.memory_space<vmem>>, vector<512x128xf32>,
    return
  }
  func.func @transform_0(%arg0: i32) -> (i32, i32) {
    %c0_i32 = arith.constant 0 : i32
    %c0_i32_0 = arith.constant 0 : i32
    return %arg0, %c0_i32 : i32, i32
  }
  func.func @transform_1(%arg0: i32) -> (i32, i32) {
    %c0_i32 = arith.constant 0 : i32
    %c0_i32_0 = arith.constant 0 : i32
    %c0_i32_1 = arith.constant 0 : i32
    return %c0_i32, %c0_i32_0 : i32, i32
  }
  func.func @transform_2(%arg0: i32) -> (i32, i32) {
    %c0_i32 = arith.constant 0 : i32
    %c0_i32_0 = arith.constant 0 : i32
    %c0_i32_1 = arith.constant 0 : i32
    return %c0_i32, %c0_i32_0 : i32, i32
  }
  func.func @transform_3(%arg0: i32) -> (i32, i32) {
    %c0_i32 = arith.constant 0 : i32
    %c0_i32_0 = arith.constant 0 : i32
    return %arg0, %c0_i32 : i32, i32
  }
}

</mosaic_0001>

<llo_original>
// kernel: decoder_forward.5
$region0: #{decoder_forward.5}
  #allocation0 [shape = 'u32[]', space=smem, size = 0x4, offset = 0x4, fixed_abs, tag = 'smem constant byte address 0x4 - core index']
  #allocation1 [shape = 'u32[144,128]{1,0:T(1,128)}', space=vmem, size = 0x12000, scoped, tag = 'internal scratch']
  %s0 = inlined_call_operand.vmem [shape: bf16[128,576], index: 0, kind: input, shape index: {}]
  %s1 = inlined_call_operand.vmem [shape: bf16[576,128], index: 1, kind: input, shape index: {}]
  %s2 = inlined_call_operand.vmem [shape: f32[1,128], index: 2, kind: input, shape index: {}]
  %s3 = inlined_call_operand.vmem [shape: bf16[128,128], index: 3, kind: output, shape index: {}]
  %s4 = sld [smem:[#allocation0]]
  $region22: #{decoder_forward.5} parent=0
    _
  %s6 = ssub.s32 1, %s4
  %s7 = scalar_select 0, %s6, %s4
  // Predicated region
  $region2: #{decoder_forward.5} parent=0 // pred_check
    _
  $region3: #{decoder_forward.5} parent=0 // pred_check_branch
    %9 = sbr.rel (0) target = $region5
  $region4: #{decoder_forward.5} parent=0 // pred_region
    _
  $region5: #{decoder_forward.5} parent=0 // pred_fallthru
    _
  // Predicated region
  $region6: #{decoder_forward.5} parent=0 // pred_check
    _
  $region7: #{decoder_forward.5} parent=0 // pred_check_branch
    %11 = sbr.rel (0) target = $region9
  $region8: #{decoder_forward.5} parent=0 // pred_region
    _
  $region9: #{decoder_forward.5} parent=0 // pred_fallthru
    _
  // Predicated region
  $region10: #{decoder_forward.5} parent=0 // pred_check
    _
  $region11: #{decoder_forward.5} parent=0 // pred_check_branch
    %13 = sbr.rel (0) target = $region13
  $region12: #{decoder_forward.5} parent=0 // pred_region
    _
  $region13: #{decoder_forward.5} parent=0 // pred_fallthru
    _
  %v15 = vld [vmem:[%s0] sm:$0xff]
  %v16 = vld [vmem:[%s0 + $0x8] sm:$0xff]
  %v17 = vld [vmem:[%s0 + $0x10] sm:$0xf]
  %v18 = vld [vmem:[%s0 + $0x14] sm:$0xff]
  %v19 = vld [vmem:[%s0 + $0x1c] sm:$0xff]
  %v20 = vld [vmem:[%s0 + $0x24] sm:$0xf]
  %v21 = vld [vmem:[%s0 + $0x28] sm:$0xff]
  %v22 = vld [vmem:[%s0 + $0x30] sm:$0xff]
  %v23 = vld [vmem:[%s0 + $0x38] sm:$0xf]
  %v24 = vld [vmem:[%s0 + $0x3c] sm:$0xff]
  %v25 = vld [vmem:[%s0 + $0x44] sm:$0xff]
  %v26 = vld [vmem:[%s0 + $0x4c] sm:$0xf]
  %v27 = vld [vmem:[%s0 + $0x50] sm:$0xff]
  %v28 = vld [vmem:[%s0 + $0x58] sm:$0xff]
  %v29 = vld [vmem:[%s0 + $0x60] sm:$0xf]
  %v30 = vld [vmem:[%s0 + $0x64] sm:$0xff]
  %v31 = vld [vmem:[%s0 + $0x6c] sm:$0xff]
  %v32 = vld [vmem:[%s0 + $0x74] sm:$0xf]
  %v33 = vld [vmem:[%s0 + $0x78] sm:$0xff]
  %v34 = vld [vmem:[%s0 + $0x80] sm:$0xff]
  %v35 = vld [vmem:[%s0 + $0x88] sm:$0xf]
  %v36 = vld [vmem:[%s0 + $0x8c] sm:$0xff]
  %v37 = vld [vmem:[%s0 + $0x94] sm:$0xff]
  %v38 = vld [vmem:[%s0 + $0x9c] sm:$0xf]
  %v39 = vld [vmem:[%s0 + $0xa0] sm:$0xff]
  %v40 = vld [vmem:[%s0 + $0xa8] sm:$0xff]
  %v41 = vld [vmem:[%s0 + $0xb0] sm:$0xf]
  %v42 = vld [vmem:[%s0 + $0xb4] sm:$0xff]
  %v43 = vld [vmem:[%s0 + $0xbc] sm:$0xff]
  %v44 = vld [vmem:[%s0 + $0xc4] sm:$0xf]
  %v45 = vld [vmem:[%s0 + $0xc8] sm:$0xff]
  %v46 = vld [vmem:[%s0 + $0xd0] sm:$0xff]
  %v47 = vld [vmem:[%s0 + $0xd8] sm:$0xf]
  %v48 = vld [vmem:[%s0 + $0xdc] sm:$0xff]
  %v49 = vld [vmem:[%s0 + $0xe4] sm:$0xff]
  %v50 = vld [vmem:[%s0 + $0xec] sm:$0xf]
  %v51 = vld [vmem:[%s0 + $0xf0] sm:$0xff]
  %v52 = vld [vmem:[%s0 + $0xf8] sm:$0xff]
  %v53 = vld [vmem:[%s0 + $0x100] sm:$0xf]
  %v54 = vld [vmem:[%s0 + $0x104] sm:$0xff]
  %v55 = vld [vmem:[%s0 + $0x10c] sm:$0xff]
  %v56 = vld [vmem:[%s0 + $0x114] sm:$0xf]
  %v57 = vld [vmem:[%s0 + $0x118] sm:$0xff]
  %v58 = vld [vmem:[%s0 + $0x120] sm:$0xff]
  %v59 = vld [vmem:[%s0 + $0x128] sm:$0xf]
  %v60 = vld [vmem:[%s0 + $0x12c] sm:$0xff]
  %v61 = vld [vmem:[%s0 + $0x134] sm:$0xff]
  %v62 = vld [vmem:[%s0 + $0x13c] sm:$0xf]
  %v63 = vld [vmem:[%s1] sm:$0xf]
  %v64 = vld [vmem:[%s1 + $0x4] sm:$0xf]
  %v65 = vld [vmem:[%s1 + $0x8] sm:$0xf]
  %v66 = vld [vmem:[%s1 + $0xc] sm:$0xf]
  %v67 = vld [vmem:[%s1 + $0x10] sm:$0xf]
  %v68 = vld [vmem:[%s1 + $0x14] sm:$0xf]
  %v69 = vld [vmem:[%s1 + $0x18] sm:$0xf]
  %v70 = vld [vmem:[%s1 + $0x1c] sm:$0xf]
  %v71 = vld [vmem:[%s1 + $0x20] sm:$0xf]
  %v72 = vld [vmem:[%s1 + $0x24] sm:$0xf]
  %v73 = vld [vmem:[%s1 + $0x28] sm:$0xf]
  %v74 = vld [vmem:[%s1 + $0x2c] sm:$0xf]
  %v75 = vld [vmem:[%s1 + $0x30] sm:$0xf]
  %v76 = vld [vmem:[%s1 + $0x34] sm:$0xf]
  %v77 = vld [vmem:[%s1 + $0x38] sm:$0xf]
  %v78 = vld [vmem:[%s1 + $0x3c] sm:$0xf]
  %v79 = vld [vmem:[%s1 + $0x40] sm:$0xf]
  %v80 = vld [vmem:[%s1 + $0x44] sm:$0xf]
  %v81 = vld [vmem:[%s1 + $0x48] sm:$0xf]
  %v82 = vld [vmem:[%s1 + $0x4c] sm:$0xf]
  %v83 = vld [vmem:[%s1 + $0x50] sm:$0xf]
  %v84 = vld [vmem:[%s1 + $0x54] sm:$0xf]
  %v85 = vld [vmem:[%s1 + $0x58] sm:$0xf]
  %v86 = vld [vmem:[%s1 + $0x5c] sm:$0xf]
  %v87 = vld [vmem:[%s1 + $0x60] sm:$0xf]
  %v88 = vld [vmem:[%s1 + $0x64] sm:$0xf]
  %v89 = vld [vmem:[%s1 + $0x68] sm:$0xf]
  %v90 = vld [vmem:[%s1 + $0x6c] sm:$0xf]
  %v91 = vld [vmem:[%s1 + $0x70] sm:$0xf]
  %v92 = vld [vmem:[%s1 + $0x74] sm:$0xf]
  %v93 = vld [vmem:[%s1 + $0x78] sm:$0xf]
  %v94 = vld [vmem:[%s1 + $0x7c] sm:$0xf]
  %v95 = vld [vmem:[%s1 + $0x80] sm:$0xf]
  %v96 = vld [vmem:[%s1 + $0x84] sm:$0xf]
  %v97 = vld [vmem:[%s1 + $0x88] sm:$0xf]
  %v98 = vld [vmem:[%s1 + $0x8c] sm:$0xf]
  %v99 = vld [vmem:[%s1 + $0x90] sm:$0xf]
  %v100 = vld [vmem:[%s1 + $0x94] sm:$0xf]
  %v101 = vld [vmem:[%s1 + $0x98] sm:$0xf]
  %v102 = vld [vmem:[%s1 + $0x9c] sm:$0xf]
  %v103 = vld [vmem:[%s1 + $0xa0] sm:$0xf]
  %v104 = vld [vmem:[%s1 + $0xa4] sm:$0xf]
  %v105 = vld [vmem:[%s1 + $0xa8] sm:$0xf]
  %v106 = vld [vmem:[%s1 + $0xac] sm:$0xf]
  %v107 = vld [vmem:[%s1 + $0xb0] sm:$0xf]
  %v108 = vld [vmem:[%s1 + $0xb4] sm:$0xf]
  %v109 = vld [vmem:[%s1 + $0xb8] sm:$0xf]
  %v110 = vld [vmem:[%s1 + $0xbc] sm:$0xf]
  %v111 = vld [vmem:[%s1 + $0xc0] sm:$0xf]
  %v112 = vld [vmem:[%s1 + $0xc4] sm:$0xf]
  %v113 = vld [vmem:[%s1 + $0xc8] sm:$0xf]
  %v114 = vld [vmem:[%s1 + $0xcc] sm:$0xf]
  %v115 = vld [vmem:[%s1 + $0xd0] sm:$0xf]
  %v116 = vld [vmem:[%s1 + $0xd4] sm:$0xf]
  %v117 = vld [vmem:[%s1 + $0xd8] sm:$0xf]
  %v118 = vld [vmem:[%s1 + $0xdc] sm:$0xf]
  %v119 = vld [vmem:[%s1 + $0xe0] sm:$0xf]
  %v120 = vld [vmem:[%s1 + $0xe4] sm:$0xf]
  %v121 = vld [vmem:[%s1 + $0xe8] sm:$0xf]
  %v122 = vld [vmem:[%s1 + $0xec] sm:$0xf]
  %v123 = vld [vmem:[%s1 + $0xf0] sm:$0xf]
  %v124 = vld [vmem:[%s1 + $0xf4] sm:$0xf]
  %v125 = vld [vmem:[%s1 + $0xf8] sm:$0xf]
  %v126 = vld [vmem:[%s1 + $0xfc] sm:$0xf]
  %v127 = vld [vmem:[%s1 + $0x100] sm:$0xf]
  %v128 = vld [vmem:[%s1 + $0x104] sm:$0xf]
  %v129 = vld [vmem:[%s1 + $0x108] sm:$0xf]
  %v130 = vld [vmem:[%s1 + $0x10c] sm:$0xf]
  %v131 = vld [vmem:[%s1 + $0x110] sm:$0xf]
  %v132 = vld [vmem:[%s1 + $0x114] sm:$0xf]
  %v133 = vld [vmem:[%s1 + $0x118] sm:$0xf]
  %v134 = vld [vmem:[%s1 + $0x11c] sm:$0xf]
  %v135 = vld [vmem:[%s2] sm:$0x1]
  %v137 = vlaneseq
  %v138 = vshrl.u32 %v137, 7
  %v139 = vsub.s32 0, %v138
  %v140 = vrot.slane %v135, %v139
  %v190 = vunpack.c.l.b16 %v15
  %v191 = vunpack.c.h.b16 %v15
  %v192 = vunpack.c.l.b16 %v16
  %v193 = vunpack.c.h.b16 %v16
  %v194 = vunpack.c.l.b16 %v17
  %v195 = vunpack.c.l.b16 %v18
  %v196 = vunpack.c.h.b16 %v18
  %v197 = vunpack.c.l.b16 %v19
  %v198 = vunpack.c.h.b16 %v19
  %v199 = vunpack.c.l.b16 %v20
  %v200 = vunpack.c.l.b16 %v21
  %v201 = vunpack.c.h.b16 %v21
  %v202 = vunpack.c.l.b16 %v22
  %v203 = vunpack.c.h.b16 %v22
  %v204 = vunpack.c.l.b16 %v23
  %v205 = vunpack.c.l.b16 %v24
  %v206 = vunpack.c.h.b16 %v24
  %v207 = vunpack.c.l.b16 %v25
  %v208 = vunpack.c.h.b16 %v25
  %v209 = vunpack.c.l.b16 %v26
  %v210 = vunpack.c.l.b16 %v27
  %v211 = vunpack.c.h.b16 %v27
  %v212 = vunpack.c.l.b16 %v28
  %v213 = vunpack.c.h.b16 %v28
  %v214 = vunpack.c.l.b16 %v29
  %v215 = vunpack.c.l.b16 %v30
  %v216 = vunpack.c.h.b16 %v30
  %v217 = vunpack.c.l.b16 %v31
  %v218 = vunpack.c.h.b16 %v31
  %v219 = vunpack.c.l.b16 %v32
  %v220 = vunpack.c.l.b16 %v33
  %v221 = vunpack.c.h.b16 %v33
  %v222 = vunpack.c.l.b16 %v34
  %v223 = vunpack.c.h.b16 %v34
  %v224 = vunpack.c.l.b16 %v35
  %v225 = vunpack.c.l.b16 %v36
  %v226 = vunpack.c.h.b16 %v36
  %v227 = vunpack.c.l.b16 %v37
  %v228 = vunpack.c.h.b16 %v37
  %v229 = vunpack.c.l.b16 %v38
  %v230 = vunpack.c.l.b16 %v39
  %v231 = vunpack.c.h.b16 %v39
  %v232 = vunpack.c.l.b16 %v40
  %v233 = vunpack.c.h.b16 %v40
  %v234 = vunpack.c.l.b16 %v41
  %v235 = vunpack.c.l.b16 %v42
  %v236 = vunpack.c.h.b16 %v42
  %v237 = vunpack.c.l.b16 %v43
  %v238 = vunpack.c.h.b16 %v43
  %v239 = vunpack.c.l.b16 %v44
  %v240 = vunpack.c.l.b16 %v45
  %v241 = vunpack.c.h.b16 %v45
  %v242 = vunpack.c.l.b16 %v46
  %v243 = vunpack.c.h.b16 %v46
  %v244 = vunpack.c.l.b16 %v47
  %v245 = vunpack.c.l.b16 %v48
  %v246 = vunpack.c.h.b16 %v48
  %v247 = vunpack.c.l.b16 %v49
  %v248 = vunpack.c.h.b16 %v49
  %v249 = vunpack.c.l.b16 %v50
  %v250 = vunpack.c.l.b16 %v51
  %v251 = vunpack.c.h.b16 %v51
  %v252 = vunpack.c.l.b16 %v52
  %v253 = vunpack.c.h.b16 %v52
  %v254 = vunpack.c.l.b16 %v53
  %v255 = vunpack.c.l.b16 %v54
  %v256 = vunpack.c.h.b16 %v54
  %v257 = vunpack.c.l.b16 %v55
  %v258 = vunpack.c.h.b16 %v55
  %v259 = vunpack.c.l.b16 %v56
  %v260 = vunpack.c.l.b16 %v57
  %v261 = vunpack.c.h.b16 %v57
  %v262 = vunpack.c.l.b16 %v58
  %v263 = vunpack.c.h.b16 %v58
  %v264 = vunpack.c.l.b16 %v59
  %v265 = vunpack.c.l.b16 %v60
  %v266 = vunpack.c.h.b16 %v60
  %v267 = vunpack.c.l.b16 %v61
  %v268 = vunpack.c.h.b16 %v61
  %v269 = vunpack.c.l.b16 %v62
  %v270 = vpack.c.b16 %v195, %v190
  %v271 = vpack.c.b16 %v196, %v191
  %v272 = vpack.c.b16 %v197, %v192
  %v273 = vpack.c.b16 %v198, %v193
  %v274 = vpack.c.b16 %v199, %v194
  %v275 = vpack.c.b16 %v205, %v200
  %v276 = vpack.c.b16 %v206, %v201
  %v277 = vpack.c.b16 %v207, %v202
  %v278 = vpack.c.b16 %v208, %v203
  %v279 = vpack.c.b16 %v209, %v204
  %v280 = vpack.c.b16 %v215, %v210
  %v281 = vpack.c.b16 %v216, %v211
  %v282 = vpack.c.b16 %v217, %v212
  %v283 = vpack.c.b16 %v218, %v213
  %v284 = vpack.c.b16 %v219, %v214
  %v285 = vpack.c.b16 %v225, %v220
  %v286 = vpack.c.b16 %v226, %v221
  %v287 = vpack.c.b16 %v227, %v222
  %v288 = vpack.c.b16 %v228, %v223
  %v289 = vpack.c.b16 %v229, %v224
  %v290 = vpack.c.b16 %v235, %v230
  %v291 = vpack.c.b16 %v236, %v231
  %v292 = vpack.c.b16 %v237, %v232
  %v293 = vpack.c.b16 %v238, %v233
  %v294 = vpack.c.b16 %v239, %v234
  %v295 = vpack.c.b16 %v245, %v240
  %v296 = vpack.c.b16 %v246, %v241
  %v297 = vpack.c.b16 %v247, %v242
  %v298 = vpack.c.b16 %v248, %v243
  %v299 = vpack.c.b16 %v249, %v244
  %v300 = vpack.c.b16 %v255, %v250
  %v301 = vpack.c.b16 %v256, %v251
  %v302 = vpack.c.b16 %v257, %v252
  %v303 = vpack.c.b16 %v258, %v253
  %v304 = vpack.c.b16 %v259, %v254
  %v305 = vpack.c.b16 %v265, %v260
  %v306 = vpack.c.b16 %v266, %v261
  %v307 = vpack.c.b16 %v267, %v262
  %v308 = vpack.c.b16 %v268, %v263
  %v309 = vpack.c.b16 %v269, %v264
  %v414 = vunpack.c.l.b16 %v63
  %v415 = vunpack.c.l.b16 %v64
  %v416 = vunpack.c.l.b16 %v65
  %v417 = vunpack.c.l.b16 %v66
  %v418 = vunpack.c.l.b16 %v67
  %v419 = vunpack.c.l.b16 %v68
  %v420 = vunpack.c.l.b16 %v69
  %v421 = vunpack.c.l.b16 %v70
  %v422 = vunpack.c.l.b16 %v71
  %v423 = vunpack.c.l.b16 %v72
  %v424 = vunpack.c.l.b16 %v73
  %v425 = vunpack.c.l.b16 %v74
  %v426 = vunpack.c.l.b16 %v75
  %v427 = vunpack.c.l.b16 %v76
  %v428 = vunpack.c.l.b16 %v77
  %v429 = vunpack.c.l.b16 %v78
  %v430 = vunpack.c.l.b16 %v79
  %v431 = vunpack.c.l.b16 %v80
  %v432 = vunpack.c.l.b16 %v81
  %v433 = vunpack.c.l.b16 %v82
  %v434 = vunpack.c.l.b16 %v83
  %v435 = vunpack.c.l.b16 %v84
  %v436 = vunpack.c.l.b16 %v85
  %v437 = vunpack.c.l.b16 %v86
  %v438 = vunpack.c.l.b16 %v87
  %v439 = vunpack.c.l.b16 %v88
  %v440 = vunpack.c.l.b16 %v89
  %v441 = vunpack.c.l.b16 %v90
  %v442 = vunpack.c.l.b16 %v91
  %v443 = vunpack.c.l.b16 %v92
  %v444 = vunpack.c.l.b16 %v93
  %v445 = vunpack.c.l.b16 %v94
  %v446 = vunpack.c.l.b16 %v95
  %v447 = vunpack.c.l.b16 %v96
  %v448 = vunpack.c.l.b16 %v97
  %v449 = vunpack.c.l.b16 %v98
  %v450 = vunpack.c.l.b16 %v99
  %v451 = vunpack.c.l.b16 %v100
  %v452 = vunpack.c.l.b16 %v101
  %v453 = vunpack.c.l.b16 %v102
  %v454 = vunpack.c.l.b16 %v103
  %v455 = vunpack.c.l.b16 %v104
  %v456 = vunpack.c.l.b16 %v105
  %v457 = vunpack.c.l.b16 %v106
  %v458 = vunpack.c.l.b16 %v107
  %v459 = vunpack.c.l.b16 %v108
  %v460 = vunpack.c.l.b16 %v109
  %v461 = vunpack.c.l.b16 %v110
  %v462 = vunpack.c.l.b16 %v111
  %v463 = vunpack.c.l.b16 %v112
  %v464 = vunpack.c.l.b16 %v113
  %v465 = vunpack.c.l.b16 %v114
  %v466 = vunpack.c.l.b16 %v115
  %v467 = vunpack.c.l.b16 %v116
  %v468 = vunpack.c.l.b16 %v117
  %v469 = vunpack.c.l.b16 %v118
  %v470 = vunpack.c.l.b16 %v119
  %v471 = vunpack.c.l.b16 %v120
  %v472 = vunpack.c.l.b16 %v121
  %v473 = vunpack.c.l.b16 %v122
  %v474 = vunpack.c.l.b16 %v123
  %v475 = vunpack.c.l.b16 %v124
  %v476 = vunpack.c.l.b16 %v125
  %v477 = vunpack.c.l.b16 %v126
  %v478 = vunpack.c.l.b16 %v127
  %v479 = vunpack.c.l.b16 %v128
  %v480 = vunpack.c.l.b16 %v129
  %v481 = vunpack.c.l.b16 %v130
  %v482 = vunpack.c.l.b16 %v131
  %v483 = vunpack.c.l.b16 %v132
  %v484 = vunpack.c.l.b16 %v133
  %v485 = vunpack.c.l.b16 %v134
  %v486 = vpack.c.b16 %v415, %v414
  %v487 = vpack.c.b16 %v417, %v416
  %v488 = vpack.c.b16 %v419, %v418
  %v489 = vpack.c.b16 %v421, %v420
  %v490 = vpack.c.b16 %v423, %v422
  %v491 = vpack.c.b16 %v425, %v424
  %v492 = vpack.c.b16 %v427, %v426
  %v493 = vpack.c.b16 %v429, %v428
  %v494 = vpack.c.b16 %v431, %v430
  %v495 = vpack.c.b16 %v433, %v432
  %v496 = vpack.c.b16 %v435, %v434
  %v497 = vpack.c.b16 %v437, %v436
  %v498 = vpack.c.b16 %v439, %v438
  %v499 = vpack.c.b16 %v441, %v440
  %v500 = vpack.c.b16 %v443, %v442
  %v501 = vpack.c.b16 %v445, %v444
  %v502 = vpack.c.b16 %v447, %v446
  %v503 = vpack.c.b16 %v449, %v448
  %v504 = vpack.c.b16 %v451, %v450
  %v505 = vpack.c.b16 %v453, %v452
  %v506 = vpack.c.b16 %v455, %v454
  %v507 = vpack.c.b16 %v457, %v456
  %v508 = vpack.c.b16 %v459, %v458
  %v509 = vpack.c.b16 %v461, %v460
  %v510 = vpack.c.b16 %v463, %v462
  %v511 = vpack.c.b16 %v465, %v464
  %v512 = vpack.c.b16 %v467, %v466
  %v513 = vpack.c.b16 %v469, %v468
  %v514 = vpack.c.b16 %v471, %v470
  %v515 = vpack.c.b16 %v473, %v472
  %v516 = vpack.c.b16 %v475, %v474
  %v517 = vpack.c.b16 %v477, %v476
  %v518 = vpack.c.b16 %v479, %v478
  %v519 = vpack.c.b16 %v481, %v480
  %v520 = vpack.c.b16 %v483, %v482
  %v521 = vpack.c.b16 %v485, %v484
  %vm558 = vcmask 523264
  %v560 = vsel %vm558, %v274, 0
  %v563 = vsel %vm558, %v279, 0
  %v566 = vsel %vm558, %v284, 0
  %v569 = vsel %vm558, %v289, 0
  %v572 = vsel %vm558, %v294, 0
  %v575 = vsel %vm558, %v299, 0
  %v578 = vsel %vm558, %v304, 0
  %v581 = vsel %vm558, %v309, 0
  %583 = vmatprep.subr.bf16.mxu0 0
  %584 = vmatpush1.bf16.msra.mxu0 %v493
  %585 = vmatprep.subr.bf16.mxu0 0
  %586 = vmatpush1.bf16.msra.mxu0 %v492
  %587 = vmatprep.subr.bf16.mxu0 0
  %588 = vmatpush1.bf16.msra.mxu0 %v491
  %589 = vmatprep.subr.bf16.mxu0 0
  %590 = vmatpush1.bf16.msra.mxu0 %v490
  %591 = vmatprep.subr.bf16.mxu0 0
  %592 = vmatpush1.bf16.msra.mxu0 %v489
  %593 = vmatprep.subr.bf16.mxu0 0
  %594 = vmatpush1.bf16.msra.mxu0 %v488
  %595 = vmatprep.subr.bf16.mxu0 0
  %596 = vmatpush1.bf16.msra.mxu0 %v487
  %597 = vmatprep.subr.bf16.mxu0 0
  %598 = vmatpush1.bf16.msra.mxu0 %v486
  %599 = vmatprep.subr.bf16.mxu0 0
  %600 = vmatpush2.bf16.msra.mxu0 %v501
  %601 = vmatprep.subr.bf16.mxu0 0
  %602 = vmatpush2.bf16.msra.mxu0 %v500
  %603 = vmatprep.subr.bf16.mxu0 0
  %604 = vmatpush2.bf16.msra.mxu0 %v499
  %605 = vmatprep.subr.bf16.mxu0 0
  %606 = vmatpush2.bf16.msra.mxu0 %v498
  %607 = vmatprep.subr.bf16.mxu0 0
  %608 = vmatpush2.bf16.msra.mxu0 %v497
  %609 = vmatprep.subr.bf16.mxu0 0
  %610 = vmatpush2.bf16.msra.mxu0 %v496
  %611 = vmatprep.subr.bf16.mxu0 0
  %612 = vmatpush2.bf16.msra.mxu0 %v495
  %613 = vmatprep.subr.bf16.mxu0 0
  %614 = vmatpush2.bf16.msra.mxu0 %v494
  %615 = vmatprep.mubr.bf16.mxu0 %v271
  %616 = vmatmul.mubr.bf16.gmra.mxu0 %v270
  %v617 = vpop.f32.mrf.mxu0
  %v618 = vadd.f32 %v140, %v617
  %v619 = vpop.f32.mrf.mxu0
  %v620 = vpop.f32.mrf.mxu0
  %v621 = vadd.f32 %v140, %v620
  %v622 = vpop.f32.mrf.mxu0
  %623 = vmatprep.mubr.bf16.mxu0 %v276
  %624 = vmatmul.mubr.bf16.gmra.mxu0 %v275
  %v625 = vpop.f32.mrf.mxu0
  %v626 = vadd.f32 %v140, %v625
  %v627 = vpop.f32.mrf.mxu0
  %v628 = vpop.f32.mrf.mxu0
  %v629 = vadd.f32 %v140, %v628
  %v630 = vpop.f32.mrf.mxu0
  %631 = vmatprep.mubr.bf16.mxu0 %v281
  %632 = vmatmul.mubr.bf16.gmra.mxu0 %v280
  %v633 = vpop.f32.mrf.mxu0
  %v634 = vadd.f32 %v140, %v633
  %v635 = vpop.f32.mrf.mxu0
  %v636 = vpop.f32.mrf.mxu0
  %v637 = vadd.f32 %v140, %v636
  %v638 = vpop.f32.mrf.mxu0
  %639 = vmatprep.mubr.bf16.mxu0 %v286
  %640 = vmatmul.mubr.bf16.gmra.mxu0 %v285
  %v641 = vpop.f32.mrf.mxu0
  %v642 = vadd.f32 %v140, %v641
  %v643 = vpop.f32.mrf.mxu0
  %v644 = vpop.f32.mrf.mxu0
  %v645 = vadd.f32 %v140, %v644
  %v646 = vpop.f32.mrf.mxu0
  %647 = vmatprep.mubr.bf16.mxu0 %v291
  %648 = vmatmul.mubr.bf16.gmra.mxu0 %v290
  %v649 = vpop.f32.mrf.mxu0
  %v650 = vadd.f32 %v140, %v649
  %v651 = vpop.f32.mrf.mxu0
  %v652 = vpop.f32.mrf.mxu0
  %v653 = vadd.f32 %v140, %v652
  %v654 = vpop.f32.mrf.mxu0
  %655 = vmatprep.mubr.bf16.mxu0 %v296
  %656 = vmatmul.mubr.bf16.gmra.mxu0 %v295
  %v657 = vpop.f32.mrf.mxu0
  %v658 = vadd.f32 %v140, %v657
  %v659 = vpop.f32.mrf.mxu0
  %v660 = vpop.f32.mrf.mxu0
  %v661 = vadd.f32 %v140, %v660
  %v662 = vpop.f32.mrf.mxu0
  %663 = vmatprep.mubr.bf16.mxu0 %v301
  %664 = vmatmul.mubr.bf16.gmra.mxu0 %v300
  %v665 = vpop.f32.mrf.mxu0
  %v666 = vadd.f32 %v140, %v665
  %v667 = vpop.f32.mrf.mxu0
  %v668 = vpop.f32.mrf.mxu0
  %v669 = vadd.f32 %v140, %v668
  %v670 = vpop.f32.mrf.mxu0
  %671 = vmatprep.mubr.bf16.mxu0 %v306
  %672 = vmatmul.mubr.bf16.gmra.mxu0 %v305
  %v673 = vpop.f32.mrf.mxu0
  %v674 = vadd.f32 %v140, %v673
  %v675 = vpop.f32.mrf.mxu0
  %v676 = vpop.f32.mrf.mxu0
  %v677 = vadd.f32 %v140, %v676
  %v678 = vpop.f32.mrf.mxu0
  %679 = vdwg.mxu0
  %680 = vmatprep.subr.bf16.mxu0 0
  %681 = vmatpush1.bf16.msra.mxu0 %v509
  %682 = vmatprep.subr.bf16.mxu0 0
  %683 = vmatpush1.bf16.msra.mxu0 %v508
  %684 = vmatprep.subr.bf16.mxu0 0
  %685 = vmatpush1.bf16.msra.mxu0 %v507
  %686 = vmatprep.subr.bf16.mxu0 0
  %687 = vmatpush1.bf16.msra.mxu0 %v506
  %688 = vmatprep.subr.bf16.mxu0 0
  %689 = vmatpush1.bf16.msra.mxu0 %v505
  %690 = vmatprep.subr.bf16.mxu0 0
  %691 = vmatpush1.bf16.msra.mxu0 %v504
  %692 = vmatprep.subr.bf16.mxu0 0
  %693 = vmatpush1.bf16.msra.mxu0 %v503
  %694 = vmatprep.subr.bf16.mxu0 0
  %695 = vmatpush1.bf16.msra.mxu0 %v502
  %696 = vmatprep.subr.bf16.mxu0 0
  %697 = vmatpush2.bf16.msra.mxu0 %v517
  %698 = vmatprep.subr.bf16.mxu0 0
  %699 = vmatpush2.bf16.msra.mxu0 %v516
  %700 = vmatprep.subr.bf16.mxu0 0
  %701 = vmatpush2.bf16.msra.mxu0 %v515
  %702 = vmatprep.subr.bf16.mxu0 0
  %703 = vmatpush2.bf16.msra.mxu0 %v514
  %704 = vmatprep.subr.bf16.mxu0 0
  %705 = vmatpush2.bf16.msra.mxu0 %v513
  %706 = vmatprep.subr.bf16.mxu0 0
  %707 = vmatpush2.bf16.msra.mxu0 %v512
  %708 = vmatprep.subr.bf16.mxu0 0
  %709 = vmatpush2.bf16.msra.mxu0 %v511
  %710 = vmatprep.subr.bf16.mxu0 0
  %711 = vmatpush2.bf16.msra.mxu0 %v510
  %712 = vmatprep.mubr.bf16.mxu0 %v273
  %713 = vmatmul.mubr.bf16.gmra.mxu0 %v272
  %v714 = vpop.f32.mrf.mxu0
  %v715 = vadd.f32 %v618, %v714
  %v716 = vpop.f32.mrf.mxu0
  %v717 = vpop.f32.mrf.mxu0
  %v718 = vadd.f32 %v621, %v717
  %v719 = vpop.f32.mrf.mxu0
  %720 = vmatprep.mubr.bf16.mxu0 %v278
  %721 = vmatmul.mubr.bf16.gmra.mxu0 %v277
  %v722 = vpop.f32.mrf.mxu0
  %v723 = vadd.f32 %v626, %v722
  %v724 = vpop.f32.mrf.mxu0
  %v725 = vpop.f32.mrf.mxu0
  %v726 = vadd.f32 %v629, %v725
  %v727 = vpop.f32.mrf.mxu0
  %728 = vmatprep.mubr.bf16.mxu0 %v283
  %729 = vmatmul.mubr.bf16.gmra.mxu0 %v282
  %v730 = vpop.f32.mrf.mxu0
  %v731 = vadd.f32 %v634, %v730
  %v732 = vpop.f32.mrf.mxu0
  %v733 = vpop.f32.mrf.mxu0
  %v734 = vadd.f32 %v637, %v733
  %v735 = vpop.f32.mrf.mxu0
  %736 = vmatprep.mubr.bf16.mxu0 %v288
  %737 = vmatmul.mubr.bf16.gmra.mxu0 %v287
  %v738 = vpop.f32.mrf.mxu0
  %v739 = vadd.f32 %v642, %v738
  %v740 = vpop.f32.mrf.mxu0
  %v741 = vpop.f32.mrf.mxu0
  %v742 = vadd.f32 %v645, %v741
  %v743 = vpop.f32.mrf.mxu0
  %744 = vmatprep.mubr.bf16.mxu0 %v293
  %745 = vmatmul.mubr.bf16.gmra.mxu0 %v292
  %v746 = vpop.f32.mrf.mxu0
  %v747 = vadd.f32 %v650, %v746
  %v748 = vpop.f32.mrf.mxu0
  %v749 = vpop.f32.mrf.mxu0
  %v750 = vadd.f32 %v653, %v749
  %v751 = vpop.f32.mrf.mxu0
  %752 = vmatprep.mubr.bf16.mxu0 %v298
  %753 = vmatmul.mubr.bf16.gmra.mxu0 %v297
  %v754 = vpop.f32.mrf.mxu0
  %v755 = vadd.f32 %v658, %v754
  %v756 = vpop.f32.mrf.mxu0
  %v757 = vpop.f32.mrf.mxu0
  %v758 = vadd.f32 %v661, %v757
  %v759 = vpop.f32.mrf.mxu0
  %760 = vmatprep.mubr.bf16.mxu0 %v303
  %761 = vmatmul.mubr.bf16.gmra.mxu0 %v302
  %v762 = vpop.f32.mrf.mxu0
  %v763 = vadd.f32 %v666, %v762
  %v764 = vpop.f32.mrf.mxu0
  %v765 = vpop.f32.mrf.mxu0
  %v766 = vadd.f32 %v669, %v765
  %v767 = vpop.f32.mrf.mxu0
  %768 = vmatprep.mubr.bf16.mxu0 %v308
  %769 = vmatmul.mubr.bf16.gmra.mxu0 %v307
  %v770 = vpop.f32.mrf.mxu0
  %v771 = vadd.f32 %v674, %v770
  %v772 = vpop.f32.mrf.mxu0
  %v773 = vpop.f32.mrf.mxu0
  %v774 = vadd.f32 %v677, %v773
  %v775 = vpop.f32.mrf.mxu0
  %776 = vdwg.mxu0
  %777 = vmatprep.subr.bf16.mxu0 0
  %778 = vmatpush1.bf16.msra.mxu0 0
  %779 = vmatprep.subr.bf16.mxu0 0
  %780 = vmatpush1.bf16.msra.mxu0 0
  %781 = vmatprep.subr.bf16.mxu0 0
  %782 = vmatpush1.bf16.msra.mxu0 0
  %783 = vmatprep.subr.bf16.mxu0 0
  %784 = vmatpush1.bf16.msra.mxu0 0
  %785 = vmatprep.subr.bf16.mxu0 0
  %786 = vmatpush1.bf16.msra.mxu0 %v521
  %787 = vmatprep.subr.bf16.mxu0 0
  %788 = vmatpush1.bf16.msra.mxu0 %v520
  %789 = vmatprep.subr.bf16.mxu0 0
  %790 = vmatpush1.bf16.msra.mxu0 %v519
  %791 = vmatprep.subr.bf16.mxu0 0
  %792 = vmatpush1.bf16.msra.mxu0 %v518
  %793 = vmatprep.subr.bf16.mxu0 0
  %794 = vmatpush2.bf16.msra.mxu0 0
  %795 = vmatprep.subr.bf16.mxu0 0
  %796 = vmatpush2.bf16.msra.mxu0 0
  %797 = vmatprep.subr.bf16.mxu0 0
  %798 = vmatpush2.bf16.msra.mxu0 0
  %799 = vmatprep.subr.bf16.mxu0 0
  %800 = vmatpush2.bf16.msra.mxu0 0
  %801 = vmatprep.subr.bf16.mxu0 0
  %802 = vmatpush2.bf16.msra.mxu0 0
  %803 = vmatprep.subr.bf16.mxu0 0
  %804 = vmatpush2.bf16.msra.mxu0 0
  %805 = vmatprep.subr.bf16.mxu0 0
  %806 = vmatpush2.bf16.msra.mxu0 0
  %807 = vmatprep.subr.bf16.mxu0 0
  %808 = vmatpush2.bf16.msra.mxu0 0
  %809 = vmatprep.mubr.bf16.mxu0 0
  %810 = vmatmul.mubr.bf16.gmra.mxu0 %v560
  %v811 = vpop.f32.mrf.mxu0
  %v812 = vadd.f32 %v715, %v811
  %v813 = vpop.f32.mrf.mxu0
  %v814 = vpop.f32.mrf.mxu0
  %v815 = vadd.f32 %v718, %v814
  %v816 = vpop.f32.mrf.mxu0
  %817 = vmatprep.mubr.bf16.mxu0 0
  %818 = vmatmul.mubr.bf16.gmra.mxu0 %v563
  %v819 = vpop.f32.mrf.mxu0
  %v820 = vadd.f32 %v723, %v819
  %v821 = vpop.f32.mrf.mxu0
  %v822 = vpop.f32.mrf.mxu0
  %v823 = vadd.f32 %v726, %v822
  %v824 = vpop.f32.mrf.mxu0
  %825 = vmatprep.mubr.bf16.mxu0 0
  %826 = vmatmul.mubr.bf16.gmra.mxu0 %v566
  %v827 = vpop.f32.mrf.mxu0
  %v828 = vadd.f32 %v731, %v827
  %v829 = vpop.f32.mrf.mxu0
  %v830 = vpop.f32.mrf.mxu0
  %v831 = vadd.f32 %v734, %v830
  %v832 = vpop.f32.mrf.mxu0
  %833 = vmatprep.mubr.bf16.mxu0 0
  %834 = vmatmul.mubr.bf16.gmra.mxu0 %v569
  %v835 = vpop.f32.mrf.mxu0
  %v836 = vadd.f32 %v739, %v835
  %v837 = vpop.f32.mrf.mxu0
  %v838 = vpop.f32.mrf.mxu0
  %v839 = vadd.f32 %v742, %v838
  %v840 = vpop.f32.mrf.mxu0
  %841 = vmatprep.mubr.bf16.mxu0 0
  %842 = vmatmul.mubr.bf16.gmra.mxu0 %v572
  %v843 = vpop.f32.mrf.mxu0
  %v844 = vadd.f32 %v747, %v843
  %v845 = vpop.f32.mrf.mxu0
  %v846 = vpop.f32.mrf.mxu0
  %v847 = vadd.f32 %v750, %v846
  %v848 = vpop.f32.mrf.mxu0
  %849 = vmatprep.mubr.bf16.mxu0 0
  %850 = vmatmul.mubr.bf16.gmra.mxu0 %v575
  %v851 = vpop.f32.mrf.mxu0
  %v852 = vadd.f32 %v755, %v851
  %v853 = vpop.f32.mrf.mxu0
  %v854 = vpop.f32.mrf.mxu0
  %v855 = vadd.f32 %v758, %v854
  %v856 = vpop.f32.mrf.mxu0
  %857 = vmatprep.mubr.bf16.mxu0 0
  %858 = vmatmul.mubr.bf16.gmra.mxu0 %v578
  %v859 = vpop.f32.mrf.mxu0
  %v860 = vadd.f32 %v763, %v859
  %v861 = vpop.f32.mrf.mxu0
  %v862 = vpop.f32.mrf.mxu0
  %v863 = vadd.f32 %v766, %v862
  %v864 = vpop.f32.mrf.mxu0
  %865 = vmatprep.mubr.bf16.mxu0 0
  %866 = vmatmul.mubr.bf16.gmra.mxu0 %v581
  %v867 = vpop.f32.mrf.mxu0
  %v868 = vadd.f32 %v771, %v867
  %v869 = vpop.f32.mrf.mxu0
  %v870 = vpop.f32.mrf.mxu0
  %v871 = vadd.f32 %v774, %v870
  %v872 = vpop.f32.mrf.mxu0
  %873 = vdwg.mxu0
  %v874 = vmax.f32 %v812, 0.0
  %v875 = vmax.f32 %v815, 0.0
  %v876 = vmax.f32 %v820, 0.0
  %v877 = vmax.f32 %v823, 0.0
  %v878 = vmax.f32 %v828, 0.0
  %v879 = vmax.f32 %v831, 0.0
  %v880 = vmax.f32 %v836, 0.0
  %v881 = vmax.f32 %v839, 0.0
  %v882 = vmax.f32 %v844, 0.0
  %v883 = vmax.f32 %v847, 0.0
  %v884 = vmax.f32 %v852, 0.0
  %v885 = vmax.f32 %v855, 0.0
  %v886 = vmax.f32 %v860, 0.0
  %v887 = vmax.f32 %v863, 0.0
  %v888 = vmax.f32 %v868, 0.0
  %v889 = vmax.f32 %v871, 0.0
  %v890 = vpack.c.bf16 %v875, %v874
  %v891 = vpack.c.bf16 %v877, %v876
  %v892 = vpack.c.bf16 %v879, %v878
  %v893 = vpack.c.bf16 %v881, %v880
  %v894 = vpack.c.bf16 %v883, %v882
  %v895 = vpack.c.bf16 %v885, %v884
  %v896 = vpack.c.bf16 %v887, %v886
  %v897 = vpack.c.bf16 %v889, %v888
  %v906 = vunpack.c.l.b16 %v890
  %v907 = vunpack.c.h.b16 %v890
  %v908 = vunpack.c.l.b16 %v891
  %v909 = vunpack.c.h.b16 %v891
  %v910 = vunpack.c.l.b16 %v892
  %v911 = vunpack.c.h.b16 %v892
  %v912 = vunpack.c.l.b16 %v893
  %v913 = vunpack.c.h.b16 %v893
  %v914 = vunpack.c.l.b16 %v894
  %v915 = vunpack.c.h.b16 %v894
  %v916 = vunpack.c.l.b16 %v895
  %v917 = vunpack.c.h.b16 %v895
  %v918 = vunpack.c.l.b16 %v896
  %v919 = vunpack.c.h.b16 %v896
  %v920 = vunpack.c.l.b16 %v897
  %v921 = vunpack.c.h.b16 %v897
  %v922 = vpack.c.b16 %v906, %v906
  %v923 = vpack.c.b16 %v907, %v907
  %v924 = vpack.c.b16 %v908, %v908
  %v925 = vpack.c.b16 %v909, %v909
  %v926 = vpack.c.b16 %v910, %v910
  %v927 = vpack.c.b16 %v911, %v911
  %v928 = vpack.c.b16 %v912, %v912
  %v929 = vpack.c.b16 %v913, %v913
  %v930 = vpack.c.b16 %v914, %v914
  %v931 = vpack.c.b16 %v915, %v915
  %v932 = vpack.c.b16 %v916, %v916
  %v933 = vpack.c.b16 %v917, %v917
  %v934 = vpack.c.b16 %v918, %v918
  %v935 = vpack.c.b16 %v919, %v919
  %v936 = vpack.c.b16 %v920, %v920
  %v937 = vpack.c.b16 %v921, %v921
  %954 = vst [vmem:[%s3] sm:$0xf] %v922
  %955 = vst [vmem:[%s3 + $0x4] sm:$0xf] %v923
  %956 = vst [vmem:[%s3 + $0x8] sm:$0xf] %v924
  %957 = vst [vmem:[%s3 + $0xc] sm:$0xf] %v925
  %958 = vst [vmem:[%s3 + $0x10] sm:$0xf] %v926
  %959 = vst [vmem:[%s3 + $0x14] sm:$0xf] %v927
  %960 = vst [vmem:[%s3 + $0x18] sm:$0xf] %v928
  %961 = vst [vmem:[%s3 + $0x1c] sm:$0xf] %v929
  %962 = vst [vmem:[%s3 + $0x20] sm:$0xf] %v930
  %963 = vst [vmem:[%s3 + $0x24] sm:$0xf] %v931
  %964 = vst [vmem:[%s3 + $0x28] sm:$0xf] %v932
  %965 = vst [vmem:[%s3 + $0x2c] sm:$0xf] %v933
  %966 = vst [vmem:[%s3 + $0x30] sm:$0xf] %v934
  %967 = vst [vmem:[%s3 + $0x34] sm:$0xf] %v935
  %968 = vst [vmem:[%s3 + $0x38] sm:$0xf] %v936
  %969 = vst [vmem:[%s3 + $0x3c] sm:$0xf] %v937
  // Predicated region
  $region14: #{decoder_forward.5} parent=0 // pred_check
    _
  $region15: #{decoder_forward.5} parent=0 // pred_check_branch
    %971 = sbr.rel (0) target = $region17
  $region16: #{decoder_forward.5} parent=0 // pred_region
    _
  $region17: #{decoder_forward.5} parent=0 // pred_fallthru
    _
  // Predicated region
  $region18: #{decoder_forward.5} parent=0 // pred_check
    _
  $region19: #{decoder_forward.5} parent=0 // pred_check_branch
    %973 = sbr.rel (0) target = $region21
  $region20: #{decoder_forward.5} parent=0 // pred_region
    _
  $region21: #{decoder_forward.5} parent=0 // pred_fallthru
    _

// kernel: decoder_forward.4
$region0: #{decoder_forward.4}
  #allocation0 [shape = 'u32[]', space=smem, size = 0x4, offset = 0x4, fixed_abs, tag = 'smem constant byte address 0x4 - core index']
  #allocation1 [shape = 'u32[144,128]{1,0:T(1,128)}', space=vmem, size = 0x12000, scoped, tag = 'internal scratch']
  %s0 = inlined_call_operand.vmem [shape: bf16[8,32], index: 0, kind: input, shape index: {}]
  %s1 = inlined_call_operand.hbm [shape: bf16[32,256], index: 1, kind: input, shape index: {}]
  %s2 = inlined_call_operand.hbm [shape: f32[1,256], index: 2, kind: input, shape index: {}]
  %s3 = inlined_call_operand.hbm [shape: bf16[256,4096], index: 3, kind: input, shape index: {}]
  %s4 = inlined_call_operand.hbm [shape: f32[1,4096], index: 4, kind: input, shape index: {}]
  %s5 = inlined_call_operand.vmem [shape: f32[8,4096], index: 5, kind: output, shape index: {}]
  %s6 = sld [smem:[#allocation0]]
  $region46: #{decoder_forward.4} parent=0
    _
  %s8 = ssub.s32 1, %s6
  %s9 = scalar_select 0, %s8, %s6
  $region1: #{decoder_forward.4} parent=0
    #allocation2 [shape = 'u8[16384]{0}', space=vmem, size = 0x4000, scoped, tag = 'input window, operand 1, single buffered']
    #allocation3 [shape = 's32[1]{0}', space=sflag, size = 0x4, scoped, tag = 'scoped memory for decoder_forward.4']
    #allocation4 [shape = 'u8[1024]{0}', space=vmem, size = 0x400, scoped, tag = 'input window, operand 2, single buffered']
    #allocation5 [shape = 's32[1]{0}', space=sflag, size = 0x4, scoped, tag = 'scoped memory for decoder_forward.4']
    #allocation6 [shape = 'u8[2097152]{0}', space=vmem, size = 0x200000, scoped, tag = 'input window, operand 3, single buffered']
    #allocation7 [shape = 'u8[16384]{0}', space=vmem, size = 0x4000, scoped, tag = 'input window, operand 4, single buffered']
    #allocation8 [shape = 's32[1]{0}', space=sflag, size = 0x4, scoped, tag = 'scoped memory for decoder_forward.4']
    %10 = vsyncpa [#allocation3], 0
    %11 = vsyncpa [#allocation5], 0
    %12 = vsyncpa [#allocation8], 0
    // Predicated region
    $region2: #{decoder_forward.4} parent=1 // pred_check
      _
    $region3: #{decoder_forward.4} parent=1 // pred_check_branch
      %14 = sbr.rel (0) target = $region5
    $region4: #{decoder_forward.4} parent=1 // pred_region
      _
    $region5: #{decoder_forward.4} parent=1 // pred_fallthru
      _
    // Predicated region
    $region6: #{decoder_forward.4} parent=1 // pred_check
      _
    $region7: #{decoder_forward.4} parent=1 // pred_check_branch
      %16 = sbr.rel (0) target = $region9
    $region8: #{decoder_forward.4} parent=1 // pred_region
      %s18 = ssub.s32 512, 512
      %19 = vsyncadd [#allocation3], %s18
      %s20 = sshll.u32 [#allocation2], 4
      %s21 = int_to_ptr.vmem [resolvable:$true] %s20
      %26 = dma.hbm_to_vmem [thread:$0]  %s1, 512, %s21, [#allocation3], 128, 128, 8
    $region9: #{decoder_forward.4} parent=1 // pred_fallthru
      _
    // Predicated region
    $region10: #{decoder_forward.4} parent=1 // pred_check
      _
    $region11: #{decoder_forward.4} parent=1 // pred_check_branch
      %28 = sbr.rel (0) target = $region13
    $region12: #{decoder_forward.4} parent=1 // pred_region
      %s30 = ssub.s32 32, 32
      %31 = vsyncadd [#allocation5], %s30
      %s33 = sshll.u32 [#allocation4], 4
      %s34 = int_to_ptr.vmem [resolvable:$true] %s33
      %36 = dma.hbm_to_vmem [thread:$0]  %s2, 32, %s34, [#allocation5]
    $region13: #{decoder_forward.4} parent=1 // pred_fallthru
      _
    // Predicated region
    $region14: #{decoder_forward.4} parent=1 // pred_check
      _
    $region15: #{decoder_forward.4} parent=1 // pred_check_branch
      %38 = sbr.rel (0) target = $region17
    $region16: #{decoder_forward.4} parent=1 // pred_region
      %s40 = ssub.s32 65536, 65536
      %41 = vsyncadd [#allocation5], %s40
      %s42 = sshll.u32 [#allocation6], 4
      %s43 = int_to_ptr.vmem [resolvable:$true] %s42
      %48 = dma.hbm_to_vmem [thread:$0]  %s3, 65536, %s43, [#allocation5], 2048, 2048, 128
    $region17: #{decoder_forward.4} parent=1 // pred_fallthru
      _
    // Predicated region
    $region18: #{decoder_forward.4} parent=1 // pred_check
      _
    $region19: #{decoder_forward.4} parent=1 // pred_check_branch
      %50 = sbr.rel (0) target = $region21
    $region20: #{decoder_forward.4} parent=1 // pred_region
      %s52 = ssub.s32 512, 512
      %53 = vsyncadd [#allocation8], %s52
      %s55 = sshll.u32 [#allocation7], 4
      %s56 = int_to_ptr.vmem [resolvable:$true] %s55
      %58 = dma.hbm_to_vmem [thread:$0]  %s4, 512, %s56, [#allocation8]
    $region21: #{decoder_forward.4} parent=1 // pred_fallthru
      _
    // Predicated region
    $region22: #{decoder_forward.4} parent=1 // pred_check
      _
    $region23: #{decoder_forward.4} parent=1 // pred_check_branch
      %60 = sbr.rel (0) target = $region25
    $region24: #{decoder_forward.4} parent=1 // pred_region
      %61 = dma.done [#allocation3], 512
    $region25: #{decoder_forward.4} parent=1 // pred_fallthru
      _
    // Predicated region
    $region26: #{decoder_forward.4} parent=1 // pred_check
      _
    $region27: #{decoder_forward.4} parent=1 // pred_check_branch
      %63 = sbr.rel (0) target = $region29
    $region28: #{decoder_forward.4} parent=1 // pred_region
      %64 = dma.done [#allocation5], 32
    $region29: #{decoder_forward.4} parent=1 // pred_fallthru
      _
    // Predicated region
    $region30: #{decoder_forward.4} parent=1 // pred_check
      _
    $region31: #{decoder_forward.4} parent=1 // pred_check_branch
      %66 = sbr.rel (0) target = $region33
    $region32: #{decoder_forward.4} parent=1 // pred_region
      %67 = dma.done [#allocation5], 65536
    $region33: #{decoder_forward.4} parent=1 // pred_fallthru
      _
    // Predicated region
    $region34: #{decoder_forward.4} parent=1 // pred_check
      _
    $region35: #{decoder_forward.4} parent=1 // pred_check_branch
      %69 = sbr.rel (0) target = $region37
    $region36: #{decoder_forward.4} parent=1 // pred_region
      %70 = dma.done [#allocation8], 512
    $region37: #{decoder_forward.4} parent=1 // pred_fallthru
      _
    %v72 = vld [vmem:[%s0] sm:$0xf]
    %v73 = vld [vmem:[#allocation2] sm:$0xff]
    %v74 = vld [vmem:[#allocation2 + $0x8] sm:$0xff]
    %v75 = vld [vmem:[#allocation2 + $0x10] sm:$0xff]
    %v76 = vld [vmem:[#allocation2 + $0x18] sm:$0xff]
    %v77 = vld [vmem:[#allocation4] sm:$0x3]
    %v79 = vlaneseq
    %v80 = vshrl.u32 %v79, 7
    %v81 = vsub.s32 0, %v80
    %v82 = vrot.slane %v77, %v81
    %v83 = vlaneseq
    %v84 = vshrl.u32 %v83, 7
    %v85 = vsub.s32 1, %v84
    %v86 = vrot.slane %v77, %v85
    %v93 = vunpack.c.l.b16 %v73
    %v94 = vunpack.c.h.b16 %v73
    %v95 = vunpack.c.l.b16 %v74
    %v96 = vunpack.c.h.b16 %v74
    %v97 = vunpack.c.l.b16 %v75
    %v98 = vunpack.c.h.b16 %v75
    %v99 = vunpack.c.l.b16 %v76
    %v100 = vunpack.c.h.b16 %v76
    %v101 = vpack.c.b16 %v95, %v93
    %v102 = vpack.c.b16 %v96, %v94
    %v103 = vpack.c.b16 %v99, %v97
    %v104 = vpack.c.b16 %v100, %v98
    %vm109 = vcmask 261120
    %v111 = vsel %vm109, %v72, 0
    %113 = vmatprep.subr.bf16.mxu0 0
    %114 = vmatpush1.bf16.msra.mxu0 0
    %115 = vmatprep.subr.bf16.mxu0 0
    %116 = vmatpush1.bf16.msra.mxu0 0
    %117 = vmatprep.subr.bf16.mxu0 0
    %118 = vmatpush1.bf16.msra.mxu0 0
    %119 = vmatprep.subr.bf16.mxu0 0
    %120 = vmatpush1.bf16.msra.mxu0 0
    %121 = vmatprep.subr.bf16.mxu0 0
    %122 = vmatpush1.bf16.msra.mxu0 0
    %123 = vmatprep.subr.bf16.mxu0 0
    %124 = vmatpush1.bf16.msra.mxu0 0
    %125 = vmatprep.subr.bf16.mxu0 %v104
    %126 = vmatpush1.bf16.msra.mxu0 %v103
    %127 = vmatprep.subr.bf16.mxu0 %v102
    %128 = vmatpush1.bf16.msra.mxu0 %v101
    %129 = vmatprep.subr.bf16.mxu0 0
    %130 = vmatpush2.bf16.msra.mxu0 0
    %131 = vmatprep.subr.bf16.mxu0 0
    %132 = vmatpush2.bf16.msra.mxu0 0
    %133 = vmatprep.subr.bf16.mxu0 0
    %134 = vmatpush2.bf16.msra.mxu0 0
    %135 = vmatprep.subr.bf16.mxu0 0
    %136 = vmatpush2.bf16.msra.mxu0 0
    %137 = vmatprep.subr.bf16.mxu0 0
    %138 = vmatpush2.bf16.msra.mxu0 0
    %139 = vmatprep.subr.bf16.mxu0 0
    %140 = vmatpush2.bf16.msra.mxu0 0
    %141 = vmatprep.subr.bf16.mxu0 0
    %142 = vmatpush2.bf16.msra.mxu0 0
    %143 = vmatprep.subr.bf16.mxu0 0
    %144 = vmatpush2.bf16.msra.mxu0 0
    %145 = vmatprep.mubr.bf16.mxu0 0
    %146 = vmatmul.mubr.bf16.gmra.mxu0 %v111
    %v147 = vpop.f32.mrf.mxu0
    %v148 = vadd.f32 %v82, %v147
    %v149 = vpop.f32.mrf.mxu0
    %v150 = vadd.f32 %v86, %v149
    %v151 = vpop.f32.mrf.mxu0
    %v152 = vpop.f32.mrf.mxu0
    %153 = vdwg.mxu0
    %v154 = vmax.f32 %v148, 0.0
    %v155 = vmax.f32 %v150, 0.0
    %v156 = vpack.c.bf16 %v154, %v154
    %v157 = vpack.c.bf16 %v155, %v155
    %v158 = vld [vmem:[#allocation6] sm:$0xff]
    %v159 = vld [vmem:[#allocation6 + $0x8] sm:$0xff]
    %v160 = vld [vmem:[#allocation6 + $0x10] sm:$0xff]
    %v161 = vld [vmem:[#allocation6 + $0x18] sm:$0xff]
    %v162 = vld [vmem:[#allocation6 + $0x20] sm:$0xff]
    %v163 = vld [vmem:[#allocation6 + $0x28] sm:$0xff]
    %v164 = vld [vmem:[#allocation6 + $0x30] sm:$0xff]
    %v165 = vld [vmem:[#allocation6 + $0x38] sm:$0xff]
    %v166 = vld [vmem:[#allocation6 + $0x40] sm:$0xff]
    %v167 = vld [vmem:[#allocation6 + $0x48] sm:$0xff]
    %v168 = vld [vmem:[#allocation6 + $0x50] sm:$0xff]
    %v169 = vld [vmem:[#allocation6 + $0x58] sm:$0xff]
    %v170 = vld [vmem:[#allocation6 + $0x60] sm:$0xff]
    %v171 = vld [vmem:[#allocation6 + $0x68] sm:$0xff]
    %v172 = vld [vmem:[#allocation6 + $0x70] sm:$0xff]
    %v173 = vld [vmem:[#allocation6 + $0x78] sm:$0xff]
    %v174 = vld [vmem:[#allocation6 + $0x80] sm:$0xff]
    %v175 = vld [vmem:[#allocation6 + $0x88] sm:$0xff]
    %v176 = vld [vmem:[#allocation6 + $0x90] sm:$0xff]
    %v177 = vld [vmem:[#allocation6 + $0x98] sm:$0xff]
    %v178 = vld [vmem:[#allocation6 + $0xa0] sm:$0xff]
    %v179 = vld [vmem:[#allocation6 + $0xa8] sm:$0xff]
    %v180 = vld [vmem:[#allocation6 + $0xb0] sm:$0xff]
    %v181 = vld [vmem:[#allocation6 + $0xb8] sm:$0xff]
    %v182 = vld [vmem:[#allocation6 + $0xc0] sm:$0xff]
    %v183 = vld [vmem:[#allocation6 + $0xc8] sm:$0xff]
    %v184 = vld [vmem:[#allocation6 + $0xd0] sm:$0xff]
    %v185 = vld [vmem:[#allocation6 + $0xd8] sm:$0xff]
    %v186 = vld [vmem:[#allocation6 + $0xe0] sm:$0xff]
    %v187 = vld [vmem:[#allocation6 + $0xe8] sm:$0xff]
    %v188 = vld [vmem:[#allocation6 + $0xf0] sm:$0xff]
    %v189 = vld [vmem:[#allocation6 + $0xf8] sm:$0xff]
    %v190 = vld [vmem:[#allocation6 + $0x100] sm:$0xff]
    %v191 = vld [vmem:[#allocation6 + $0x108] sm:$0xff]
    %v192 = vld [vmem:[#allocation6 + $0x110] sm:$0xff]
    %v193 = vld [vmem:[#allocation6 + $0x118] sm:$0xff]
    %v194 = vld [vmem:[#allocation6 + $0x120] sm:$0xff]
    %v195 = vld [vmem:[#allocation6 + $0x128] sm:$0xff]
    %v196 = vld [vmem:[#allocation6 + $0x130] sm:$0xff]
    %v197 = vld [vmem:[#allocation6 + $0x138] sm:$0xff]
    %v198 = vld [vmem:[#allocation6 + $0x140] sm:$0xff]
    %v199 = vld [vmem:[#allocation6 + $0x148] sm:$0xff]
    %v200 = vld [vmem:[#allocation6 + $0x150] sm:$0xff]
    %v201 = vld [vmem:[#allocation6 + $0x158] sm:$0xff]
    %v202 = vld [vmem:[#allocation6 + $0x160] sm:$0xff]
    %v203 = vld [vmem:[#allocation6 + $0x168] sm:$0xff]
    %v204 = vld [vmem:[#allocation6 + $0x170] sm:$0xff]
    %v205 = vld [vmem:[#allocation6 + $0x178] sm:$0xff]
    %v206 = vld [vmem:[#allocation6 + $0x180] sm:$0xff]
    %v207 = vld [vmem:[#allocation6 + $0x188] sm:$0xff]
    %v208 = vld [vmem:[#allocation6 + $0x190] sm:$0xff]
    %v209 = vld [vmem:[#allocation6 + $0x198] sm:$0xff]
    %v210 = vld [vmem:[#allocation6 + $0x1a0] sm:$0xff]
    %v211 = vld [vmem:[#allocation6 + $0x1a8] sm:$0xff]
    %v212 = vld [vmem:[#allocation6 + $0x1b0] sm:$0xff]
    %v213 = vld [vmem:[#allocation6 + $0x1b8] sm:$0xff]
    %v214 = vld [vmem:[#allocation6 + $0x1c0] sm:$0xff]
    %v215 = vld [vmem:[#allocation6 + $0x1c8] sm:$0xff]
    %v216 = vld [vmem:[#allocation6 + $0x1d0] sm:$0xff]
    %v217 = vld [vmem:[#allocation6 + $0x1d8] sm:$0xff]
    %v218 = vld [vmem:[#allocation6 + $0x1e0] sm:$0xff]
    %v219 = vld [vmem:[#allocation6 + $0x1e8] sm:$0xff]
    %v220 = vld [vmem:[#allocation6 + $0x1f0] sm:$0xff]
    %v221 = vld [vmem:[#allocation6 + $0x1f8] sm:$0xff]
    %v222 = vld [vmem:[#allocation6 + $0x200] sm:$0xff]
    %v223 = vld [vmem:[#allocation6 + $0x208] sm:$0xff]
    %v224 = vld [vmem:[#allocation6 + $0x210] sm:$0xff]
    %v225 = vld [vmem:[#allocation6 + $0x218] sm:$0xff]
    %v226 = vld [vmem:[#allocation6 + $0x220] sm:$0xff]
    %v227 = vld [vmem:[#allocation6 + $0x228] sm:$0xff]
    %v228 = vld [vmem:[#allocation6 + $0x230] sm:$0xff]
    %v229 = vld [vmem:[#allocation6 + $0x238] sm:$0xff]
    %v230 = vld [vmem:[#allocation6 + $0x240] sm:$0xff]
    %v231 = vld [vmem:[#allocation6 + $0x248] sm:$0xff]
    %v232 = vld [vmem:[#allocation6 + $0x250] sm:$0xff]
    %v233 = vld [vmem:[#allocation6 + $0x258] sm:$0xff]
    %v234 = vld [vmem:[#allocation6 + $0x260] sm:$0xff]
    %v235 = vld [vmem:[#allocation6 + $0x268] sm:$0xff]
    %v236 = vld [vmem:[#allocation6 + $0x270] sm:$0xff]
    %v237 = vld [vmem:[#allocation6 + $0x278] sm:$0xff]
    %v238 = vld [vmem:[#allocation6 + $0x280] sm:$0xff]
    %v239 = vld [vmem:[#allocation6 + $0x288] sm:$0xff]
    %v240 = vld [vmem:[#allocation6 + $0x290] sm:$0xff]
    %v241 = vld [vmem:[#allocation6 + $0x298] sm:$0xff]
    %v242 = vld [vmem:[#allocation6 + $0x2a0] sm:$0xff]
    %v243 = vld [vmem:[#allocation6 + $0x2a8] sm:$0xff]
    %v244 = vld [vmem:[#allocation6 + $0x2b0] sm:$0xff]
    %v245 = vld [vmem:[#allocation6 + $0x2b8] sm:$0xff]
    %v246 = vld [vmem:[#allocation6 + $0x2c0] sm:$0xff]
    %v247 = vld [vmem:[#allocation6 + $0x2c8] sm:$0xff]
    %v248 = vld [vmem:[#allocation6 + $0x2d0] sm:$0xff]
    %v249 = vld [vmem:[#allocation6 + $0x2d8] sm:$0xff]
    %v250 = vld [vmem:[#allocation6 + $0x2e0] sm:$0xff]
    %v251 = vld [vmem:[#allocation6 + $0x2e8] sm:$0xff]
    %v252 = vld [vmem:[#allocation6 + $0x2f0] sm:$0xff]
    %v253 = vld [vmem:[#allocation6 + $0x2f8] sm:$0xff]
    %v254 = vld [vmem:[#allocation6 + $0x300] sm:$0xff]
    %v255 = vld [vmem:[#allocation6 + $0x308] sm:$0xff]
    %v256 = vld [vmem:[#allocation6 + $0x310] sm:$0xff]
    %v257 = vld [vmem:[#allocation6 + $0x318] sm:$0xff]
    %v258 = vld [vmem:[#allocation6 + $0x320] sm:$0xff]
    %v259 = vld [vmem:[#allocation6 + $0x328] sm:$0xff]
    %v260 = vld [vmem:[#allocation6 + $0x330] sm:$0xff]
    %v261 = vld [vmem:[#allocation6 + $0x338] sm:$0xff]
    %v262 = vld [vmem:[#allocation6 + $0x340] sm:$0xff]
    %v263 = vld [vmem:[#allocation6 + $0x348] sm:$0xff]
    %v264 = vld [vmem:[#allocation6 + $0x350] sm:$0xff]
    %v265 = vld [vmem:[#allocation6 + $0x358] sm:$0xff]
    %v266 = vld [vmem:[#allocation6 + $0x360] sm:$0xff]
    %v267 = vld [vmem:[#allocation6 + $0x368] sm:$0xff]
    %v268 = vld [vmem:[#allocation6 + $0x370] sm:$0xff]
    %v269 = vld [vmem:[#allocation6 + $0x378] sm:$0xff]
    %v270 = vld [vmem:[#allocation6 + $0x380] sm:$0xff]
    %v271 = vld [vmem:[#allocation6 + $0x388] sm:$0xff]
    %v272 = vld [vmem:[#allocation6 + $0x390] sm:$0xff]
    %v273 = vld [vmem:[#allocation6 + $0x398] sm:$0xff]
    %v274 = vld [vmem:[#allocation6 + $0x3a0] sm:$0xff]
    %v275 = vld [vmem:[#allocation6 + $0x3a8] sm:$0xff]
    %v276 = vld [vmem:[#allocation6 + $0x3b0] sm:$0xff]
    %v277 = vld [vmem:[#allocation6 + $0x3b8] sm:$0xff]
    %v278 = vld [vmem:[#allocation6 + $0x3c0] sm:$0xff]
    %v279 = vld [vmem:[#allocation6 + $0x3c8] sm:$0xff]
    %v280 = vld [vmem:[#allocation6 + $0x3d0] sm:$0xff]
    %v281 = vld [vmem:[#allocation6 + $0x3d8] sm:$0xff]
    %v282 = vld [vmem:[#allocation6 + $0x3e0] sm:$0xff]
    %v283 = vld [vmem:[#allocation6 + $0x3e8] sm:$0xff]
    %v284 = vld [vmem:[#allocation6 + $0x3f0] sm:$0xff]
    %v285 = vld [vmem:[#allocation6 + $0x3f8] sm:$0xff]
    %v286 = vld [vmem:[#allocation6 + $0x400] sm:$0xff]
    %v287 = vld [vmem:[#allocation6 + $0x408] sm:$0xff]
    %v288 = vld [vmem:[#allocation6 + $0x410] sm:$0xff]
    %v289 = vld [vmem:[#allocation6 + $0x418] sm:$0xff]
    %v290 = vld [vmem:[#allocation6 + $0x420] sm:$0xff]
    %v291 = vld [vmem:[#allocation6 + $0x428] sm:$0xff]
    %v292 = vld [vmem:[#allocation6 + $0x430] sm:$0xff]
    %v293 = vld [vmem:[#allocation6 + $0x438] sm:$0xff]
    %v294 = vld [vmem:[#allocation6 + $0x440] sm:$0xff]
    %v295 = vld [vmem:[#allocation6 + $0x448] sm:$0xff]
    %v296 = vld [vmem:[#allocation6 + $0x450] sm:$0xff]
    %v297 = vld [vmem:[#allocation6 + $0x458] sm:$0xff]
    %v298 = vld [vmem:[#allocation6 + $0x460] sm:$0xff]
    %v299 = vld [vmem:[#allocation6 + $0x468] sm:$0xff]
    %v300 = vld [vmem:[#allocation6 + $0x470] sm:$0xff]
    %v301 = vld [vmem:[#allocation6 + $0x478] sm:$0xff]
    %v302 = vld [vmem:[#allocation6 + $0x480] sm:$0xff]
    %v303 = vld [vmem:[#allocation6 + $0x488] sm:$0xff]
    %v304 = vld [vmem:[#allocation6 + $0x490] sm:$0xff]
    %v305 = vld [vmem:[#allocation6 + $0x498] sm:$0xff]
    %v306 = vld [vmem:[#allocation6 + $0x4a0] sm:$0xff]
    %v307 = vld [vmem:[#allocation6 + $0x4a8] sm:$0xff]
    %v308 = vld [vmem:[#allocation6 + $0x4b0] sm:$0xff]
    %v309 = vld [vmem:[#allocation6 + $0x4b8] sm:$0xff]
    %v310 = vld [vmem:[#allocation6 + $0x4c0] sm:$0xff]
    %v311 = vld [vmem:[#allocation6 + $0x4c8] sm:$0xff]
    %v312 = vld [vmem:[#allocation6 + $0x4d0] sm:$0xff]
    %v313 = vld [vmem:[#allocation6 + $0x4d8] sm:$0xff]
    %v314 = vld [vmem:[#allocation6 + $0x4e0] sm:$0xff]
    %v315 = vld [vmem:[#allocation6 + $0x4e8] sm:$0xff]
    %v316 = vld [vmem:[#allocation6 + $0x4f0] sm:$0xff]
    %v317 = vld [vmem:[#allocation6 + $0x4f8] sm:$0xff]
    %v318 = vld [vmem:[#allocation6 + $0x500] sm:$0xff]
    %v319 = vld [vmem:[#allocation6 + $0x508] sm:$0xff]
    %v320 = vld [vmem:[#allocation6 + $0x510] sm:$0xff]
    %v321 = vld [vmem:[#allocation6 + $0x518] sm:$0xff]
    %v322 = vld [vmem:[#allocation6 + $0x520] sm:$0xff]
    %v323 = vld [vmem:[#allocation6 + $0x528] sm:$0xff]
    %v324 = vld [vmem:[#allocation6 + $0x530] sm:$0xff]
    %v325 = vld [vmem:[#allocation6 + $0x538] sm:$0xff]
    %v326 = vld [vmem:[#allocation6 + $0x540] sm:$0xff]
    %v327 = vld [vmem:[#allocation6 + $0x548] sm:$0xff]
    %v328 = vld [vmem:[#allocation6 + $0x550] sm:$0xff]
    %v329 = vld [vmem:[#allocation6 + $0x558] sm:$0xff]
    %v330 = vld [vmem:[#allocation6 + $0x560] sm:$0xff]
    %v331 = vld [vmem:[#allocation6 + $0x568] sm:$0xff]
    %v332 = vld [vmem:[#allocation6 + $0x570] sm:$0xff]
    %v333 = vld [vmem:[#allocation6 + $0x578] sm:$0xff]
    %v334 = vld [vmem:[#allocation6 + $0x580] sm:$0xff]
    %v335 = vld [vmem:[#allocation6 + $0x588] sm:$0xff]
    %v336 = vld [vmem:[#allocation6 + $0x590] sm:$0xff]
    %v337 = vld [vmem:[#allocation6 + $0x598] sm:$0xff]
    %v338 = vld [vmem:[#allocation6 + $0x5a0] sm:$0xff]
    %v339 = vld [vmem:[#allocation6 + $0x5a8] sm:$0xff]
    %v340 = vld [vmem:[#allocation6 + $0x5b0] sm:$0xff]
    %v341 = vld [vmem:[#allocation6 + $0x5b8] sm:$0xff]
    %v342 = vld [vmem:[#allocation6 + $0x5c0] sm:$0xff]
    %v343 = vld [vmem:[#allocation6 + $0x5c8] sm:$0xff]
    %v344 = vld [vmem:[#allocation6 + $0x5d0] sm:$0xff]
    %v345 = vld [vmem:[#allocation6 + $0x5d8] sm:$0xff]
    %v346 = vld [vmem:[#allocation6 + $0x5e0] sm:$0xff]
    %v347 = vld [vmem:[#allocation6 + $0x5e8] sm:$0xff]
    %v348 = vld [vmem:[#allocation6 + $0x5f0] sm:$0xff]
    %v349 = vld [vmem:[#allocation6 + $0x5f8] sm:$0xff]
    %v350 = vld [vmem:[#allocation6 + $0x600] sm:$0xff]
    %v351 = vld [vmem:[#allocation6 + $0x608] sm:$0xff]
    %v352 = vld [vmem:[#allocation6 + $0x610] sm:$0xff]
    %v353 = vld [vmem:[#allocation6 + $0x618] sm:$0xff]
    %v354 = vld [vmem:[#allocation6 + $0x620] sm:$0xff]
    %v355 = vld [vmem:[#allocation6 + $0x628] sm:$0xff]
    %v356 = vld [vmem:[#allocation6 + $0x630] sm:$0xff]
    %v357 = vld [vmem:[#allocation6 + $0x638] sm:$0xff]
    %v358 = vld [vmem:[#allocation6 + $0x640] sm:$0xff]
    %v359 = vld [vmem:[#allocation6 + $0x648] sm:$0xff]
    %v360 = vld [vmem:[#allocation6 + $0x650] sm:$0xff]
    %v361 = vld [vmem:[#allocation6 + $0x658] sm:$0xff]
    %v362 = vld [vmem:[#allocation6 + $0x660] sm:$0xff]
    %v363 = vld [vmem:[#allocation6 + $0x668] sm:$0xff]
    %v364 = vld [vmem:[#allocation6 + $0x670] sm:$0xff]
    %v365 = vld [vmem:[#allocation6 + $0x678] sm:$0xff]
    %v366 = vld [vmem:[#allocation6 + $0x680] sm:$0xff]
    %v367 = vld [vmem:[#allocation6 + $0x688] sm:$0xff]
    %v368 = vld [vmem:[#allocation6 + $0x690] sm:$0xff]
    %v369 = vld [vmem:[#allocation6 + $0x698] sm:$0xff]
    %v370 = vld [vmem:[#allocation6 + $0x6a0] sm:$0xff]
    %v371 = vld [vmem:[#allocation6 + $0x6a8] sm:$0xff]
    %v372 = vld [vmem:[#allocation6 + $0x6b0] sm:$0xff]
    %v373 = vld [vmem:[#allocation6 + $0x6b8] sm:$0xff]
    %v374 = vld [vmem:[#allocation6 + $0x6c0] sm:$0xff]
    %v375 = vld [vmem:[#allocation6 + $0x6c8] sm:$0xff]
    %v376 = vld [vmem:[#allocation6 + $0x6d0] sm:$0xff]
    %v377 = vld [vmem:[#allocation6 + $0x6d8] sm:$0xff]
    %v378 = vld [vmem:[#allocation6 + $0x6e0] sm:$0xff]
    %v379 = vld [vmem:[#allocation6 + $0x6e8] sm:$0xff]
    %v380 = vld [vmem:[#allocation6 + $0x6f0] sm:$0xff]
    %v381 = vld [vmem:[#allocation6 + $0x6f8] sm:$0xff]
    %v382 = vld [vmem:[#allocation6 + $0x700] sm:$0xff]
    %v383 = vld [vmem:[#allocation6 + $0x708] sm:$0xff]
    %v384 = vld [vmem:[#allocation6 + $0x710] sm:$0xff]
    %v385 = vld [vmem:[#allocation6 + $0x718] sm:$0xff]
    %v386 = vld [vmem:[#allocation6 + $0x720] sm:$0xff]
    %v387 = vld [vmem:[#allocation6 + $0x728] sm:$0xff]
    %v388 = vld [vmem:[#allocation6 + $0x730] sm:$0xff]
    %v389 = vld [vmem:[#allocation6 + $0x738] sm:$0xff]
    %v390 = vld [vmem:[#allocation6 + $0x740] sm:$0xff]
    %v391 = vld [vmem:[#allocation6 + $0x748] sm:$0xff]
    %v392 = vld [vmem:[#allocation6 + $0x750] sm:$0xff]
    %v393 = vld [vmem:[#allocation6 + $0x758] sm:$0xff]
    %v394 = vld [vmem:[#allocation6 + $0x760] sm:$0xff]
    %v395 = vld [vmem:[#allocation6 + $0x768] sm:$0xff]
    %v396 = vld [vmem:[#allocation6 + $0x770] sm:$0xff]
    %v397 = vld [vmem:[#allocation6 + $0x778] sm:$0xff]
    %v398 = vld [vmem:[#allocation6 + $0x780] sm:$0xff]
    %v399 = vld [vmem:[#allocation6 + $0x788] sm:$0xff]
    %v400 = vld [vmem:[#allocation6 + $0x790] sm:$0xff]
    %v401 = vld [vmem:[#allocation6 + $0x798] sm:$0xff]
    %v402 = vld [vmem:[#allocation6 + $0x7a0] sm:$0xff]
    %v403 = vld [vmem:[#allocation6 + $0x7a8] sm:$0xff]
    %v404 = vld [vmem:[#allocation6 + $0x7b0] sm:$0xff]
    %v405 = vld [vmem:[#allocation6 + $0x7b8] sm:$0xff]
    %v406 = vld [vmem:[#allocation6 + $0x7c0] sm:$0xff]
    %v407 = vld [vmem:[#allocation6 + $0x7c8] sm:$0xff]
    %v408 = vld [vmem:[#allocation6 + $0x7d0] sm:$0xff]
    %v409 = vld [vmem:[#allocation6 + $0x7d8] sm:$0xff]
    %v410 = vld [vmem:[#allocation6 + $0x7e0] sm:$0xff]
    %v411 = vld [vmem:[#allocation6 + $0x7e8] sm:$0xff]
    %v412 = vld [vmem:[#allocation6 + $0x7f0] sm:$0xff]
    %v413 = vld [vmem:[#allocation6 + $0x7f8] sm:$0xff]
    %v414 = vld [vmem:[#allocation6 + $0x800] sm:$0xff]
    %v415 = vld [vmem:[#allocation6 + $0x808] sm:$0xff]
    %v416 = vld [vmem:[#allocation6 + $0x810] sm:$0xff]
    %v417 = vld [vmem:[#allocation6 + $0x818] sm:$0xff]
    %v418 = vld [vmem:[#allocation6 + $0x820] sm:$0xff]
    %v419 = vld [vmem:[#allocation6 + $0x828] sm:$0xff]
    %v420 = vld [vmem:[#allocation6 + $0x830] sm:$0xff]
    %v421 = vld [vmem:[#allocation6 + $0x838] sm:$0xff]
    %v422 = vld [vmem:[#allocation6 + $0x840] sm:$0xff]
    %v423 = vld [vmem:[#allocation6 + $0x848] sm:$0xff]
    %v424 = vld [vmem:[#allocation6 + $0x850] sm:$0xff]
    %v425 = vld [vmem:[#allocation6 + $0x858] sm:$0xff]
    %v426 = vld [vmem:[#allocation6 + $0x860] sm:$0xff]
    %v427 = vld [vmem:[#allocation6 + $0x868] sm:$0xff]
    %v428 = vld [vmem:[#allocation6 + $0x870] sm:$0xff]
    %v429 = vld [vmem:[#allocation6 + $0x878] sm:$0xff]
    %v430 = vld [vmem:[#allocation6 + $0x880] sm:$0xff]
    %v431 = vld [vmem:[#allocation6 + $0x888] sm:$0xff]
    %v432 = vld [vmem:[#allocation6 + $0x890] sm:$0xff]
    %v433 = vld [vmem:[#allocation6 + $0x898] sm:$0xff]
    %v434 = vld [vmem:[#allocation6 + $0x8a0] sm:$0xff]
    %v435 = vld [vmem:[#allocation6 + $0x8a8] sm:$0xff]
    %v436 = vld [vmem:[#allocation6 + $0x8b0] sm:$0xff]
    %v437 = vld [vmem:[#allocation6 + $0x8b8] sm:$0xff]
    %v438 = vld [vmem:[#allocation6 + $0x8c0] sm:$0xff]
    %v439 = vld [vmem:[#allocation6 + $0x8c8] sm:$0xff]
    %v440 = vld [vmem:[#allocation6 + $0x8d0] sm:$0xff]
    %v441 = vld [vmem:[#allocation6 + $0x8d8] sm:$0xff]
    %v442 = vld [vmem:[#allocation6 + $0x8e0] sm:$0xff]
    %v443 = vld [vmem:[#allocation6 + $0x8e8] sm:$0xff]
    %v444 = vld [vmem:[#allocation6 + $0x8f0] sm:$0xff]
    %v445 = vld [vmem:[#allocation6 + $0x8f8] sm:$0xff]
    %v446 = vld [vmem:[#allocation6 + $0x900] sm:$0xff]
    %v447 = vld [vmem:[#allocation6 + $0x908] sm:$0xff]
    %v448 = vld [vmem:[#allocation6 + $0x910] sm:$0xff]
    %v449 = vld [vmem:[#allocation6 + $0x918] sm:$0xff]
    %v450 = vld [vmem:[#allocation6 + $0x920] sm:$0xff]
    %v451 = vld [vmem:[#allocation6 + $0x928] sm:$0xff]
    %v452 = vld [vmem:[#allocation6 + $0x930] sm:$0xff]
    %v453 = vld [vmem:[#allocation6 + $0x938] sm:$0xff]
    %v454 = vld [vmem:[#allocation6 + $0x940] sm:$0xff]
    %v455 = vld [vmem:[#allocation6 + $0x948] sm:$0xff]
    %v456 = vld [vmem:[#allocation6 + $0x950] sm:$0xff]
    %v457 = vld [vmem:[#allocation6 + $0x958] sm:$0xff]
    %v458 = vld [vmem:[#allocation6 + $0x960] sm:$0xff]
    %v459 = vld [vmem:[#allocation6 + $0x968] sm:$0xff]
    %v460 = vld [vmem:[#allocation6 + $0x970] sm:$0xff]
    %v461 = vld [vmem:[#allocation6 + $0x978] sm:$0xff]
    %v462 = vld [vmem:[#allocation6 + $0x980] sm:$0xff]
    %v463 = vld [vmem:[#allocation6 + $0x988] sm:$0xff]
    %v464 = vld [vmem:[#allocation6 + $0x990] sm:$0xff]
    %v465 = vld [vmem:[#allocation6 + $0x998] sm:$0xff]
    %v466 = vld [vmem:[#allocation6 + $0x9a0] sm:$0xff]
    %v467 = vld [vmem:[#allocation6 + $0x9a8] sm:$0xff]
    %v468 = vld [vmem:[#allocation6 + $0x9b0] sm:$0xff]
    %v469 = vld [vmem:[#allocation6 + $0x9b8] sm:$0xff]
    %v470 = vld [vmem:[#allocation6 + $0x9c0] sm:$0xff]
    %v471 = vld [vmem:[#allocation6 + $0x9c8] sm:$0xff]
    %v472 = vld [vmem:[#allocation6 + $0x9d0] sm:$0xff]
    %v473 = vld [vmem:[#allocation6 + $0x9d8] sm:$0xff]
    %v474 = vld [vmem:[#allocation6 + $0x9e0] sm:$0xff]
    %v475 = vld [vmem:[#allocation6 + $0x9e8] sm:$0xff]
    %v476 = vld [vmem:[#allocation6 + $0x9f0] sm:$0xff]
    %v477 = vld [vmem:[#allocation6 + $0x9f8] sm:$0xff]
    %v478 = vld [vmem:[#allocation6 + $0xa00] sm:$0xff]
    %v479 = vld [vmem:[#allocation6 + $0xa08] sm:$0xff]
    %v480 = vld [vmem:[#allocation6 + $0xa10] sm:$0xff]
    %v481 = vld [vmem:[#allocation6 + $0xa18] sm:$0xff]
    %v482 = vld [vmem:[#allocation6 + $0xa20] sm:$0xff]
    %v483 = vld [vmem:[#allocation6 + $0xa28] sm:$0xff]
    %v484 = vld [vmem:[#allocation6 + $0xa30] sm:$0xff]
    %v485 = vld [vmem:[#allocation6 + $0xa38] sm:$0xff]
    %v486 = vld [vmem:[#allocation6 + $0xa40] sm:$0xff]
    %v487 = vld [vmem:[#allocation6 + $0xa48] sm:$0xff]
    %v488 = vld [vmem:[#allocation6 + $0xa50] sm:$0xff]
    %v489 = vld [vmem:[#allocation6 + $0xa58] sm:$0xff]
    %v490 = vld [vmem:[#allocation6 + $0xa60] sm:$0xff]
    %v491 = vld [vmem:[#allocation6 + $0xa68] sm:$0xff]
    %v492 = vld [vmem:[#allocation6 + $0xa70] sm:$0xff]
    %v493 = vld [vmem:[#allocation6 + $0xa78] sm:$0xff]
    %v494 = vld [vmem:[#allocation6 + $0xa80] sm:$0xff]
    %v495 = vld [vmem:[#allocation6 + $0xa88] sm:$0xff]
    %v496 = vld [vmem:[#allocation6 + $0xa90] sm:$0xff]
    %v497 = vld [vmem:[#allocation6 + $0xa98] sm:$0xff]
    %v498 = vld [vmem:[#allocation6 + $0xaa0] sm:$0xff]
    %v499 = vld [vmem:[#allocation6 + $0xaa8] sm:$0xff]
    %v500 = vld [vmem:[#allocation6 + $0xab0] sm:$0xff]
    %v501 = vld [vmem:[#allocation6 + $0xab8] sm:$0xff]
    %v502 = vld [vmem:[#allocation6 + $0xac0] sm:$0xff]
    %v503 = vld [vmem:[#allocation6 + $0xac8] sm:$0xff]
    %v504 = vld [vmem:[#allocation6 + $0xad0] sm:$0xff]
    %v505 = vld [vmem:[#allocation6 + $0xad8] sm:$0xff]
    %v506 = vld [vmem:[#allocation6 + $0xae0] sm:$0xff]
    %v507 = vld [vmem:[#allocation6 + $0xae8] sm:$0xff]
    %v508 = vld [vmem:[#allocation6 + $0xaf0] sm:$0xff]
    %v509 = vld [vmem:[#allocation6 + $0xaf8] sm:$0xff]
    %v510 = vld [vmem:[#allocation6 + $0xb00] sm:$0xff]
    %v511 = vld [vmem:[#allocation6 + $0xb08] sm:$0xff]
    %v512 = vld [vmem:[#allocation6 + $0xb10] sm:$0xff]
    %v513 = vld [vmem:[#allocation6 + $0xb18] sm:$0xff]
    %v514 = vld [vmem:[#allocation6 + $0xb20] sm:$0xff]
    %v515 = vld [vmem:[#allocation6 + $0xb28] sm:$0xff]
    %v516 = vld [vmem:[#allocation6 + $0xb30] sm:$0xff]
    %v517 = vld [vmem:[#allocation6 + $0xb38] sm:$0xff]
    %v518 = vld [vmem:[#allocation6 + $0xb40] sm:$0xff]
    %v519 = vld [vmem:[#allocation6 + $0xb48] sm:$0xff]
    %v520 = vld [vmem:[#allocation6 + $0xb50] sm:$0xff]
    %v521 = vld [vmem:[#allocation6 + $0xb58] sm:$0xff]
    %v522 = vld [vmem:[#allocation6 + $0xb60] sm:$0xff]
    %v523 = vld [vmem:[#allocation6 + $0xb68] sm:$0xff]
    %v524 = vld [vmem:[#allocation6 + $0xb70] sm:$0xff]
    %v525 = vld [vmem:[#allocation6 + $0xb78] sm:$0xff]
    %v526 = vld [vmem:[#allocation6 + $0xb80] sm:$0xff]
    %v527 = vld [vmem:[#allocation6 + $0xb88] sm:$0xff]
    %v528 = vld [vmem:[#allocation6 + $0xb90] sm:$0xff]
    %v529 = vld [vmem:[#allocation6 + $0xb98] sm:$0xff]
    %v530 = vld [vmem:[#allocation6 + $0xba0] sm:$0xff]
    %v531 = vld [vmem:[#allocation6 + $0xba8] sm:$0xff]
    %v532 = vld [vmem:[#allocation6 + $0xbb0] sm:$0xff]
    %v533 = vld [vmem:[#allocation6 + $0xbb8] sm:$0xff]
    %v534 = vld [vmem:[#allocation6 + $0xbc0] sm:$0xff]
    %v535 = vld [vmem:[#allocation6 + $0xbc8] sm:$0xff]
    %v536 = vld [vmem:[#allocation6 + $0xbd0] sm:$0xff]
    %v537 = vld [vmem:[#allocation6 + $0xbd8] sm:$0xff]
    %v538 = vld [vmem:[#allocation6 + $0xbe0] sm:$0xff]
    %v539 = vld [vmem:[#allocation6 + $0xbe8] sm:$0xff]
    %v540 = vld [vmem:[#allocation6 + $0xbf0] sm:$0xff]
    %v541 = vld [vmem:[#allocation6 + $0xbf8] sm:$0xff]
    %v542 = vld [vmem:[#allocation6 + $0xc00] sm:$0xff]
    %v543 = vld [vmem:[#allocation6 + $0xc08] sm:$0xff]
    %v544 = vld [vmem:[#allocation6 + $0xc10] sm:$0xff]
    %v545 = vld [vmem:[#allocation6 + $0xc18] sm:$0xff]
    %v546 = vld [vmem:[#allocation6 + $0xc20] sm:$0xff]
    %v547 = vld [vmem:[#allocation6 + $0xc28] sm:$0xff]
    %v548 = vld [vmem:[#allocation6 + $0xc30] sm:$0xff]
    %v549 = vld [vmem:[#allocation6 + $0xc38] sm:$0xff]
    %v550 = vld [vmem:[#allocation6 + $0xc40] sm:$0xff]
    %v551 = vld [vmem:[#allocation6 + $0xc48] sm:$0xff]
    %v552 = vld [vmem:[#allocation6 + $0xc50] sm:$0xff]
    %v553 = vld [vmem:[#allocation6 + $0xc58] sm:$0xff]
    %v554 = vld [vmem:[#allocation6 + $0xc60] sm:$0xff]
    %v555 = vld [vmem:[#allocation6 + $0xc68] sm:$0xff]
    %v556 = vld [vmem:[#allocation6 + $0xc70] sm:$0xff]
    %v557 = vld [vmem:[#allocation6 + $0xc78] sm:$0xff]
    %v558 = vld [vmem:[#allocation6 + $0xc80] sm:$0xff]
    %v559 = vld [vmem:[#allocation6 + $0xc88] sm:$0xff]
    %v560 = vld [vmem:[#allocation6 + $0xc90] sm:$0xff]
    %v561 = vld [vmem:[#allocation6 + $0xc98] sm:$0xff]
    %v562 = vld [vmem:[#allocation6 + $0xca0] sm:$0xff]
    %v563 = vld [vmem:[#allocation6 + $0xca8] sm:$0xff]
    %v564 = vld [vmem:[#allocation6 + $0xcb0] sm:$0xff]
    %v565 = vld [vmem:[#allocation6 + $0xcb8] sm:$0xff]
    %v566 = vld [vmem:[#allocation6 + $0xcc0] sm:$0xff]
    %v567 = vld [vmem:[#allocation6 + $0xcc8] sm:$0xff]
    %v568 = vld [vmem:[#allocation6 + $0xcd0] sm:$0xff]
    %v569 = vld [vmem:[#allocation6 + $0xcd8] sm:$0xff]
    %v570 = vld [vmem:[#allocation6 + $0xce0] sm:$0xff]
    %v571 = vld [vmem:[#allocation6 + $0xce8] sm:$0xff]
    %v572 = vld [vmem:[#allocation6 + $0xcf0] sm:$0xff]
    %v573 = vld [vmem:[#allocation6 + $0xcf8] sm:$0xff]
    %v574 = vld [vmem:[#allocation6 + $0xd00] sm:$0xff]
    %v575 = vld [vmem:[#allocation6 + $0xd08] sm:$0xff]
    %v576 = vld [vmem:[#allocation6 + $0xd10] sm:$0xff]
    %v577 = vld [vmem:[#allocation6 + $0xd18] sm:$0xff]
    %v578 = vld [vmem:[#allocation6 + $0xd20] sm:$0xff]
    %v579 = vld [vmem:[#allocation6 + $0xd28] sm:$0xff]
    %v580 = vld [vmem:[#allocation6 + $0xd30] sm:$0xff]
    %v581 = vld [vmem:[#allocation6 + $0xd38] sm:$0xff]
    %v582 = vld [vmem:[#allocation6 + $0xd40] sm:$0xff]
    %v583 = vld [vmem:[#allocation6 + $0xd48] sm:$0xff]
    %v584 = vld [vmem:[#allocation6 + $0xd50] sm:$0xff]
    %v585 = vld [vmem:[#allocation6 + $0xd58] sm:$0xff]
    %v586 = vld [vmem:[#allocation6 + $0xd60] sm:$0xff]
    %v587 = vld [vmem:[#allocation6 + $0xd68] sm:$0xff]
    %v588 = vld [vmem:[#allocation6 + $0xd70] sm:$0xff]
    %v589 = vld [vmem:[#allocation6 + $0xd78] sm:$0xff]
    %v590 = vld [vmem:[#allocation6 + $0xd80] sm:$0xff]
    %v591 = vld [vmem:[#allocation6 + $0xd88] sm:$0xff]
    %v592 = vld [vmem:[#allocation6 + $0xd90] sm:$0xff]
    %v593 = vld [vmem:[#allocation6 + $0xd98] sm:$0xff]
    %v594 = vld [vmem:[#allocation6 + $0xda0] sm:$0xff]
    %v595 = vld [vmem:[#allocation6 + $0xda8] sm:$0xff]
    %v596 = vld [vmem:[#allocation6 + $0xdb0] sm:$0xff]
    %v597 = vld [vmem:[#allocation6 + $0xdb8] sm:$0xff]
    %v598 = vld [vmem:[#allocation6 + $0xdc0] sm:$0xff]
    %v599 = vld [vmem:[#allocation6 + $0xdc8] sm:$0xff]
    %v600 = vld [vmem:[#allocation6 + $0xdd0] sm:$0xff]
    %v601 = vld [vmem:[#allocation6 + $0xdd8] sm:$0xff]
    %v602 = vld [vmem:[#allocation6 + $0xde0] sm:$0xff]
    %v603 = vld [vmem:[#allocation6 + $0xde8] sm:$0xff]
    %v604 = vld [vmem:[#allocation6 + $0xdf0] sm:$0xff]
    %v605 = vld [vmem:[#allocation6 + $0xdf8] sm:$0xff]
    %v606 = vld [vmem:[#allocation6 + $0xe00] sm:$0xff]
    %v607 = vld [vmem:[#allocation6 + $0xe08] sm:$0xff]
    %v608 = vld [vmem:[#allocation6 + $0xe10] sm:$0xff]
    %v609 = vld [vmem:[#allocation6 + $0xe18] sm:$0xff]
    %v610 = vld [vmem:[#allocation6 + $0xe20] sm:$0xff]
    %v611 = vld [vmem:[#allocation6 + $0xe28] sm:$0xff]
    %v612 = vld [vmem:[#allocation6 + $0xe30] sm:$0xff]
    %v613 = vld [vmem:[#allocation6 + $0xe38] sm:$0xff]
    %v614 = vld [vmem:[#allocation6 + $0xe40] sm:$0xff]
    %v615 = vld [vmem:[#allocation6 + $0xe48] sm:$0xff]
    %v616 = vld [vmem:[#allocation6 + $0xe50] sm:$0xff]
    %v617 = vld [vmem:[#allocation6 + $0xe58] sm:$0xff]
    %v618 = vld [vmem:[#allocation6 + $0xe60] sm:$0xff]
    %v619 = vld [vmem:[#allocation6 + $0xe68] sm:$0xff]
    %v620 = vld [vmem:[#allocation6 + $0xe70] sm:$0xff]
    %v621 = vld [vmem:[#allocation6 + $0xe78] sm:$0xff]
    %v622 = vld [vmem:[#allocation6 + $0xe80] sm:$0xff]
    %v623 = vld [vmem:[#allocation6 + $0xe88] sm:$0xff]
    %v624 = vld [vmem:[#allocation6 + $0xe90] sm:$0xff]
    %v625 = vld [vmem:[#allocation6 + $0xe98] sm:$0xff]
    %v626 = vld [vmem:[#allocation6 + $0xea0] sm:$0xff]
    %v627 = vld [vmem:[#allocation6 + $0xea8] sm:$0xff]
    %v628 = vld [vmem:[#allocation6 + $0xeb0] sm:$0xff]
    %v629 = vld [vmem:[#allocation6 + $0xeb8] sm:$0xff]
    %v630 = vld [vmem:[#allocation6 + $0xec0] sm:$0xff]
    %v631 = vld [vmem:[#allocation6 + $0xec8] sm:$0xff]
    %v632 = vld [vmem:[#allocation6 + $0xed0] sm:$0xff]
    %v633 = vld [vmem:[#allocation6 + $0xed8] sm:$0xff]
    %v634 = vld [vmem:[#allocation6 + $0xee0] sm:$0xff]
    %v635 = vld [vmem:[#allocation6 + $0xee8] sm:$0xff]
    %v636 = vld [vmem:[#allocation6 + $0xef0] sm:$0xff]
    %v637 = vld [vmem:[#allocation6 + $0xef8] sm:$0xff]
    %v638 = vld [vmem:[#allocation6 + $0xf00] sm:$0xff]
    %v639 = vld [vmem:[#allocation6 + $0xf08] sm:$0xff]
    %v640 = vld [vmem:[#allocation6 + $0xf10] sm:$0xff]
    %v641 = vld [vmem:[#allocation6 + $0xf18] sm:$0xff]
    %v642 = vld [vmem:[#allocation6 + $0xf20] sm:$0xff]
    %v643 = vld [vmem:[#allocation6 + $0xf28] sm:$0xff]
    %v644 = vld [vmem:[#allocation6 + $0xf30] sm:$0xff]
    %v645 = vld [vmem:[#allocation6 + $0xf38] sm:$0xff]
    %v646 = vld [vmem:[#allocation6 + $0xf40] sm:$0xff]
    %v647 = vld [vmem:[#allocation6 + $0xf48] sm:$0xff]
    %v648 = vld [vmem:[#allocation6 + $0xf50] sm:$0xff]
    %v649 = vld [vmem:[#allocation6 + $0xf58] sm:$0xff]
    %v650 = vld [vmem:[#allocation6 + $0xf60] sm:$0xff]
    %v651 = vld [vmem:[#allocation6 + $0xf68] sm:$0xff]
    %v652 = vld [vmem:[#allocation6 + $0xf70] sm:$0xff]
    %v653 = vld [vmem:[#allocation6 + $0xf78] sm:$0xff]
    %v654 = vld [vmem:[#allocation6 + $0xf80] sm:$0xff]
    %v655 = vld [vmem:[#allocation6 + $0xf88] sm:$0xff]
    %v656 = vld [vmem:[#allocation6 + $0xf90] sm:$0xff]
    %v657 = vld [vmem:[#allocation6 + $0xf98] sm:$0xff]
    %v658 = vld [vmem:[#allocation6 + $0xfa0] sm:$0xff]
    %v659 = vld [vmem:[#allocation6 + $0xfa8] sm:$0xff]
    %v660 = vld [vmem:[#allocation6 + $0xfb0] sm:$0xff]
    %v661 = vld [vmem:[#allocation6 + $0xfb8] sm:$0xff]
    %v662 = vld [vmem:[#allocation6 + $0xfc0] sm:$0xff]
    %v663 = vld [vmem:[#allocation6 + $0xfc8] sm:$0xff]
    %v664 = vld [vmem:[#allocation6 + $0xfd0] sm:$0xff]
    %v665 = vld [vmem:[#allocation6 + $0xfd8] sm:$0xff]
    %v666 = vld [vmem:[#allocation6 + $0xfe0] sm:$0xff]
    %v667 = vld [vmem:[#allocation6 + $0xfe8] sm:$0xff]
    %v668 = vld [vmem:[#allocation6 + $0xff0] sm:$0xff]
    %v669 = vld [vmem:[#allocation6 + $0xff8] sm:$0xff]
    %v670 = vld [vmem:[#allocation7] sm:$0xff]
    %v671 = vld [vmem:[#allocation7 + $0x8] sm:$0xff]
    %v672 = vld [vmem:[#allocation7 + $0x10] sm:$0xff]
    %v673 = vld [vmem:[#allocation7 + $0x18] sm:$0xff]
    %v678 = vlaneseq
    %v679 = vshrl.u32 %v678, 7
    %v680 = vsub.s32 0, %v679
    %v681 = vrot.slane %v670, %v680
    %v682 = vlaneseq
    %v683 = vshrl.u32 %v682, 7
    %v684 = vsub.s32 1, %v683
    %v685 = vrot.slane %v670, %v684
    %v686 = vlaneseq
    %v687 = vshrl.u32 %v686, 7
    %v688 = vsub.s32 2, %v687
    %v689 = vrot.slane %v670, %v688
    %v690 = vlaneseq
    %v691 = vshrl.u32 %v690, 7
    %v692 = vsub.s32 3, %v691
    %v693 = vrot.slane %v670, %v692
    %v694 = vlaneseq
    %v695 = vshrl.u32 %v694, 7
    %v696 = vsub.s32 4, %v695
    %v697 = vrot.slane %v670, %v696
    %v698 = vlaneseq
    %v699 = vshrl.u32 %v698, 7
    %v700 = vsub.s32 5, %v699
    %v701 = vrot.slane %v670, %v700
    %v702 = vlaneseq
    %v703 = vshrl.u32 %v702, 7
    %v704 = vsub.s32 6, %v703
    %v705 = vrot.slane %v670, %v704
    %v706 = vlaneseq
    %v707 = vshrl.u32 %v706, 7
    %v708 = vsub.s32 7, %v707
    %v709 = vrot.slane %v670, %v708
    %v710 = vlaneseq
    %v711 = vshrl.u32 %v710, 7
    %v712 = vsub.s32 0, %v711
    %v713 = vrot.slane %v671, %v712
    %v714 = vlaneseq
    %v715 = vshrl.u32 %v714, 7
    %v716 = vsub.s32 1, %v715
    %v717 = vrot.slane %v671, %v716
    %v718 = vlaneseq
    %v719 = vshrl.u32 %v718, 7
    %v720 = vsub.s32 2, %v719
    %v721 = vrot.slane %v671, %v720
    %v722 = vlaneseq
    %v723 = vshrl.u32 %v722, 7
    %v724 = vsub.s32 3, %v723
    %v725 = vrot.slane %v671, %v724
    %v726 = vlaneseq
    %v727 = vshrl.u32 %v726, 7
    %v728 = vsub.s32 4, %v727
    %v729 = vrot.slane %v671, %v728
    %v730 = vlaneseq
    %v731 = vshrl.u32 %v730, 7
    %v732 = vsub.s32 5, %v731
    %v733 = vrot.slane %v671, %v732
    %v734 = vlaneseq
    %v735 = vshrl.u32 %v734, 7
    %v736 = vsub.s32 6, %v735
    %v737 = vrot.slane %v671, %v736
    %v738 = vlaneseq
    %v739 = vshrl.u32 %v738, 7
    %v740 = vsub.s32 7, %v739
    %v741 = vrot.slane %v671, %v740
    %v742 = vlaneseq
    %v743 = vshrl.u32 %v742, 7
    %v744 = vsub.s32 0, %v743
    %v745 = vrot.slane %v672, %v744
    %v746 = vlaneseq
    %v747 = vshrl.u32 %v746, 7
    %v748 = vsub.s32 1, %v747
    %v749 = vrot.slane %v672, %v748
    %v750 = vlaneseq
    %v751 = vshrl.u32 %v750, 7
    %v752 = vsub.s32 2, %v751
    %v753 = vrot.slane %v672, %v752
    %v754 = vlaneseq
    %v755 = vshrl.u32 %v754, 7
    %v756 = vsub.s32 3, %v755
    %v757 = vrot.slane %v672, %v756
    %v758 = vlaneseq
    %v759 = vshrl.u32 %v758, 7
    %v760 = vsub.s32 4, %v759
    %v761 = vrot.slane %v672, %v760
    %v762 = vlaneseq
    %v763 = vshrl.u32 %v762, 7
    %v764 = vsub.s32 5, %v763
    %v765 = vrot.slane %v672, %v764
    %v766 = vlaneseq
    %v767 = vshrl.u32 %v766, 7
    %v768 = vsub.s32 6, %v767
    %v769 = vrot.slane %v672, %v768
    %v770 = vlaneseq
    %v771 = vshrl.u32 %v770, 7
    %v772 = vsub.s32 7, %v771
    %v773 = vrot.slane %v672, %v772
    %v774 = vlaneseq
    %v775 = vshrl.u32 %v774, 7
    %v776 = vsub.s32 0, %v775
    %v777 = vrot.slane %v673, %v776
    %v778 = vlaneseq
    %v779 = vshrl.u32 %v778, 7
    %v780 = vsub.s32 1, %v779
    %v781 = vrot.slane %v673, %v780
    %v782 = vlaneseq
    %v783 = vshrl.u32 %v782, 7
    %v784 = vsub.s32 2, %v783
    %v785 = vrot.slane %v673, %v784
    %v786 = vlaneseq
    %v787 = vshrl.u32 %v786, 7
    %v788 = vsub.s32 3, %v787
    %v789 = vrot.slane %v673, %v788
    %v790 = vlaneseq
    %v791 = vshrl.u32 %v790, 7
    %v792 = vsub.s32 4, %v791
    %v793 = vrot.slane %v673, %v792
    %v794 = vlaneseq
    %v795 = vshrl.u32 %v794, 7
    %v796 = vsub.s32 5, %v795
    %v797 = vrot.slane %v673, %v796
    %v798 = vlaneseq
    %v799 = vshrl.u32 %v798, 7
    %v800 = vsub.s32 6, %v799
    %v801 = vrot.slane %v673, %v800
    %v802 = vlaneseq
    %v803 = vshrl.u32 %v802, 7
    %v804 = vsub.s32 7, %v803
    %v805 = vrot.slane %v673, %v804
    %v1350 = vunpack.c.l.b16 %v158
    %v1351 = vunpack.c.h.b16 %v158
    %v1352 = vunpack.c.l.b16 %v159
    %v1353 = vunpack.c.h.b16 %v159
    %v1354 = vunpack.c.l.b16 %v160
    %v1355 = vunpack.c.h.b16 %v160
    %v1356 = vunpack.c.l.b16 %v161
    %v1357 = vunpack.c.h.b16 %v161
    %v1358 = vunpack.c.l.b16 %v162
    %v1359 = vunpack.c.h.b16 %v162
    %v1360 = vunpack.c.l.b16 %v163
    %v1361 = vunpack.c.h.b16 %v163
    %v1362 = vunpack.c.l.b16 %v164
    %v1363 = vunpack.c.h.b16 %v164
    %v1364 = vunpack.c.l.b16 %v165
    %v1365 = vunpack.c.h.b16 %v165
    %v1366 = vunpack.c.l.b16 %v166
    %v1367 = vunpack.c.h.b16 %v166
    %v1368 = vunpack.c.l.b16 %v167
    %v1369 = vunpack.c.h.b16 %v167
    %v1370 = vunpack.c.l.b16 %v168
    %v1371 = vunpack.c.h.b16 %v168
    %v1372 = vunpack.c.l.b16 %v169
    %v1373 = vunpack.c.h.b16 %v169
    %v1374 = vunpack.c.l.b16 %v170
    %v1375 = vunpack.c.h.b16 %v170
    %v1376 = vunpack.c.l.b16 %v171
    %v1377 = vunpack.c.h.b16 %v171
    %v1378 = vunpack.c.l.b16 %v172
    %v1379 = vunpack.c.h.b16 %v172
    %v1380 = vunpack.c.l.b16 %v173
    %v1381 = vunpack.c.h.b16 %v173
    %v1382 = vunpack.c.l.b16 %v174
    %v1383 = vunpack.c.h.b16 %v174
    %v1384 = vunpack.c.l.b16 %v175
    %v1385 = vunpack.c.h.b16 %v175
    %v1386 = vunpack.c.l.b16 %v176
    %v1387 = vunpack.c.h.b16 %v176
    %v1388 = vunpack.c.l.b16 %v177
    %v1389 = vunpack.c.h.b16 %v177
    %v1390 = vunpack.c.l.b16 %v178
    %v1391 = vunpack.c.h.b16 %v178
    %v1392 = vunpack.c.l.b16 %v179
    %v1393 = vunpack.c.h.b16 %v179
    %v1394 = vunpack.c.l.b16 %v180
    %v1395 = vunpack.c.h.b16 %v180
    %v1396 = vunpack.c.l.b16 %v181
    %v1397 = vunpack.c.h.b16 %v181
    %v1398 = vunpack.c.l.b16 %v182
    %v1399 = vunpack.c.h.b16 %v182
    %v1400 = vunpack.c.l.b16 %v183
    %v1401 = vunpack.c.h.b16 %v183
    %v1402 = vunpack.c.l.b16 %v184
    %v1403 = vunpack.c.h.b16 %v184
    %v1404 = vunpack.c.l.b16 %v185
    %v1405 = vunpack.c.h.b16 %v185
    %v1406 = vunpack.c.l.b16 %v186
    %v1407 = vunpack.c.h.b16 %v186
    %v1408 = vunpack.c.l.b16 %v187
    %v1409 = vunpack.c.h.b16 %v187
    %v1410 = vunpack.c.l.b16 %v188
    %v1411 = vunpack.c.h.b16 %v188
    %v1412 = vunpack.c.l.b16 %v189
    %v1413 = vunpack.c.h.b16 %v189
    %v1414 = vunpack.c.l.b16 %v190
    %v1415 = vunpack.c.h.b16 %v190
    %v1416 = vunpack.c.l.b16 %v191
    %v1417 = vunpack.c.h.b16 %v191
    %v1418 = vunpack.c.l.b16 %v192
    %v1419 = vunpack.c.h.b16 %v192
    %v1420 = vunpack.c.l.b16 %v193
    %v1421 = vunpack.c.h.b16 %v193
    %v1422 = vunpack.c.l.b16 %v194
    %v1423 = vunpack.c.h.b16 %v194
    %v1424 = vunpack.c.l.b16 %v195
    %v1425 = vunpack.c.h.b16 %v195
    %v1426 = vunpack.c.l.b16 %v196
    %v1427 = vunpack.c.h.b16 %v196
    %v1428 = vunpack.c.l.b16 %v197
    %v1429 = vunpack.c.h.b16 %v197
    %v1430 = vunpack.c.l.b16 %v198
    %v1431 = vunpack.c.h.b16 %v198
    %v1432 = vunpack.c.l.b16 %v199
    %v1433 = vunpack.c.h.b16 %v199
    %v1434 = vunpack.c.l.b16 %v200
    %v1435 = vunpack.c.h.b16 %v200
    %v1436 = vunpack.c.l.b16 %v201
    %v1437 = vunpack.c.h.b16 %v201
    %v1438 = vunpack.c.l.b16 %v202
    %v1439 = vunpack.c.h.b16 %v202
    %v1440 = vunpack.c.l.b16 %v203
    %v1441 = vunpack.c.h.b16 %v203
    %v1442 = vunpack.c.l.b16 %v204
    %v1443 = vunpack.c.h.b16 %v204
    %v1444 = vunpack.c.l.b16 %v205
    %v1445 = vunpack.c.h.b16 %v205
    %v1446 = vunpack.c.l.b16 %v206
    %v1447 = vunpack.c.h.b16 %v206
    %v1448 = vunpack.c.l.b16 %v207
    %v1449 = vunpack.c.h.b16 %v207
    %v1450 = vunpack.c.l.b16 %v208
    %v1451 = vunpack.c.h.b16 %v208
    %v1452 = vunpack.c.l.b16 %v209
    %v1453 = vunpack.c.h.b16 %v209
    %v1454 = vunpack.c.l.b16 %v210
    %v1455 = vunpack.c.h.b16 %v210
    %v1456 = vunpack.c.l.b16 %v211
    %v1457 = vunpack.c.h.b16 %v211
    %v1458 = vunpack.c.l.b16 %v212
    %v1459 = vunpack.c.h.b16 %v212
    %v1460 = vunpack.c.l.b16 %v213
    %v1461 = vunpack.c.h.b16 %v213
    %v1462 = vunpack.c.l.b16 %v214
    %v1463 = vunpack.c.h.b16 %v214
    %v1464 = vunpack.c.l.b16 %v215
    %v1465 = vunpack.c.h.b16 %v215
    %v1466 = vunpack.c.l.b16 %v216
    %v1467 = vunpack.c.h.b16 %v216
    %v1468 = vunpack.c.l.b16 %v217
    %v1469 = vunpack.c.h.b16 %v217
    %v1470 = vunpack.c.l.b16 %v218
    %v1471 = vunpack.c.h.b16 %v218
    %v1472 = vunpack.c.l.b16 %v219
    %v1473 = vunpack.c.h.b16 %v219
    %v1474 = vunpack.c.l.b16 %v220
    %v1475 = vunpack.c.h.b16 %v220
    %v1476 = vunpack.c.l.b16 %v221
    %v1477 = vunpack.c.h.b16 %v221
    %v1478 = vunpack.c.l.b16 %v222
    %v1479 = vunpack.c.h.b16 %v222
    %v1480 = vunpack.c.l.b16 %v223
    %v1481 = vunpack.c.h.b16 %v223
    %v1482 = vunpack.c.l.b16 %v224
    %v1483 = vunpack.c.h.b16 %v224
    %v1484 = vunpack.c.l.b16 %v225
    %v1485 = vunpack.c.h.b16 %v225
    %v1486 = vunpack.c.l.b16 %v226
    %v1487 = vunpack.c.h.b16 %v226
    %v1488 = vunpack.c.l.b16 %v227
    %v1489 = vunpack.c.h.b16 %v227
    %v1490 = vunpack.c.l.b16 %v228
    %v1491 = vunpack.c.h.b16 %v228
    %v1492 = vunpack.c.l.b16 %v229
    %v1493 = vunpack.c.h.b16 %v229
    %v1494 = vunpack.c.l.b16 %v230
    %v1495 = vunpack.c.h.b16 %v230
    %v1496 = vunpack.c.l.b16 %v231
    %v1497 = vunpack.c.h.b16 %v231
    %v1498 = vunpack.c.l.b16 %v232
    %v1499 = vunpack.c.h.b16 %v232
    %v1500 = vunpack.c.l.b16 %v233
    %v1501 = vunpack.c.h.b16 %v233
    %v1502 = vunpack.c.l.b16 %v234
    %v1503 = vunpack.c.h.b16 %v234
    %v1504 = vunpack.c.l.b16 %v235
    %v1505 = vunpack.c.h.b16 %v235
    %v1506 = vunpack.c.l.b16 %v236
    %v1507 = vunpack.c.h.b16 %v236
    %v1508 = vunpack.c.l.b16 %v237
    %v1509 = vunpack.c.h.b16 %v237
    %v1510 = vunpack.c.l.b16 %v238
    %v1511 = vunpack.c.h.b16 %v238
    %v1512 = vunpack.c.l.b16 %v239
    %v1513 = vunpack.c.h.b16 %v239
    %v1514 = vunpack.c.l.b16 %v240
    %v1515 = vunpack.c.h.b16 %v240
    %v1516 = vunpack.c.l.b16 %v241
    %v1517 = vunpack.c.h.b16 %v241
    %v1518 = vunpack.c.l.b16 %v242
    %v1519 = vunpack.c.h.b16 %v242
    %v1520 = vunpack.c.l.b16 %v243
    %v1521 = vunpack.c.h.b16 %v243
    %v1522 = vunpack.c.l.b16 %v244
    %v1523 = vunpack.c.h.b16 %v244
    %v1524 = vunpack.c.l.b16 %v245
    %v1525 = vunpack.c.h.b16 %v245
    %v1526 = vunpack.c.l.b16 %v246
    %v1527 = vunpack.c.h.b16 %v246
    %v1528 = vunpack.c.l.b16 %v247
    %v1529 = vunpack.c.h.b16 %v247
    %v1530 = vunpack.c.l.b16 %v248
    %v1531 = vunpack.c.h.b16 %v248
    %v1532 = vunpack.c.l.b16 %v249
    %v1533 = vunpack.c.h.b16 %v249
    %v1534 = vunpack.c.l.b16 %v250
    %v1535 = vunpack.c.h.b16 %v250
    %v1536 = vunpack.c.l.b16 %v251
    %v1537 = vunpack.c.h.b16 %v251
    %v1538 = vunpack.c.l.b16 %v252
    %v1539 = vunpack.c.h.b16 %v252
    %v1540 = vunpack.c.l.b16 %v253
    %v1541 = vunpack.c.h.b16 %v253
    %v1542 = vunpack.c.l.b16 %v254
    %v1543 = vunpack.c.h.b16 %v254
    %v1544 = vunpack.c.l.b16 %v255
    %v1545 = vunpack.c.h.b16 %v255
    %v1546 = vunpack.c.l.b16 %v256
    %v1547 = vunpack.c.h.b16 %v256
    %v1548 = vunpack.c.l.b16 %v257
    %v1549 = vunpack.c.h.b16 %v257
    %v1550 = vunpack.c.l.b16 %v258
    %v1551 = vunpack.c.h.b16 %v258
    %v1552 = vunpack.c.l.b16 %v259
    %v1553 = vunpack.c.h.b16 %v259
    %v1554 = vunpack.c.l.b16 %v260
    %v1555 = vunpack.c.h.b16 %v260
    %v1556 = vunpack.c.l.b16 %v261
    %v1557 = vunpack.c.h.b16 %v261
    %v1558 = vunpack.c.l.b16 %v262
    %v1559 = vunpack.c.h.b16 %v262
    %v1560 = vunpack.c.l.b16 %v263
    %v1561 = vunpack.c.h.b16 %v263
    %v1562 = vunpack.c.l.b16 %v264
    %v1563 = vunpack.c.h.b16 %v264
    %v1564 = vunpack.c.l.b16 %v265
    %v1565 = vunpack.c.h.b16 %v265
    %v1566 = vunpack.c.l.b16 %v266
    %v1567 = vunpack.c.h.b16 %v266
    %v1568 = vunpack.c.l.b16 %v267
    %v1569 = vunpack.c.h.b16 %v267
    %v1570 = vunpack.c.l.b16 %v268
    %v1571 = vunpack.c.h.b16 %v268
    %v1572 = vunpack.c.l.b16 %v269
    %v1573 = vunpack.c.h.b16 %v269
    %v1574 = vunpack.c.l.b16 %v270
    %v1575 = vunpack.c.h.b16 %v270
    %v1576 = vunpack.c.l.b16 %v271
    %v1577 = vunpack.c.h.b16 %v271
    %v1578 = vunpack.c.l.b16 %v272
    %v1579 = vunpack.c.h.b16 %v272
    %v1580 = vunpack.c.l.b16 %v273
    %v1581 = vunpack.c.h.b16 %v273
    %v1582 = vunpack.c.l.b16 %v274
    %v1583 = vunpack.c.h.b16 %v274
    %v1584 = vunpack.c.l.b16 %v275
    %v1585 = vunpack.c.h.b16 %v275
    %v1586 = vunpack.c.l.b16 %v276
    %v1587 = vunpack.c.h.b16 %v276
    %v1588 = vunpack.c.l.b16 %v277
    %v1589 = vunpack.c.h.b16 %v277
    %v1590 = vunpack.c.l.b16 %v278
    %v1591 = vunpack.c.h.b16 %v278
    %v1592 = vunpack.c.l.b16 %v279
    %v1593 = vunpack.c.h.b16 %v279
    %v1594 = vunpack.c.l.b16 %v280
    %v1595 = vunpack.c.h.b16 %v280
    %v1596 = vunpack.c.l.b16 %v281
    %v1597 = vunpack.c.h.b16 %v281
    %v1598 = vunpack.c.l.b16 %v282
    %v1599 = vunpack.c.h.b16 %v282
    %v1600 = vunpack.c.l.b16 %v283
    %v1601 = vunpack.c.h.b16 %v283
    %v1602 = vunpack.c.l.b16 %v284
    %v1603 = vunpack.c.h.b16 %v284
    %v1604 = vunpack.c.l.b16 %v285
    %v1605 = vunpack.c.h.b16 %v285
    %v1606 = vunpack.c.l.b16 %v286
    %v1607 = vunpack.c.h.b16 %v286
    %v1608 = vunpack.c.l.b16 %v287
    %v1609 = vunpack.c.h.b16 %v287
    %v1610 = vunpack.c.l.b16 %v288
    %v1611 = vunpack.c.h.b16 %v288
    %v1612 = vunpack.c.l.b16 %v289
    %v1613 = vunpack.c.h.b16 %v289
    %v1614 = vunpack.c.l.b16 %v290
    %v1615 = vunpack.c.h.b16 %v290
    %v1616 = vunpack.c.l.b16 %v291
    %v1617 = vunpack.c.h.b16 %v291
    %v1618 = vunpack.c.l.b16 %v292
    %v1619 = vunpack.c.h.b16 %v292
    %v1620 = vunpack.c.l.b16 %v293
    %v1621 = vunpack.c.h.b16 %v293
    %v1622 = vunpack.c.l.b16 %v294
    %v1623 = vunpack.c.h.b16 %v294
    %v1624 = vunpack.c.l.b16 %v295
    %v1625 = vunpack.c.h.b16 %v295
    %v1626 = vunpack.c.l.b16 %v296
    %v1627 = vunpack.c.h.b16 %v296
    %v1628 = vunpack.c.l.b16 %v297
    %v1629 = vunpack.c.h.b16 %v297
    %v1630 = vunpack.c.l.b16 %v298
    %v1631 = vunpack.c.h.b16 %v298
    %v1632 = vunpack.c.l.b16 %v299
    %v1633 = vunpack.c.h.b16 %v299
    %v1634 = vunpack.c.l.b16 %v300
    %v1635 = vunpack.c.h.b16 %v300
    %v1636 = vunpack.c.l.b16 %v301
    %v1637 = vunpack.c.h.b16 %v301
    %v1638 = vunpack.c.l.b16 %v302
    %v1639 = vunpack.c.h.b16 %v302
    %v1640 = vunpack.c.l.b16 %v303
    %v1641 = vunpack.c.h.b16 %v303
    %v1642 = vunpack.c.l.b16 %v304
    %v1643 = vunpack.c.h.b16 %v304
    %v1644 = vunpack.c.l.b16 %v305
    %v1645 = vunpack.c.h.b16 %v305
    %v1646 = vunpack.c.l.b16 %v306
    %v1647 = vunpack.c.h.b16 %v306
    %v1648 = vunpack.c.l.b16 %v307
    %v1649 = vunpack.c.h.b16 %v307
    %v1650 = vunpack.c.l.b16 %v308
    %v1651 = vunpack.c.h.b16 %v308
    %v1652 = vunpack.c.l.b16 %v309
    %v1653 = vunpack.c.h.b16 %v309
    %v1654 = vunpack.c.l.b16 %v310
    %v1655 = vunpack.c.h.b16 %v310
    %v1656 = vunpack.c.l.b16 %v311
    %v1657 = vunpack.c.h.b16 %v311
    %v1658 = vunpack.c.l.b16 %v312
    %v1659 = vunpack.c.h.b16 %v312
    %v1660 = vunpack.c.l.b16 %v313
    %v1661 = vunpack.c.h.b16 %v313
    %v1662 = vunpack.c.l.b16 %v314
    %v1663 = vunpack.c.h.b16 %v314
    %v1664 = vunpack.c.l.b16 %v315
    %v1665 = vunpack.c.h.b16 %v315
    %v1666 = vunpack.c.l.b16 %v316
    %v1667 = vunpack.c.h.b16 %v316
    %v1668 = vunpack.c.l.b16 %v317
    %v1669 = vunpack.c.h.b16 %v317
    %v1670 = vunpack.c.l.b16 %v318
    %v1671 = vunpack.c.h.b16 %v318
    %v1672 = vunpack.c.l.b16 %v319
    %v1673 = vunpack.c.h.b16 %v319
    %v1674 = vunpack.c.l.b16 %v320
    %v1675 = vunpack.c.h.b16 %v320
    %v1676 = vunpack.c.l.b16 %v321
    %v1677 = vunpack.c.h.b16 %v321
    %v1678 = vunpack.c.l.b16 %v322
    %v1679 = vunpack.c.h.b16 %v322
    %v1680 = vunpack.c.l.b16 %v323
    %v1681 = vunpack.c.h.b16 %v323
    %v1682 = vunpack.c.l.b16 %v324
    %v1683 = vunpack.c.h.b16 %v324
    %v1684 = vunpack.c.l.b16 %v325
    %v1685 = vunpack.c.h.b16 %v325
    %v1686 = vunpack.c.l.b16 %v326
    %v1687 = vunpack.c.h.b16 %v326
    %v1688 = vunpack.c.l.b16 %v327
    %v1689 = vunpack.c.h.b16 %v327
    %v1690 = vunpack.c.l.b16 %v328
    %v1691 = vunpack.c.h.b16 %v328
    %v1692 = vunpack.c.l.b16 %v329
    %v1693 = vunpack.c.h.b16 %v329
    %v1694 = vunpack.c.l.b16 %v330
    %v1695 = vunpack.c.h.b16 %v330
    %v1696 = vunpack.c.l.b16 %v331
    %v1697 = vunpack.c.h.b16 %v331
    %v1698 = vunpack.c.l.b16 %v332
    %v1699 = vunpack.c.h.b16 %v332
    %v1700 = vunpack.c.l.b16 %v333
    %v1701 = vunpack.c.h.b16 %v333
    %v1702 = vunpack.c.l.b16 %v334
    %v1703 = vunpack.c.h.b16 %v334
    %v1704 = vunpack.c.l.b16 %v335
    %v1705 = vunpack.c.h.b16 %v335
    %v1706 = vunpack.c.l.b16 %v336
    %v1707 = vunpack.c.h.b16 %v336
    %v1708 = vunpack.c.l.b16 %v337
    %v1709 = vunpack.c.h.b16 %v337
    %v1710 = vunpack.c.l.b16 %v338
    %v1711 = vunpack.c.h.b16 %v338
    %v1712 = vunpack.c.l.b16 %v339
    %v1713 = vunpack.c.h.b16 %v339
    %v1714 = vunpack.c.l.b16 %v340
    %v1715 = vunpack.c.h.b16 %v340
    %v1716 = vunpack.c.l.b16 %v341
    %v1717 = vunpack.c.h.b16 %v341
    %v1718 = vunpack.c.l.b16 %v342
    %v1719 = vunpack.c.h.b16 %v342
    %v1720 = vunpack.c.l.b16 %v343
    %v1721 = vunpack.c.h.b16 %v343
    %v1722 = vunpack.c.l.b16 %v344
    %v1723 = vunpack.c.h.b16 %v344
    %v1724 = vunpack.c.l.b16 %v345
    %v1725 = vunpack.c.h.b16 %v345
    %v1726 = vunpack.c.l.b16 %v346
    %v1727 = vunpack.c.h.b16 %v346
    %v1728 = vunpack.c.l.b16 %v347
    %v1729 = vunpack.c.h.b16 %v347
    %v1730 = vunpack.c.l.b16 %v348
    %v1731 = vunpack.c.h.b16 %v348
    %v1732 = vunpack.c.l.b16 %v349
    %v1733 = vunpack.c.h.b16 %v349
    %v1734 = vunpack.c.l.b16 %v350
    %v1735 = vunpack.c.h.b16 %v350
    %v1736 = vunpack.c.l.b16 %v351
    %v1737 = vunpack.c.h.b16 %v351
    %v1738 = vunpack.c.l.b16 %v352
    %v1739 = vunpack.c.h.b16 %v352
    %v1740 = vunpack.c.l.b16 %v353
    %v1741 = vunpack.c.h.b16 %v353
    %v1742 = vunpack.c.l.b16 %v354
    %v1743 = vunpack.c.h.b16 %v354
    %v1744 = vunpack.c.l.b16 %v355
    %v1745 = vunpack.c.h.b16 %v355
    %v1746 = vunpack.c.l.b16 %v356
    %v1747 = vunpack.c.h.b16 %v356
    %v1748 = vunpack.c.l.b16 %v357
    %v1749 = vunpack.c.h.b16 %v357
    %v1750 = vunpack.c.l.b16 %v358
    %v1751 = vunpack.c.h.b16 %v358
    %v1752 = vunpack.c.l.b16 %v359
    %v1753 = vunpack.c.h.b16 %v359
    %v1754 = vunpack.c.l.b16 %v360
    %v1755 = vunpack.c.h.b16 %v360
    %v1756 = vunpack.c.l.b16 %v361
    %v1757 = vunpack.c.h.b16 %v361
    %v1758 = vunpack.c.l.b16 %v362
    %v1759 = vunpack.c.h.b16 %v362
    %v1760 = vunpack.c.l.b16 %v363
    %v1761 = vunpack.c.h.b16 %v363
    %v1762 = vunpack.c.l.b16 %v364
    %v1763 = vunpack.c.h.b16 %v364
    %v1764 = vunpack.c.l.b16 %v365
    %v1765 = vunpack.c.h.b16 %v365
    %v1766 = vunpack.c.l.b16 %v366
    %v1767 = vunpack.c.h.b16 %v366
    %v1768 = vunpack.c.l.b16 %v367
    %v1769 = vunpack.c.h.b16 %v367
    %v1770 = vunpack.c.l.b16 %v368
    %v1771 = vunpack.c.h.b16 %v368
    %v1772 = vunpack.c.l.b16 %v369
    %v1773 = vunpack.c.h.b16 %v369
    %v1774 = vunpack.c.l.b16 %v370
    %v1775 = vunpack.c.h.b16 %v370
    %v1776 = vunpack.c.l.b16 %v371
    %v1777 = vunpack.c.h.b16 %v371
    %v1778 = vunpack.c.l.b16 %v372
    %v1779 = vunpack.c.h.b16 %v372
    %v1780 = vunpack.c.l.b16 %v373
    %v1781 = vunpack.c.h.b16 %v373
    %v1782 = vunpack.c.l.b16 %v374
    %v1783 = vunpack.c.h.b16 %v374
    %v1784 = vunpack.c.l.b16 %v375
    %v1785 = vunpack.c.h.b16 %v375
    %v1786 = vunpack.c.l.b16 %v376
    %v1787 = vunpack.c.h.b16 %v376
    %v1788 = vunpack.c.l.b16 %v377
    %v1789 = vunpack.c.h.b16 %v377
    %v1790 = vunpack.c.l.b16 %v378
    %v1791 = vunpack.c.h.b16 %v378
    %v1792 = vunpack.c.l.b16 %v379
    %v1793 = vunpack.c.h.b16 %v379
    %v1794 = vunpack.c.l.b16 %v380
    %v1795 = vunpack.c.h.b16 %v380
    %v1796 = vunpack.c.l.b16 %v381
    %v1797 = vunpack.c.h.b16 %v381
    %v1798 = vunpack.c.l.b16 %v382
    %v1799 = vunpack.c.h.b16 %v382
    %v1800 = vunpack.c.l.b16 %v383
    %v1801 = vunpack.c.h.b16 %v383
    %v1802 = vunpack.c.l.b16 %v384
    %v1803 = vunpack.c.h.b16 %v384
    %v1804 = vunpack.c.l.b16 %v385
    %v1805 = vunpack.c.h.b16 %v385
    %v1806 = vunpack.c.l.b16 %v386
    %v1807 = vunpack.c.h.b16 %v386
    %v1808 = vunpack.c.l.b16 %v387
    %v1809 = vunpack.c.h.b16 %v387
    %v1810 = vunpack.c.l.b16 %v388
    %v1811 = vunpack.c.h.b16 %v388
    %v1812 = vunpack.c.l.b16 %v389
    %v1813 = vunpack.c.h.b16 %v389
    %v1814 = vunpack.c.l.b16 %v390
    %v1815 = vunpack.c.h.b16 %v390
    %v1816 = vunpack.c.l.b16 %v391
    %v1817 = vunpack.c.h.b16 %v391
    %v1818 = vunpack.c.l.b16 %v392
    %v1819 = vunpack.c.h.b16 %v392
    %v1820 = vunpack.c.l.b16 %v393
    %v1821 = vunpack.c.h.b16 %v393
    %v1822 = vunpack.c.l.b16 %v394
    %v1823 = vunpack.c.h.b16 %v394
    %v1824 = vunpack.c.l.b16 %v395
    %v1825 = vunpack.c.h.b16 %v395
    %v1826 = vunpack.c.l.b16 %v396
    %v1827 = vunpack.c.h.b16 %v396
    %v1828 = vunpack.c.l.b16 %v397
    %v1829 = vunpack.c.h.b16 %v397
    %v1830 = vunpack.c.l.b16 %v398
    %v1831 = vunpack.c.h.b16 %v398
    %v1832 = vunpack.c.l.b16 %v399
    %v1833 = vunpack.c.h.b16 %v399
    %v1834 = vunpack.c.l.b16 %v400
    %v1835 = vunpack.c.h.b16 %v400
    %v1836 = vunpack.c.l.b16 %v401
    %v1837 = vunpack.c.h.b16 %v401
    %v1838 = vunpack.c.l.b16 %v402
    %v1839 = vunpack.c.h.b16 %v402
    %v1840 = vunpack.c.l.b16 %v403
    %v1841 = vunpack.c.h.b16 %v403
    %v1842 = vunpack.c.l.b16 %v404
    %v1843 = vunpack.c.h.b16 %v404
    %v1844 = vunpack.c.l.b16 %v405
    %v1845 = vunpack.c.h.b16 %v405
    %v1846 = vunpack.c.l.b16 %v406
    %v1847 = vunpack.c.h.b16 %v406
    %v1848 = vunpack.c.l.b16 %v407
    %v1849 = vunpack.c.h.b16 %v407
    %v1850 = vunpack.c.l.b16 %v408
    %v1851 = vunpack.c.h.b16 %v408
    %v1852 = vunpack.c.l.b16 %v409
    %v1853 = vunpack.c.h.b16 %v409
    %v1854 = vunpack.c.l.b16 %v410
    %v1855 = vunpack.c.h.b16 %v410
    %v1856 = vunpack.c.l.b16 %v411
    %v1857 = vunpack.c.h.b16 %v411
    %v1858 = vunpack.c.l.b16 %v412
    %v1859 = vunpack.c.h.b16 %v412
    %v1860 = vunpack.c.l.b16 %v413
    %v1861 = vunpack.c.h.b16 %v413
    %v1862 = vunpack.c.l.b16 %v414
    %v1863 = vunpack.c.h.b16 %v414
    %v1864 = vunpack.c.l.b16 %v415
    %v1865 = vunpack.c.h.b16 %v415
    %v1866 = vunpack.c.l.b16 %v416
    %v1867 = vunpack.c.h.b16 %v416
    %v1868 = vunpack.c.l.b16 %v417
    %v1869 = vunpack.c.h.b16 %v417
    %v1870 = vunpack.c.l.b16 %v418
    %v1871 = vunpack.c.h.b16 %v418
    %v1872 = vunpack.c.l.b16 %v419
    %v1873 = vunpack.c.h.b16 %v419
    %v1874 = vunpack.c.l.b16 %v420
    %v1875 = vunpack.c.h.b16 %v420
    %v1876 = vunpack.c.l.b16 %v421
    %v1877 = vunpack.c.h.b16 %v421
    %v1878 = vunpack.c.l.b16 %v422
    %v1879 = vunpack.c.h.b16 %v422
    %v1880 = vunpack.c.l.b16 %v423
    %v1881 = vunpack.c.h.b16 %v423
    %v1882 = vunpack.c.l.b16 %v424
    %v1883 = vunpack.c.h.b16 %v424
    %v1884 = vunpack.c.l.b16 %v425
    %v1885 = vunpack.c.h.b16 %v425
    %v1886 = vunpack.c.l.b16 %v426
    %v1887 = vunpack.c.h.b16 %v426
    %v1888 = vunpack.c.l.b16 %v427
    %v1889 = vunpack.c.h.b16 %v427
    %v1890 = vunpack.c.l.b16 %v428
    %v1891 = vunpack.c.h.b16 %v428
    %v1892 = vunpack.c.l.b16 %v429
    %v1893 = vunpack.c.h.b16 %v429
    %v1894 = vunpack.c.l.b16 %v430
    %v1895 = vunpack.c.h.b16 %v430
    %v1896 = vunpack.c.l.b16 %v431
    %v1897 = vunpack.c.h.b16 %v431
    %v1898 = vunpack.c.l.b16 %v432
    %v1899 = vunpack.c.h.b16 %v432
    %v1900 = vunpack.c.l.b16 %v433
    %v1901 = vunpack.c.h.b16 %v433
    %v1902 = vunpack.c.l.b16 %v434
    %v1903 = vunpack.c.h.b16 %v434
    %v1904 = vunpack.c.l.b16 %v435
    %v1905 = vunpack.c.h.b16 %v435
    %v1906 = vunpack.c.l.b16 %v436
    %v1907 = vunpack.c.h.b16 %v436
    %v1908 = vunpack.c.l.b16 %v437
    %v1909 = vunpack.c.h.b16 %v437
    %v1910 = vunpack.c.l.b16 %v438
    %v1911 = vunpack.c.h.b16 %v438
    %v1912 = vunpack.c.l.b16 %v439
    %v1913 = vunpack.c.h.b16 %v439
    %v1914 = vunpack.c.l.b16 %v440
    %v1915 = vunpack.c.h.b16 %v440
    %v1916 = vunpack.c.l.b16 %v441
    %v1917 = vunpack.c.h.b16 %v441
    %v1918 = vunpack.c.l.b16 %v442
    %v1919 = vunpack.c.h.b16 %v442
    %v1920 = vunpack.c.l.b16 %v443
    %v1921 = vunpack.c.h.b16 %v443
    %v1922 = vunpack.c.l.b16 %v444
    %v1923 = vunpack.c.h.b16 %v444
    %v1924 = vunpack.c.l.b16 %v445
    %v1925 = vunpack.c.h.b16 %v445
    %v1926 = vunpack.c.l.b16 %v446
    %v1927 = vunpack.c.h.b16 %v446
    %v1928 = vunpack.c.l.b16 %v447
    %v1929 = vunpack.c.h.b16 %v447
    %v1930 = vunpack.c.l.b16 %v448
    %v1931 = vunpack.c.h.b16 %v448
    %v1932 = vunpack.c.l.b16 %v449
    %v1933 = vunpack.c.h.b16 %v449
    %v1934 = vunpack.c.l.b16 %v450
    %v1935 = vunpack.c.h.b16 %v450
    %v1936 = vunpack.c.l.b16 %v451
    %v1937 = vunpack.c.h.b16 %v451
    %v1938 = vunpack.c.l.b16 %v452
    %v1939 = vunpack.c.h.b16 %v452
    %v1940 = vunpack.c.l.b16 %v453
    %v1941 = vunpack.c.h.b16 %v453
    %v1942 = vunpack.c.l.b16 %v454
    %v1943 = vunpack.c.h.b16 %v454
    %v1944 = vunpack.c.l.b16 %v455
    %v1945 = vunpack.c.h.b16 %v455
    %v1946 = vunpack.c.l.b16 %v456
    %v1947 = vunpack.c.h.b16 %v456
    %v1948 = vunpack.c.l.b16 %v457
    %v1949 = vunpack.c.h.b16 %v457
    %v1950 = vunpack.c.l.b16 %v458
    %v1951 = vunpack.c.h.b16 %v458
    %v1952 = vunpack.c.l.b16 %v459
    %v1953 = vunpack.c.h.b16 %v459
    %v1954 = vunpack.c.l.b16 %v460
    %v1955 = vunpack.c.h.b16 %v460
    %v1956 = vunpack.c.l.b16 %v461
    %v1957 = vunpack.c.h.b16 %v461
    %v1958 = vunpack.c.l.b16 %v462
    %v1959 = vunpack.c.h.b16 %v462
    %v1960 = vunpack.c.l.b16 %v463
    %v1961 = vunpack.c.h.b16 %v463
    %v1962 = vunpack.c.l.b16 %v464
    %v1963 = vunpack.c.h.b16 %v464
    %v1964 = vunpack.c.l.b16 %v465
    %v1965 = vunpack.c.h.b16 %v465
    %v1966 = vunpack.c.l.b16 %v466
    %v1967 = vunpack.c.h.b16 %v466
    %v1968 = vunpack.c.l.b16 %v467
    %v1969 = vunpack.c.h.b16 %v467
    %v1970 = vunpack.c.l.b16 %v468
    %v1971 = vunpack.c.h.b16 %v468
    %v1972 = vunpack.c.l.b16 %v469
    %v1973 = vunpack.c.h.b16 %v469
    %v1974 = vunpack.c.l.b16 %v470
    %v1975 = vunpack.c.h.b16 %v470
    %v1976 = vunpack.c.l.b16 %v471
    %v1977 = vunpack.c.h.b16 %v471
    %v1978 = vunpack.c.l.b16 %v472
    %v1979 = vunpack.c.h.b16 %v472
    %v1980 = vunpack.c.l.b16 %v473
    %v1981 = vunpack.c.h.b16 %v473
    %v1982 = vunpack.c.l.b16 %v474
    %v1983 = vunpack.c.h.b16 %v474
    %v1984 = vunpack.c.l.b16 %v475
    %v1985 = vunpack.c.h.b16 %v475
    %v1986 = vunpack.c.l.b16 %v476
    %v1987 = vunpack.c.h.b16 %v476
    %v1988 = vunpack.c.l.b16 %v477
    %v1989 = vunpack.c.h.b16 %v477
    %v1990 = vunpack.c.l.b16 %v478
    %v1991 = vunpack.c.h.b16 %v478
    %v1992 = vunpack.c.l.b16 %v479
    %v1993 = vunpack.c.h.b16 %v479
    %v1994 = vunpack.c.l.b16 %v480
    %v1995 = vunpack.c.h.b16 %v480
    %v1996 = vunpack.c.l.b16 %v481
    %v1997 = vunpack.c.h.b16 %v481
    %v1998 = vunpack.c.l.b16 %v482
    %v1999 = vunpack.c.h.b16 %v482
    %v2000 = vunpack.c.l.b16 %v483
    %v2001 = vunpack.c.h.b16 %v483
    %v2002 = vunpack.c.l.b16 %v484
    %v2003 = vunpack.c.h.b16 %v484
    %v2004 = vunpack.c.l.b16 %v485
    %v2005 = vunpack.c.h.b16 %v485
    %v2006 = vunpack.c.l.b16 %v486
    %v2007 = vunpack.c.h.b16 %v486
    %v2008 = vunpack.c.l.b16 %v487
    %v2009 = vunpack.c.h.b16 %v487
    %v2010 = vunpack.c.l.b16 %v488
    %v2011 = vunpack.c.h.b16 %v488
    %v2012 = vunpack.c.l.b16 %v489
    %v2013 = vunpack.c.h.b16 %v489
    %v2014 = vunpack.c.l.b16 %v490
    %v2015 = vunpack.c.h.b16 %v490
    %v2016 = vunpack.c.l.b16 %v491
    %v2017 = vunpack.c.h.b16 %v491
    %v2018 = vunpack.c.l.b16 %v492
    %v2019 = vunpack.c.h.b16 %v492
    %v2020 = vunpack.c.l.b16 %v493
    %v2021 = vunpack.c.h.b16 %v493
    %v2022 = vunpack.c.l.b16 %v494
    %v2023 = vunpack.c.h.b16 %v494
    %v2024 = vunpack.c.l.b16 %v495
    %v2025 = vunpack.c.h.b16 %v495
    %v2026 = vunpack.c.l.b16 %v496
    %v2027 = vunpack.c.h.b16 %v496
    %v2028 = vunpack.c.l.b16 %v497
    %v2029 = vunpack.c.h.b16 %v497
    %v2030 = vunpack.c.l.b16 %v498
    %v2031 = vunpack.c.h.b16 %v498
    %v2032 = vunpack.c.l.b16 %v499
    %v2033 = vunpack.c.h.b16 %v499
    %v2034 = vunpack.c.l.b16 %v500
    %v2035 = vunpack.c.h.b16 %v500
    %v2036 = vunpack.c.l.b16 %v501
    %v2037 = vunpack.c.h.b16 %v501
    %v2038 = vunpack.c.l.b16 %v502
    %v2039 = vunpack.c.h.b16 %v502
    %v2040 = vunpack.c.l.b16 %v503
    %v2041 = vunpack.c.h.b16 %v503
    %v2042 = vunpack.c.l.b16 %v504
    %v2043 = vunpack.c.h.b16 %v504
    %v2044 = vunpack.c.l.b16 %v505
    %v2045 = vunpack.c.h.b16 %v505
    %v2046 = vunpack.c.l.b16 %v506
    %v2047 = vunpack.c.h.b16 %v506
    %v2048 = vunpack.c.l.b16 %v507
    %v2049 = vunpack.c.h.b16 %v507
    %v2050 = vunpack.c.l.b16 %v508
    %v2051 = vunpack.c.h.b16 %v508
    %v2052 = vunpack.c.l.b16 %v509
    %v2053 = vunpack.c.h.b16 %v509
    %v2054 = vunpack.c.l.b16 %v510
    %v2055 = vunpack.c.h.b16 %v510
    %v2056 = vunpack.c.l.b16 %v511
    %v2057 = vunpack.c.h.b16 %v511
    %v2058 = vunpack.c.l.b16 %v512
    %v2059 = vunpack.c.h.b16 %v512
    %v2060 = vunpack.c.l.b16 %v513
    %v2061 = vunpack.c.h.b16 %v513
    %v2062 = vunpack.c.l.b16 %v514
    %v2063 = vunpack.c.h.b16 %v514
    %v2064 = vunpack.c.l.b16 %v515
    %v2065 = vunpack.c.h.b16 %v515
    %v2066 = vunpack.c.l.b16 %v516
    %v2067 = vunpack.c.h.b16 %v516
    %v2068 = vunpack.c.l.b16 %v517
    %v2069 = vunpack.c.h.b16 %v517
    %v2070 = vunpack.c.l.b16 %v518
    %v2071 = vunpack.c.h.b16 %v518
    %v2072 = vunpack.c.l.b16 %v519
    %v2073 = vunpack.c.h.b16 %v519
    %v2074 = vunpack.c.l.b16 %v520
    %v2075 = vunpack.c.h.b16 %v520
    %v2076 = vunpack.c.l.b16 %v521
    %v2077 = vunpack.c.h.b16 %v521
    %v2078 = vunpack.c.l.b16 %v522
    %v2079 = vunpack.c.h.b16 %v522
    %v2080 = vunpack.c.l.b16 %v523
    %v2081 = vunpack.c.h.b16 %v523
    %v2082 = vunpack.c.l.b16 %v524
    %v2083 = vunpack.c.h.b16 %v524
    %v2084 = vunpack.c.l.b16 %v525
    %v2085 = vunpack.c.h.b16 %v525
    %v2086 = vunpack.c.l.b16 %v526
    %v2087 = vunpack.c.h.b16 %v526
    %v2088 = vunpack.c.l.b16 %v527
    %v2089 = vunpack.c.h.b16 %v527
    %v2090 = vunpack.c.l.b16 %v528
    %v2091 = vunpack.c.h.b16 %v528
    %v2092 = vunpack.c.l.b16 %v529
    %v2093 = vunpack.c.h.b16 %v529
    %v2094 = vunpack.c.l.b16 %v530
    %v2095 = vunpack.c.h.b16 %v530
    %v2096 = vunpack.c.l.b16 %v531
    %v2097 = vunpack.c.h.b16 %v531
    %v2098 = vunpack.c.l.b16 %v532
    %v2099 = vunpack.c.h.b16 %v532
    %v2100 = vunpack.c.l.b16 %v533
    %v2101 = vunpack.c.h.b16 %v533
    %v2102 = vunpack.c.l.b16 %v534
    %v2103 = vunpack.c.h.b16 %v534
    %v2104 = vunpack.c.l.b16 %v535
    %v2105 = vunpack.c.h.b16 %v535
    %v2106 = vunpack.c.l.b16 %v536
    %v2107 = vunpack.c.h.b16 %v536
    %v2108 = vunpack.c.l.b16 %v537
    %v2109 = vunpack.c.h.b16 %v537
    %v2110 = vunpack.c.l.b16 %v538
    %v2111 = vunpack.c.h.b16 %v538
    %v2112 = vunpack.c.l.b16 %v539
    %v2113 = vunpack.c.h.b16 %v539
    %v2114 = vunpack.c.l.b16 %v540
    %v2115 = vunpack.c.h.b16 %v540
    %v2116 = vunpack.c.l.b16 %v541
    %v2117 = vunpack.c.h.b16 %v541
    %v2118 = vunpack.c.l.b16 %v542
    %v2119 = vunpack.c.h.b16 %v542
    %v2120 = vunpack.c.l.b16 %v543
    %v2121 = vunpack.c.h.b16 %v543
    %v2122 = vunpack.c.l.b16 %v544
    %v2123 = vunpack.c.h.b16 %v544
    %v2124 = vunpack.c.l.b16 %v545
    %v2125 = vunpack.c.h.b16 %v545
    %v2126 = vunpack.c.l.b16 %v546
    %v2127 = vunpack.c.h.b16 %v546
    %v2128 = vunpack.c.l.b16 %v547
    %v2129 = vunpack.c.h.b16 %v547
    %v2130 = vunpack.c.l.b16 %v548
    %v2131 = vunpack.c.h.b16 %v548
    %v2132 = vunpack.c.l.b16 %v549
    %v2133 = vunpack.c.h.b16 %v549
    %v2134 = vunpack.c.l.b16 %v550
    %v2135 = vunpack.c.h.b16 %v550
    %v2136 = vunpack.c.l.b16 %v551
    %v2137 = vunpack.c.h.b16 %v551
    %v2138 = vunpack.c.l.b16 %v552
    %v2139 = vunpack.c.h.b16 %v552
    %v2140 = vunpack.c.l.b16 %v553
    %v2141 = vunpack.c.h.b16 %v553
    %v2142 = vunpack.c.l.b16 %v554
    %v2143 = vunpack.c.h.b16 %v554
    %v2144 = vunpack.c.l.b16 %v555
    %v2145 = vunpack.c.h.b16 %v555
    %v2146 = vunpack.c.l.b16 %v556
    %v2147 = vunpack.c.h.b16 %v556
    %v2148 = vunpack.c.l.b16 %v557
    %v2149 = vunpack.c.h.b16 %v557
    %v2150 = vunpack.c.l.b16 %v558
    %v2151 = vunpack.c.h.b16 %v558
    %v2152 = vunpack.c.l.b16 %v559
    %v2153 = vunpack.c.h.b16 %v559
    %v2154 = vunpack.c.l.b16 %v560
    %v2155 = vunpack.c.h.b16 %v560
    %v2156 = vunpack.c.l.b16 %v561
    %v2157 = vunpack.c.h.b16 %v561
    %v2158 = vunpack.c.l.b16 %v562
    %v2159 = vunpack.c.h.b16 %v562
    %v2160 = vunpack.c.l.b16 %v563
    %v2161 = vunpack.c.h.b16 %v563
    %v2162 = vunpack.c.l.b16 %v564
    %v2163 = vunpack.c.h.b16 %v564
    %v2164 = vunpack.c.l.b16 %v565
    %v2165 = vunpack.c.h.b16 %v565
    %v2166 = vunpack.c.l.b16 %v566
    %v2167 = vunpack.c.h.b16 %v566
    %v2168 = vunpack.c.l.b16 %v567
    %v2169 = vunpack.c.h.b16 %v567
    %v2170 = vunpack.c.l.b16 %v568
    %v2171 = vunpack.c.h.b16 %v568
    %v2172 = vunpack.c.l.b16 %v569
    %v2173 = vunpack.c.h.b16 %v569
    %v2174 = vunpack.c.l.b16 %v570
    %v2175 = vunpack.c.h.b16 %v570
    %v2176 = vunpack.c.l.b16 %v571
    %v2177 = vunpack.c.h.b16 %v571
    %v2178 = vunpack.c.l.b16 %v572
    %v2179 = vunpack.c.h.b16 %v572
    %v2180 = vunpack.c.l.b16 %v573
    %v2181 = vunpack.c.h.b16 %v573
    %v2182 = vunpack.c.l.b16 %v574
    %v2183 = vunpack.c.h.b16 %v574
    %v2184 = vunpack.c.l.b16 %v575
    %v2185 = vunpack.c.h.b16 %v575
    %v2186 = vunpack.c.l.b16 %v576
    %v2187 = vunpack.c.h.b16 %v576
    %v2188 = vunpack.c.l.b16 %v577
    %v2189 = vunpack.c.h.b16 %v577
    %v2190 = vunpack.c.l.b16 %v578
    %v2191 = vunpack.c.h.b16 %v578
    %v2192 = vunpack.c.l.b16 %v579
    %v2193 = vunpack.c.h.b16 %v579
    %v2194 = vunpack.c.l.b16 %v580
    %v2195 = vunpack.c.h.b16 %v580
    %v2196 = vunpack.c.l.b16 %v581
    %v2197 = vunpack.c.h.b16 %v581
    %v2198 = vunpack.c.l.b16 %v582
    %v2199 = vunpack.c.h.b16 %v582
    %v2200 = vunpack.c.l.b16 %v583
    %v2201 = vunpack.c.h.b16 %v583
    %v2202 = vunpack.c.l.b16 %v584
    %v2203 = vunpack.c.h.b16 %v584
    %v2204 = vunpack.c.l.b16 %v585
    %v2205 = vunpack.c.h.b16 %v585
    %v2206 = vunpack.c.l.b16 %v586
    %v2207 = vunpack.c.h.b16 %v586
    %v2208 = vunpack.c.l.b16 %v587
    %v2209 = vunpack.c.h.b16 %v587
    %v2210 = vunpack.c.l.b16 %v588
    %v2211 = vunpack.c.h.b16 %v588
    %v2212 = vunpack.c.l.b16 %v589
    %v2213 = vunpack.c.h.b16 %v589
    %v2214 = vunpack.c.l.b16 %v590
    %v2215 = vunpack.c.h.b16 %v590
    %v2216 = vunpack.c.l.b16 %v591
    %v2217 = vunpack.c.h.b16 %v591
    %v2218 = vunpack.c.l.b16 %v592
    %v2219 = vunpack.c.h.b16 %v592
    %v2220 = vunpack.c.l.b16 %v593
    %v2221 = vunpack.c.h.b16 %v593
    %v2222 = vunpack.c.l.b16 %v594
    %v2223 = vunpack.c.h.b16 %v594
    %v2224 = vunpack.c.l.b16 %v595
    %v2225 = vunpack.c.h.b16 %v595
    %v2226 = vunpack.c.l.b16 %v596
    %v2227 = vunpack.c.h.b16 %v596
    %v2228 = vunpack.c.l.b16 %v597
    %v2229 = vunpack.c.h.b16 %v597
    %v2230 = vunpack.c.l.b16 %v598
    %v2231 = vunpack.c.h.b16 %v598
    %v2232 = vunpack.c.l.b16 %v599
    %v2233 = vunpack.c.h.b16 %v599
    %v2234 = vunpack.c.l.b16 %v600
    %v2235 = vunpack.c.h.b16 %v600
    %v2236 = vunpack.c.l.b16 %v601
    %v2237 = vunpack.c.h.b16 %v601
    %v2238 = vunpack.c.l.b16 %v602
    %v2239 = vunpack.c.h.b16 %v602
    %v2240 = vunpack.c.l.b16 %v603
    %v2241 = vunpack.c.h.b16 %v603
    %v2242 = vunpack.c.l.b16 %v604
    %v2243 = vunpack.c.h.b16 %v604
    %v2244 = vunpack.c.l.b16 %v605
    %v2245 = vunpack.c.h.b16 %v605
    %v2246 = vunpack.c.l.b16 %v606
    %v2247 = vunpack.c.h.b16 %v606
    %v2248 = vunpack.c.l.b16 %v607
    %v2249 = vunpack.c.h.b16 %v607
    %v2250 = vunpack.c.l.b16 %v608
    %v2251 = vunpack.c.h.b16 %v608
    %v2252 = vunpack.c.l.b16 %v609
    %v2253 = vunpack.c.h.b16 %v609
    %v2254 = vunpack.c.l.b16 %v610
    %v2255 = vunpack.c.h.b16 %v610
    %v2256 = vunpack.c.l.b16 %v611
    %v2257 = vunpack.c.h.b16 %v611
    %v2258 = vunpack.c.l.b16 %v612
    %v2259 = vunpack.c.h.b16 %v612
    %v2260 = vunpack.c.l.b16 %v613
    %v2261 = vunpack.c.h.b16 %v613
    %v2262 = vunpack.c.l.b16 %v614
    %v2263 = vunpack.c.h.b16 %v614
    %v2264 = vunpack.c.l.b16 %v615
    %v2265 = vunpack.c.h.b16 %v615
    %v2266 = vunpack.c.l.b16 %v616
    %v2267 = vunpack.c.h.b16 %v616
    %v2268 = vunpack.c.l.b16 %v617
    %v2269 = vunpack.c.h.b16 %v617
    %v2270 = vunpack.c.l.b16 %v618
    %v2271 = vunpack.c.h.b16 %v618
    %v2272 = vunpack.c.l.b16 %v619
    %v2273 = vunpack.c.h.b16 %v619
    %v2274 = vunpack.c.l.b16 %v620
    %v2275 = vunpack.c.h.b16 %v620
    %v2276 = vunpack.c.l.b16 %v621
    %v2277 = vunpack.c.h.b16 %v621
    %v2278 = vunpack.c.l.b16 %v622
    %v2279 = vunpack.c.h.b16 %v622
    %v2280 = vunpack.c.l.b16 %v623
    %v2281 = vunpack.c.h.b16 %v623
    %v2282 = vunpack.c.l.b16 %v624
    %v2283 = vunpack.c.h.b16 %v624
    %v2284 = vunpack.c.l.b16 %v625
    %v2285 = vunpack.c.h.b16 %v625
    %v2286 = vunpack.c.l.b16 %v626
    %v2287 = vunpack.c.h.b16 %v626
    %v2288 = vunpack.c.l.b16 %v627
    %v2289 = vunpack.c.h.b16 %v627
    %v2290 = vunpack.c.l.b16 %v628
    %v2291 = vunpack.c.h.b16 %v628
    %v2292 = vunpack.c.l.b16 %v629
    %v2293 = vunpack.c.h.b16 %v629
    %v2294 = vunpack.c.l.b16 %v630
    %v2295 = vunpack.c.h.b16 %v630
    %v2296 = vunpack.c.l.b16 %v631
    %v2297 = vunpack.c.h.b16 %v631
    %v2298 = vunpack.c.l.b16 %v632
    %v2299 = vunpack.c.h.b16 %v632
    %v2300 = vunpack.c.l.b16 %v633
    %v2301 = vunpack.c.h.b16 %v633
    %v2302 = vunpack.c.l.b16 %v634
    %v2303 = vunpack.c.h.b16 %v634
    %v2304 = vunpack.c.l.b16 %v635
    %v2305 = vunpack.c.h.b16 %v635
    %v2306 = vunpack.c.l.b16 %v636
    %v2307 = vunpack.c.h.b16 %v636
    %v2308 = vunpack.c.l.b16 %v637
    %v2309 = vunpack.c.h.b16 %v637
    %v2310 = vunpack.c.l.b16 %v638
    %v2311 = vunpack.c.h.b16 %v638
    %v2312 = vunpack.c.l.b16 %v639
    %v2313 = vunpack.c.h.b16 %v639
    %v2314 = vunpack.c.l.b16 %v640
    %v2315 = vunpack.c.h.b16 %v640
    %v2316 = vunpack.c.l.b16 %v641
    %v2317 = vunpack.c.h.b16 %v641
    %v2318 = vunpack.c.l.b16 %v642
    %v2319 = vunpack.c.h.b16 %v642
    %v2320 = vunpack.c.l.b16 %v643
    %v2321 = vunpack.c.h.b16 %v643
    %v2322 = vunpack.c.l.b16 %v644
    %v2323 = vunpack.c.h.b16 %v644
    %v2324 = vunpack.c.l.b16 %v645
    %v2325 = vunpack.c.h.b16 %v645
    %v2326 = vunpack.c.l.b16 %v646
    %v2327 = vunpack.c.h.b16 %v646
    %v2328 = vunpack.c.l.b16 %v647
    %v2329 = vunpack.c.h.b16 %v647
    %v2330 = vunpack.c.l.b16 %v648
    %v2331 = vunpack.c.h.b16 %v648
    %v2332 = vunpack.c.l.b16 %v649
    %v2333 = vunpack.c.h.b16 %v649
    %v2334 = vunpack.c.l.b16 %v650
    %v2335 = vunpack.c.h.b16 %v650
    %v2336 = vunpack.c.l.b16 %v651
    %v2337 = vunpack.c.h.b16 %v651
    %v2338 = vunpack.c.l.b16 %v652
    %v2339 = vunpack.c.h.b16 %v652
    %v2340 = vunpack.c.l.b16 %v653
    %v2341 = vunpack.c.h.b16 %v653
    %v2342 = vunpack.c.l.b16 %v654
    %v2343 = vunpack.c.h.b16 %v654
    %v2344 = vunpack.c.l.b16 %v655
    %v2345 = vunpack.c.h.b16 %v655
    %v2346 = vunpack.c.l.b16 %v656
    %v2347 = vunpack.c.h.b16 %v656
    %v2348 = vunpack.c.l.b16 %v657
    %v2349 = vunpack.c.h.b16 %v657
    %v2350 = vunpack.c.l.b16 %v658
    %v2351 = vunpack.c.h.b16 %v658
    %v2352 = vunpack.c.l.b16 %v659
    %v2353 = vunpack.c.h.b16 %v659
    %v2354 = vunpack.c.l.b16 %v660
    %v2355 = vunpack.c.h.b16 %v660
    %v2356 = vunpack.c.l.b16 %v661
    %v2357 = vunpack.c.h.b16 %v661
    %v2358 = vunpack.c.l.b16 %v662
    %v2359 = vunpack.c.h.b16 %v662
    %v2360 = vunpack.c.l.b16 %v663
    %v2361 = vunpack.c.h.b16 %v663
    %v2362 = vunpack.c.l.b16 %v664
    %v2363 = vunpack.c.h.b16 %v664
    %v2364 = vunpack.c.l.b16 %v665
    %v2365 = vunpack.c.h.b16 %v665
    %v2366 = vunpack.c.l.b16 %v666
    %v2367 = vunpack.c.h.b16 %v666
    %v2368 = vunpack.c.l.b16 %v667
    %v2369 = vunpack.c.h.b16 %v667
    %v2370 = vunpack.c.l.b16 %v668
    %v2371 = vunpack.c.h.b16 %v668
    %v2372 = vunpack.c.l.b16 %v669
    %v2373 = vunpack.c.h.b16 %v669
    %v2374 = vpack.c.b16 %v1382, %v1350
    %v2375 = vpack.c.b16 %v1383, %v1351
    %v2376 = vpack.c.b16 %v1384, %v1352
    %v2377 = vpack.c.b16 %v1385, %v1353
    %v2378 = vpack.c.b16 %v1386, %v1354
    %v2379 = vpack.c.b16 %v1387, %v1355
    %v2380 = vpack.c.b16 %v1388, %v1356
    %v2381 = vpack.c.b16 %v1389, %v1357
    %v2382 = vpack.c.b16 %v1390, %v1358
    %v2383 = vpack.c.b16 %v1391, %v1359
    %v2384 = vpack.c.b16 %v1392, %v1360
    %v2385 = vpack.c.b16 %v1393, %v1361
    %v2386 = vpack.c.b16 %v1394, %v1362
    %v2387 = vpack.c.b16 %v1395, %v1363
    %v2388 = vpack.c.b16 %v1396, %v1364
    %v2389 = vpack.c.b16 %v1397, %v1365
    %v2390 = vpack.c.b16 %v1398, %v1366
    %v2391 = vpack.c.b16 %v1399, %v1367
    %v2392 = vpack.c.b16 %v1400, %v1368
    %v2393 = vpack.c.b16 %v1401, %v1369
    %v2394 = vpack.c.b16 %v1402, %v1370
    %v2395 = vpack.c.b16 %v1403, %v1371
    %v2396 = vpack.c.b16 %v1404, %v1372
    %v2397 = vpack.c.b16 %v1405, %v1373
    %v2398 = vpack.c.b16 %v1406, %v1374
    %v2399 = vpack.c.b16 %v1407, %v1375
    %v2400 = vpack.c.b16 %v1408, %v1376
    %v2401 = vpack.c.b16 %v1409, %v1377
    %v2402 = vpack.c.b16 %v1410, %v1378
    %v2403 = vpack.c.b16 %v1411, %v1379
    %v2404 = vpack.c.b16 %v1412, %v1380
    %v2405 = vpack.c.b16 %v1413, %v1381
    %v2406 = vpack.c.b16 %v1446, %v1414
    %v2407 = vpack.c.b16 %v1447, %v1415
    %v2408 = vpack.c.b16 %v1448, %v1416
    %v2409 = vpack.c.b16 %v1449, %v1417
    %v2410 = vpack.c.b16 %v1450, %v1418
    %v2411 = vpack.c.b16 %v1451, %v1419
    %v2412 = vpack.c.b16 %v1452, %v1420
    %v2413 = vpack.c.b16 %v1453, %v1421
    %v2414 = vpack.c.b16 %v1454, %v1422
    %v2415 = vpack.c.b16 %v1455, %v1423
    %v2416 = vpack.c.b16 %v1456, %v1424
    %v2417 = vpack.c.b16 %v1457, %v1425
    %v2418 = vpack.c.b16 %v1458, %v1426
    %v2419 = vpack.c.b16 %v1459, %v1427
    %v2420 = vpack.c.b16 %v1460, %v1428
    %v2421 = vpack.c.b16 %v1461, %v1429
    %v2422 = vpack.c.b16 %v1462, %v1430
    %v2423 = vpack.c.b16 %v1463, %v1431
    %v2424 = vpack.c.b16 %v1464, %v1432
    %v2425 = vpack.c.b16 %v1465, %v1433
    %v2426 = vpack.c.b16 %v1466, %v1434
    %v2427 = vpack.c.b16 %v1467, %v1435
    %v2428 = vpack.c.b16 %v1468, %v1436
    %v2429 = vpack.c.b16 %v1469, %v1437
    %v2430 = vpack.c.b16 %v1470, %v1438
    %v2431 = vpack.c.b16 %v1471, %v1439
    %v2432 = vpack.c.b16 %v1472, %v1440
    %v2433 = vpack.c.b16 %v1473, %v1441
    %v2434 = vpack.c.b16 %v1474, %v1442
    %v2435 = vpack.c.b16 %v1475, %v1443
    %v2436 = vpack.c.b16 %v1476, %v1444
    %v2437 = vpack.c.b16 %v1477, %v1445
    %v2438 = vpack.c.b16 %v1510, %v1478
    %v2439 = vpack.c.b16 %v1511, %v1479
    %v2440 = vpack.c.b16 %v1512, %v1480
    %v2441 = vpack.c.b16 %v1513, %v1481
    %v2442 = vpack.c.b16 %v1514, %v1482
    %v2443 = vpack.c.b16 %v1515, %v1483
    %v2444 = vpack.c.b16 %v1516, %v1484
    %v2445 = vpack.c.b16 %v1517, %v1485
    %v2446 = vpack.c.b16 %v1518, %v1486
    %v2447 = vpack.c.b16 %v1519, %v1487
    %v2448 = vpack.c.b16 %v1520, %v1488
    %v2449 = vpack.c.b16 %v1521, %v1489
    %v2450 = vpack.c.b16 %v1522, %v1490
    %v2451 = vpack.c.b16 %v1523, %v1491
    %v2452 = vpack.c.b16 %v1524, %v1492
    %v2453 = vpack.c.b16 %v1525, %v1493
    %v2454 = vpack.c.b16 %v1526, %v1494
    %v2455 = vpack.c.b16 %v1527, %v1495
    %v2456 = vpack.c.b16 %v1528, %v1496
    %v2457 = vpack.c.b16 %v1529, %v1497
    %v2458 = vpack.c.b16 %v1530, %v1498
    %v2459 = vpack.c.b16 %v1531, %v1499
    %v2460 = vpack.c.b16 %v1532, %v1500
    %v2461 = vpack.c.b16 %v1533, %v1501
    %v2462 = vpack.c.b16 %v1534, %v1502
    %v2463 = vpack.c.b16 %v1535, %v1503
    %v2464 = vpack.c.b16 %v1536, %v1504
    %v2465 = vpack.c.b16 %v1537, %v1505
    %v2466 = vpack.c.b16 %v1538, %v1506
    %v2467 = vpack.c.b16 %v1539, %v1507
    %v2468 = vpack.c.b16 %v1540, %v1508
    %v2469 = vpack.c.b16 %v1541, %v1509
    %v2470 = vpack.c.b16 %v1574, %v1542
    %v2471 = vpack.c.b16 %v1575, %v1543
    %v2472 = vpack.c.b16 %v1576, %v1544
    %v2473 = vpack.c.b16 %v1577, %v1545
    %v2474 = vpack.c.b16 %v1578, %v1546
    %v2475 = vpack.c.b16 %v1579, %v1547
    %v2476 = vpack.c.b16 %v1580, %v1548
    %v2477 = vpack.c.b16 %v1581, %v1549
    %v2478 = vpack.c.b16 %v1582, %v1550
    %v2479 = vpack.c.b16 %v1583, %v1551
    %v2480 = vpack.c.b16 %v1584, %v1552
    %v2481 = vpack.c.b16 %v1585, %v1553
    %v2482 = vpack.c.b16 %v1586, %v1554
    %v2483 = vpack.c.b16 %v1587, %v1555
    %v2484 = vpack.c.b16 %v1588, %v1556
    %v2485 = vpack.c.b16 %v1589, %v1557
    %v2486 = vpack.c.b16 %v1590, %v1558
    %v2487 = vpack.c.b16 %v1591, %v1559
    %v2488 = vpack.c.b16 %v1592, %v1560
    %v2489 = vpack.c.b16 %v1593, %v1561
    %v2490 = vpack.c.b16 %v1594, %v1562
    %v2491 = vpack.c.b16 %v1595, %v1563
    %v2492 = vpack.c.b16 %v1596, %v1564
    %v2493 = vpack.c.b16 %v1597, %v1565
    %v2494 = vpack.c.b16 %v1598, %v1566
    %v2495 = vpack.c.b16 %v1599, %v1567
    %v2496 = vpack.c.b16 %v1600, %v1568
    %v2497 = vpack.c.b16 %v1601, %v1569
    %v2498 = vpack.c.b16 %v1602, %v1570
    %v2499 = vpack.c.b16 %v1603, %v1571
    %v2500 = vpack.c.b16 %v1604, %v1572
    %v2501 = vpack.c.b16 %v1605, %v1573
    %v2502 = vpack.c.b16 %v1638, %v1606
    %v2503 = vpack.c.b16 %v1639, %v1607
    %v2504 = vpack.c.b16 %v1640, %v1608
    %v2505 = vpack.c.b16 %v1641, %v1609
    %v2506 = vpack.c.b16 %v1642, %v1610
    %v2507 = vpack.c.b16 %v1643, %v1611
    %v2508 = vpack.c.b16 %v1644, %v1612
    %v2509 = vpack.c.b16 %v1645, %v1613
    %v2510 = vpack.c.b16 %v1646, %v1614
    %v2511 = vpack.c.b16 %v1647, %v1615
    %v2512 = vpack.c.b16 %v1648, %v1616
    %v2513 = vpack.c.b16 %v1649, %v1617
    %v2514 = vpack.c.b16 %v1650, %v1618
    %v2515 = vpack.c.b16 %v1651, %v1619
    %v2516 = vpack.c.b16 %v1652, %v1620
    %v2517 = vpack.c.b16 %v1653, %v1621
    %v2518 = vpack.c.b16 %v1654, %v1622
    %v2519 = vpack.c.b16 %v1655, %v1623
    %v2520 = vpack.c.b16 %v1656, %v1624
    %v2521 = vpack.c.b16 %v1657, %v1625
    %v2522 = vpack.c.b16 %v1658, %v1626
    %v2523 = vpack.c.b16 %v1659, %v1627
    %v2524 = vpack.c.b16 %v1660, %v1628
    %v2525 = vpack.c.b16 %v1661, %v1629
    %v2526 = vpack.c.b16 %v1662, %v1630
    %v2527 = vpack.c.b16 %v1663, %v1631
    %v2528 = vpack.c.b16 %v1664, %v1632
    %v2529 = vpack.c.b16 %v1665, %v1633
    %v2530 = vpack.c.b16 %v1666, %v1634
    %v2531 = vpack.c.b16 %v1667, %v1635
    %v2532 = vpack.c.b16 %v1668, %v1636
    %v2533 = vpack.c.b16 %v1669, %v1637
    %v2534 = vpack.c.b16 %v1702, %v1670
    %v2535 = vpack.c.b16 %v1703, %v1671
    %v2536 = vpack.c.b16 %v1704, %v1672
    %v2537 = vpack.c.b16 %v1705, %v1673
    %v2538 = vpack.c.b16 %v1706, %v1674
    %v2539 = vpack.c.b16 %v1707, %v1675
    %v2540 = vpack.c.b16 %v1708, %v1676
    %v2541 = vpack.c.b16 %v1709, %v1677
    %v2542 = vpack.c.b16 %v1710, %v1678
    %v2543 = vpack.c.b16 %v1711, %v1679
    %v2544 = vpack.c.b16 %v1712, %v1680
    %v2545 = vpack.c.b16 %v1713, %v1681
    %v2546 = vpack.c.b16 %v1714, %v1682
    %v2547 = vpack.c.b16 %v1715, %v1683
    %v2548 = vpack.c.b16 %v1716, %v1684
    %v2549 = vpack.c.b16 %v1717, %v1685
    %v2550 = vpack.c.b16 %v1718, %v1686
    %v2551 = vpack.c.b16 %v1719, %v1687
    %v2552 = vpack.c.b16 %v1720, %v1688
    %v2553 = vpack.c.b16 %v1721, %v1689
    %v2554 = vpack.c.b16 %v1722, %v1690
    %v2555 = vpack.c.b16 %v1723, %v1691
    %v2556 = vpack.c.b16 %v1724, %v1692
    %v2557 = vpack.c.b16 %v1725, %v1693
    %v2558 = vpack.c.b16 %v1726, %v1694
    %v2559 = vpack.c.b16 %v1727, %v1695
    %v2560 = vpack.c.b16 %v1728, %v1696
    %v2561 = vpack.c.b16 %v1729, %v1697
    %v2562 = vpack.c.b16 %v1730, %v1698
    %v2563 = vpack.c.b16 %v1731, %v1699
    %v2564 = vpack.c.b16 %v1732, %v1700
    %v2565 = vpack.c.b16 %v1733, %v1701
    %v2566 = vpack.c.b16 %v1766, %v1734
    %v2567 = vpack.c.b16 %v1767, %v1735
    %v2568 = vpack.c.b16 %v1768, %v1736
    %v2569 = vpack.c.b16 %v1769, %v1737
    %v2570 = vpack.c.b16 %v1770, %v1738
    %v2571 = vpack.c.b16 %v1771, %v1739
    %v2572 = vpack.c.b16 %v1772, %v1740
    %v2573 = vpack.c.b16 %v1773, %v1741
    %v2574 = vpack.c.b16 %v1774, %v1742
    %v2575 = vpack.c.b16 %v1775, %v1743
    %v2576 = vpack.c.b16 %v1776, %v1744
    %v2577 = vpack.c.b16 %v1777, %v1745
    %v2578 = vpack.c.b16 %v1778, %v1746
    %v2579 = vpack.c.b16 %v1779, %v1747
    %v2580 = vpack.c.b16 %v1780, %v1748
    %v2581 = vpack.c.b16 %v1781, %v1749
    %v2582 = vpack.c.b16 %v1782, %v1750
    %v2583 = vpack.c.b16 %v1783, %v1751
    %v2584 = vpack.c.b16 %v1784, %v1752
    %v2585 = vpack.c.b16 %v1785, %v1753
    %v2586 = vpack.c.b16 %v1786, %v1754
    %v2587 = vpack.c.b16 %v1787, %v1755
    %v2588 = vpack.c.b16 %v1788, %v1756
    %v2589 = vpack.c.b16 %v1789, %v1757
    %v2590 = vpack.c.b16 %v1790, %v1758
    %v2591 = vpack.c.b16 %v1791, %v1759
    %v2592 = vpack.c.b16 %v1792, %v1760
    %v2593 = vpack.c.b16 %v1793, %v1761
    %v2594 = vpack.c.b16 %v1794, %v1762
    %v2595 = vpack.c.b16 %v1795, %v1763
    %v2596 = vpack.c.b16 %v1796, %v1764
    %v2597 = vpack.c.b16 %v1797, %v1765
    %v2598 = vpack.c.b16 %v1830, %v1798
    %v2599 = vpack.c.b16 %v1831, %v1799
    %v2600 = vpack.c.b16 %v1832, %v1800
    %v2601 = vpack.c.b16 %v1833, %v1801
    %v2602 = vpack.c.b16 %v1834, %v1802
    %v2603 = vpack.c.b16 %v1835, %v1803
    %v2604 = vpack.c.b16 %v1836, %v1804
    %v2605 = vpack.c.b16 %v1837, %v1805
    %v2606 = vpack.c.b16 %v1838, %v1806
    %v2607 = vpack.c.b16 %v1839, %v1807
    %v2608 = vpack.c.b16 %v1840, %v1808
    %v2609 = vpack.c.b16 %v1841, %v1809
    %v2610 = vpack.c.b16 %v1842, %v1810
    %v2611 = vpack.c.b16 %v1843, %v1811
    %v2612 = vpack.c.b16 %v1844, %v1812
    %v2613 = vpack.c.b16 %v1845, %v1813
    %v2614 = vpack.c.b16 %v1846, %v1814
    %v2615 = vpack.c.b16 %v1847, %v1815
    %v2616 = vpack.c.b16 %v1848, %v1816
    %v2617 = vpack.c.b16 %v1849, %v1817
    %v2618 = vpack.c.b16 %v1850, %v1818
    %v2619 = vpack.c.b16 %v1851, %v1819
    %v2620 = vpack.c.b16 %v1852, %v1820
    %v2621 = vpack.c.b16 %v1853, %v1821
    %v2622 = vpack.c.b16 %v1854, %v1822
    %v2623 = vpack.c.b16 %v1855, %v1823
    %v2624 = vpack.c.b16 %v1856, %v1824
    %v2625 = vpack.c.b16 %v1857, %v1825
    %v2626 = vpack.c.b16 %v1858, %v1826
    %v2627 = vpack.c.b16 %v1859, %v1827
    %v2628 = vpack.c.b16 %v1860, %v1828
    %v2629 = vpack.c.b16 %v1861, %v1829
    %v2630 = vpack.c.b16 %v1894, %v1862
    %v2631 = vpack.c.b16 %v1895, %v1863
    %v2632 = vpack.c.b16 %v1896, %v1864
    %v2633 = vpack.c.b16 %v1897, %v1865
    %v2634 = vpack.c.b16 %v1898, %v1866
    %v2635 = vpack.c.b16 %v1899, %v1867
    %v2636 = vpack.c.b16 %v1900, %v1868
    %v2637 = vpack.c.b16 %v1901, %v1869
    %v2638 = vpack.c.b16 %v1902, %v1870
    %v2639 = vpack.c.b16 %v1903, %v1871
    %v2640 = vpack.c.b16 %v1904, %v1872
    %v2641 = vpack.c.b16 %v1905, %v1873
    %v2642 = vpack.c.b16 %v1906, %v1874
    %v2643 = vpack.c.b16 %v1907, %v1875
    %v2644 = vpack.c.b16 %v1908, %v1876
    %v2645 = vpack.c.b16 %v1909, %v1877
    %v2646 = vpack.c.b16 %v1910, %v1878
    %v2647 = vpack.c.b16 %v1911, %v1879
    %v2648 = vpack.c.b16 %v1912, %v1880
    %v2649 = vpack.c.b16 %v1913, %v1881
    %v2650 = vpack.c.b16 %v1914, %v1882
    %v2651 = vpack.c.b16 %v1915, %v1883
    %v2652 = vpack.c.b16 %v1916, %v1884
    %v2653 = vpack.c.b16 %v1917, %v1885
    %v2654 = vpack.c.b16 %v1918, %v1886
    %v2655 = vpack.c.b16 %v1919, %v1887
    %v2656 = vpack.c.b16 %v1920, %v1888
    %v2657 = vpack.c.b16 %v1921, %v1889
    %v2658 = vpack.c.b16 %v1922, %v1890
    %v2659 = vpack.c.b16 %v1923, %v1891
    %v2660 = vpack.c.b16 %v1924, %v1892
    %v2661 = vpack.c.b16 %v1925, %v1893
    %v2662 = vpack.c.b16 %v1958, %v1926
    %v2663 = vpack.c.b16 %v1959, %v1927
    %v2664 = vpack.c.b16 %v1960, %v1928
    %v2665 = vpack.c.b16 %v1961, %v1929
    %v2666 = vpack.c.b16 %v1962, %v1930
    %v2667 = vpack.c.b16 %v1963, %v1931
    %v2668 = vpack.c.b16 %v1964, %v1932
    %v2669 = vpack.c.b16 %v1965, %v1933
    %v2670 = vpack.c.b16 %v1966, %v1934
    %v2671 = vpack.c.b16 %v1967, %v1935
    %v2672 = vpack.c.b16 %v1968, %v1936
    %v2673 = vpack.c.b16 %v1969, %v1937
    %v2674 = vpack.c.b16 %v1970, %v1938
    %v2675 = vpack.c.b16 %v1971, %v1939
    %v2676 = vpack.c.b16 %v1972, %v1940
    %v2677 = vpack.c.b16 %v1973, %v1941
    %v2678 = vpack.c.b16 %v1974, %v1942
    %v2679 = vpack.c.b16 %v1975, %v1943
    %v2680 = vpack.c.b16 %v1976, %v1944
    %v2681 = vpack.c.b16 %v1977, %v1945
    %v2682 = vpack.c.b16 %v1978, %v1946
    %v2683 = vpack.c.b16 %v1979, %v1947
    %v2684 = vpack.c.b16 %v1980, %v1948
    %v2685 = vpack.c.b16 %v1981, %v1949
    %v2686 = vpack.c.b16 %v1982, %v1950
    %v2687 = vpack.c.b16 %v1983, %v1951
    %v2688 = vpack.c.b16 %v1984, %v1952
    %v2689 = vpack.c.b16 %v1985, %v1953
    %v2690 = vpack.c.b16 %v1986, %v1954
    %v2691 = vpack.c.b16 %v1987, %v1955
    %v2692 = vpack.c.b16 %v1988, %v1956
    %v2693 = vpack.c.b16 %v1989, %v1957
    %v2694 = vpack.c.b16 %v2022, %v1990
    %v2695 = vpack.c.b16 %v2023, %v1991
    %v2696 = vpack.c.b16 %v2024, %v1992
    %v2697 = vpack.c.b16 %v2025, %v1993
    %v2698 = vpack.c.b16 %v2026, %v1994
    %v2699 = vpack.c.b16 %v2027, %v1995
    %v2700 = vpack.c.b16 %v2028, %v1996
    %v2701 = vpack.c.b16 %v2029, %v1997
    %v2702 = vpack.c.b16 %v2030, %v1998
    %v2703 = vpack.c.b16 %v2031, %v1999
    %v2704 = vpack.c.b16 %v2032, %v2000
    %v2705 = vpack.c.b16 %v2033, %v2001
    %v2706 = vpack.c.b16 %v2034, %v2002
    %v2707 = vpack.c.b16 %v2035, %v2003
    %v2708 = vpack.c.b16 %v2036, %v2004
    %v2709 = vpack.c.b16 %v2037, %v2005
    %v2710 = vpack.c.b16 %v2038, %v2006
    %v2711 = vpack.c.b16 %v2039, %v2007
    %v2712 = vpack.c.b16 %v2040, %v2008
    %v2713 = vpack.c.b16 %v2041, %v2009
    %v2714 = vpack.c.b16 %v2042, %v2010
    %v2715 = vpack.c.b16 %v2043, %v2011
    %v2716 = vpack.c.b16 %v2044, %v2012
    %v2717 = vpack.c.b16 %v2045, %v2013
    %v2718 = vpack.c.b16 %v2046, %v2014
    %v2719 = vpack.c.b16 %v2047, %v2015
    %v2720 = vpack.c.b16 %v2048, %v2016
    %v2721 = vpack.c.b16 %v2049, %v2017
    %v2722 = vpack.c.b16 %v2050, %v2018
    %v2723 = vpack.c.b16 %v2051, %v2019
    %v2724 = vpack.c.b16 %v2052, %v2020
    %v2725 = vpack.c.b16 %v2053, %v2021
    %v2726 = vpack.c.b16 %v2086, %v2054
    %v2727 = vpack.c.b16 %v2087, %v2055
    %v2728 = vpack.c.b16 %v2088, %v2056
    %v2729 = vpack.c.b16 %v2089, %v2057
    %v2730 = vpack.c.b16 %v2090, %v2058
    %v2731 = vpack.c.b16 %v2091, %v2059
    %v2732 = vpack.c.b16 %v2092, %v2060
    %v2733 = vpack.c.b16 %v2093, %v2061
    %v2734 = vpack.c.b16 %v2094, %v2062
    %v2735 = vpack.c.b16 %v2095, %v2063
    %v2736 = vpack.c.b16 %v2096, %v2064
    %v2737 = vpack.c.b16 %v2097, %v2065
    %v2738 = vpack.c.b16 %v2098, %v2066
    %v2739 = vpack.c.b16 %v2099, %v2067
    %v2740 = vpack.c.b16 %v2100, %v2068
    %v2741 = vpack.c.b16 %v2101, %v2069
    %v2742 = vpack.c.b16 %v2102, %v2070
    %v2743 = vpack.c.b16 %v2103, %v2071
    %v2744 = vpack.c.b16 %v2104, %v2072
    %v2745 = vpack.c.b16 %v2105, %v2073
    %v2746 = vpack.c.b16 %v2106, %v2074
    %v2747 = vpack.c.b16 %v2107, %v2075
    %v2748 = vpack.c.b16 %v2108, %v2076
    %v2749 = vpack.c.b16 %v2109, %v2077
    %v2750 = vpack.c.b16 %v2110, %v2078
    %v2751 = vpack.c.b16 %v2111, %v2079
    %v2752 = vpack.c.b16 %v2112, %v2080
    %v2753 = vpack.c.b16 %v2113, %v2081
    %v2754 = vpack.c.b16 %v2114, %v2082
    %v2755 = vpack.c.b16 %v2115, %v2083
    %v2756 = vpack.c.b16 %v2116, %v2084
    %v2757 = vpack.c.b16 %v2117, %v2085
    %v2758 = vpack.c.b16 %v2150, %v2118
    %v2759 = vpack.c.b16 %v2151, %v2119
    %v2760 = vpack.c.b16 %v2152, %v2120
    %v2761 = vpack.c.b16 %v2153, %v2121
    %v2762 = vpack.c.b16 %v2154, %v2122
    %v2763 = vpack.c.b16 %v2155, %v2123
    %v2764 = vpack.c.b16 %v2156, %v2124
    %v2765 = vpack.c.b16 %v2157, %v2125
    %v2766 = vpack.c.b16 %v2158, %v2126
    %v2767 = vpack.c.b16 %v2159, %v2127
    %v2768 = vpack.c.b16 %v2160, %v2128
    %v2769 = vpack.c.b16 %v2161, %v2129
    %v2770 = vpack.c.b16 %v2162, %v2130
    %v2771 = vpack.c.b16 %v2163, %v2131
    %v2772 = vpack.c.b16 %v2164, %v2132
    %v2773 = vpack.c.b16 %v2165, %v2133
    %v2774 = vpack.c.b16 %v2166, %v2134
    %v2775 = vpack.c.b16 %v2167, %v2135
    %v2776 = vpack.c.b16 %v2168, %v2136
    %v2777 = vpack.c.b16 %v2169, %v2137
    %v2778 = vpack.c.b16 %v2170, %v2138
    %v2779 = vpack.c.b16 %v2171, %v2139
    %v2780 = vpack.c.b16 %v2172, %v2140
    %v2781 = vpack.c.b16 %v2173, %v2141
    %v2782 = vpack.c.b16 %v2174, %v2142
    %v2783 = vpack.c.b16 %v2175, %v2143
    %v2784 = vpack.c.b16 %v2176, %v2144
    %v2785 = vpack.c.b16 %v2177, %v2145
    %v2786 = vpack.c.b16 %v2178, %v2146
    %v2787 = vpack.c.b16 %v2179, %v2147
    %v2788 = vpack.c.b16 %v2180, %v2148
    %v2789 = vpack.c.b16 %v2181, %v2149
    %v2790 = vpack.c.b16 %v2214, %v2182
    %v2791 = vpack.c.b16 %v2215, %v2183
    %v2792 = vpack.c.b16 %v2216, %v2184
    %v2793 = vpack.c.b16 %v2217, %v2185
    %v2794 = vpack.c.b16 %v2218, %v2186
    %v2795 = vpack.c.b16 %v2219, %v2187
    %v2796 = vpack.c.b16 %v2220, %v2188
    %v2797 = vpack.c.b16 %v2221, %v2189
    %v2798 = vpack.c.b16 %v2222, %v2190
    %v2799 = vpack.c.b16 %v2223, %v2191
    %v2800 = vpack.c.b16 %v2224, %v2192
    %v2801 = vpack.c.b16 %v2225, %v2193
    %v2802 = vpack.c.b16 %v2226, %v2194
    %v2803 = vpack.c.b16 %v2227, %v2195
    %v2804 = vpack.c.b16 %v2228, %v2196
    %v2805 = vpack.c.b16 %v2229, %v2197
    %v2806 = vpack.c.b16 %v2230, %v2198
    %v2807 = vpack.c.b16 %v2231, %v2199
    %v2808 = vpack.c.b16 %v2232, %v2200
    %v2809 = vpack.c.b16 %v2233, %v2201
    %v2810 = vpack.c.b16 %v2234, %v2202
    %v2811 = vpack.c.b16 %v2235, %v2203
    %v2812 = vpack.c.b16 %v2236, %v2204
    %v2813 = vpack.c.b16 %v2237, %v2205
    %v2814 = vpack.c.b16 %v2238, %v2206
    %v2815 = vpack.c.b16 %v2239, %v2207
    %v2816 = vpack.c.b16 %v2240, %v2208
    %v2817 = vpack.c.b16 %v2241, %v2209
    %v2818 = vpack.c.b16 %v2242, %v2210
    %v2819 = vpack.c.b16 %v2243, %v2211
    %v2820 = vpack.c.b16 %v2244, %v2212
    %v2821 = vpack.c.b16 %v2245, %v2213
    %v2822 = vpack.c.b16 %v2278, %v2246
    %v2823 = vpack.c.b16 %v2279, %v2247
    %v2824 = vpack.c.b16 %v2280, %v2248
    %v2825 = vpack.c.b16 %v2281, %v2249
    %v2826 = vpack.c.b16 %v2282, %v2250
    %v2827 = vpack.c.b16 %v2283, %v2251
    %v2828 = vpack.c.b16 %v2284, %v2252
    %v2829 = vpack.c.b16 %v2285, %v2253
    %v2830 = vpack.c.b16 %v2286, %v2254
    %v2831 = vpack.c.b16 %v2287, %v2255
    %v2832 = vpack.c.b16 %v2288, %v2256
    %v2833 = vpack.c.b16 %v2289, %v2257
    %v2834 = vpack.c.b16 %v2290, %v2258
    %v2835 = vpack.c.b16 %v2291, %v2259
    %v2836 = vpack.c.b16 %v2292, %v2260
    %v2837 = vpack.c.b16 %v2293, %v2261
    %v2838 = vpack.c.b16 %v2294, %v2262
    %v2839 = vpack.c.b16 %v2295, %v2263
    %v2840 = vpack.c.b16 %v2296, %v2264
    %v2841 = vpack.c.b16 %v2297, %v2265
    %v2842 = vpack.c.b16 %v2298, %v2266
    %v2843 = vpack.c.b16 %v2299, %v2267
    %v2844 = vpack.c.b16 %v2300, %v2268
    %v2845 = vpack.c.b16 %v2301, %v2269
    %v2846 = vpack.c.b16 %v2302, %v2270
    %v2847 = vpack.c.b16 %v2303, %v2271
    %v2848 = vpack.c.b16 %v2304, %v2272
    %v2849 = vpack.c.b16 %v2305, %v2273
    %v2850 = vpack.c.b16 %v2306, %v2274
    %v2851 = vpack.c.b16 %v2307, %v2275
    %v2852 = vpack.c.b16 %v2308, %v2276
    %v2853 = vpack.c.b16 %v2309, %v2277
    %v2854 = vpack.c.b16 %v2342, %v2310
    %v2855 = vpack.c.b16 %v2343, %v2311
    %v2856 = vpack.c.b16 %v2344, %v2312
    %v2857 = vpack.c.b16 %v2345, %v2313
    %v2858 = vpack.c.b16 %v2346, %v2314
    %v2859 = vpack.c.b16 %v2347, %v2315
    %v2860 = vpack.c.b16 %v2348, %v2316
    %v2861 = vpack.c.b16 %v2349, %v2317
    %v2862 = vpack.c.b16 %v2350, %v2318
    %v2863 = vpack.c.b16 %v2351, %v2319
    %v2864 = vpack.c.b16 %v2352, %v2320
    %v2865 = vpack.c.b16 %v2353, %v2321
    %v2866 = vpack.c.b16 %v2354, %v2322
    %v2867 = vpack.c.b16 %v2355, %v2323
    %v2868 = vpack.c.b16 %v2356, %v2324
    %v2869 = vpack.c.b16 %v2357, %v2325
    %v2870 = vpack.c.b16 %v2358, %v2326
    %v2871 = vpack.c.b16 %v2359, %v2327
    %v2872 = vpack.c.b16 %v2360, %v2328
    %v2873 = vpack.c.b16 %v2361, %v2329
    %v2874 = vpack.c.b16 %v2362, %v2330
    %v2875 = vpack.c.b16 %v2363, %v2331
    %v2876 = vpack.c.b16 %v2364, %v2332
    %v2877 = vpack.c.b16 %v2365, %v2333
    %v2878 = vpack.c.b16 %v2366, %v2334
    %v2879 = vpack.c.b16 %v2367, %v2335
    %v2880 = vpack.c.b16 %v2368, %v2336
    %v2881 = vpack.c.b16 %v2369, %v2337
    %v2882 = vpack.c.b16 %v2370, %v2338
    %v2883 = vpack.c.b16 %v2371, %v2339
    %v2884 = vpack.c.b16 %v2372, %v2340
    %v2885 = vpack.c.b16 %v2373, %v2341
    %3398 = vmatprep.subr.bf16.mxu0 %v2599
    %3399 = vmatpush1.bf16.msra.mxu0 %v2598
    %3400 = vmatprep.subr.bf16.mxu0 %v2567
    %3401 = vmatpush1.bf16.msra.mxu0 %v2566
    %3402 = vmatprep.subr.bf16.mxu0 %v2535
    %3403 = vmatpush1.bf16.msra.mxu0 %v2534
    %3404 = vmatprep.subr.bf16.mxu0 %v2503
    %3405 = vmatpush1.bf16.msra.mxu0 %v2502
    %3406 = vmatprep.subr.bf16.mxu0 %v2471
    %3407 = vmatpush1.bf16.msra.mxu0 %v2470
    %3408 = vmatprep.subr.bf16.mxu0 %v2439
    %3409 = vmatpush1.bf16.msra.mxu0 %v2438
    %3410 = vmatprep.subr.bf16.mxu0 %v2407
    %3411 = vmatpush1.bf16.msra.mxu0 %v2406
    %3412 = vmatprep.subr.bf16.mxu0 %v2375
    %3413 = vmatpush1.bf16.msra.mxu0 %v2374
    %3414 = vmatprep.subr.bf16.mxu0 %v2855
    %3415 = vmatpush2.bf16.msra.mxu0 %v2854
    %3416 = vmatprep.subr.bf16.mxu0 %v2823
    %3417 = vmatpush2.bf16.msra.mxu0 %v2822
    %3418 = vmatprep.subr.bf16.mxu0 %v2791
    %3419 = vmatpush2.bf16.msra.mxu0 %v2790
    %3420 = vmatprep.subr.bf16.mxu0 %v2759
    %3421 = vmatpush2.bf16.msra.mxu0 %v2758
    %3422 = vmatprep.subr.bf16.mxu0 %v2727
    %3423 = vmatpush2.bf16.msra.mxu0 %v2726
    %3424 = vmatprep.subr.bf16.mxu0 %v2695
    %3425 = vmatpush2.bf16.msra.mxu0 %v2694
    %3426 = vmatprep.subr.bf16.mxu0 %v2663
    %3427 = vmatpush2.bf16.msra.mxu0 %v2662
    %3428 = vmatprep.subr.bf16.mxu0 %v2631
    %3429 = vmatpush2.bf16.msra.mxu0 %v2630
    %3430 = vmatprep.mubr.bf16.mxu0 %v157
    %3431 = vmatmul.mubr.bf16.gmra.mxu0 %v156
    %v3432 = vpop.f32.mrf.mxu0
    %v3433 = vadd.f32 %v681, %v3432
    %v3434 = vpop.f32.mrf.mxu0
    %v3435 = vadd.f32 %v685, %v3434
    %v3436 = vpop.f32.mrf.mxu0
    %v3437 = vpop.f32.mrf.mxu0
    %3438 = vdwg.mxu0
    %3439 = vmatprep.subr.bf16.mxu0 %v2601
    %3440 = vmatpush1.bf16.msra.mxu0 %v2600
    %3441 = vmatprep.subr.bf16.mxu0 %v2569
    %3442 = vmatpush1.bf16.msra.mxu0 %v2568
    %3443 = vmatprep.subr.bf16.mxu0 %v2537
    %3444 = vmatpush1.bf16.msra.mxu0 %v2536
    %3445 = vmatprep.subr.bf16.mxu0 %v2505
    %3446 = vmatpush1.bf16.msra.mxu0 %v2504
    %3447 = vmatprep.subr.bf16.mxu0 %v2473
    %3448 = vmatpush1.bf16.msra.mxu0 %v2472
    %3449 = vmatprep.subr.bf16.mxu0 %v2441
    %3450 = vmatpush1.bf16.msra.mxu0 %v2440
    %3451 = vmatprep.subr.bf16.mxu0 %v2409
    %3452 = vmatpush1.bf16.msra.mxu0 %v2408
    %3453 = vmatprep.subr.bf16.mxu0 %v2377
    %3454 = vmatpush1.bf16.msra.mxu0 %v2376
    %3455 = vmatprep.subr.bf16.mxu0 %v2857
    %3456 = vmatpush2.bf16.msra.mxu0 %v2856
    %3457 = vmatprep.subr.bf16.mxu0 %v2825
    %3458 = vmatpush2.bf16.msra.mxu0 %v2824
    %3459 = vmatprep.subr.bf16.mxu0 %v2793
    %3460 = vmatpush2.bf16.msra.mxu0 %v2792
    %3461 = vmatprep.subr.bf16.mxu0 %v2761
    %3462 = vmatpush2.bf16.msra.mxu0 %v2760
    %3463 = vmatprep.subr.bf16.mxu0 %v2729
    %3464 = vmatpush2.bf16.msra.mxu0 %v2728
    %3465 = vmatprep.subr.bf16.mxu0 %v2697
    %3466 = vmatpush2.bf16.msra.mxu0 %v2696
    %3467 = vmatprep.subr.bf16.mxu0 %v2665
    %3468 = vmatpush2.bf16.msra.mxu0 %v2664
    %3469 = vmatprep.subr.bf16.mxu0 %v2633
    %3470 = vmatpush2.bf16.msra.mxu0 %v2632
    %3471 = vmatprep.mubr.bf16.mxu0 %v157
    %3472 = vmatmul.mubr.bf16.gmra.mxu0 %v156
    %v3473 = vpop.f32.mrf.mxu0
    %v3474 = vadd.f32 %v689, %v3473
    %v3475 = vpop.f32.mrf.mxu0
    %v3476 = vadd.f32 %v693, %v3475
    %v3477 = vpop.f32.mrf.mxu0
    %v3478 = vpop.f32.mrf.mxu0
    %3479 = vdwg.mxu0
    %3480 = vmatprep.subr.bf16.mxu0 %v2603
    %3481 = vmatpush1.bf16.msra.mxu0 %v2602
    %3482 = vmatprep.subr.bf16.mxu0 %v2571
    %3483 = vmatpush1.bf16.msra.mxu0 %v2570
    %3484 = vmatprep.subr.bf16.mxu0 %v2539
    %3485 = vmatpush1.bf16.msra.mxu0 %v2538
    %3486 = vmatprep.subr.bf16.mxu0 %v2507
    %3487 = vmatpush1.bf16.msra.mxu0 %v2506
    %3488 = vmatprep.subr.bf16.mxu0 %v2475
    %3489 = vmatpush1.bf16.msra.mxu0 %v2474
    %3490 = vmatprep.subr.bf16.mxu0 %v2443
    %3491 = vmatpush1.bf16.msra.mxu0 %v2442
    %3492 = vmatprep.subr.bf16.mxu0 %v2411
    %3493 = vmatpush1.bf16.msra.mxu0 %v2410
    %3494 = vmatprep.subr.bf16.mxu0 %v2379
    %3495 = vmatpush1.bf16.msra.mxu0 %v2378
    %3496 = vmatprep.subr.bf16.mxu0 %v2859
    %3497 = vmatpush2.bf16.msra.mxu0 %v2858
    %3498 = vmatprep.subr.bf16.mxu0 %v2827
    %3499 = vmatpush2.bf16.msra.mxu0 %v2826
    %3500 = vmatprep.subr.bf16.mxu0 %v2795
    %3501 = vmatpush2.bf16.msra.mxu0 %v2794
    %3502 = vmatprep.subr.bf16.mxu0 %v2763
    %3503 = vmatpush2.bf16.msra.mxu0 %v2762
    %3504 = vmatprep.subr.bf16.mxu0 %v2731
    %3505 = vmatpush2.bf16.msra.mxu0 %v2730
    %3506 = vmatprep.subr.bf16.mxu0 %v2699
    %3507 = vmatpush2.bf16.msra.mxu0 %v2698
    %3508 = vmatprep.subr.bf16.mxu0 %v2667
    %3509 = vmatpush2.bf16.msra.mxu0 %v2666
    %3510 = vmatprep.subr.bf16.mxu0 %v2635
    %3511 = vmatpush2.bf16.msra.mxu0 %v2634
    %3512 = vmatprep.mubr.bf16.mxu0 %v157
    %3513 = vmatmul.mubr.bf16.gmra.mxu0 %v156
    %v3514 = vpop.f32.mrf.mxu0
    %v3515 = vadd.f32 %v697, %v3514
    %v3516 = vpop.f32.mrf.mxu0
    %v3517 = vadd.f32 %v701, %v3516
    %v3518 = vpop.f32.mrf.mxu0
    %v3519 = vpop.f32.mrf.mxu0
    %3520 = vdwg.mxu0
    %3521 = vmatprep.subr.bf16.mxu0 %v2605
    %3522 = vmatpush1.bf16.msra.mxu0 %v2604
    %3523 = vmatprep.subr.bf16.mxu0 %v2573
    %3524 = vmatpush1.bf16.msra.mxu0 %v2572
    %3525 = vmatprep.subr.bf16.mxu0 %v2541
    %3526 = vmatpush1.bf16.msra.mxu0 %v2540
    %3527 = vmatprep.subr.bf16.mxu0 %v2509
    %3528 = vmatpush1.bf16.msra.mxu0 %v2508
    %3529 = vmatprep.subr.bf16.mxu0 %v2477
    %3530 = vmatpush1.bf16.msra.mxu0 %v2476
    %3531 = vmatprep.subr.bf16.mxu0 %v2445
    %3532 = vmatpush1.bf16.msra.mxu0 %v2444
    %3533 = vmatprep.subr.bf16.mxu0 %v2413
    %3534 = vmatpush1.bf16.msra.mxu0 %v2412
    %3535 = vmatprep.subr.bf16.mxu0 %v2381
    %3536 = vmatpush1.bf16.msra.mxu0 %v2380
    %3537 = vmatprep.subr.bf16.mxu0 %v2861
    %3538 = vmatpush2.bf16.msra.mxu0 %v2860
    %3539 = vmatprep.subr.bf16.mxu0 %v2829
    %3540 = vmatpush2.bf16.msra.mxu0 %v2828
    %3541 = vmatprep.subr.bf16.mxu0 %v2797
    %3542 = vmatpush2.bf16.msra.mxu0 %v2796
    %3543 = vmatprep.subr.bf16.mxu0 %v2765
    %3544 = vmatpush2.bf16.msra.mxu0 %v2764
    %3545 = vmatprep.subr.bf16.mxu0 %v2733
    %3546 = vmatpush2.bf16.msra.mxu0 %v2732
    %3547 = vmatprep.subr.bf16.mxu0 %v2701
    %3548 = vmatpush2.bf16.msra.mxu0 %v2700
    %3549 = vmatprep.subr.bf16.mxu0 %v2669
    %3550 = vmatpush2.bf16.msra.mxu0 %v2668
    %3551 = vmatprep.subr.bf16.mxu0 %v2637
    %3552 = vmatpush2.bf16.msra.mxu0 %v2636
    %3553 = vmatprep.mubr.bf16.mxu0 %v157
    %3554 = vmatmul.mubr.bf16.gmra.mxu0 %v156
    %v3555 = vpop.f32.mrf.mxu0
    %v3556 = vadd.f32 %v705, %v3555
    %v3557 = vpop.f32.mrf.mxu0
    %v3558 = vadd.f32 %v709, %v3557
    %v3559 = vpop.f32.mrf.mxu0
    %v3560 = vpop.f32.mrf.mxu0
    %3561 = vdwg.mxu0
    %3562 = vmatprep.subr.bf16.mxu0 %v2607
    %3563 = vmatpush1.bf16.msra.mxu0 %v2606
    %3564 = vmatprep.subr.bf16.mxu0 %v2575
    %3565 = vmatpush1.bf16.msra.mxu0 %v2574
    %3566 = vmatprep.subr.bf16.mxu0 %v2543
    %3567 = vmatpush1.bf16.msra.mxu0 %v2542
    %3568 = vmatprep.subr.bf16.mxu0 %v2511
    %3569 = vmatpush1.bf16.msra.mxu0 %v2510
    %3570 = vmatprep.subr.bf16.mxu0 %v2479
    %3571 = vmatpush1.bf16.msra.mxu0 %v2478
    %3572 = vmatprep.subr.bf16.mxu0 %v2447
    %3573 = vmatpush1.bf16.msra.mxu0 %v2446
    %3574 = vmatprep.subr.bf16.mxu0 %v2415
    %3575 = vmatpush1.bf16.msra.mxu0 %v2414
    %3576 = vmatprep.subr.bf16.mxu0 %v2383
    %3577 = vmatpush1.bf16.msra.mxu0 %v2382
    %3578 = vmatprep.subr.bf16.mxu0 %v2863
    %3579 = vmatpush2.bf16.msra.mxu0 %v2862
    %3580 = vmatprep.subr.bf16.mxu0 %v2831
    %3581 = vmatpush2.bf16.msra.mxu0 %v2830
    %3582 = vmatprep.subr.bf16.mxu0 %v2799
    %3583 = vmatpush2.bf16.msra.mxu0 %v2798
    %3584 = vmatprep.subr.bf16.mxu0 %v2767
    %3585 = vmatpush2.bf16.msra.mxu0 %v2766
    %3586 = vmatprep.subr.bf16.mxu0 %v2735
    %3587 = vmatpush2.bf16.msra.mxu0 %v2734
    %3588 = vmatprep.subr.bf16.mxu0 %v2703
    %3589 = vmatpush2.bf16.msra.mxu0 %v2702
    %3590 = vmatprep.subr.bf16.mxu0 %v2671
    %3591 = vmatpush2.bf16.msra.mxu0 %v2670
    %3592 = vmatprep.subr.bf16.mxu0 %v2639
    %3593 = vmatpush2.bf16.msra.mxu0 %v2638
    %3594 = vmatprep.mubr.bf16.mxu0 %v157
    %3595 = vmatmul.mubr.bf16.gmra.mxu0 %v156
    %v3596 = vpop.f32.mrf.mxu0
    %v3597 = vadd.f32 %v713, %v3596
    %v3598 = vpop.f32.mrf.mxu0
    %v3599 = vadd.f32 %v717, %v3598
    %v3600 = vpop.f32.mrf.mxu0
    %v3601 = vpop.f32.mrf.mxu0
    %3602 = vdwg.mxu0
    %3603 = vmatprep.subr.bf16.mxu0 %v2609
    %3604 = vmatpush1.bf16.msra.mxu0 %v2608
    %3605 = vmatprep.subr.bf16.mxu0 %v2577
    %3606 = vmatpush1.bf16.msra.mxu0 %v2576
    %3607 = vmatprep.subr.bf16.mxu0 %v2545
    %3608 = vmatpush1.bf16.msra.mxu0 %v2544
    %3609 = vmatprep.subr.bf16.mxu0 %v2513
    %3610 = vmatpush1.bf16.msra.mxu0 %v2512
    %3611 = vmatprep.subr.bf16.mxu0 %v2481
    %3612 = vmatpush1.bf16.msra.mxu0 %v2480
    %3613 = vmatprep.subr.bf16.mxu0 %v2449
    %3614 = vmatpush1.bf16.msra.mxu0 %v2448
    %3615 = vmatprep.subr.bf16.mxu0 %v2417
    %3616 = vmatpush1.bf16.msra.mxu0 %v2416
    %3617 = vmatprep.subr.bf16.mxu0 %v2385
    %3618 = vmatpush1.bf16.msra.mxu0 %v2384
    %3619 = vmatprep.subr.bf16.mxu0 %v2865
    %3620 = vmatpush2.bf16.msra.mxu0 %v2864
    %3621 = vmatprep.subr.bf16.mxu0 %v2833
    %3622 = vmatpush2.bf16.msra.mxu0 %v2832
    %3623 = vmatprep.subr.bf16.mxu0 %v2801
    %3624 = vmatpush2.bf16.msra.mxu0 %v2800
    %3625 = vmatprep.subr.bf16.mxu0 %v2769
    %3626 = vmatpush2.bf16.msra.mxu0 %v2768
    %3627 = vmatprep.subr.bf16.mxu0 %v2737
    %3628 = vmatpush2.bf16.msra.mxu0 %v2736
    %3629 = vmatprep.subr.bf16.mxu0 %v2705
    %3630 = vmatpush2.bf16.msra.mxu0 %v2704
    %3631 = vmatprep.subr.bf16.mxu0 %v2673
    %3632 = vmatpush2.bf16.msra.mxu0 %v2672
    %3633 = vmatprep.subr.bf16.mxu0 %v2641
    %3634 = vmatpush2.bf16.msra.mxu0 %v2640
    %3635 = vmatprep.mubr.bf16.mxu0 %v157
    %3636 = vmatmul.mubr.bf16.gmra.mxu0 %v156
    %v3637 = vpop.f32.mrf.mxu0
    %v3638 = vadd.f32 %v721, %v3637
    %v3639 = vpop.f32.mrf.mxu0
    %v3640 = vadd.f32 %v725, %v3639
    %v3641 = vpop.f32.mrf.mxu0
    %v3642 = vpop.f32.mrf.mxu0
    %3643 = vdwg.mxu0
    %3644 = vmatprep.subr.bf16.mxu0 %v2611
    %3645 = vmatpush1.bf16.msra.mxu0 %v2610
    %3646 = vmatprep.subr.bf16.mxu0 %v2579
    %3647 = vmatpush1.bf16.msra.mxu0 %v2578
    %3648 = vmatprep.subr.bf16.mxu0 %v2547
    %3649 = vmatpush1.bf16.msra.mxu0 %v2546
    %3650 = vmatprep.subr.bf16.mxu0 %v2515
    %3651 = vmatpush1.bf16.msra.mxu0 %v2514
    %3652 = vmatprep.subr.bf16.mxu0 %v2483
    %3653 = vmatpush1.bf16.msra.mxu0 %v2482
    %3654 = vmatprep.subr.bf16.mxu0 %v2451
    %3655 = vmatpush1.bf16.msra.mxu0 %v2450
    %3656 = vmatprep.subr.bf16.mxu0 %v2419
    %3657 = vmatpush1.bf16.msra.mxu0 %v2418
    %3658 = vmatprep.subr.bf16.mxu0 %v2387
    %3659 = vmatpush1.bf16.msra.mxu0 %v2386
    %3660 = vmatprep.subr.bf16.mxu0 %v2867
    %3661 = vmatpush2.bf16.msra.mxu0 %v2866
    %3662 = vmatprep.subr.bf16.mxu0 %v2835
    %3663 = vmatpush2.bf16.msra.mxu0 %v2834
    %3664 = vmatprep.subr.bf16.mxu0 %v2803
    %3665 = vmatpush2.bf16.msra.mxu0 %v2802
    %3666 = vmatprep.subr.bf16.mxu0 %v2771
    %3667 = vmatpush2.bf16.msra.mxu0 %v2770
    %3668 = vmatprep.subr.bf16.mxu0 %v2739
    %3669 = vmatpush2.bf16.msra.mxu0 %v2738
    %3670 = vmatprep.subr.bf16.mxu0 %v2707
    %3671 = vmatpush2.bf16.msra.mxu0 %v2706
    %3672 = vmatprep.subr.bf16.mxu0 %v2675
    %3673 = vmatpush2.bf16.msra.mxu0 %v2674
    %3674 = vmatprep.subr.bf16.mxu0 %v2643
    %3675 = vmatpush2.bf16.msra.mxu0 %v2642
    %3676 = vmatprep.mubr.bf16.mxu0 %v157
    %3677 = vmatmul.mubr.bf16.gmra.mxu0 %v156
    %v3678 = vpop.f32.mrf.mxu0
    %v3679 = vadd.f32 %v729, %v3678
    %v3680 = vpop.f32.mrf.mxu0
    %v3681 = vadd.f32 %v733, %v3680
    %v3682 = vpop.f32.mrf.mxu0
    %v3683 = vpop.f32.mrf.mxu0
    %3684 = vdwg.mxu0
    %3685 = vmatprep.subr.bf16.mxu0 %v2613
    %3686 = vmatpush1.bf16.msra.mxu0 %v2612
    %3687 = vmatprep.subr.bf16.mxu0 %v2581
    %3688 = vmatpush1.bf16.msra.mxu0 %v2580
    %3689 = vmatprep.subr.bf16.mxu0 %v2549
    %3690 = vmatpush1.bf16.msra.mxu0 %v2548
    %3691 = vmatprep.subr.bf16.mxu0 %v2517
    %3692 = vmatpush1.bf16.msra.mxu0 %v2516
    %3693 = vmatprep.subr.bf16.mxu0 %v2485
    %3694 = vmatpush1.bf16.msra.mxu0 %v2484
    %3695 = vmatprep.subr.bf16.mxu0 %v2453
    %3696 = vmatpush1.bf16.msra.mxu0 %v2452
    %3697 = vmatprep.subr.bf16.mxu0 %v2421
    %3698 = vmatpush1.bf16.msra.mxu0 %v2420
    %3699 = vmatprep.subr.bf16.mxu0 %v2389
    %3700 = vmatpush1.bf16.msra.mxu0 %v2388
    %3701 = vmatprep.subr.bf16.mxu0 %v2869
    %3702 = vmatpush2.bf16.msra.mxu0 %v2868
    %3703 = vmatprep.subr.bf16.mxu0 %v2837
    %3704 = vmatpush2.bf16.msra.mxu0 %v2836
    %3705 = vmatprep.subr.bf16.mxu0 %v2805
    %3706 = vmatpush2.bf16.msra.mxu0 %v2804
    %3707 = vmatprep.subr.bf16.mxu0 %v2773
    %3708 = vmatpush2.bf16.msra.mxu0 %v2772
    %3709 = vmatprep.subr.bf16.mxu0 %v2741
    %3710 = vmatpush2.bf16.msra.mxu0 %v2740
    %3711 = vmatprep.subr.bf16.mxu0 %v2709
    %3712 = vmatpush2.bf16.msra.mxu0 %v2708
    %3713 = vmatprep.subr.bf16.mxu0 %v2677
    %3714 = vmatpush2.bf16.msra.mxu0 %v2676
    %3715 = vmatprep.subr.bf16.mxu0 %v2645
    %3716 = vmatpush2.bf16.msra.mxu0 %v2644
    %3717 = vmatprep.mubr.bf16.mxu0 %v157
    %3718 = vmatmul.mubr.bf16.gmra.mxu0 %v156
    %v3719 = vpop.f32.mrf.mxu0
    %v3720 = vadd.f32 %v737, %v3719
    %v3721 = vpop.f32.mrf.mxu0
    %v3722 = vadd.f32 %v741, %v3721
    %v3723 = vpop.f32.mrf.mxu0
    %v3724 = vpop.f32.mrf.mxu0
    %3725 = vdwg.mxu0
    %3726 = vmatprep.subr.bf16.mxu0 %v2615
    %3727 = vmatpush1.bf16.msra.mxu0 %v2614
    %3728 = vmatprep.subr.bf16.mxu0 %v2583
    %3729 = vmatpush1.bf16.msra.mxu0 %v2582
    %3730 = vmatprep.subr.bf16.mxu0 %v2551
    %3731 = vmatpush1.bf16.msra.mxu0 %v2550
    %3732 = vmatprep.subr.bf16.mxu0 %v2519
    %3733 = vmatpush1.bf16.msra.mxu0 %v2518
    %3734 = vmatprep.subr.bf16.mxu0 %v2487
    %3735 = vmatpush1.bf16.msra.mxu0 %v2486
    %3736 = vmatprep.subr.bf16.mxu0 %v2455
    %3737 = vmatpush1.bf16.msra.mxu0 %v2454
    %3738 = vmatprep.subr.bf16.mxu0 %v2423
    %3739 = vmatpush1.bf16.msra.mxu0 %v2422
    %3740 = vmatprep.subr.bf16.mxu0 %v2391
    %3741 = vmatpush1.bf16.msra.mxu0 %v2390
    %3742 = vmatprep.subr.bf16.mxu0 %v2871
    %3743 = vmatpush2.bf16.msra.mxu0 %v2870
    %3744 = vmatprep.subr.bf16.mxu0 %v2839
    %3745 = vmatpush2.bf16.msra.mxu0 %v2838
    %3746 = vmatprep.subr.bf16.mxu0 %v2807
    %3747 = vmatpush2.bf16.msra.mxu0 %v2806
    %3748 = vmatprep.subr.bf16.mxu0 %v2775
    %3749 = vmatpush2.bf16.msra.mxu0 %v2774
    %3750 = vmatprep.subr.bf16.mxu0 %v2743
    %3751 = vmatpush2.bf16.msra.mxu0 %v2742
    %3752 = vmatprep.subr.bf16.mxu0 %v2711
    %3753 = vmatpush2.bf16.msra.mxu0 %v2710
    %3754 = vmatprep.subr.bf16.mxu0 %v2679
    %3755 = vmatpush2.bf16.msra.mxu0 %v2678
    %3756 = vmatprep.subr.bf16.mxu0 %v2647
    %3757 = vmatpush2.bf16.msra.mxu0 %v2646
    %3758 = vmatprep.mubr.bf16.mxu0 %v157
    %3759 = vmatmul.mubr.bf16.gmra.mxu0 %v156
    %v3760 = vpop.f32.mrf.mxu0
    %v3761 = vadd.f32 %v745, %v3760
    %v3762 = vpop.f32.mrf.mxu0
    %v3763 = vadd.f32 %v749, %v3762
    %v3764 = vpop.f32.mrf.mxu0
    %v3765 = vpop.f32.mrf.mxu0
    %3766 = vdwg.mxu0
    %3767 = vmatprep.subr.bf16.mxu0 %v2617
    %3768 = vmatpush1.bf16.msra.mxu0 %v2616
    %3769 = vmatprep.subr.bf16.mxu0 %v2585
    %3770 = vmatpush1.bf16.msra.mxu0 %v2584
    %3771 = vmatprep.subr.bf16.mxu0 %v2553
    %3772 = vmatpush1.bf16.msra.mxu0 %v2552
    %3773 = vmatprep.subr.bf16.mxu0 %v2521
    %3774 = vmatpush1.bf16.msra.mxu0 %v2520
    %3775 = vmatprep.subr.bf16.mxu0 %v2489
    %3776 = vmatpush1.bf16.msra.mxu0 %v2488
    %3777 = vmatprep.subr.bf16.mxu0 %v2457
    %3778 = vmatpush1.bf16.msra.mxu0 %v2456
    %3779 = vmatprep.subr.bf16.mxu0 %v2425
    %3780 = vmatpush1.bf16.msra.mxu0 %v2424
    %3781 = vmatprep.subr.bf16.mxu0 %v2393
    %3782 = vmatpush1.bf16.msra.mxu0 %v2392
    %3783 = vmatprep.subr.bf16.mxu0 %v2873
    %3784 = vmatpush2.bf16.msra.mxu0 %v2872
    %3785 = vmatprep.subr.bf16.mxu0 %v2841
    %3786 = vmatpush2.bf16.msra.mxu0 %v2840
    %3787 = vmatprep.subr.bf16.mxu0 %v2809
    %3788 = vmatpush2.bf16.msra.mxu0 %v2808
    %3789 = vmatprep.subr.bf16.mxu0 %v2777
    %3790 = vmatpush2.bf16.msra.mxu0 %v2776
    %3791 = vmatprep.subr.bf16.mxu0 %v2745
    %3792 = vmatpush2.bf16.msra.mxu0 %v2744
    %3793 = vmatprep.subr.bf16.mxu0 %v2713
    %3794 = vmatpush2.bf16.msra.mxu0 %v2712
    %3795 = vmatprep.subr.bf16.mxu0 %v2681
    %3796 = vmatpush2.bf16.msra.mxu0 %v2680
    %3797 = vmatprep.subr.bf16.mxu0 %v2649
    %3798 = vmatpush2.bf16.msra.mxu0 %v2648
    %3799 = vmatprep.mubr.bf16.mxu0 %v157
    %3800 = vmatmul.mubr.bf16.gmra.mxu0 %v156
    %v3801 = vpop.f32.mrf.mxu0
    %v3802 = vadd.f32 %v753, %v3801
    %v3803 = vpop.f32.mrf.mxu0
    %v3804 = vadd.f32 %v757, %v3803
    %v3805 = vpop.f32.mrf.mxu0
    %v3806 = vpop.f32.mrf.mxu0
    %3807 = vdwg.mxu0
    %3808 = vmatprep.subr.bf16.mxu0 %v2619
    %3809 = vmatpush1.bf16.msra.mxu0 %v2618
    %3810 = vmatprep.subr.bf16.mxu0 %v2587
    %3811 = vmatpush1.bf16.msra.mxu0 %v2586
    %3812 = vmatprep.subr.bf16.mxu0 %v2555
    %3813 = vmatpush1.bf16.msra.mxu0 %v2554
    %3814 = vmatprep.subr.bf16.mxu0 %v2523
    %3815 = vmatpush1.bf16.msra.mxu0 %v2522
    %3816 = vmatprep.subr.bf16.mxu0 %v2491
    %3817 = vmatpush1.bf16.msra.mxu0 %v2490
    %3818 = vmatprep.subr.bf16.mxu0 %v2459
    %3819 = vmatpush1.bf16.msra.mxu0 %v2458
    %3820 = vmatprep.subr.bf16.mxu0 %v2427
    %3821 = vmatpush1.bf16.msra.mxu0 %v2426
    %3822 = vmatprep.subr.bf16.mxu0 %v2395
    %3823 = vmatpush1.bf16.msra.mxu0 %v2394
    %3824 = vmatprep.subr.bf16.mxu0 %v2875
    %3825 = vmatpush2.bf16.msra.mxu0 %v2874
    %3826 = vmatprep.subr.bf16.mxu0 %v2843
    %3827 = vmatpush2.bf16.msra.mxu0 %v2842
    %3828 = vmatprep.subr.bf16.mxu0 %v2811
    %3829 = vmatpush2.bf16.msra.mxu0 %v2810
    %3830 = vmatprep.subr.bf16.mxu0 %v2779
    %3831 = vmatpush2.bf16.msra.mxu0 %v2778
    %3832 = vmatprep.subr.bf16.mxu0 %v2747
    %3833 = vmatpush2.bf16.msra.mxu0 %v2746
    %3834 = vmatprep.subr.bf16.mxu0 %v2715
    %3835 = vmatpush2.bf16.msra.mxu0 %v2714
    %3836 = vmatprep.subr.bf16.mxu0 %v2683
    %3837 = vmatpush2.bf16.msra.mxu0 %v2682
    %3838 = vmatprep.subr.bf16.mxu0 %v2651
    %3839 = vmatpush2.bf16.msra.mxu0 %v2650
    %3840 = vmatprep.mubr.bf16.mxu0 %v157
    %3841 = vmatmul.mubr.bf16.gmra.mxu0 %v156
    %v3842 = vpop.f32.mrf.mxu0
    %v3843 = vadd.f32 %v761, %v3842
    %v3844 = vpop.f32.mrf.mxu0
    %v3845 = vadd.f32 %v765, %v3844
    %v3846 = vpop.f32.mrf.mxu0
    %v3847 = vpop.f32.mrf.mxu0
    %3848 = vdwg.mxu0
    %3849 = vmatprep.subr.bf16.mxu0 %v2621
    %3850 = vmatpush1.bf16.msra.mxu0 %v2620
    %3851 = vmatprep.subr.bf16.mxu0 %v2589
    %3852 = vmatpush1.bf16.msra.mxu0 %v2588
    %3853 = vmatprep.subr.bf16.mxu0 %v2557
    %3854 = vmatpush1.bf16.msra.mxu0 %v2556
    %3855 = vmatprep.subr.bf16.mxu0 %v2525
    %3856 = vmatpush1.bf16.msra.mxu0 %v2524
    %3857 = vmatprep.subr.bf16.mxu0 %v2493
    %3858 = vmatpush1.bf16.msra.mxu0 %v2492
    %3859 = vmatprep.subr.bf16.mxu0 %v2461
    %3860 = vmatpush1.bf16.msra.mxu0 %v2460
    %3861 = vmatprep.subr.bf16.mxu0 %v2429
    %3862 = vmatpush1.bf16.msra.mxu0 %v2428
    %3863 = vmatprep.subr.bf16.mxu0 %v2397
    %3864 = vmatpush1.bf16.msra.mxu0 %v2396
    %3865 = vmatprep.subr.bf16.mxu0 %v2877
    %3866 = vmatpush2.bf16.msra.mxu0 %v2876
    %3867 = vmatprep.subr.bf16.mxu0 %v2845
    %3868 = vmatpush2.bf16.msra.mxu0 %v2844
    %3869 = vmatprep.subr.bf16.mxu0 %v2813
    %3870 = vmatpush2.bf16.msra.mxu0 %v2812
    %3871 = vmatprep.subr.bf16.mxu0 %v2781
    %3872 = vmatpush2.bf16.msra.mxu0 %v2780
    %3873 = vmatprep.subr.bf16.mxu0 %v2749
    %3874 = vmatpush2.bf16.msra.mxu0 %v2748
    %3875 = vmatprep.subr.bf16.mxu0 %v2717
    %3876 = vmatpush2.bf16.msra.mxu0 %v2716
    %3877 = vmatprep.subr.bf16.mxu0 %v2685
    %3878 = vmatpush2.bf16.msra.mxu0 %v2684
    %3879 = vmatprep.subr.bf16.mxu0 %v2653
    %3880 = vmatpush2.bf16.msra.mxu0 %v2652
    %3881 = vmatprep.mubr.bf16.mxu0 %v157
    %3882 = vmatmul.mubr.bf16.gmra.mxu0 %v156
    %v3883 = vpop.f32.mrf.mxu0
    %v3884 = vadd.f32 %v769, %v3883
    %v3885 = vpop.f32.mrf.mxu0
    %v3886 = vadd.f32 %v773, %v3885
    %v3887 = vpop.f32.mrf.mxu0
    %v3888 = vpop.f32.mrf.mxu0
    %3889 = vdwg.mxu0
    %3890 = vmatprep.subr.bf16.mxu0 %v2623
    %3891 = vmatpush1.bf16.msra.mxu0 %v2622
    %3892 = vmatprep.subr.bf16.mxu0 %v2591
    %3893 = vmatpush1.bf16.msra.mxu0 %v2590
    %3894 = vmatprep.subr.bf16.mxu0 %v2559
    %3895 = vmatpush1.bf16.msra.mxu0 %v2558
    %3896 = vmatprep.subr.bf16.mxu0 %v2527
    %3897 = vmatpush1.bf16.msra.mxu0 %v2526
    %3898 = vmatprep.subr.bf16.mxu0 %v2495
    %3899 = vmatpush1.bf16.msra.mxu0 %v2494
    %3900 = vmatprep.subr.bf16.mxu0 %v2463
    %3901 = vmatpush1.bf16.msra.mxu0 %v2462
    %3902 = vmatprep.subr.bf16.mxu0 %v2431
    %3903 = vmatpush1.bf16.msra.mxu0 %v2430
    %3904 = vmatprep.subr.bf16.mxu0 %v2399
    %3905 = vmatpush1.bf16.msra.mxu0 %v2398
    %3906 = vmatprep.subr.bf16.mxu0 %v2879
    %3907 = vmatpush2.bf16.msra.mxu0 %v2878
    %3908 = vmatprep.subr.bf16.mxu0 %v2847
    %3909 = vmatpush2.bf16.msra.mxu0 %v2846
    %3910 = vmatprep.subr.bf16.mxu0 %v2815
    %3911 = vmatpush2.bf16.msra.mxu0 %v2814
    %3912 = vmatprep.subr.bf16.mxu0 %v2783
    %3913 = vmatpush2.bf16.msra.mxu0 %v2782
    %3914 = vmatprep.subr.bf16.mxu0 %v2751
    %3915 = vmatpush2.bf16.msra.mxu0 %v2750
    %3916 = vmatprep.subr.bf16.mxu0 %v2719
    %3917 = vmatpush2.bf16.msra.mxu0 %v2718
    %3918 = vmatprep.subr.bf16.mxu0 %v2687
    %3919 = vmatpush2.bf16.msra.mxu0 %v2686
    %3920 = vmatprep.subr.bf16.mxu0 %v2655
    %3921 = vmatpush2.bf16.msra.mxu0 %v2654
    %3922 = vmatprep.mubr.bf16.mxu0 %v157
    %3923 = vmatmul.mubr.bf16.gmra.mxu0 %v156
    %v3924 = vpop.f32.mrf.mxu0
    %v3925 = vadd.f32 %v777, %v3924
    %v3926 = vpop.f32.mrf.mxu0
    %v3927 = vadd.f32 %v781, %v3926
    %v3928 = vpop.f32.mrf.mxu0
    %v3929 = vpop.f32.mrf.mxu0
    %3930 = vdwg.mxu0
    %3931 = vmatprep.subr.bf16.mxu0 %v2625
    %3932 = vmatpush1.bf16.msra.mxu0 %v2624
    %3933 = vmatprep.subr.bf16.mxu0 %v2593
    %3934 = vmatpush1.bf16.msra.mxu0 %v2592
    %3935 = vmatprep.subr.bf16.mxu0 %v2561
    %3936 = vmatpush1.bf16.msra.mxu0 %v2560
    %3937 = vmatprep.subr.bf16.mxu0 %v2529
    %3938 = vmatpush1.bf16.msra.mxu0 %v2528
    %3939 = vmatprep.subr.bf16.mxu0 %v2497
    %3940 = vmatpush1.bf16.msra.mxu0 %v2496
    %3941 = vmatprep.subr.bf16.mxu0 %v2465
    %3942 = vmatpush1.bf16.msra.mxu0 %v2464
    %3943 = vmatprep.subr.bf16.mxu0 %v2433
    %3944 = vmatpush1.bf16.msra.mxu0 %v2432
    %3945 = vmatprep.subr.bf16.mxu0 %v2401
    %3946 = vmatpush1.bf16.msra.mxu0 %v2400
    %3947 = vmatprep.subr.bf16.mxu0 %v2881
    %3948 = vmatpush2.bf16.msra.mxu0 %v2880
    %3949 = vmatprep.subr.bf16.mxu0 %v2849
    %3950 = vmatpush2.bf16.msra.mxu0 %v2848
    %3951 = vmatprep.subr.bf16.mxu0 %v2817
    %3952 = vmatpush2.bf16.msra.mxu0 %v2816
    %3953 = vmatprep.subr.bf16.mxu0 %v2785
    %3954 = vmatpush2.bf16.msra.mxu0 %v2784
    %3955 = vmatprep.subr.bf16.mxu0 %v2753
    %3956 = vmatpush2.bf16.msra.mxu0 %v2752
    %3957 = vmatprep.subr.bf16.mxu0 %v2721
    %3958 = vmatpush2.bf16.msra.mxu0 %v2720
    %3959 = vmatprep.subr.bf16.mxu0 %v2689
    %3960 = vmatpush2.bf16.msra.mxu0 %v2688
    %3961 = vmatprep.subr.bf16.mxu0 %v2657
    %3962 = vmatpush2.bf16.msra.mxu0 %v2656
    %3963 = vmatprep.mubr.bf16.mxu0 %v157
    %3964 = vmatmul.mubr.bf16.gmra.mxu0 %v156
    %v3965 = vpop.f32.mrf.mxu0
    %v3966 = vadd.f32 %v785, %v3965
    %v3967 = vpop.f32.mrf.mxu0
    %v3968 = vadd.f32 %v789, %v3967
    %v3969 = vpop.f32.mrf.mxu0
    %v3970 = vpop.f32.mrf.mxu0
    %3971 = vdwg.mxu0
    %3972 = vmatprep.subr.bf16.mxu0 %v2627
    %3973 = vmatpush1.bf16.msra.mxu0 %v2626
    %3974 = vmatprep.subr.bf16.mxu0 %v2595
    %3975 = vmatpush1.bf16.msra.mxu0 %v2594
    %3976 = vmatprep.subr.bf16.mxu0 %v2563
    %3977 = vmatpush1.bf16.msra.mxu0 %v2562
    %3978 = vmatprep.subr.bf16.mxu0 %v2531
    %3979 = vmatpush1.bf16.msra.mxu0 %v2530
    %3980 = vmatprep.subr.bf16.mxu0 %v2499
    %3981 = vmatpush1.bf16.msra.mxu0 %v2498
    %3982 = vmatprep.subr.bf16.mxu0 %v2467
    %3983 = vmatpush1.bf16.msra.mxu0 %v2466
    %3984 = vmatprep.subr.bf16.mxu0 %v2435
    %3985 = vmatpush1.bf16.msra.mxu0 %v2434
    %3986 = vmatprep.subr.bf16.mxu0 %v2403
    %3987 = vmatpush1.bf16.msra.mxu0 %v2402
    %3988 = vmatprep.subr.bf16.mxu0 %v2883
    %3989 = vmatpush2.bf16.msra.mxu0 %v2882
    %3990 = vmatprep.subr.bf16.mxu0 %v2851
    %3991 = vmatpush2.bf16.msra.mxu0 %v2850
    %3992 = vmatprep.subr.bf16.mxu0 %v2819
    %3993 = vmatpush2.bf16.msra.mxu0 %v2818
    %3994 = vmatprep.subr.bf16.mxu0 %v2787
    %3995 = vmatpush2.bf16.msra.mxu0 %v2786
    %3996 = vmatprep.subr.bf16.mxu0 %v2755
    %3997 = vmatpush2.bf16.msra.mxu0 %v2754
    %3998 = vmatprep.subr.bf16.mxu0 %v2723
    %3999 = vmatpush2.bf16.msra.mxu0 %v2722
    %4000 = vmatprep.subr.bf16.mxu0 %v2691
    %4001 = vmatpush2.bf16.msra.mxu0 %v2690
    %4002 = vmatprep.subr.bf16.mxu0 %v2659
    %4003 = vmatpush2.bf16.msra.mxu0 %v2658
    %4004 = vmatprep.mubr.bf16.mxu0 %v157
    %4005 = vmatmul.mubr.bf16.gmra.mxu0 %v156
    %v4006 = vpop.f32.mrf.mxu0
    %v4007 = vadd.f32 %v793, %v4006
    %v4008 = vpop.f32.mrf.mxu0
    %v4009 = vadd.f32 %v797, %v4008
    %v4010 = vpop.f32.mrf.mxu0
    %v4011 = vpop.f32.mrf.mxu0
    %4012 = vdwg.mxu0
    %4013 = vmatprep.subr.bf16.mxu0 %v2629
    %4014 = vmatpush1.bf16.msra.mxu0 %v2628
    %4015 = vmatprep.subr.bf16.mxu0 %v2597
    %4016 = vmatpush1.bf16.msra.mxu0 %v2596
    %4017 = vmatprep.subr.bf16.mxu0 %v2565
    %4018 = vmatpush1.bf16.msra.mxu0 %v2564
    %4019 = vmatprep.subr.bf16.mxu0 %v2533
    %4020 = vmatpush1.bf16.msra.mxu0 %v2532
    %4021 = vmatprep.subr.bf16.mxu0 %v2501
    %4022 = vmatpush1.bf16.msra.mxu0 %v2500
    %4023 = vmatprep.subr.bf16.mxu0 %v2469
    %4024 = vmatpush1.bf16.msra.mxu0 %v2468
    %4025 = vmatprep.subr.bf16.mxu0 %v2437
    %4026 = vmatpush1.bf16.msra.mxu0 %v2436
    %4027 = vmatprep.subr.bf16.mxu0 %v2405
    %4028 = vmatpush1.bf16.msra.mxu0 %v2404
    %4029 = vmatprep.subr.bf16.mxu0 %v2885
    %4030 = vmatpush2.bf16.msra.mxu0 %v2884
    %4031 = vmatprep.subr.bf16.mxu0 %v2853
    %4032 = vmatpush2.bf16.msra.mxu0 %v2852
    %4033 = vmatprep.subr.bf16.mxu0 %v2821
    %4034 = vmatpush2.bf16.msra.mxu0 %v2820
    %4035 = vmatprep.subr.bf16.mxu0 %v2789
    %4036 = vmatpush2.bf16.msra.mxu0 %v2788
    %4037 = vmatprep.subr.bf16.mxu0 %v2757
    %4038 = vmatpush2.bf16.msra.mxu0 %v2756
    %4039 = vmatprep.subr.bf16.mxu0 %v2725
    %4040 = vmatpush2.bf16.msra.mxu0 %v2724
    %4041 = vmatprep.subr.bf16.mxu0 %v2693
    %4042 = vmatpush2.bf16.msra.mxu0 %v2692
    %4043 = vmatprep.subr.bf16.mxu0 %v2661
    %4044 = vmatpush2.bf16.msra.mxu0 %v2660
    %4045 = vmatprep.mubr.bf16.mxu0 %v157
    %4046 = vmatmul.mubr.bf16.gmra.mxu0 %v156
    %v4047 = vpop.f32.mrf.mxu0
    %v4048 = vadd.f32 %v801, %v4047
    %v4049 = vpop.f32.mrf.mxu0
    %v4050 = vadd.f32 %v805, %v4049
    %v4051 = vpop.f32.mrf.mxu0
    %v4052 = vpop.f32.mrf.mxu0
    %4053 = vdwg.mxu0
    %4054 = vst [vmem:[%s5] sm:$0xff] %v3433
    %4055 = vst [vmem:[%s5 + $0x8] sm:$0xff] %v3435
    %4056 = vst [vmem:[%s5 + $0x10] sm:$0xff] %v3474
    %4057 = vst [vmem:[%s5 + $0x18] sm:$0xff] %v3476
    %4058 = vst [vmem:[%s5 + $0x20] sm:$0xff] %v3515
    %4059 = vst [vmem:[%s5 + $0x28] sm:$0xff] %v3517
    %4060 = vst [vmem:[%s5 + $0x30] sm:$0xff] %v3556
    %4061 = vst [vmem:[%s5 + $0x38] sm:$0xff] %v3558
    %4062 = vst [vmem:[%s5 + $0x40] sm:$0xff] %v3597
    %4063 = vst [vmem:[%s5 + $0x48] sm:$0xff] %v3599
    %4064 = vst [vmem:[%s5 + $0x50] sm:$0xff] %v3638
    %4065 = vst [vmem:[%s5 + $0x58] sm:$0xff] %v3640
    %4066 = vst [vmem:[%s5 + $0x60] sm:$0xff] %v3679
    %4067 = vst [vmem:[%s5 + $0x68] sm:$0xff] %v3681
    %4068 = vst [vmem:[%s5 + $0x70] sm:$0xff] %v3720
    %4069 = vst [vmem:[%s5 + $0x78] sm:$0xff] %v3722
    %4070 = vst [vmem:[%s5 + $0x80] sm:$0xff] %v3761
    %4071 = vst [vmem:[%s5 + $0x88] sm:$0xff] %v3763
    %4072 = vst [vmem:[%s5 + $0x90] sm:$0xff] %v3802
    %4073 = vst [vmem:[%s5 + $0x98] sm:$0xff] %v3804
    %4074 = vst [vmem:[%s5 + $0xa0] sm:$0xff] %v3843
    %4075 = vst [vmem:[%s5 + $0xa8] sm:$0xff] %v3845
    %4076 = vst [vmem:[%s5 + $0xb0] sm:$0xff] %v3884
    %4077 = vst [vmem:[%s5 + $0xb8] sm:$0xff] %v3886
    %4078 = vst [vmem:[%s5 + $0xc0] sm:$0xff] %v3925
    %4079 = vst [vmem:[%s5 + $0xc8] sm:$0xff] %v3927
    %4080 = vst [vmem:[%s5 + $0xd0] sm:$0xff] %v3966
    %4081 = vst [vmem:[%s5 + $0xd8] sm:$0xff] %v3968
    %4082 = vst [vmem:[%s5 + $0xe0] sm:$0xff] %v4007
    %4083 = vst [vmem:[%s5 + $0xe8] sm:$0xff] %v4009
    %4084 = vst [vmem:[%s5 + $0xf0] sm:$0xff] %v4048
    %4085 = vst [vmem:[%s5 + $0xf8] sm:$0xff] %v4050
    // Predicated region
    $region38: #{decoder_forward.4} parent=1 // pred_check
      _
    $region39: #{decoder_forward.4} parent=1 // pred_check_branch
      %4087 = sbr.rel (0) target = $region41
    $region40: #{decoder_forward.4} parent=1 // pred_region
      _
    $region41: #{decoder_forward.4} parent=1 // pred_fallthru
      _
    // Predicated region
    $region42: #{decoder_forward.4} parent=1 // pred_check
      _
    $region43: #{decoder_forward.4} parent=1 // pred_check_branch
      %4089 = sbr.rel (0) target = $region45
    $region44: #{decoder_forward.4} parent=1 // pred_region
      _
    $region45: #{decoder_forward.4} parent=1 // pred_fallthru
      _
    %4090 = vsyncpa [#allocation3], 1
    %4091 = vsyncpa [#allocation5], 1
    %4092 = vsyncpa [#allocation8], 1

// kernel: decoder_forward.6
$region0: #{decoder_forward.6}
  #allocation0 [shape = 'u32[]', space=smem, size = 0x4, offset = 0x4, fixed_abs, tag = 'smem constant byte address 0x4 - core index']
  #allocation1 [shape = 'u32[144,128]{1,0:T(1,128)}', space=vmem, size = 0x12000, scoped, tag = 'internal scratch']
  %s0 = inlined_call_operand.vmem [shape: bf16[512,288], index: 0, kind: input, shape index: {}]
  %s1 = inlined_call_operand.vmem [shape: bf16[288,128], index: 1, kind: input, shape index: {}]
  %s2 = inlined_call_operand.vmem [shape: f32[1,128], index: 2, kind: input, shape index: {}]
  %s3 = inlined_call_operand.vmem [shape: bf16[512,128], index: 3, kind: output, shape index: {}]
  %s4 = sld [smem:[#allocation0]]
  $region22: #{decoder_forward.6} parent=0
    _
  %s6 = ssub.s32 1, %s4
  %s7 = scalar_select 0, %s6, %s4
  // Predicated region
  $region2: #{decoder_forward.6} parent=0 // pred_check
    _
  $region3: #{decoder_forward.6} parent=0 // pred_check_branch
    %9 = sbr.rel (0) target = $region5
  $region4: #{decoder_forward.6} parent=0 // pred_region
    _
  $region5: #{decoder_forward.6} parent=0 // pred_fallthru
    _
  // Predicated region
  $region6: #{decoder_forward.6} parent=0 // pred_check
    _
  $region7: #{decoder_forward.6} parent=0 // pred_check_branch
    %11 = sbr.rel (0) target = $region9
  $region8: #{decoder_forward.6} parent=0 // pred_region
    _
  $region9: #{decoder_forward.6} parent=0 // pred_fallthru
    _
  // Predicated region
  $region10: #{decoder_forward.6} parent=0 // pred_check
    _
  $region11: #{decoder_forward.6} parent=0 // pred_check_branch
    %13 = sbr.rel (0) target = $region13
  $region12: #{decoder_forward.6} parent=0 // pred_region
    _
  $region13: #{decoder_forward.6} parent=0 // pred_fallthru
    _
  %v15 = vld [vmem:[%s0] sm:$0xff]
  %v16 = vld [vmem:[%s0 + $0x8] sm:$0xf]
  %v17 = vld [vmem:[%s0 + $0xc] sm:$0xff]
  %v18 = vld [vmem:[%s0 + $0x14] sm:$0xf]
  %v19 = vld [vmem:[%s0 + $0x18] sm:$0xff]
  %v20 = vld [vmem:[%s0 + $0x20] sm:$0xf]
  %v21 = vld [vmem:[%s0 + $0x24] sm:$0xff]
  %v22 = vld [vmem:[%s0 + $0x2c] sm:$0xf]
  %v23 = vld [vmem:[%s0 + $0x30] sm:$0xff]
  %v24 = vld [vmem:[%s0 + $0x38] sm:$0xf]
  %v25 = vld [vmem:[%s0 + $0x3c] sm:$0xff]
  %v26 = vld [vmem:[%s0 + $0x44] sm:$0xf]
  %v27 = vld [vmem:[%s0 + $0x48] sm:$0xff]
  %v28 = vld [vmem:[%s0 + $0x50] sm:$0xf]
  %v29 = vld [vmem:[%s0 + $0x54] sm:$0xff]
  %v30 = vld [vmem:[%s0 + $0x5c] sm:$0xf]
  %v31 = vld [vmem:[%s0 + $0x60] sm:$0xff]
  %v32 = vld [vmem:[%s0 + $0x68] sm:$0xf]
  %v33 = vld [vmem:[%s0 + $0x6c] sm:$0xff]
  %v34 = vld [vmem:[%s0 + $0x74] sm:$0xf]
  %v35 = vld [vmem:[%s0 + $0x78] sm:$0xff]
  %v36 = vld [vmem:[%s0 + $0x80] sm:$0xf]
  %v37 = vld [vmem:[%s0 + $0x84] sm:$0xff]
  %v38 = vld [vmem:[%s0 + $0x8c] sm:$0xf]
  %v39 = vld [vmem:[%s0 + $0x90] sm:$0xff]
  %v40 = vld [vmem:[%s0 + $0x98] sm:$0xf]
  %v41 = vld [vmem:[%s0 + $0x9c] sm:$0xff]
  %v42 = vld [vmem:[%s0 + $0xa4] sm:$0xf]
  %v43 = vld [vmem:[%s0 + $0xa8] sm:$0xff]
  %v44 = vld [vmem:[%s0 + $0xb0] sm:$0xf]
  %v45 = vld [vmem:[%s0 + $0xb4] sm:$0xff]
  %v46 = vld [vmem:[%s0 + $0xbc] sm:$0xf]
  %v47 = vld [vmem:[%s0 + $0xc0] sm:$0xff]
  %v48 = vld [vmem:[%s0 + $0xc8] sm:$0xf]
  %v49 = vld [vmem:[%s0 + $0xcc] sm:$0xff]
  %v50 = vld [vmem:[%s0 + $0xd4] sm:$0xf]
  %v51 = vld [vmem:[%s0 + $0xd8] sm:$0xff]
  %v52 = vld [vmem:[%s0 + $0xe0] sm:$0xf]
  %v53 = vld [vmem:[%s0 + $0xe4] sm:$0xff]
  %v54 = vld [vmem:[%s0 + $0xec] sm:$0xf]
  %v55 = vld [vmem:[%s0 + $0xf0] sm:$0xff]
  %v56 = vld [vmem:[%s0 + $0xf8] sm:$0xf]
  %v57 = vld [vmem:[%s0 + $0xfc] sm:$0xff]
  %v58 = vld [vmem:[%s0 + $0x104] sm:$0xf]
  %v59 = vld [vmem:[%s0 + $0x108] sm:$0xff]
  %v60 = vld [vmem:[%s0 + $0x110] sm:$0xf]
  %v61 = vld [vmem:[%s0 + $0x114] sm:$0xff]
  %v62 = vld [vmem:[%s0 + $0x11c] sm:$0xf]
  %v63 = vld [vmem:[%s0 + $0x120] sm:$0xff]
  %v64 = vld [vmem:[%s0 + $0x128] sm:$0xf]
  %v65 = vld [vmem:[%s0 + $0x12c] sm:$0xff]
  %v66 = vld [vmem:[%s0 + $0x134] sm:$0xf]
  %v67 = vld [vmem:[%s0 + $0x138] sm:$0xff]
  %v68 = vld [vmem:[%s0 + $0x140] sm:$0xf]
  %v69 = vld [vmem:[%s0 + $0x144] sm:$0xff]
  %v70 = vld [vmem:[%s0 + $0x14c] sm:$0xf]
  %v71 = vld [vmem:[%s0 + $0x150] sm:$0xff]
  %v72 = vld [vmem:[%s0 + $0x158] sm:$0xf]
  %v73 = vld [vmem:[%s0 + $0x15c] sm:$0xff]
  %v74 = vld [vmem:[%s0 + $0x164] sm:$0xf]
  %v75 = vld [vmem:[%s0 + $0x168] sm:$0xff]
  %v76 = vld [vmem:[%s0 + $0x170] sm:$0xf]
  %v77 = vld [vmem:[%s0 + $0x174] sm:$0xff]
  %v78 = vld [vmem:[%s0 + $0x17c] sm:$0xf]
  %v79 = vld [vmem:[%s0 + $0x180] sm:$0xff]
  %v80 = vld [vmem:[%s0 + $0x188] sm:$0xf]
  %v81 = vld [vmem:[%s0 + $0x18c] sm:$0xff]
  %v82 = vld [vmem:[%s0 + $0x194] sm:$0xf]
  %v83 = vld [vmem:[%s0 + $0x198] sm:$0xff]
  %v84 = vld [vmem:[%s0 + $0x1a0] sm:$0xf]
  %v85 = vld [vmem:[%s0 + $0x1a4] sm:$0xff]
  %v86 = vld [vmem:[%s0 + $0x1ac] sm:$0xf]
  %v87 = vld [vmem:[%s0 + $0x1b0] sm:$0xff]
  %v88 = vld [vmem:[%s0 + $0x1b8] sm:$0xf]
  %v89 = vld [vmem:[%s0 + $0x1bc] sm:$0xff]
  %v90 = vld [vmem:[%s0 + $0x1c4] sm:$0xf]
  %v91 = vld [vmem:[%s0 + $0x1c8] sm:$0xff]
  %v92 = vld [vmem:[%s0 + $0x1d0] sm:$0xf]
  %v93 = vld [vmem:[%s0 + $0x1d4] sm:$0xff]
  %v94 = vld [vmem:[%s0 + $0x1dc] sm:$0xf]
  %v95 = vld [vmem:[%s0 + $0x1e0] sm:$0xff]
  %v96 = vld [vmem:[%s0 + $0x1e8] sm:$0xf]
  %v97 = vld [vmem:[%s0 + $0x1ec] sm:$0xff]
  %v98 = vld [vmem:[%s0 + $0x1f4] sm:$0xf]
  %v99 = vld [vmem:[%s0 + $0x1f8] sm:$0xff]
  %v100 = vld [vmem:[%s0 + $0x200] sm:$0xf]
  %v101 = vld [vmem:[%s0 + $0x204] sm:$0xff]
  %v102 = vld [vmem:[%s0 + $0x20c] sm:$0xf]
  %v103 = vld [vmem:[%s0 + $0x210] sm:$0xff]
  %v104 = vld [vmem:[%s0 + $0x218] sm:$0xf]
  %v105 = vld [vmem:[%s0 + $0x21c] sm:$0xff]
  %v106 = vld [vmem:[%s0 + $0x224] sm:$0xf]
  %v107 = vld [vmem:[%s0 + $0x228] sm:$0xff]
  %v108 = vld [vmem:[%s0 + $0x230] sm:$0xf]
  %v109 = vld [vmem:[%s0 + $0x234] sm:$0xff]
  %v110 = vld [vmem:[%s0 + $0x23c] sm:$0xf]
  %v111 = vld [vmem:[%s0 + $0x240] sm:$0xff]
  %v112 = vld [vmem:[%s0 + $0x248] sm:$0xf]
  %v113 = vld [vmem:[%s0 + $0x24c] sm:$0xff]
  %v114 = vld [vmem:[%s0 + $0x254] sm:$0xf]
  %v115 = vld [vmem:[%s0 + $0x258] sm:$0xff]
  %v116 = vld [vmem:[%s0 + $0x260] sm:$0xf]
  %v117 = vld [vmem:[%s0 + $0x264] sm:$0xff]
  %v118 = vld [vmem:[%s0 + $0x26c] sm:$0xf]
  %v119 = vld [vmem:[%s0 + $0x270] sm:$0xff]
  %v120 = vld [vmem:[%s0 + $0x278] sm:$0xf]
  %v121 = vld [vmem:[%s0 + $0x27c] sm:$0xff]
  %v122 = vld [vmem:[%s0 + $0x284] sm:$0xf]
  %v123 = vld [vmem:[%s0 + $0x288] sm:$0xff]
  %v124 = vld [vmem:[%s0 + $0x290] sm:$0xf]
  %v125 = vld [vmem:[%s0 + $0x294] sm:$0xff]
  %v126 = vld [vmem:[%s0 + $0x29c] sm:$0xf]
  %v127 = vld [vmem:[%s0 + $0x2a0] sm:$0xff]
  %v128 = vld [vmem:[%s0 + $0x2a8] sm:$0xf]
  %v129 = vld [vmem:[%s0 + $0x2ac] sm:$0xff]
  %v130 = vld [vmem:[%s0 + $0x2b4] sm:$0xf]
  %v131 = vld [vmem:[%s0 + $0x2b8] sm:$0xff]
  %v132 = vld [vmem:[%s0 + $0x2c0] sm:$0xf]
  %v133 = vld [vmem:[%s0 + $0x2c4] sm:$0xff]
  %v134 = vld [vmem:[%s0 + $0x2cc] sm:$0xf]
  %v135 = vld [vmem:[%s0 + $0x2d0] sm:$0xff]
  %v136 = vld [vmem:[%s0 + $0x2d8] sm:$0xf]
  %v137 = vld [vmem:[%s0 + $0x2dc] sm:$0xff]
  %v138 = vld [vmem:[%s0 + $0x2e4] sm:$0xf]
  %v139 = vld [vmem:[%s0 + $0x2e8] sm:$0xff]
  %v140 = vld [vmem:[%s0 + $0x2f0] sm:$0xf]
  %v141 = vld [vmem:[%s0 + $0x2f4] sm:$0xff]
  %v142 = vld [vmem:[%s0 + $0x2fc] sm:$0xf]
  %v143 = vld [vmem:[%s1] sm:$0xf]
  %v144 = vld [vmem:[%s1 + $0x4] sm:$0xf]
  %v145 = vld [vmem:[%s1 + $0x8] sm:$0xf]
  %v146 = vld [vmem:[%s1 + $0xc] sm:$0xf]
  %v147 = vld [vmem:[%s1 + $0x10] sm:$0xf]
  %v148 = vld [vmem:[%s1 + $0x14] sm:$0xf]
  %v149 = vld [vmem:[%s1 + $0x18] sm:$0xf]
  %v150 = vld [vmem:[%s1 + $0x1c] sm:$0xf]
  %v151 = vld [vmem:[%s1 + $0x20] sm:$0xf]
  %v152 = vld [vmem:[%s1 + $0x24] sm:$0xf]
  %v153 = vld [vmem:[%s1 + $0x28] sm:$0xf]
  %v154 = vld [vmem:[%s1 + $0x2c] sm:$0xf]
  %v155 = vld [vmem:[%s1 + $0x30] sm:$0xf]
  %v156 = vld [vmem:[%s1 + $0x34] sm:$0xf]
  %v157 = vld [vmem:[%s1 + $0x38] sm:$0xf]
  %v158 = vld [vmem:[%s1 + $0x3c] sm:$0xf]
  %v159 = vld [vmem:[%s1 + $0x40] sm:$0xf]
  %v160 = vld [vmem:[%s1 + $0x44] sm:$0xf]
  %v161 = vld [vmem:[%s1 + $0x48] sm:$0xf]
  %v162 = vld [vmem:[%s1 + $0x4c] sm:$0xf]
  %v163 = vld [vmem:[%s1 + $0x50] sm:$0xf]
  %v164 = vld [vmem:[%s1 + $0x54] sm:$0xf]
  %v165 = vld [vmem:[%s1 + $0x58] sm:$0xf]
  %v166 = vld [vmem:[%s1 + $0x5c] sm:$0xf]
  %v167 = vld [vmem:[%s1 + $0x60] sm:$0xf]
  %v168 = vld [vmem:[%s1 + $0x64] sm:$0xf]
  %v169 = vld [vmem:[%s1 + $0x68] sm:$0xf]
  %v170 = vld [vmem:[%s1 + $0x6c] sm:$0xf]
  %v171 = vld [vmem:[%s1 + $0x70] sm:$0xf]
  %v172 = vld [vmem:[%s1 + $0x74] sm:$0xf]
  %v173 = vld [vmem:[%s1 + $0x78] sm:$0xf]
  %v174 = vld [vmem:[%s1 + $0x7c] sm:$0xf]
  %v175 = vld [vmem:[%s1 + $0x80] sm:$0xf]
  %v176 = vld [vmem:[%s1 + $0x84] sm:$0xf]
  %v177 = vld [vmem:[%s1 + $0x88] sm:$0xf]
  %v178 = vld [vmem:[%s1 + $0x8c] sm:$0xf]
  %v179 = vld [vmem:[%s2] sm:$0x1]
  %v181 = vlaneseq
  %v182 = vshrl.u32 %v181, 7
  %v183 = vsub.s32 0, %v182
  %v184 = vrot.slane %v179, %v183
  %v314 = vunpack.c.l.b16 %v15
  %v315 = vunpack.c.h.b16 %v15
  %v316 = vunpack.c.l.b16 %v16
  %v317 = vunpack.c.l.b16 %v17
  %v318 = vunpack.c.h.b16 %v17
  %v319 = vunpack.c.l.b16 %v18
  %v320 = vunpack.c.l.b16 %v19
  %v321 = vunpack.c.h.b16 %v19
  %v322 = vunpack.c.l.b16 %v20
  %v323 = vunpack.c.l.b16 %v21
  %v324 = vunpack.c.h.b16 %v21
  %v325 = vunpack.c.l.b16 %v22
  %v326 = vunpack.c.l.b16 %v23
  %v327 = vunpack.c.h.b16 %v23
  %v328 = vunpack.c.l.b16 %v24
  %v329 = vunpack.c.l.b16 %v25
  %v330 = vunpack.c.h.b16 %v25
  %v331 = vunpack.c.l.b16 %v26
  %v332 = vunpack.c.l.b16 %v27
  %v333 = vunpack.c.h.b16 %v27
  %v334 = vunpack.c.l.b16 %v28
  %v335 = vunpack.c.l.b16 %v29
  %v336 = vunpack.c.h.b16 %v29
  %v337 = vunpack.c.l.b16 %v30
  %v338 = vunpack.c.l.b16 %v31
  %v339 = vunpack.c.h.b16 %v31
  %v340 = vunpack.c.l.b16 %v32
  %v341 = vunpack.c.l.b16 %v33
  %v342 = vunpack.c.h.b16 %v33
  %v343 = vunpack.c.l.b16 %v34
  %v344 = vunpack.c.l.b16 %v35
  %v345 = vunpack.c.h.b16 %v35
  %v346 = vunpack.c.l.b16 %v36
  %v347 = vunpack.c.l.b16 %v37
  %v348 = vunpack.c.h.b16 %v37
  %v349 = vunpack.c.l.b16 %v38
  %v350 = vunpack.c.l.b16 %v39
  %v351 = vunpack.c.h.b16 %v39
  %v352 = vunpack.c.l.b16 %v40
  %v353 = vunpack.c.l.b16 %v41
  %v354 = vunpack.c.h.b16 %v41
  %v355 = vunpack.c.l.b16 %v42
  %v356 = vunpack.c.l.b16 %v43
  %v357 = vunpack.c.h.b16 %v43
  %v358 = vunpack.c.l.b16 %v44
  %v359 = vunpack.c.l.b16 %v45
  %v360 = vunpack.c.h.b16 %v45
  %v361 = vunpack.c.l.b16 %v46
  %v362 = vunpack.c.l.b16 %v47
  %v363 = vunpack.c.h.b16 %v47
  %v364 = vunpack.c.l.b16 %v48
  %v365 = vunpack.c.l.b16 %v49
  %v366 = vunpack.c.h.b16 %v49
  %v367 = vunpack.c.l.b16 %v50
  %v368 = vunpack.c.l.b16 %v51
  %v369 = vunpack.c.h.b16 %v51
  %v370 = vunpack.c.l.b16 %v52
  %v371 = vunpack.c.l.b16 %v53
  %v372 = vunpack.c.h.b16 %v53
  %v373 = vunpack.c.l.b16 %v54
  %v374 = vunpack.c.l.b16 %v55
  %v375 = vunpack.c.h.b16 %v55
  %v376 = vunpack.c.l.b16 %v56
  %v377 = vunpack.c.l.b16 %v57
  %v378 = vunpack.c.h.b16 %v57
  %v379 = vunpack.c.l.b16 %v58
  %v380 = vunpack.c.l.b16 %v59
  %v381 = vunpack.c.h.b16 %v59
  %v382 = vunpack.c.l.b16 %v60
  %v383 = vunpack.c.l.b16 %v61
  %v384 = vunpack.c.h.b16 %v61
  %v385 = vunpack.c.l.b16 %v62
  %v386 = vunpack.c.l.b16 %v63
  %v387 = vunpack.c.h.b16 %v63
  %v388 = vunpack.c.l.b16 %v64
  %v389 = vunpack.c.l.b16 %v65
  %v390 = vunpack.c.h.b16 %v65
  %v391 = vunpack.c.l.b16 %v66
  %v392 = vunpack.c.l.b16 %v67
  %v393 = vunpack.c.h.b16 %v67
  %v394 = vunpack.c.l.b16 %v68
  %v395 = vunpack.c.l.b16 %v69
  %v396 = vunpack.c.h.b16 %v69
  %v397 = vunpack.c.l.b16 %v70
  %v398 = vunpack.c.l.b16 %v71
  %v399 = vunpack.c.h.b16 %v71
  %v400 = vunpack.c.l.b16 %v72
  %v401 = vunpack.c.l.b16 %v73
  %v402 = vunpack.c.h.b16 %v73
  %v403 = vunpack.c.l.b16 %v74
  %v404 = vunpack.c.l.b16 %v75
  %v405 = vunpack.c.h.b16 %v75
  %v406 = vunpack.c.l.b16 %v76
  %v407 = vunpack.c.l.b16 %v77
  %v408 = vunpack.c.h.b16 %v77
  %v409 = vunpack.c.l.b16 %v78
  %v410 = vunpack.c.l.b16 %v79
  %v411 = vunpack.c.h.b16 %v79
  %v412 = vunpack.c.l.b16 %v80
  %v413 = vunpack.c.l.b16 %v81
  %v414 = vunpack.c.h.b16 %v81
  %v415 = vunpack.c.l.b16 %v82
  %v416 = vunpack.c.l.b16 %v83
  %v417 = vunpack.c.h.b16 %v83
  %v418 = vunpack.c.l.b16 %v84
  %v419 = vunpack.c.l.b16 %v85
  %v420 = vunpack.c.h.b16 %v85
  %v421 = vunpack.c.l.b16 %v86
  %v422 = vunpack.c.l.b16 %v87
  %v423 = vunpack.c.h.b16 %v87
  %v424 = vunpack.c.l.b16 %v88
  %v425 = vunpack.c.l.b16 %v89
  %v426 = vunpack.c.h.b16 %v89
  %v427 = vunpack.c.l.b16 %v90
  %v428 = vunpack.c.l.b16 %v91
  %v429 = vunpack.c.h.b16 %v91
  %v430 = vunpack.c.l.b16 %v92
  %v431 = vunpack.c.l.b16 %v93
  %v432 = vunpack.c.h.b16 %v93
  %v433 = vunpack.c.l.b16 %v94
  %v434 = vunpack.c.l.b16 %v95
  %v435 = vunpack.c.h.b16 %v95
  %v436 = vunpack.c.l.b16 %v96
  %v437 = vunpack.c.l.b16 %v97
  %v438 = vunpack.c.h.b16 %v97
  %v439 = vunpack.c.l.b16 %v98
  %v440 = vunpack.c.l.b16 %v99
  %v441 = vunpack.c.h.b16 %v99
  %v442 = vunpack.c.l.b16 %v100
  %v443 = vunpack.c.l.b16 %v101
  %v444 = vunpack.c.h.b16 %v101
  %v445 = vunpack.c.l.b16 %v102
  %v446 = vunpack.c.l.b16 %v103
  %v447 = vunpack.c.h.b16 %v103
  %v448 = vunpack.c.l.b16 %v104
  %v449 = vunpack.c.l.b16 %v105
  %v450 = vunpack.c.h.b16 %v105
  %v451 = vunpack.c.l.b16 %v106
  %v452 = vunpack.c.l.b16 %v107
  %v453 = vunpack.c.h.b16 %v107
  %v454 = vunpack.c.l.b16 %v108
  %v455 = vunpack.c.l.b16 %v109
  %v456 = vunpack.c.h.b16 %v109
  %v457 = vunpack.c.l.b16 %v110
  %v458 = vunpack.c.l.b16 %v111
  %v459 = vunpack.c.h.b16 %v111
  %v460 = vunpack.c.l.b16 %v112
  %v461 = vunpack.c.l.b16 %v113
  %v462 = vunpack.c.h.b16 %v113
  %v463 = vunpack.c.l.b16 %v114
  %v464 = vunpack.c.l.b16 %v115
  %v465 = vunpack.c.h.b16 %v115
  %v466 = vunpack.c.l.b16 %v116
  %v467 = vunpack.c.l.b16 %v117
  %v468 = vunpack.c.h.b16 %v117
  %v469 = vunpack.c.l.b16 %v118
  %v470 = vunpack.c.l.b16 %v119
  %v471 = vunpack.c.h.b16 %v119
  %v472 = vunpack.c.l.b16 %v120
  %v473 = vunpack.c.l.b16 %v121
  %v474 = vunpack.c.h.b16 %v121
  %v475 = vunpack.c.l.b16 %v122
  %v476 = vunpack.c.l.b16 %v123
  %v477 = vunpack.c.h.b16 %v123
  %v478 = vunpack.c.l.b16 %v124
  %v479 = vunpack.c.l.b16 %v125
  %v480 = vunpack.c.h.b16 %v125
  %v481 = vunpack.c.l.b16 %v126
  %v482 = vunpack.c.l.b16 %v127
  %v483 = vunpack.c.h.b16 %v127
  %v484 = vunpack.c.l.b16 %v128
  %v485 = vunpack.c.l.b16 %v129
  %v486 = vunpack.c.h.b16 %v129
  %v487 = vunpack.c.l.b16 %v130
  %v488 = vunpack.c.l.b16 %v131
  %v489 = vunpack.c.h.b16 %v131
  %v490 = vunpack.c.l.b16 %v132
  %v491 = vunpack.c.l.b16 %v133
  %v492 = vunpack.c.h.b16 %v133
  %v493 = vunpack.c.l.b16 %v134
  %v494 = vunpack.c.l.b16 %v135
  %v495 = vunpack.c.h.b16 %v135
  %v496 = vunpack.c.l.b16 %v136
  %v497 = vunpack.c.l.b16 %v137
  %v498 = vunpack.c.h.b16 %v137
  %v499 = vunpack.c.l.b16 %v138
  %v500 = vunpack.c.l.b16 %v139
  %v501 = vunpack.c.h.b16 %v139
  %v502 = vunpack.c.l.b16 %v140
  %v503 = vunpack.c.l.b16 %v141
  %v504 = vunpack.c.h.b16 %v141
  %v505 = vunpack.c.l.b16 %v142
  %v506 = vpack.c.b16 %v317, %v314
  %v507 = vpack.c.b16 %v318, %v315
  %v508 = vpack.c.b16 %v319, %v316
  %v509 = vpack.c.b16 %v323, %v320
  %v510 = vpack.c.b16 %v324, %v321
  %v511 = vpack.c.b16 %v325, %v322
  %v512 = vpack.c.b16 %v329, %v326
  %v513 = vpack.c.b16 %v330, %v327
  %v514 = vpack.c.b16 %v331, %v328
  %v515 = vpack.c.b16 %v335, %v332
  %v516 = vpack.c.b16 %v336, %v333
  %v517 = vpack.c.b16 %v337, %v334
  %v518 = vpack.c.b16 %v341, %v338
  %v519 = vpack.c.b16 %v342, %v339
  %v520 = vpack.c.b16 %v343, %v340
  %v521 = vpack.c.b16 %v347, %v344
  %v522 = vpack.c.b16 %v348, %v345
  %v523 = vpack.c.b16 %v349, %v346
  %v524 = vpack.c.b16 %v353, %v350
  %v525 = vpack.c.b16 %v354, %v351
  %v526 = vpack.c.b16 %v355, %v352
  %v527 = vpack.c.b16 %v359, %v356
  %v528 = vpack.c.b16 %v360, %v357
  %v529 = vpack.c.b16 %v361, %v358
  %v530 = vpack.c.b16 %v365, %v362
  %v531 = vpack.c.b16 %v366, %v363
  %v532 = vpack.c.b16 %v367, %v364
  %v533 = vpack.c.b16 %v371, %v368
  %v534 = vpack.c.b16 %v372, %v369
  %v535 = vpack.c.b16 %v373, %v370
  %v536 = vpack.c.b16 %v377, %v374
  %v537 = vpack.c.b16 %v378, %v375
  %v538 = vpack.c.b16 %v379, %v376
  %v539 = vpack.c.b16 %v383, %v380
  %v540 = vpack.c.b16 %v384, %v381
  %v541 = vpack.c.b16 %v385, %v382
  %v542 = vpack.c.b16 %v389, %v386
  %v543 = vpack.c.b16 %v390, %v387
  %v544 = vpack.c.b16 %v391, %v388
  %v545 = vpack.c.b16 %v395, %v392
  %v546 = vpack.c.b16 %v396, %v393
  %v547 = vpack.c.b16 %v397, %v394
  %v548 = vpack.c.b16 %v401, %v398
  %v549 = vpack.c.b16 %v402, %v399
  %v550 = vpack.c.b16 %v403, %v400
  %v551 = vpack.c.b16 %v407, %v404
  %v552 = vpack.c.b16 %v408, %v405
  %v553 = vpack.c.b16 %v409, %v406
  %v554 = vpack.c.b16 %v413, %v410
  %v555 = vpack.c.b16 %v414, %v411
  %v556 = vpack.c.b16 %v415, %v412
  %v557 = vpack.c.b16 %v419, %v416
  %v558 = vpack.c.b16 %v420, %v417
  %v559 = vpack.c.b16 %v421, %v418
  %v560 = vpack.c.b16 %v425, %v422
  %v561 = vpack.c.b16 %v426, %v423
  %v562 = vpack.c.b16 %v427, %v424
  %v563 = vpack.c.b16 %v431, %v428
  %v564 = vpack.c.b16 %v432, %v429
  %v565 = vpack.c.b16 %v433, %v430
  %v566 = vpack.c.b16 %v437, %v434
  %v567 = vpack.c.b16 %v438, %v435
  %v568 = vpack.c.b16 %v439, %v436
  %v569 = vpack.c.b16 %v443, %v440
  %v570 = vpack.c.b16 %v444, %v441
  %v571 = vpack.c.b16 %v445, %v442
  %v572 = vpack.c.b16 %v449, %v446
  %v573 = vpack.c.b16 %v450, %v447
  %v574 = vpack.c.b16 %v451, %v448
  %v575 = vpack.c.b16 %v455, %v452
  %v576 = vpack.c.b16 %v456, %v453
  %v577 = vpack.c.b16 %v457, %v454
  %v578 = vpack.c.b16 %v461, %v458
  %v579 = vpack.c.b16 %v462, %v459
  %v580 = vpack.c.b16 %v463, %v460
  %v581 = vpack.c.b16 %v467, %v464
  %v582 = vpack.c.b16 %v468, %v465
  %v583 = vpack.c.b16 %v469, %v466
  %v584 = vpack.c.b16 %v473, %v470
  %v585 = vpack.c.b16 %v474, %v471
  %v586 = vpack.c.b16 %v475, %v472
  %v587 = vpack.c.b16 %v479, %v476
  %v588 = vpack.c.b16 %v480, %v477
  %v589 = vpack.c.b16 %v481, %v478
  %v590 = vpack.c.b16 %v485, %v482
  %v591 = vpack.c.b16 %v486, %v483
  %v592 = vpack.c.b16 %v487, %v484
  %v593 = vpack.c.b16 %v491, %v488
  %v594 = vpack.c.b16 %v492, %v489
  %v595 = vpack.c.b16 %v493, %v490
  %v596 = vpack.c.b16 %v497, %v494
  %v597 = vpack.c.b16 %v498, %v495
  %v598 = vpack.c.b16 %v499, %v496
  %v599 = vpack.c.b16 %v503, %v500
  %v600 = vpack.c.b16 %v504, %v501
  %v601 = vpack.c.b16 %v505, %v502
  %v702 = vunpack.c.l.b16 %v143
  %v703 = vunpack.c.l.b16 %v144
  %v704 = vunpack.c.l.b16 %v145
  %v705 = vunpack.c.l.b16 %v146
  %v706 = vunpack.c.l.b16 %v147
  %v707 = vunpack.c.l.b16 %v148
  %v708 = vunpack.c.l.b16 %v149
  %v709 = vunpack.c.l.b16 %v150
  %v710 = vunpack.c.l.b16 %v151
  %v711 = vunpack.c.l.b16 %v152
  %v712 = vunpack.c.l.b16 %v153
  %v713 = vunpack.c.l.b16 %v154
  %v714 = vunpack.c.l.b16 %v155
  %v715 = vunpack.c.l.b16 %v156
  %v716 = vunpack.c.l.b16 %v157
  %v717 = vunpack.c.l.b16 %v158
  %v718 = vunpack.c.l.b16 %v159
  %v719 = vunpack.c.l.b16 %v160
  %v720 = vunpack.c.l.b16 %v161
  %v721 = vunpack.c.l.b16 %v162
  %v722 = vunpack.c.l.b16 %v163
  %v723 = vunpack.c.l.b16 %v164
  %v724 = vunpack.c.l.b16 %v165
  %v725 = vunpack.c.l.b16 %v166
  %v726 = vunpack.c.l.b16 %v167
  %v727 = vunpack.c.l.b16 %v168
  %v728 = vunpack.c.l.b16 %v169
  %v729 = vunpack.c.l.b16 %v170
  %v730 = vunpack.c.l.b16 %v171
  %v731 = vunpack.c.l.b16 %v172
  %v732 = vunpack.c.l.b16 %v173
  %v733 = vunpack.c.l.b16 %v174
  %v734 = vunpack.c.l.b16 %v175
  %v735 = vunpack.c.l.b16 %v176
  %v736 = vunpack.c.l.b16 %v177
  %v737 = vunpack.c.l.b16 %v178
  %v738 = vpack.c.b16 %v703, %v702
  %v739 = vpack.c.b16 %v705, %v704
  %v740 = vpack.c.b16 %v707, %v706
  %v741 = vpack.c.b16 %v709, %v708
  %v742 = vpack.c.b16 %v711, %v710
  %v743 = vpack.c.b16 %v713, %v712
  %v744 = vpack.c.b16 %v715, %v714
  %v745 = vpack.c.b16 %v717, %v716
  %v746 = vpack.c.b16 %v719, %v718
  %v747 = vpack.c.b16 %v721, %v720
  %v748 = vpack.c.b16 %v723, %v722
  %v749 = vpack.c.b16 %v725, %v724
  %v750 = vpack.c.b16 %v727, %v726
  %v751 = vpack.c.b16 %v729, %v728
  %v752 = vpack.c.b16 %v731, %v730
  %v753 = vpack.c.b16 %v733, %v732
  %v754 = vpack.c.b16 %v735, %v734
  %v755 = vpack.c.b16 %v737, %v736
  %vm774 = vcmask 261120
  %v776 = vsel %vm774, %v508, 0
  %v779 = vsel %vm774, %v511, 0
  %v782 = vsel %vm774, %v514, 0
  %v785 = vsel %vm774, %v517, 0
  %v788 = vsel %vm774, %v520, 0
  %v791 = vsel %vm774, %v523, 0
  %v794 = vsel %vm774, %v526, 0
  %v797 = vsel %vm774, %v529, 0
  %v800 = vsel %vm774, %v532, 0
  %v803 = vsel %vm774, %v535, 0
  %v806 = vsel %vm774, %v538, 0
  %v809 = vsel %vm774, %v541, 0
  %v812 = vsel %vm774, %v544, 0
  %v815 = vsel %vm774, %v547, 0
  %v818 = vsel %vm774, %v550, 0
  %v821 = vsel %vm774, %v553, 0
  %v824 = vsel %vm774, %v556, 0
  %v827 = vsel %vm774, %v559, 0
  %v830 = vsel %vm774, %v562, 0
  %v833 = vsel %vm774, %v565, 0
  %v836 = vsel %vm774, %v568, 0
  %v839 = vsel %vm774, %v571, 0
  %v842 = vsel %vm774, %v574, 0
  %v845 = vsel %vm774, %v577, 0
  %v848 = vsel %vm774, %v580, 0
  %v851 = vsel %vm774, %v583, 0
  %v854 = vsel %vm774, %v586, 0
  %v857 = vsel %vm774, %v589, 0
  %v860 = vsel %vm774, %v592, 0
  %v863 = vsel %vm774, %v595, 0
  %v866 = vsel %vm774, %v598, 0
  %v869 = vsel %vm774, %v601, 0
  %871 = vmatprep.subr.bf16.mxu0 0
  %872 = vmatpush1.bf16.msra.mxu0 %v745
  %873 = vmatprep.subr.bf16.mxu0 0
  %874 = vmatpush1.bf16.msra.mxu0 %v744
  %875 = vmatprep.subr.bf16.mxu0 0
  %876 = vmatpush1.bf16.msra.mxu0 %v743
  %877 = vmatprep.subr.bf16.mxu0 0
  %878 = vmatpush1.bf16.msra.mxu0 %v742
  %879 = vmatprep.subr.bf16.mxu0 0
  %880 = vmatpush1.bf16.msra.mxu0 %v741
  %881 = vmatprep.subr.bf16.mxu0 0
  %882 = vmatpush1.bf16.msra.mxu0 %v740
  %883 = vmatprep.subr.bf16.mxu0 0
  %884 = vmatpush1.bf16.msra.mxu0 %v739
  %885 = vmatprep.subr.bf16.mxu0 0
  %886 = vmatpush1.bf16.msra.mxu0 %v738
  %887 = vmatprep.subr.bf16.mxu0 0
  %888 = vmatpush2.bf16.msra.mxu0 %v753
  %889 = vmatprep.subr.bf16.mxu0 0
  %890 = vmatpush2.bf16.msra.mxu0 %v752
  %891 = vmatprep.subr.bf16.mxu0 0
  %892 = vmatpush2.bf16.msra.mxu0 %v751
  %893 = vmatprep.subr.bf16.mxu0 0
  %894 = vmatpush2.bf16.msra.mxu0 %v750
  %895 = vmatprep.subr.bf16.mxu0 0
  %896 = vmatpush2.bf16.msra.mxu0 %v749
  %897 = vmatprep.subr.bf16.mxu0 0
  %898 = vmatpush2.bf16.msra.mxu0 %v748
  %899 = vmatprep.subr.bf16.mxu0 0
  %900 = vmatpush2.bf16.msra.mxu0 %v747
  %901 = vmatprep.subr.bf16.mxu0 0
  %902 = vmatpush2.bf16.msra.mxu0 %v746
  %903 = vmatprep.mubr.bf16.mxu0 %v507
  %904 = vmatmul.mubr.bf16.gmra.mxu0 %v506
  %v905 = vpop.f32.mrf.mxu0
  %v906 = vadd.f32 %v184, %v905
  %v907 = vpop.f32.mrf.mxu0
  %v908 = vpop.f32.mrf.mxu0
  %v909 = vadd.f32 %v184, %v908
  %v910 = vpop.f32.mrf.mxu0
  %911 = vmatprep.mubr.bf16.mxu0 %v510
  %912 = vmatmul.mubr.bf16.gmra.mxu0 %v509
  %v913 = vpop.f32.mrf.mxu0
  %v914 = vadd.f32 %v184, %v913
  %v915 = vpop.f32.mrf.mxu0
  %v916 = vpop.f32.mrf.mxu0
  %v917 = vadd.f32 %v184, %v916
  %v918 = vpop.f32.mrf.mxu0
  %919 = vmatprep.mubr.bf16.mxu0 %v513
  %920 = vmatmul.mubr.bf16.gmra.mxu0 %v512
  %v921 = vpop.f32.mrf.mxu0
  %v922 = vadd.f32 %v184, %v921
  %v923 = vpop.f32.mrf.mxu0
  %v924 = vpop.f32.mrf.mxu0
  %v925 = vadd.f32 %v184, %v924
  %v926 = vpop.f32.mrf.mxu0
  %927 = vmatprep.mubr.bf16.mxu0 %v516
  %928 = vmatmul.mubr.bf16.gmra.mxu0 %v515
  %v929 = vpop.f32.mrf.mxu0
  %v930 = vadd.f32 %v184, %v929
  %v931 = vpop.f32.mrf.mxu0
  %v932 = vpop.f32.mrf.mxu0
  %v933 = vadd.f32 %v184, %v932
  %v934 = vpop.f32.mrf.mxu0
  %935 = vmatprep.mubr.bf16.mxu0 %v519
  %936 = vmatmul.mubr.bf16.gmra.mxu0 %v518
  %v937 = vpop.f32.mrf.mxu0
  %v938 = vadd.f32 %v184, %v937
  %v939 = vpop.f32.mrf.mxu0
  %v940 = vpop.f32.mrf.mxu0
  %v941 = vadd.f32 %v184, %v940
  %v942 = vpop.f32.mrf.mxu0
  %943 = vmatprep.mubr.bf16.mxu0 %v522
  %944 = vmatmul.mubr.bf16.gmra.mxu0 %v521
  %v945 = vpop.f32.mrf.mxu0
  %v946 = vadd.f32 %v184, %v945
  %v947 = vpop.f32.mrf.mxu0
  %v948 = vpop.f32.mrf.mxu0
  %v949 = vadd.f32 %v184, %v948
  %v950 = vpop.f32.mrf.mxu0
  %951 = vmatprep.mubr.bf16.mxu0 %v525
  %952 = vmatmul.mubr.bf16.gmra.mxu0 %v524
  %v953 = vpop.f32.mrf.mxu0
  %v954 = vadd.f32 %v184, %v953
  %v955 = vpop.f32.mrf.mxu0
  %v956 = vpop.f32.mrf.mxu0
  %v957 = vadd.f32 %v184, %v956
  %v958 = vpop.f32.mrf.mxu0
  %959 = vmatprep.mubr.bf16.mxu0 %v528
  %960 = vmatmul.mubr.bf16.gmra.mxu0 %v527
  %v961 = vpop.f32.mrf.mxu0
  %v962 = vadd.f32 %v184, %v961
  %v963 = vpop.f32.mrf.mxu0
  %v964 = vpop.f32.mrf.mxu0
  %v965 = vadd.f32 %v184, %v964
  %v966 = vpop.f32.mrf.mxu0
  %967 = vmatprep.mubr.bf16.mxu0 %v531
  %968 = vmatmul.mubr.bf16.gmra.mxu0 %v530
  %v969 = vpop.f32.mrf.mxu0
  %v970 = vadd.f32 %v184, %v969
  %v971 = vpop.f32.mrf.mxu0
  %v972 = vpop.f32.mrf.mxu0
  %v973 = vadd.f32 %v184, %v972
  %v974 = vpop.f32.mrf.mxu0
  %975 = vmatprep.mubr.bf16.mxu0 %v534
  %976 = vmatmul.mubr.bf16.gmra.mxu0 %v533
  %v977 = vpop.f32.mrf.mxu0
  %v978 = vadd.f32 %v184, %v977
  %v979 = vpop.f32.mrf.mxu0
  %v980 = vpop.f32.mrf.mxu0
  %v981 = vadd.f32 %v184, %v980
  %v982 = vpop.f32.mrf.mxu0
  %983 = vmatprep.mubr.bf16.mxu0 %v537
  %984 = vmatmul.mubr.bf16.gmra.mxu0 %v536
  %v985 = vpop.f32.mrf.mxu0
  %v986 = vadd.f32 %v184, %v985
  %v987 = vpop.f32.mrf.mxu0
  %v988 = vpop.f32.mrf.mxu0
  %v989 = vadd.f32 %v184, %v988
  %v990 = vpop.f32.mrf.mxu0
  %991 = vmatprep.mubr.bf16.mxu0 %v540
  %992 = vmatmul.mubr.bf16.gmra.mxu0 %v539
  %v993 = vpop.f32.mrf.mxu0
  %v994 = vadd.f32 %v184, %v993
  %v995 = vpop.f32.mrf.mxu0
  %v996 = vpop.f32.mrf.mxu0
  %v997 = vadd.f32 %v184, %v996
  %v998 = vpop.f32.mrf.mxu0
  %999 = vmatprep.mubr.bf16.mxu0 %v543
  %1000 = vmatmul.mubr.bf16.gmra.mxu0 %v542
  %v1001 = vpop.f32.mrf.mxu0
  %v1002 = vadd.f32 %v184, %v1001
  %v1003 = vpop.f32.mrf.mxu0
  %v1004 = vpop.f32.mrf.mxu0
  %v1005 = vadd.f32 %v184, %v1004
  %v1006 = vpop.f32.mrf.mxu0
  %1007 = vmatprep.mubr.bf16.mxu0 %v546
  %1008 = vmatmul.mubr.bf16.gmra.mxu0 %v545
  %v1009 = vpop.f32.mrf.mxu0
  %v1010 = vadd.f32 %v184, %v1009
  %v1011 = vpop.f32.mrf.mxu0
  %v1012 = vpop.f32.mrf.mxu0
  %v1013 = vadd.f32 %v184, %v1012
  %v1014 = vpop.f32.mrf.mxu0
  %1015 = vmatprep.mubr.bf16.mxu0 %v549
  %1016 = vmatmul.mubr.bf16.gmra.mxu0 %v548
  %v1017 = vpop.f32.mrf.mxu0
  %v1018 = vadd.f32 %v184, %v1017
  %v1019 = vpop.f32.mrf.mxu0
  %v1020 = vpop.f32.mrf.mxu0
  %v1021 = vadd.f32 %v184, %v1020
  %v1022 = vpop.f32.mrf.mxu0
  %1023 = vmatprep.mubr.bf16.mxu0 %v552
  %1024 = vmatmul.mubr.bf16.gmra.mxu0 %v551
  %v1025 = vpop.f32.mrf.mxu0
  %v1026 = vadd.f32 %v184, %v1025
  %v1027 = vpop.f32.mrf.mxu0
  %v1028 = vpop.f32.mrf.mxu0
  %v1029 = vadd.f32 %v184, %v1028
  %v1030 = vpop.f32.mrf.mxu0
  %1031 = vmatprep.mubr.bf16.mxu0 %v555
  %1032 = vmatmul.mubr.bf16.gmra.mxu0 %v554
  %v1033 = vpop.f32.mrf.mxu0
  %v1034 = vadd.f32 %v184, %v1033
  %v1035 = vpop.f32.mrf.mxu0
  %v1036 = vpop.f32.mrf.mxu0
  %v1037 = vadd.f32 %v184, %v1036
  %v1038 = vpop.f32.mrf.mxu0
  %1039 = vmatprep.mubr.bf16.mxu0 %v558
  %1040 = vmatmul.mubr.bf16.gmra.mxu0 %v557
  %v1041 = vpop.f32.mrf.mxu0
  %v1042 = vadd.f32 %v184, %v1041
  %v1043 = vpop.f32.mrf.mxu0
  %v1044 = vpop.f32.mrf.mxu0
  %v1045 = vadd.f32 %v184, %v1044
  %v1046 = vpop.f32.mrf.mxu0
  %1047 = vmatprep.mubr.bf16.mxu0 %v561
  %1048 = vmatmul.mubr.bf16.gmra.mxu0 %v560
  %v1049 = vpop.f32.mrf.mxu0
  %v1050 = vadd.f32 %v184, %v1049
  %v1051 = vpop.f32.mrf.mxu0
  %v1052 = vpop.f32.mrf.mxu0
  %v1053 = vadd.f32 %v184, %v1052
  %v1054 = vpop.f32.mrf.mxu0
  %1055 = vmatprep.mubr.bf16.mxu0 %v564
  %1056 = vmatmul.mubr.bf16.gmra.mxu0 %v563
  %v1057 = vpop.f32.mrf.mxu0
  %v1058 = vadd.f32 %v184, %v1057
  %v1059 = vpop.f32.mrf.mxu0
  %v1060 = vpop.f32.mrf.mxu0
  %v1061 = vadd.f32 %v184, %v1060
  %v1062 = vpop.f32.mrf.mxu0
  %1063 = vmatprep.mubr.bf16.mxu0 %v567
  %1064 = vmatmul.mubr.bf16.gmra.mxu0 %v566
  %v1065 = vpop.f32.mrf.mxu0
  %v1066 = vadd.f32 %v184, %v1065
  %v1067 = vpop.f32.mrf.mxu0
  %v1068 = vpop.f32.mrf.mxu0
  %v1069 = vadd.f32 %v184, %v1068
  %v1070 = vpop.f32.mrf.mxu0
  %1071 = vmatprep.mubr.bf16.mxu0 %v570
  %1072 = vmatmul.mubr.bf16.gmra.mxu0 %v569
  %v1073 = vpop.f32.mrf.mxu0
  %v1074 = vadd.f32 %v184, %v1073
  %v1075 = vpop.f32.mrf.mxu0
  %v1076 = vpop.f32.mrf.mxu0
  %v1077 = vadd.f32 %v184, %v1076
  %v1078 = vpop.f32.mrf.mxu0
  %1079 = vmatprep.mubr.bf16.mxu0 %v573
  %1080 = vmatmul.mubr.bf16.gmra.mxu0 %v572
  %v1081 = vpop.f32.mrf.mxu0
  %v1082 = vadd.f32 %v184, %v1081
  %v1083 = vpop.f32.mrf.mxu0
  %v1084 = vpop.f32.mrf.mxu0
  %v1085 = vadd.f32 %v184, %v1084
  %v1086 = vpop.f32.mrf.mxu0
  %1087 = vmatprep.mubr.bf16.mxu0 %v576
  %1088 = vmatmul.mubr.bf16.gmra.mxu0 %v575
  %v1089 = vpop.f32.mrf.mxu0
  %v1090 = vadd.f32 %v184, %v1089
  %v1091 = vpop.f32.mrf.mxu0
  %v1092 = vpop.f32.mrf.mxu0
  %v1093 = vadd.f32 %v184, %v1092
  %v1094 = vpop.f32.mrf.mxu0
  %1095 = vmatprep.mubr.bf16.mxu0 %v579
  %1096 = vmatmul.mubr.bf16.gmra.mxu0 %v578
  %v1097 = vpop.f32.mrf.mxu0
  %v1098 = vadd.f32 %v184, %v1097
  %v1099 = vpop.f32.mrf.mxu0
  %v1100 = vpop.f32.mrf.mxu0
  %v1101 = vadd.f32 %v184, %v1100
  %v1102 = vpop.f32.mrf.mxu0
  %1103 = vmatprep.mubr.bf16.mxu0 %v582
  %1104 = vmatmul.mubr.bf16.gmra.mxu0 %v581
  %v1105 = vpop.f32.mrf.mxu0
  %v1106 = vadd.f32 %v184, %v1105
  %v1107 = vpop.f32.mrf.mxu0
  %v1108 = vpop.f32.mrf.mxu0
  %v1109 = vadd.f32 %v184, %v1108
  %v1110 = vpop.f32.mrf.mxu0
  %1111 = vmatprep.mubr.bf16.mxu0 %v585
  %1112 = vmatmul.mubr.bf16.gmra.mxu0 %v584
  %v1113 = vpop.f32.mrf.mxu0
  %v1114 = vadd.f32 %v184, %v1113
  %v1115 = vpop.f32.mrf.mxu0
  %v1116 = vpop.f32.mrf.mxu0
  %v1117 = vadd.f32 %v184, %v1116
  %v1118 = vpop.f32.mrf.mxu0
  %1119 = vmatprep.mubr.bf16.mxu0 %v588
  %1120 = vmatmul.mubr.bf16.gmra.mxu0 %v587
  %v1121 = vpop.f32.mrf.mxu0
  %v1122 = vadd.f32 %v184, %v1121
  %v1123 = vpop.f32.mrf.mxu0
  %v1124 = vpop.f32.mrf.mxu0
  %v1125 = vadd.f32 %v184, %v1124
  %v1126 = vpop.f32.mrf.mxu0
  %1127 = vmatprep.mubr.bf16.mxu0 %v591
  %1128 = vmatmul.mubr.bf16.gmra.mxu0 %v590
  %v1129 = vpop.f32.mrf.mxu0
  %v1130 = vadd.f32 %v184, %v1129
  %v1131 = vpop.f32.mrf.mxu0
  %v1132 = vpop.f32.mrf.mxu0
  %v1133 = vadd.f32 %v184, %v1132
  %v1134 = vpop.f32.mrf.mxu0
  %1135 = vmatprep.mubr.bf16.mxu0 %v594
  %1136 = vmatmul.mubr.bf16.gmra.mxu0 %v593
  %v1137 = vpop.f32.mrf.mxu0
  %v1138 = vadd.f32 %v184, %v1137
  %v1139 = vpop.f32.mrf.mxu0
  %v1140 = vpop.f32.mrf.mxu0
  %v1141 = vadd.f32 %v184, %v1140
  %v1142 = vpop.f32.mrf.mxu0
  %1143 = vmatprep.mubr.bf16.mxu0 %v597
  %1144 = vmatmul.mubr.bf16.gmra.mxu0 %v596
  %v1145 = vpop.f32.mrf.mxu0
  %v1146 = vadd.f32 %v184, %v1145
  %v1147 = vpop.f32.mrf.mxu0
  %v1148 = vpop.f32.mrf.mxu0
  %v1149 = vadd.f32 %v184, %v1148
  %v1150 = vpop.f32.mrf.mxu0
  %1151 = vmatprep.mubr.bf16.mxu0 %v600
  %1152 = vmatmul.mubr.bf16.gmra.mxu0 %v599
  %v1153 = vpop.f32.mrf.mxu0
  %v1154 = vadd.f32 %v184, %v1153
  %v1155 = vpop.f32.mrf.mxu0
  %v1156 = vpop.f32.mrf.mxu0
  %v1157 = vadd.f32 %v184, %v1156
  %v1158 = vpop.f32.mrf.mxu0
  %1159 = vdwg.mxu0
  %1160 = vmatprep.subr.bf16.mxu0 0
  %1161 = vmatpush1.bf16.msra.mxu0 0
  %1162 = vmatprep.subr.bf16.mxu0 0
  %1163 = vmatpush1.bf16.msra.mxu0 0
  %1164 = vmatprep.subr.bf16.mxu0 0
  %1165 = vmatpush1.bf16.msra.mxu0 0
  %1166 = vmatprep.subr.bf16.mxu0 0
  %1167 = vmatpush1.bf16.msra.mxu0 0
  %1168 = vmatprep.subr.bf16.mxu0 0
  %1169 = vmatpush1.bf16.msra.mxu0 0
  %1170 = vmatprep.subr.bf16.mxu0 0
  %1171 = vmatpush1.bf16.msra.mxu0 0
  %1172 = vmatprep.subr.bf16.mxu0 0
  %1173 = vmatpush1.bf16.msra.mxu0 %v755
  %1174 = vmatprep.subr.bf16.mxu0 0
  %1175 = vmatpush1.bf16.msra.mxu0 %v754
  %1176 = vmatprep.subr.bf16.mxu0 0
  %1177 = vmatpush2.bf16.msra.mxu0 0
  %1178 = vmatprep.subr.bf16.mxu0 0
  %1179 = vmatpush2.bf16.msra.mxu0 0
  %1180 = vmatprep.subr.bf16.mxu0 0
  %1181 = vmatpush2.bf16.msra.mxu0 0
  %1182 = vmatprep.subr.bf16.mxu0 0
  %1183 = vmatpush2.bf16.msra.mxu0 0
  %1184 = vmatprep.subr.bf16.mxu0 0
  %1185 = vmatpush2.bf16.msra.mxu0 0
  %1186 = vmatprep.subr.bf16.mxu0 0
  %1187 = vmatpush2.bf16.msra.mxu0 0
  %1188 = vmatprep.subr.bf16.mxu0 0
  %1189 = vmatpush2.bf16.msra.mxu0 0
  %1190 = vmatprep.subr.bf16.mxu0 0
  %1191 = vmatpush2.bf16.msra.mxu0 0
  %1192 = vmatprep.mubr.bf16.mxu0 0
  %1193 = vmatmul.mubr.bf16.gmra.mxu0 %v776
  %v1194 = vpop.f32.mrf.mxu0
  %v1195 = vadd.f32 %v906, %v1194
  %v1196 = vpop.f32.mrf.mxu0
  %v1197 = vpop.f32.mrf.mxu0
  %v1198 = vadd.f32 %v909, %v1197
  %v1199 = vpop.f32.mrf.mxu0
  %1200 = vmatprep.mubr.bf16.mxu0 0
  %1201 = vmatmul.mubr.bf16.gmra.mxu0 %v779
  %v1202 = vpop.f32.mrf.mxu0
  %v1203 = vadd.f32 %v914, %v1202
  %v1204 = vpop.f32.mrf.mxu0
  %v1205 = vpop.f32.mrf.mxu0
  %v1206 = vadd.f32 %v917, %v1205
  %v1207 = vpop.f32.mrf.mxu0
  %1208 = vmatprep.mubr.bf16.mxu0 0
  %1209 = vmatmul.mubr.bf16.gmra.mxu0 %v782
  %v1210 = vpop.f32.mrf.mxu0
  %v1211 = vadd.f32 %v922, %v1210
  %v1212 = vpop.f32.mrf.mxu0
  %v1213 = vpop.f32.mrf.mxu0
  %v1214 = vadd.f32 %v925, %v1213
  %v1215 = vpop.f32.mrf.mxu0
  %1216 = vmatprep.mubr.bf16.mxu0 0
  %1217 = vmatmul.mubr.bf16.gmra.mxu0 %v785
  %v1218 = vpop.f32.mrf.mxu0
  %v1219 = vadd.f32 %v930, %v1218
  %v1220 = vpop.f32.mrf.mxu0
  %v1221 = vpop.f32.mrf.mxu0
  %v1222 = vadd.f32 %v933, %v1221
  %v1223 = vpop.f32.mrf.mxu0
  %1224 = vmatprep.mubr.bf16.mxu0 0
  %1225 = vmatmul.mubr.bf16.gmra.mxu0 %v788
  %v1226 = vpop.f32.mrf.mxu0
  %v1227 = vadd.f32 %v938, %v1226
  %v1228 = vpop.f32.mrf.mxu0
  %v1229 = vpop.f32.mrf.mxu0
  %v1230 = vadd.f32 %v941, %v1229
  %v1231 = vpop.f32.mrf.mxu0
  %1232 = vmatprep.mubr.bf16.mxu0 0
  %1233 = vmatmul.mubr.bf16.gmra.mxu0 %v791
  %v1234 = vpop.f32.mrf.mxu0
  %v1235 = vadd.f32 %v946, %v1234
  %v1236 = vpop.f32.mrf.mxu0
  %v1237 = vpop.f32.mrf.mxu0
  %v1238 = vadd.f32 %v949, %v1237
  %v1239 = vpop.f32.mrf.mxu0
  %1240 = vmatprep.mubr.bf16.mxu0 0
  %1241 = vmatmul.mubr.bf16.gmra.mxu0 %v794
  %v1242 = vpop.f32.mrf.mxu0
  %v1243 = vadd.f32 %v954, %v1242
  %v1244 = vpop.f32.mrf.mxu0
  %v1245 = vpop.f32.mrf.mxu0
  %v1246 = vadd.f32 %v957, %v1245
  %v1247 = vpop.f32.mrf.mxu0
  %1248 = vmatprep.mubr.bf16.mxu0 0
  %1249 = vmatmul.mubr.bf16.gmra.mxu0 %v797
  %v1250 = vpop.f32.mrf.mxu0
  %v1251 = vadd.f32 %v962, %v1250
  %v1252 = vpop.f32.mrf.mxu0
  %v1253 = vpop.f32.mrf.mxu0
  %v1254 = vadd.f32 %v965, %v1253
  %v1255 = vpop.f32.mrf.mxu0
  %1256 = vmatprep.mubr.bf16.mxu0 0
  %1257 = vmatmul.mubr.bf16.gmra.mxu0 %v800
  %v1258 = vpop.f32.mrf.mxu0
  %v1259 = vadd.f32 %v970, %v1258
  %v1260 = vpop.f32.mrf.mxu0
  %v1261 = vpop.f32.mrf.mxu0
  %v1262 = vadd.f32 %v973, %v1261
  %v1263 = vpop.f32.mrf.mxu0
  %1264 = vmatprep.mubr.bf16.mxu0 0
  %1265 = vmatmul.mubr.bf16.gmra.mxu0 %v803
  %v1266 = vpop.f32.mrf.mxu0
  %v1267 = vadd.f32 %v978, %v1266
  %v1268 = vpop.f32.mrf.mxu0
  %v1269 = vpop.f32.mrf.mxu0
  %v1270 = vadd.f32 %v981, %v1269
  %v1271 = vpop.f32.mrf.mxu0
  %1272 = vmatprep.mubr.bf16.mxu0 0
  %1273 = vmatmul.mubr.bf16.gmra.mxu0 %v806
  %v1274 = vpop.f32.mrf.mxu0
  %v1275 = vadd.f32 %v986, %v1274
  %v1276 = vpop.f32.mrf.mxu0
  %v1277 = vpop.f32.mrf.mxu0
  %v1278 = vadd.f32 %v989, %v1277
  %v1279 = vpop.f32.mrf.mxu0
  %1280 = vmatprep.mubr.bf16.mxu0 0
  %1281 = vmatmul.mubr.bf16.gmra.mxu0 %v809
  %v1282 = vpop.f32.mrf.mxu0
  %v1283 = vadd.f32 %v994, %v1282
  %v1284 = vpop.f32.mrf.mxu0
  %v1285 = vpop.f32.mrf.mxu0
  %v1286 = vadd.f32 %v997, %v1285
  %v1287 = vpop.f32.mrf.mxu0
  %1288 = vmatprep.mubr.bf16.mxu0 0
  %1289 = vmatmul.mubr.bf16.gmra.mxu0 %v812
  %v1290 = vpop.f32.mrf.mxu0
  %v1291 = vadd.f32 %v1002, %v1290
  %v1292 = vpop.f32.mrf.mxu0
  %v1293 = vpop.f32.mrf.mxu0
  %v1294 = vadd.f32 %v1005, %v1293
  %v1295 = vpop.f32.mrf.mxu0
  %1296 = vmatprep.mubr.bf16.mxu0 0
  %1297 = vmatmul.mubr.bf16.gmra.mxu0 %v815
  %v1298 = vpop.f32.mrf.mxu0
  %v1299 = vadd.f32 %v1010, %v1298
  %v1300 = vpop.f32.mrf.mxu0
  %v1301 = vpop.f32.mrf.mxu0
  %v1302 = vadd.f32 %v1013, %v1301
  %v1303 = vpop.f32.mrf.mxu0
  %1304 = vmatprep.mubr.bf16.mxu0 0
  %1305 = vmatmul.mubr.bf16.gmra.mxu0 %v818
  %v1306 = vpop.f32.mrf.mxu0
  %v1307 = vadd.f32 %v1018, %v1306
  %v1308 = vpop.f32.mrf.mxu0
  %v1309 = vpop.f32.mrf.mxu0
  %v1310 = vadd.f32 %v1021, %v1309
  %v1311 = vpop.f32.mrf.mxu0
  %1312 = vmatprep.mubr.bf16.mxu0 0
  %1313 = vmatmul.mubr.bf16.gmra.mxu0 %v821
  %v1314 = vpop.f32.mrf.mxu0
  %v1315 = vadd.f32 %v1026, %v1314
  %v1316 = vpop.f32.mrf.mxu0
  %v1317 = vpop.f32.mrf.mxu0
  %v1318 = vadd.f32 %v1029, %v1317
  %v1319 = vpop.f32.mrf.mxu0
  %1320 = vmatprep.mubr.bf16.mxu0 0
  %1321 = vmatmul.mubr.bf16.gmra.mxu0 %v824
  %v1322 = vpop.f32.mrf.mxu0
  %v1323 = vadd.f32 %v1034, %v1322
  %v1324 = vpop.f32.mrf.mxu0
  %v1325 = vpop.f32.mrf.mxu0
  %v1326 = vadd.f32 %v1037, %v1325
  %v1327 = vpop.f32.mrf.mxu0
  %1328 = vmatprep.mubr.bf16.mxu0 0
  %1329 = vmatmul.mubr.bf16.gmra.mxu0 %v827
  %v1330 = vpop.f32.mrf.mxu0
  %v1331 = vadd.f32 %v1042, %v1330
  %v1332 = vpop.f32.mrf.mxu0
  %v1333 = vpop.f32.mrf.mxu0
  %v1334 = vadd.f32 %v1045, %v1333
  %v1335 = vpop.f32.mrf.mxu0
  %1336 = vmatprep.mubr.bf16.mxu0 0
  %1337 = vmatmul.mubr.bf16.gmra.mxu0 %v830
  %v1338 = vpop.f32.mrf.mxu0
  %v1339 = vadd.f32 %v1050, %v1338
  %v1340 = vpop.f32.mrf.mxu0
  %v1341 = vpop.f32.mrf.mxu0
  %v1342 = vadd.f32 %v1053, %v1341
  %v1343 = vpop.f32.mrf.mxu0
  %1344 = vmatprep.mubr.bf16.mxu0 0
  %1345 = vmatmul.mubr.bf16.gmra.mxu0 %v833
  %v1346 = vpop.f32.mrf.mxu0
  %v1347 = vadd.f32 %v1058, %v1346
  %v1348 = vpop.f32.mrf.mxu0
  %v1349 = vpop.f32.mrf.mxu0
  %v1350 = vadd.f32 %v1061, %v1349
  %v1351 = vpop.f32.mrf.mxu0
  %1352 = vmatprep.mubr.bf16.mxu0 0
  %1353 = vmatmul.mubr.bf16.gmra.mxu0 %v836
  %v1354 = vpop.f32.mrf.mxu0
  %v1355 = vadd.f32 %v1066, %v1354
  %v1356 = vpop.f32.mrf.mxu0
  %v1357 = vpop.f32.mrf.mxu0
  %v1358 = vadd.f32 %v1069, %v1357
  %v1359 = vpop.f32.mrf.mxu0
  %1360 = vmatprep.mubr.bf16.mxu0 0
  %1361 = vmatmul.mubr.bf16.gmra.mxu0 %v839
  %v1362 = vpop.f32.mrf.mxu0
  %v1363 = vadd.f32 %v1074, %v1362
  %v1364 = vpop.f32.mrf.mxu0
  %v1365 = vpop.f32.mrf.mxu0
  %v1366 = vadd.f32 %v1077, %v1365
  %v1367 = vpop.f32.mrf.mxu0
  %1368 = vmatprep.mubr.bf16.mxu0 0
  %1369 = vmatmul.mubr.bf16.gmra.mxu0 %v842
  %v1370 = vpop.f32.mrf.mxu0
  %v1371 = vadd.f32 %v1082, %v1370
  %v1372 = vpop.f32.mrf.mxu0
  %v1373 = vpop.f32.mrf.mxu0
  %v1374 = vadd.f32 %v1085, %v1373
  %v1375 = vpop.f32.mrf.mxu0
  %1376 = vmatprep.mubr.bf16.mxu0 0
  %1377 = vmatmul.mubr.bf16.gmra.mxu0 %v845
  %v1378 = vpop.f32.mrf.mxu0
  %v1379 = vadd.f32 %v1090, %v1378
  %v1380 = vpop.f32.mrf.mxu0
  %v1381 = vpop.f32.mrf.mxu0
  %v1382 = vadd.f32 %v1093, %v1381
  %v1383 = vpop.f32.mrf.mxu0
  %1384 = vmatprep.mubr.bf16.mxu0 0
  %1385 = vmatmul.mubr.bf16.gmra.mxu0 %v848
  %v1386 = vpop.f32.mrf.mxu0
  %v1387 = vadd.f32 %v1098, %v1386
  %v1388 = vpop.f32.mrf.mxu0
  %v1389 = vpop.f32.mrf.mxu0
  %v1390 = vadd.f32 %v1101, %v1389
  %v1391 = vpop.f32.mrf.mxu0
  %1392 = vmatprep.mubr.bf16.mxu0 0
  %1393 = vmatmul.mubr.bf16.gmra.mxu0 %v851
  %v1394 = vpop.f32.mrf.mxu0
  %v1395 = vadd.f32 %v1106, %v1394
  %v1396 = vpop.f32.mrf.mxu0
  %v1397 = vpop.f32.mrf.mxu0
  %v1398 = vadd.f32 %v1109, %v1397
  %v1399 = vpop.f32.mrf.mxu0
  %1400 = vmatprep.mubr.bf16.mxu0 0
  %1401 = vmatmul.mubr.bf16.gmra.mxu0 %v854
  %v1402 = vpop.f32.mrf.mxu0
  %v1403 = vadd.f32 %v1114, %v1402
  %v1404 = vpop.f32.mrf.mxu0
  %v1405 = vpop.f32.mrf.mxu0
  %v1406 = vadd.f32 %v1117, %v1405
  %v1407 = vpop.f32.mrf.mxu0
  %1408 = vmatprep.mubr.bf16.mxu0 0
  %1409 = vmatmul.mubr.bf16.gmra.mxu0 %v857
  %v1410 = vpop.f32.mrf.mxu0
  %v1411 = vadd.f32 %v1122, %v1410
  %v1412 = vpop.f32.mrf.mxu0
  %v1413 = vpop.f32.mrf.mxu0
  %v1414 = vadd.f32 %v1125, %v1413
  %v1415 = vpop.f32.mrf.mxu0
  %1416 = vmatprep.mubr.bf16.mxu0 0
  %1417 = vmatmul.mubr.bf16.gmra.mxu0 %v860
  %v1418 = vpop.f32.mrf.mxu0
  %v1419 = vadd.f32 %v1130, %v1418
  %v1420 = vpop.f32.mrf.mxu0
  %v1421 = vpop.f32.mrf.mxu0
  %v1422 = vadd.f32 %v1133, %v1421
  %v1423 = vpop.f32.mrf.mxu0
  %1424 = vmatprep.mubr.bf16.mxu0 0
  %1425 = vmatmul.mubr.bf16.gmra.mxu0 %v863
  %v1426 = vpop.f32.mrf.mxu0
  %v1427 = vadd.f32 %v1138, %v1426
  %v1428 = vpop.f32.mrf.mxu0
  %v1429 = vpop.f32.mrf.mxu0
  %v1430 = vadd.f32 %v1141, %v1429
  %v1431 = vpop.f32.mrf.mxu0
  %1432 = vmatprep.mubr.bf16.mxu0 0
  %1433 = vmatmul.mubr.bf16.gmra.mxu0 %v866
  %v1434 = vpop.f32.mrf.mxu0
  %v1435 = vadd.f32 %v1146, %v1434
  %v1436 = vpop.f32.mrf.mxu0
  %v1437 = vpop.f32.mrf.mxu0
  %v1438 = vadd.f32 %v1149, %v1437
  %v1439 = vpop.f32.mrf.mxu0
  %1440 = vmatprep.mubr.bf16.mxu0 0
  %1441 = vmatmul.mubr.bf16.gmra.mxu0 %v869
  %v1442 = vpop.f32.mrf.mxu0
  %v1443 = vadd.f32 %v1154, %v1442
  %v1444 = vpop.f32.mrf.mxu0
  %v1445 = vpop.f32.mrf.mxu0
  %v1446 = vadd.f32 %v1157, %v1445
  %v1447 = vpop.f32.mrf.mxu0
  %1448 = vdwg.mxu0
  %v1449 = vmax.f32 %v1195, 0.0
  %v1450 = vmax.f32 %v1198, 0.0
  %v1451 = vmax.f32 %v1203, 0.0
  %v1452 = vmax.f32 %v1206, 0.0
  %v1453 = vmax.f32 %v1211, 0.0
  %v1454 = vmax.f32 %v1214, 0.0
  %v1455 = vmax.f32 %v1219, 0.0
  %v1456 = vmax.f32 %v1222, 0.0
  %v1457 = vmax.f32 %v1227, 0.0
  %v1458 = vmax.f32 %v1230, 0.0
  %v1459 = vmax.f32 %v1235, 0.0
  %v1460 = vmax.f32 %v1238, 0.0
  %v1461 = vmax.f32 %v1243, 0.0
  %v1462 = vmax.f32 %v1246, 0.0
  %v1463 = vmax.f32 %v1251, 0.0
  %v1464 = vmax.f32 %v1254, 0.0
  %v1465 = vmax.f32 %v1259, 0.0
  %v1466 = vmax.f32 %v1262, 0.0
  %v1467 = vmax.f32 %v1267, 0.0
  %v1468 = vmax.f32 %v1270, 0.0
  %v1469 = vmax.f32 %v1275, 0.0
  %v1470 = vmax.f32 %v1278, 0.0
  %v1471 = vmax.f32 %v1283, 0.0
  %v1472 = vmax.f32 %v1286, 0.0
  %v1473 = vmax.f32 %v1291, 0.0
  %v1474 = vmax.f32 %v1294, 0.0
  %v1475 = vmax.f32 %v1299, 0.0
  %v1476 = vmax.f32 %v1302, 0.0
  %v1477 = vmax.f32 %v1307, 0.0
  %v1478 = vmax.f32 %v1310, 0.0
  %v1479 = vmax.f32 %v1315, 0.0
  %v1480 = vmax.f32 %v1318, 0.0
  %v1481 = vmax.f32 %v1323, 0.0
  %v1482 = vmax.f32 %v1326, 0.0
  %v1483 = vmax.f32 %v1331, 0.0
  %v1484 = vmax.f32 %v1334, 0.0
  %v1485 = vmax.f32 %v1339, 0.0
  %v1486 = vmax.f32 %v1342, 0.0
  %v1487 = vmax.f32 %v1347, 0.0
  %v1488 = vmax.f32 %v1350, 0.0
  %v1489 = vmax.f32 %v1355, 0.0
  %v1490 = vmax.f32 %v1358, 0.0
  %v1491 = vmax.f32 %v1363, 0.0
  %v1492 = vmax.f32 %v1366, 0.0
  %v1493 = vmax.f32 %v1371, 0.0
  %v1494 = vmax.f32 %v1374, 0.0
  %v1495 = vmax.f32 %v1379, 0.0
  %v1496 = vmax.f32 %v1382, 0.0
  %v1497 = vmax.f32 %v1387, 0.0
  %v1498 = vmax.f32 %v1390, 0.0
  %v1499 = vmax.f32 %v1395, 0.0
  %v1500 = vmax.f32 %v1398, 0.0
  %v1501 = vmax.f32 %v1403, 0.0
  %v1502 = vmax.f32 %v1406, 0.0
  %v1503 = vmax.f32 %v1411, 0.0
  %v1504 = vmax.f32 %v1414, 0.0
  %v1505 = vmax.f32 %v1419, 0.0
  %v1506 = vmax.f32 %v1422, 0.0
  %v1507 = vmax.f32 %v1427, 0.0
  %v1508 = vmax.f32 %v1430, 0.0
  %v1509 = vmax.f32 %v1435, 0.0
  %v1510 = vmax.f32 %v1438, 0.0
  %v1511 = vmax.f32 %v1443, 0.0
  %v1512 = vmax.f32 %v1446, 0.0
  %v1513 = vpack.c.bf16 %v1450, %v1449
  %v1514 = vpack.c.bf16 %v1452, %v1451
  %v1515 = vpack.c.bf16 %v1454, %v1453
  %v1516 = vpack.c.bf16 %v1456, %v1455
  %v1517 = vpack.c.bf16 %v1458, %v1457
  %v1518 = vpack.c.bf16 %v1460, %v1459
  %v1519 = vpack.c.bf16 %v1462, %v1461
  %v1520 = vpack.c.bf16 %v1464, %v1463
  %v1521 = vpack.c.bf16 %v1466, %v1465
  %v1522 = vpack.c.bf16 %v1468, %v1467
  %v1523 = vpack.c.bf16 %v1470, %v1469
  %v1524 = vpack.c.bf16 %v1472, %v1471
  %v1525 = vpack.c.bf16 %v1474, %v1473
  %v1526 = vpack.c.bf16 %v1476, %v1475
  %v1527 = vpack.c.bf16 %v1478, %v1477
  %v1528 = vpack.c.bf16 %v1480, %v1479
  %v1529 = vpack.c.bf16 %v1482, %v1481
  %v1530 = vpack.c.bf16 %v1484, %v1483
  %v1531 = vpack.c.bf16 %v1486, %v1485
  %v1532 = vpack.c.bf16 %v1488, %v1487
  %v1533 = vpack.c.bf16 %v1490, %v1489
  %v1534 = vpack.c.bf16 %v1492, %v1491
  %v1535 = vpack.c.bf16 %v1494, %v1493
  %v1536 = vpack.c.bf16 %v1496, %v1495
  %v1537 = vpack.c.bf16 %v1498, %v1497
  %v1538 = vpack.c.bf16 %v1500, %v1499
  %v1539 = vpack.c.bf16 %v1502, %v1501
  %v1540 = vpack.c.bf16 %v1504, %v1503
  %v1541 = vpack.c.bf16 %v1506, %v1505
  %v1542 = vpack.c.bf16 %v1508, %v1507
  %v1543 = vpack.c.bf16 %v1510, %v1509
  %v1544 = vpack.c.bf16 %v1512, %v1511
  %v1577 = vunpack.c.l.b16 %v1513
  %v1578 = vunpack.c.h.b16 %v1513
  %v1579 = vunpack.c.l.b16 %v1514
  %v1580 = vunpack.c.h.b16 %v1514
  %v1581 = vunpack.c.l.b16 %v1515
  %v1582 = vunpack.c.h.b16 %v1515
  %v1583 = vunpack.c.l.b16 %v1516
  %v1584 = vunpack.c.h.b16 %v1516
  %v1585 = vunpack.c.l.b16 %v1517
  %v1586 = vunpack.c.h.b16 %v1517
  %v1587 = vunpack.c.l.b16 %v1518
  %v1588 = vunpack.c.h.b16 %v1518
  %v1589 = vunpack.c.l.b16 %v1519
  %v1590 = vunpack.c.h.b16 %v1519
  %v1591 = vunpack.c.l.b16 %v1520
  %v1592 = vunpack.c.h.b16 %v1520
  %v1593 = vunpack.c.l.b16 %v1521
  %v1594 = vunpack.c.h.b16 %v1521
  %v1595 = vunpack.c.l.b16 %v1522
  %v1596 = vunpack.c.h.b16 %v1522
  %v1597 = vunpack.c.l.b16 %v1523
  %v1598 = vunpack.c.h.b16 %v1523
  %v1599 = vunpack.c.l.b16 %v1524
  %v1600 = vunpack.c.h.b16 %v1524
  %v1601 = vunpack.c.l.b16 %v1525
  %v1602 = vunpack.c.h.b16 %v1525
  %v1603 = vunpack.c.l.b16 %v1526
  %v1604 = vunpack.c.h.b16 %v1526
  %v1605 = vunpack.c.l.b16 %v1527
  %v1606 = vunpack.c.h.b16 %v1527
  %v1607 = vunpack.c.l.b16 %v1528
  %v1608 = vunpack.c.h.b16 %v1528
  %v1609 = vunpack.c.l.b16 %v1529
  %v1610 = vunpack.c.h.b16 %v1529
  %v1611 = vunpack.c.l.b16 %v1530
  %v1612 = vunpack.c.h.b16 %v1530
  %v1613 = vunpack.c.l.b16 %v1531
  %v1614 = vunpack.c.h.b16 %v1531
  %v1615 = vunpack.c.l.b16 %v1532
  %v1616 = vunpack.c.h.b16 %v1532
  %v1617 = vunpack.c.l.b16 %v1533
  %v1618 = vunpack.c.h.b16 %v1533
  %v1619 = vunpack.c.l.b16 %v1534
  %v1620 = vunpack.c.h.b16 %v1534
  %v1621 = vunpack.c.l.b16 %v1535
  %v1622 = vunpack.c.h.b16 %v1535
  %v1623 = vunpack.c.l.b16 %v1536
  %v1624 = vunpack.c.h.b16 %v1536
  %v1625 = vunpack.c.l.b16 %v1537
  %v1626 = vunpack.c.h.b16 %v1537
  %v1627 = vunpack.c.l.b16 %v1538
  %v1628 = vunpack.c.h.b16 %v1538
  %v1629 = vunpack.c.l.b16 %v1539
  %v1630 = vunpack.c.h.b16 %v1539
  %v1631 = vunpack.c.l.b16 %v1540
  %v1632 = vunpack.c.h.b16 %v1540
  %v1633 = vunpack.c.l.b16 %v1541
  %v1634 = vunpack.c.h.b16 %v1541
  %v1635 = vunpack.c.l.b16 %v1542
  %v1636 = vunpack.c.h.b16 %v1542
  %v1637 = vunpack.c.l.b16 %v1543
  %v1638 = vunpack.c.h.b16 %v1543
  %v1639 = vunpack.c.l.b16 %v1544
  %v1640 = vunpack.c.h.b16 %v1544
  %v1641 = vpack.c.b16 %v1577, %v1577
  %v1642 = vpack.c.b16 %v1578, %v1578
  %v1643 = vpack.c.b16 %v1579, %v1579
  %v1644 = vpack.c.b16 %v1580, %v1580
  %v1645 = vpack.c.b16 %v1581, %v1581
  %v1646 = vpack.c.b16 %v1582, %v1582
  %v1647 = vpack.c.b16 %v1583, %v1583
  %v1648 = vpack.c.b16 %v1584, %v1584
  %v1649 = vpack.c.b16 %v1585, %v1585
  %v1650 = vpack.c.b16 %v1586, %v1586
  %v1651 = vpack.c.b16 %v1587, %v1587
  %v1652 = vpack.c.b16 %v1588, %v1588
  %v1653 = vpack.c.b16 %v1589, %v1589
  %v1654 = vpack.c.b16 %v1590, %v1590
  %v1655 = vpack.c.b16 %v1591, %v1591
  %v1656 = vpack.c.b16 %v1592, %v1592
  %v1657 = vpack.c.b16 %v1593, %v1593
  %v1658 = vpack.c.b16 %v1594, %v1594
  %v1659 = vpack.c.b16 %v1595, %v1595
  %v1660 = vpack.c.b16 %v1596, %v1596
  %v1661 = vpack.c.b16 %v1597, %v1597
  %v1662 = vpack.c.b16 %v1598, %v1598
  %v1663 = vpack.c.b16 %v1599, %v1599
  %v1664 = vpack.c.b16 %v1600, %v1600
  %v1665 = vpack.c.b16 %v1601, %v1601
  %v1666 = vpack.c.b16 %v1602, %v1602
  %v1667 = vpack.c.b16 %v1603, %v1603
  %v1668 = vpack.c.b16 %v1604, %v1604
  %v1669 = vpack.c.b16 %v1605, %v1605
  %v1670 = vpack.c.b16 %v1606, %v1606
  %v1671 = vpack.c.b16 %v1607, %v1607
  %v1672 = vpack.c.b16 %v1608, %v1608
  %v1673 = vpack.c.b16 %v1609, %v1609
  %v1674 = vpack.c.b16 %v1610, %v1610
  %v1675 = vpack.c.b16 %v1611, %v1611
  %v1676 = vpack.c.b16 %v1612, %v1612
  %v1677 = vpack.c.b16 %v1613, %v1613
  %v1678 = vpack.c.b16 %v1614, %v1614
  %v1679 = vpack.c.b16 %v1615, %v1615
  %v1680 = vpack.c.b16 %v1616, %v1616
  %v1681 = vpack.c.b16 %v1617, %v1617
  %v1682 = vpack.c.b16 %v1618, %v1618
  %v1683 = vpack.c.b16 %v1619, %v1619
  %v1684 = vpack.c.b16 %v1620, %v1620
  %v1685 = vpack.c.b16 %v1621, %v1621
  %v1686 = vpack.c.b16 %v1622, %v1622
  %v1687 = vpack.c.b16 %v1623, %v1623
  %v1688 = vpack.c.b16 %v1624, %v1624
  %v1689 = vpack.c.b16 %v1625, %v1625
  %v1690 = vpack.c.b16 %v1626, %v1626
  %v1691 = vpack.c.b16 %v1627, %v1627
  %v1692 = vpack.c.b16 %v1628, %v1628
  %v1693 = vpack.c.b16 %v1629, %v1629
  %v1694 = vpack.c.b16 %v1630, %v1630
  %v1695 = vpack.c.b16 %v1631, %v1631
  %v1696 = vpack.c.b16 %v1632, %v1632
  %v1697 = vpack.c.b16 %v1633, %v1633
  %v1698 = vpack.c.b16 %v1634, %v1634
  %v1699 = vpack.c.b16 %v1635, %v1635
  %v1700 = vpack.c.b16 %v1636, %v1636
  %v1701 = vpack.c.b16 %v1637, %v1637
  %v1702 = vpack.c.b16 %v1638, %v1638
  %v1703 = vpack.c.b16 %v1639, %v1639
  %v1704 = vpack.c.b16 %v1640, %v1640
  %1769 = vst [vmem:[%s3] sm:$0xf] %v1641
  %1770 = vst [vmem:[%s3 + $0x4] sm:$0xf] %v1642
  %1771 = vst [vmem:[%s3 + $0x8] sm:$0xf] %v1643
  %1772 = vst [vmem:[%s3 + $0xc] sm:$0xf] %v1644
  %1773 = vst [vmem:[%s3 + $0x10] sm:$0xf] %v1645
  %1774 = vst [vmem:[%s3 + $0x14] sm:$0xf] %v1646
  %1775 = vst [vmem:[%s3 + $0x18] sm:$0xf] %v1647
  %1776 = vst [vmem:[%s3 + $0x1c] sm:$0xf] %v1648
  %1777 = vst [vmem:[%s3 + $0x20] sm:$0xf] %v1649
  %1778 = vst [vmem:[%s3 + $0x24] sm:$0xf] %v1650
  %1779 = vst [vmem:[%s3 + $0x28] sm:$0xf] %v1651
  %1780 = vst [vmem:[%s3 + $0x2c] sm:$0xf] %v1652
  %1781 = vst [vmem:[%s3 + $0x30] sm:$0xf] %v1653
  %1782 = vst [vmem:[%s3 + $0x34] sm:$0xf] %v1654
  %1783 = vst [vmem:[%s3 + $0x38] sm:$0xf] %v1655
  %1784 = vst [vmem:[%s3 + $0x3c] sm:$0xf] %v1656
  %1785 = vst [vmem:[%s3 + $0x40] sm:$0xf] %v1657
  %1786 = vst [vmem:[%s3 + $0x44] sm:$0xf] %v1658
  %1787 = vst [vmem:[%s3 + $0x48] sm:$0xf] %v1659
  %1788 = vst [vmem:[%s3 + $0x4c] sm:$0xf] %v1660
  %1789 = vst [vmem:[%s3 + $0x50] sm:$0xf] %v1661
  %1790 = vst [vmem:[%s3 + $0x54] sm:$0xf] %v1662
  %1791 = vst [vmem:[%s3 + $0x58] sm:$0xf] %v1663
  %1792 = vst [vmem:[%s3 + $0x5c] sm:$0xf] %v1664
  %1793 = vst [vmem:[%s3 + $0x60] sm:$0xf] %v1665
  %1794 = vst [vmem:[%s3 + $0x64] sm:$0xf] %v1666
  %1795 = vst [vmem:[%s3 + $0x68] sm:$0xf] %v1667
  %1796 = vst [vmem:[%s3 + $0x6c] sm:$0xf] %v1668
  %1797 = vst [vmem:[%s3 + $0x70] sm:$0xf] %v1669
  %1798 = vst [vmem:[%s3 + $0x74] sm:$0xf] %v1670
  %1799 = vst [vmem:[%s3 + $0x78] sm:$0xf] %v1671
  %1800 = vst [vmem:[%s3 + $0x7c] sm:$0xf] %v1672
  %1801 = vst [vmem:[%s3 + $0x80] sm:$0xf] %v1673
  %1802 = vst [vmem:[%s3 + $0x84] sm:$0xf] %v1674
  %1803 = vst [vmem:[%s3 + $0x88] sm:$0xf] %v1675
  %1804 = vst [vmem:[%s3 + $0x8c] sm:$0xf] %v1676
  %1805 = vst [vmem:[%s3 + $0x90] sm:$0xf] %v1677
  %1806 = vst [vmem:[%s3 + $0x94] sm:$0xf] %v1678
  %1807 = vst [vmem:[%s3 + $0x98] sm:$0xf] %v1679
  %1808 = vst [vmem:[%s3 + $0x9c] sm:$0xf] %v1680
  %1809 = vst [vmem:[%s3 + $0xa0] sm:$0xf] %v1681
  %1810 = vst [vmem:[%s3 + $0xa4] sm:$0xf] %v1682
  %1811 = vst [vmem:[%s3 + $0xa8] sm:$0xf] %v1683
  %1812 = vst [vmem:[%s3 + $0xac] sm:$0xf] %v1684
  %1813 = vst [vmem:[%s3 + $0xb0] sm:$0xf] %v1685
  %1814 = vst [vmem:[%s3 + $0xb4] sm:$0xf] %v1686
  %1815 = vst [vmem:[%s3 + $0xb8] sm:$0xf] %v1687
  %1816 = vst [vmem:[%s3 + $0xbc] sm:$0xf] %v1688
  %1817 = vst [vmem:[%s3 + $0xc0] sm:$0xf] %v1689
  %1818 = vst [vmem:[%s3 + $0xc4] sm:$0xf] %v1690
  %1819 = vst [vmem:[%s3 + $0xc8] sm:$0xf] %v1691
  %1820 = vst [vmem:[%s3 + $0xcc] sm:$0xf] %v1692
  %1821 = vst [vmem:[%s3 + $0xd0] sm:$0xf] %v1693
  %1822 = vst [vmem:[%s3 + $0xd4] sm:$0xf] %v1694
  %1823 = vst [vmem:[%s3 + $0xd8] sm:$0xf] %v1695
  %1824 = vst [vmem:[%s3 + $0xdc] sm:$0xf] %v1696
  %1825 = vst [vmem:[%s3 + $0xe0] sm:$0xf] %v1697
  %1826 = vst [vmem:[%s3 + $0xe4] sm:$0xf] %v1698
  %1827 = vst [vmem:[%s3 + $0xe8] sm:$0xf] %v1699
  %1828 = vst [vmem:[%s3 + $0xec] sm:$0xf] %v1700
  %1829 = vst [vmem:[%s3 + $0xf0] sm:$0xf] %v1701
  %1830 = vst [vmem:[%s3 + $0xf4] sm:$0xf] %v1702
  %1831 = vst [vmem:[%s3 + $0xf8] sm:$0xf] %v1703
  %1832 = vst [vmem:[%s3 + $0xfc] sm:$0xf] %v1704
  // Predicated region
  $region14: #{decoder_forward.6} parent=0 // pred_check
    _
  $region15: #{decoder_forward.6} parent=0 // pred_check_branch
    %1834 = sbr.rel (0) target = $region17
  $region16: #{decoder_forward.6} parent=0 // pred_region
    _
  $region17: #{decoder_forward.6} parent=0 // pred_fallthru
    _
  // Predicated region
  $region18: #{decoder_forward.6} parent=0 // pred_check
    _
  $region19: #{decoder_forward.6} parent=0 // pred_check_branch
    %1836 = sbr.rel (0) target = $region21
  $region20: #{decoder_forward.6} parent=0 // pred_region
    _
  $region21: #{decoder_forward.6} parent=0 // pred_fallthru
    _

// kernel: decoder_forward.7
$region0: #{decoder_forward.7}
  #allocation0 [shape = 'u32[]', space=smem, size = 0x4, offset = 0x4, fixed_abs, tag = 'smem constant byte address 0x4 - core index']
  #allocation1 [shape = 'u32[144,128]{1,0:T(1,128)}', space=vmem, size = 0x12000, scoped, tag = 'internal scratch']
  %s0 = inlined_call_operand.vmem [shape: bf16[2048,144], index: 0, kind: input, shape index: {}]
  %s1 = inlined_call_operand.vmem [shape: bf16[144,128], index: 1, kind: input, shape index: {}]
  %s2 = inlined_call_operand.vmem [shape: f32[1,128], index: 2, kind: input, shape index: {}]
  %s3 = inlined_call_operand.vmem [shape: f32[2048,128], index: 3, kind: output, shape index: {}]
  %s4 = sld [smem:[#allocation0]]
  $region45: #{decoder_forward.7} parent=0
    _
  %s6 = ssub.s32 1, %s4
  %s7 = scalar_select 0, %s6, %s4
  loop: start=0, step=1, limit=6
  $region2: #{decoder_forward.7} parent=0 // loop_pre_header
    _
  $region3: #{decoder_forward.7} parent=0 // loop_header
    %s9 = sphi 0, %s13
    %p10 = scmp.ge.s32.totalorder %s9, 6
    %s19 = sphi 0, %s21
    %s22 = sphi 0, %s19
    %s23 = sphi 0, %s22
    %s39 = sphi 0, %s23
    %s43 = sphi 0, %s43
    %s45 = sphi 0, %s43
    %s46 = sphi 0, %s45
    %s60 = sphi 0, %s46
    %s64 = sphi 0, %s64
    %s66 = sphi 0, %s64
    %s67 = sphi 0, %s66
    %s81 = sphi 0, %s67
    %s87 = sphi 0, %s89
    %s90 = sphi 0, %s87
    %s91 = sphi 0, %s90
    %s107 = sphi 0, %s91
  $region4: #{decoder_forward.7} parent=0 // loop_header_branch
    %12 = sbr.rel (%p10) target = $region8
  $region5: #{decoder_forward.7} parent=0 // loop_body
    %s14 = ssub.s32 %s9, 1
    %s15 = ssub.s32 %s9, 2
    %s16 = sadd.s32 %s9, 1
    %s17 = ssub.s32 %s9, %s16
    %p18 = scmp.eq.s32.totalorder %s17, 0
    %s20 = sadd.s32 %s19, 1
    %s21 = scalar_select %p18, %s19, %s20
    %p24 = pneg %p18
    %p25 = scmp.eq.s32.totalorder %s9, 3
    %p26 = por %p24, %p25
    %p27 = scmp.ne.s32.totalorder %s19, %s22
    %p28 = scmp.eq.s32.totalorder %s9, 0
    %p29 = por %p27, %p28
    %p30 = scmp.ne.s32.totalorder %s19, %s22
    %p31 = scmp.eq.s32.totalorder %s14, 3
    %p32 = por %p30, %p31
    %p33 = scmp.ne.s32.totalorder %s22, %s23
    %p34 = scmp.eq.s32.totalorder %s14, 0
    %p35 = por %p33, %p34
    %p36 = scmp.ne.s32.totalorder %s22, %s23
    %p37 = scmp.eq.s32.totalorder %s15, 3
    %p38 = por %p36, %p37
    %p40 = scmp.ne.s32.totalorder %s23, %s39
    %p41 = scmp.eq.s32.totalorder %s15, 0
    %p42 = por %p40, %p41
    %s44 = sadd.s32 %s43, 1
    %p47 = scmp.eq.s32.totalorder %s9, 3
    %p48 = scmp.ne.s32.totalorder %s43, %s45
    %p49 = scmp.eq.s32.totalorder %s9, 0
    %p50 = por %p48, %p49
    %p51 = scmp.ne.s32.totalorder %s43, %s45
    %p52 = scmp.eq.s32.totalorder %s14, 3
    %p53 = por %p51, %p52
    %p54 = scmp.ne.s32.totalorder %s45, %s46
    %p55 = scmp.eq.s32.totalorder %s14, 0
    %p56 = por %p54, %p55
    %p57 = scmp.ne.s32.totalorder %s45, %s46
    %p58 = scmp.eq.s32.totalorder %s15, 3
    %p59 = por %p57, %p58
    %p61 = scmp.ne.s32.totalorder %s46, %s60
    %p62 = scmp.eq.s32.totalorder %s15, 0
    %p63 = por %p61, %p62
    %s65 = sadd.s32 %s64, 1
    %p68 = scmp.eq.s32.totalorder %s9, 3
    %p69 = scmp.ne.s32.totalorder %s64, %s66
    %p70 = scmp.eq.s32.totalorder %s9, 0
    %p71 = por %p69, %p70
    %p72 = scmp.ne.s32.totalorder %s64, %s66
    %p73 = scmp.eq.s32.totalorder %s14, 3
    %p74 = por %p72, %p73
    %p75 = scmp.ne.s32.totalorder %s66, %s67
    %p76 = scmp.eq.s32.totalorder %s14, 0
    %p77 = por %p75, %p76
    %p78 = scmp.ne.s32.totalorder %s66, %s67
    %p79 = scmp.eq.s32.totalorder %s15, 3
    %p80 = por %p78, %p79
    %p82 = scmp.ne.s32.totalorder %s67, %s81
    %p83 = scmp.eq.s32.totalorder %s15, 0
    %p84 = por %p82, %p83
    %s85 = ssub.s32 %s9, %s16
    %p86 = scmp.eq.s32.totalorder %s85, 0
    %s88 = sadd.s32 %s87, 1
    %s89 = scalar_select %p86, %s87, %s88
    %p92 = pneg %p86
    %p93 = scmp.eq.s32.totalorder %s9, 3
    %p94 = por %p92, %p93
    %p95 = scmp.ne.s32.totalorder %s87, %s90
    %p96 = scmp.eq.s32.totalorder %s9, 0
    %p97 = por %p95, %p96
    %p98 = scmp.ne.s32.totalorder %s87, %s90
    %p99 = scmp.eq.s32.totalorder %s14, 3
    %p100 = por %p98, %p99
    %p101 = scmp.ne.s32.totalorder %s90, %s91
    %p102 = scmp.eq.s32.totalorder %s14, 0
    %p103 = por %p101, %p102
    %p104 = scmp.ne.s32.totalorder %s90, %s91
    %p105 = scmp.eq.s32.totalorder %s15, 3
    %p106 = por %p104, %p105
    %p108 = scmp.ne.s32.totalorder %s91, %s107
    %p109 = scmp.eq.s32.totalorder %s15, 0
    %p110 = por %p108, %p109
    %p111 = scmp.le.s32.totalorder 1, %s9
    %p112 = scmp.lt.s32.totalorder %s9, 5
    %p113 = pnand %p111, %p112
    %p114 = pneg %p113
    // Predicated region
    $region9: #{decoder_forward.7} parent=5 // pred_check
      _
    $region10: #{decoder_forward.7} parent=5 // pred_check_branch
      %116 = sbr.rel (%p113) target = $region12
    $region11: #{decoder_forward.7} parent=5 // pred_region
      %s117 = ssub.s32 %s9, 1
      // Predicated region
      $region13: #{decoder_forward.7} parent=11 // pred_check
        %p118 = pneg %p56
      $region14: #{decoder_forward.7} parent=11 // pred_check_branch
        %120 = sbr.rel (%p118) target = $region16
      $region15: #{decoder_forward.7} parent=11 // pred_region
        _
      $region16: #{decoder_forward.7} parent=11 // pred_fallthru
        _
      // Predicated region
      $region17: #{decoder_forward.7} parent=11 // pred_check
        %p121 = pneg %p77
      $region18: #{decoder_forward.7} parent=11 // pred_check_branch
        %123 = sbr.rel (%p121) target = $region20
      $region19: #{decoder_forward.7} parent=11 // pred_region
        _
      $region20: #{decoder_forward.7} parent=11 // pred_fallthru
        _
    $region12: #{decoder_forward.7} parent=5 // pred_fallthru
      _
    %p124 = scmp.lt.s32.totalorder %s9, 4
    // Predicated region
    $region21: #{decoder_forward.7} parent=5 // pred_check
      %p125 = pneg %p124
    $region22: #{decoder_forward.7} parent=5 // pred_check_branch
      %127 = sbr.rel (%p125) target = $region24
    $region23: #{decoder_forward.7} parent=5 // pred_region
      // Predicated region
      $region25: #{decoder_forward.7} parent=23 // pred_check
        %p128 = pneg %p29
      $region26: #{decoder_forward.7} parent=23 // pred_check_branch
        %130 = sbr.rel (%p128) target = $region28
      $region27: #{decoder_forward.7} parent=23 // pred_region
        %s131 = smul.u32 64, %s9
        %p132 = scmp.lt.s32.totalorder %s131, 255
        %s133 = scalar_select %p132, %s131, 255
        %s134 = smul.addr %s133, 2
        %s135 = smul.addr %s134, 4
        %s136 = scalar_lea.vmem %s0, %s135
        %s137 = smul.u32 64, %s9
      $region28: #{decoder_forward.7} parent=23 // pred_fallthru
        _
    $region24: #{decoder_forward.7} parent=5 // pred_fallthru
      _
    %p138 = scmp.le.s32.totalorder 1, %s9
    %p139 = scmp.lt.s32.totalorder %s9, 5
    %p140 = pnand %p138, %p139
    %p141 = pneg %p140
    // Predicated region
    $region29: #{decoder_forward.7} parent=5 // pred_check
      _
    $region30: #{decoder_forward.7} parent=5 // pred_check_branch
      %143 = sbr.rel (%p140) target = $region32
    $region31: #{decoder_forward.7} parent=5 // pred_region
      %s144 = ssub.s32 %s9, 1
      %s145 = smul.u32 64, %s14
      %p146 = scmp.lt.s32.totalorder %s145, 255
      %s147 = scalar_select %p146, %s145, 255
      %s148 = smul.addr %s147, 2
      %s149 = smul.addr %s148, 4
      %s150 = scalar_lea.vmem %s0, %s149
      %p151 = pneg %p35
      %p152 = pneg %p32
      %p153 = pneg %p56
      %p154 = pneg %p53
      %p155 = pneg %p77
      %p156 = pneg %p74
      %p157 = pneg %p103
      %p158 = pneg %p100
      %s159 = smul.u32 64, %s14
      %p160 = scmp.lt.s32.totalorder %s159, 255
      %s161 = scalar_select %p160, %s159, 255
      %s162 = smul.addr %s161, 8
      %s163 = scalar_lea.vmem %s3, %s162
      %s164 = smul.u32 64, %s14
      %p165 = scmp.lt.s32.totalorder %s164, 255
      %s166 = scalar_select %p165, %s164, 255
      %s167 = smul.addr %s166, 2
      %s168 = smul.addr %s167, 4
      %s169 = scalar_lea.vmem %s0, %s168
      %s170 = smul.u32 64, %s14
      %s171 = smul.u32 64, %s14
      %p172 = scmp.lt.s32.totalorder %s171, 255
      %s173 = scalar_select %p172, %s171, 255
      %s174 = smul.addr %s173, 8
      %s175 = scalar_lea.vmem %s3, %s174
      %s176 = smul.u32 64, %s14
      %v178 = vld [vmem:[%s169] sm:$0xff]
      %v179 = vld [vmem:[%s169 + $0x8] sm:$0xff]
      %v180 = vld [vmem:[%s169 + $0x10] sm:$0xff]
      %v181 = vld [vmem:[%s169 + $0x18] sm:$0xff]
      %v182 = vld [vmem:[%s169 + $0x20] sm:$0xff]
      %v183 = vld [vmem:[%s169 + $0x28] sm:$0xff]
      %v184 = vld [vmem:[%s169 + $0x30] sm:$0xff]
      %v185 = vld [vmem:[%s169 + $0x38] sm:$0xff]
      %v186 = vld [vmem:[%s169 + $0x40] sm:$0xff]
      %v187 = vld [vmem:[%s169 + $0x48] sm:$0xff]
      %v188 = vld [vmem:[%s169 + $0x50] sm:$0xff]
      %v189 = vld [vmem:[%s169 + $0x58] sm:$0xff]
      %v190 = vld [vmem:[%s169 + $0x60] sm:$0xff]
      %v191 = vld [vmem:[%s169 + $0x68] sm:$0xff]
      %v192 = vld [vmem:[%s169 + $0x70] sm:$0xff]
      %v193 = vld [vmem:[%s169 + $0x78] sm:$0xff]
      %v194 = vld [vmem:[%s169 + $0x80] sm:$0xff]
      %v195 = vld [vmem:[%s169 + $0x88] sm:$0xff]
      %v196 = vld [vmem:[%s169 + $0x90] sm:$0xff]
      %v197 = vld [vmem:[%s169 + $0x98] sm:$0xff]
      %v198 = vld [vmem:[%s169 + $0xa0] sm:$0xff]
      %v199 = vld [vmem:[%s169 + $0xa8] sm:$0xff]
      %v200 = vld [vmem:[%s169 + $0xb0] sm:$0xff]
      %v201 = vld [vmem:[%s169 + $0xb8] sm:$0xff]
      %v202 = vld [vmem:[%s169 + $0xc0] sm:$0xff]
      %v203 = vld [vmem:[%s169 + $0xc8] sm:$0xff]
      %v204 = vld [vmem:[%s169 + $0xd0] sm:$0xff]
      %v205 = vld [vmem:[%s169 + $0xd8] sm:$0xff]
      %v206 = vld [vmem:[%s169 + $0xe0] sm:$0xff]
      %v207 = vld [vmem:[%s169 + $0xe8] sm:$0xff]
      %v208 = vld [vmem:[%s169 + $0xf0] sm:$0xff]
      %v209 = vld [vmem:[%s169 + $0xf8] sm:$0xff]
      %v210 = vld [vmem:[%s169 + $0x100] sm:$0xff]
      %v211 = vld [vmem:[%s169 + $0x108] sm:$0xff]
      %v212 = vld [vmem:[%s169 + $0x110] sm:$0xff]
      %v213 = vld [vmem:[%s169 + $0x118] sm:$0xff]
      %v214 = vld [vmem:[%s169 + $0x120] sm:$0xff]
      %v215 = vld [vmem:[%s169 + $0x128] sm:$0xff]
      %v216 = vld [vmem:[%s169 + $0x130] sm:$0xff]
      %v217 = vld [vmem:[%s169 + $0x138] sm:$0xff]
      %v218 = vld [vmem:[%s169 + $0x140] sm:$0xff]
      %v219 = vld [vmem:[%s169 + $0x148] sm:$0xff]
      %v220 = vld [vmem:[%s169 + $0x150] sm:$0xff]
      %v221 = vld [vmem:[%s169 + $0x158] sm:$0xff]
      %v222 = vld [vmem:[%s169 + $0x160] sm:$0xff]
      %v223 = vld [vmem:[%s169 + $0x168] sm:$0xff]
      %v224 = vld [vmem:[%s169 + $0x170] sm:$0xff]
      %v225 = vld [vmem:[%s169 + $0x178] sm:$0xff]
      %v226 = vld [vmem:[%s169 + $0x180] sm:$0xff]
      %v227 = vld [vmem:[%s169 + $0x188] sm:$0xff]
      %v228 = vld [vmem:[%s169 + $0x190] sm:$0xff]
      %v229 = vld [vmem:[%s169 + $0x198] sm:$0xff]
      %v230 = vld [vmem:[%s169 + $0x1a0] sm:$0xff]
      %v231 = vld [vmem:[%s169 + $0x1a8] sm:$0xff]
      %v232 = vld [vmem:[%s169 + $0x1b0] sm:$0xff]
      %v233 = vld [vmem:[%s169 + $0x1b8] sm:$0xff]
      %v234 = vld [vmem:[%s169 + $0x1c0] sm:$0xff]
      %v235 = vld [vmem:[%s169 + $0x1c8] sm:$0xff]
      %v236 = vld [vmem:[%s169 + $0x1d0] sm:$0xff]
      %v237 = vld [vmem:[%s169 + $0x1d8] sm:$0xff]
      %v238 = vld [vmem:[%s169 + $0x1e0] sm:$0xff]
      %v239 = vld [vmem:[%s169 + $0x1e8] sm:$0xff]
      %v240 = vld [vmem:[%s169 + $0x1f0] sm:$0xff]
      %v241 = vld [vmem:[%s169 + $0x1f8] sm:$0xff]
      %v242 = vld [vmem:[%s1] sm:$0xf]
      %v243 = vld [vmem:[%s1 + $0x4] sm:$0xf]
      %v244 = vld [vmem:[%s1 + $0x8] sm:$0xf]
      %v245 = vld [vmem:[%s1 + $0xc] sm:$0xf]
      %v246 = vld [vmem:[%s1 + $0x10] sm:$0xf]
      %v247 = vld [vmem:[%s1 + $0x14] sm:$0xf]
      %v248 = vld [vmem:[%s1 + $0x18] sm:$0xf]
      %v249 = vld [vmem:[%s1 + $0x1c] sm:$0xf]
      %v250 = vld [vmem:[%s1 + $0x20] sm:$0xf]
      %v251 = vld [vmem:[%s1 + $0x24] sm:$0xf]
      %v252 = vld [vmem:[%s1 + $0x28] sm:$0xf]
      %v253 = vld [vmem:[%s1 + $0x2c] sm:$0xf]
      %v254 = vld [vmem:[%s1 + $0x30] sm:$0xf]
      %v255 = vld [vmem:[%s1 + $0x34] sm:$0xf]
      %v256 = vld [vmem:[%s1 + $0x38] sm:$0xf]
      %v257 = vld [vmem:[%s1 + $0x3c] sm:$0xf]
      %v258 = vld [vmem:[%s1 + $0x40] sm:$0xf]
      %v259 = vld [vmem:[%s1 + $0x44] sm:$0xf]
      %v260 = vld [vmem:[%s2] sm:$0x1]
      %v262 = vlaneseq
      %v263 = vshrl.u32 %v262, 7
      %v264 = vsub.s32 0, %v263
      %v265 = vrot.slane %v260, %v264
      %v331 = vunpack.c.l.b16 %v178
      %v332 = vunpack.c.h.b16 %v178
      %v333 = vunpack.c.l.b16 %v179
      %v334 = vunpack.c.h.b16 %v179
      %v335 = vunpack.c.l.b16 %v180
      %v336 = vunpack.c.h.b16 %v180
      %v337 = vunpack.c.l.b16 %v181
      %v338 = vunpack.c.h.b16 %v181
      %v339 = vunpack.c.l.b16 %v182
      %v340 = vunpack.c.h.b16 %v182
      %v341 = vunpack.c.l.b16 %v183
      %v342 = vunpack.c.h.b16 %v183
      %v343 = vunpack.c.l.b16 %v184
      %v344 = vunpack.c.h.b16 %v184
      %v345 = vunpack.c.l.b16 %v185
      %v346 = vunpack.c.h.b16 %v185
      %v347 = vunpack.c.l.b16 %v186
      %v348 = vunpack.c.h.b16 %v186
      %v349 = vunpack.c.l.b16 %v187
      %v350 = vunpack.c.h.b16 %v187
      %v351 = vunpack.c.l.b16 %v188
      %v352 = vunpack.c.h.b16 %v188
      %v353 = vunpack.c.l.b16 %v189
      %v354 = vunpack.c.h.b16 %v189
      %v355 = vunpack.c.l.b16 %v190
      %v356 = vunpack.c.h.b16 %v190
      %v357 = vunpack.c.l.b16 %v191
      %v358 = vunpack.c.h.b16 %v191
      %v359 = vunpack.c.l.b16 %v192
      %v360 = vunpack.c.h.b16 %v192
      %v361 = vunpack.c.l.b16 %v193
      %v362 = vunpack.c.h.b16 %v193
      %v363 = vunpack.c.l.b16 %v194
      %v364 = vunpack.c.h.b16 %v194
      %v365 = vunpack.c.l.b16 %v195
      %v366 = vunpack.c.h.b16 %v195
      %v367 = vunpack.c.l.b16 %v196
      %v368 = vunpack.c.h.b16 %v196
      %v369 = vunpack.c.l.b16 %v197
      %v370 = vunpack.c.h.b16 %v197
      %v371 = vunpack.c.l.b16 %v198
      %v372 = vunpack.c.h.b16 %v198
      %v373 = vunpack.c.l.b16 %v199
      %v374 = vunpack.c.h.b16 %v199
      %v375 = vunpack.c.l.b16 %v200
      %v376 = vunpack.c.h.b16 %v200
      %v377 = vunpack.c.l.b16 %v201
      %v378 = vunpack.c.h.b16 %v201
      %v379 = vunpack.c.l.b16 %v202
      %v380 = vunpack.c.h.b16 %v202
      %v381 = vunpack.c.l.b16 %v203
      %v382 = vunpack.c.h.b16 %v203
      %v383 = vunpack.c.l.b16 %v204
      %v384 = vunpack.c.h.b16 %v204
      %v385 = vunpack.c.l.b16 %v205
      %v386 = vunpack.c.h.b16 %v205
      %v387 = vunpack.c.l.b16 %v206
      %v388 = vunpack.c.h.b16 %v206
      %v389 = vunpack.c.l.b16 %v207
      %v390 = vunpack.c.h.b16 %v207
      %v391 = vunpack.c.l.b16 %v208
      %v392 = vunpack.c.h.b16 %v208
      %v393 = vunpack.c.l.b16 %v209
      %v394 = vunpack.c.h.b16 %v209
      %v395 = vunpack.c.l.b16 %v210
      %v396 = vunpack.c.h.b16 %v210
      %v397 = vunpack.c.l.b16 %v211
      %v398 = vunpack.c.h.b16 %v211
      %v399 = vunpack.c.l.b16 %v212
      %v400 = vunpack.c.h.b16 %v212
      %v401 = vunpack.c.l.b16 %v213
      %v402 = vunpack.c.h.b16 %v213
      %v403 = vunpack.c.l.b16 %v214
      %v404 = vunpack.c.h.b16 %v214
      %v405 = vunpack.c.l.b16 %v215
      %v406 = vunpack.c.h.b16 %v215
      %v407 = vunpack.c.l.b16 %v216
      %v408 = vunpack.c.h.b16 %v216
      %v409 = vunpack.c.l.b16 %v217
      %v410 = vunpack.c.h.b16 %v217
      %v411 = vunpack.c.l.b16 %v218
      %v412 = vunpack.c.h.b16 %v218
      %v413 = vunpack.c.l.b16 %v219
      %v414 = vunpack.c.h.b16 %v219
      %v415 = vunpack.c.l.b16 %v220
      %v416 = vunpack.c.h.b16 %v220
      %v417 = vunpack.c.l.b16 %v221
      %v418 = vunpack.c.h.b16 %v221
      %v419 = vunpack.c.l.b16 %v222
      %v420 = vunpack.c.h.b16 %v222
      %v421 = vunpack.c.l.b16 %v223
      %v422 = vunpack.c.h.b16 %v223
      %v423 = vunpack.c.l.b16 %v224
      %v424 = vunpack.c.h.b16 %v224
      %v425 = vunpack.c.l.b16 %v225
      %v426 = vunpack.c.h.b16 %v225
      %v427 = vunpack.c.l.b16 %v226
      %v428 = vunpack.c.h.b16 %v226
      %v429 = vunpack.c.l.b16 %v227
      %v430 = vunpack.c.h.b16 %v227
      %v431 = vunpack.c.l.b16 %v228
      %v432 = vunpack.c.h.b16 %v228
      %v433 = vunpack.c.l.b16 %v229
      %v434 = vunpack.c.h.b16 %v229
      %v435 = vunpack.c.l.b16 %v230
      %v436 = vunpack.c.h.b16 %v230
      %v437 = vunpack.c.l.b16 %v231
      %v438 = vunpack.c.h.b16 %v231
      %v439 = vunpack.c.l.b16 %v232
      %v440 = vunpack.c.h.b16 %v232
      %v441 = vunpack.c.l.b16 %v233
      %v442 = vunpack.c.h.b16 %v233
      %v443 = vunpack.c.l.b16 %v234
      %v444 = vunpack.c.h.b16 %v234
      %v445 = vunpack.c.l.b16 %v235
      %v446 = vunpack.c.h.b16 %v235
      %v447 = vunpack.c.l.b16 %v236
      %v448 = vunpack.c.h.b16 %v236
      %v449 = vunpack.c.l.b16 %v237
      %v450 = vunpack.c.h.b16 %v237
      %v451 = vunpack.c.l.b16 %v238
      %v452 = vunpack.c.h.b16 %v238
      %v453 = vunpack.c.l.b16 %v239
      %v454 = vunpack.c.h.b16 %v239
      %v455 = vunpack.c.l.b16 %v240
      %v456 = vunpack.c.h.b16 %v240
      %v457 = vunpack.c.l.b16 %v241
      %v458 = vunpack.c.h.b16 %v241
      %v459 = vpack.c.b16 %v333, %v331
      %v460 = vpack.c.b16 %v334, %v332
      %v461 = vpack.c.b16 %v337, %v335
      %v462 = vpack.c.b16 %v338, %v336
      %v463 = vpack.c.b16 %v341, %v339
      %v464 = vpack.c.b16 %v342, %v340
      %v465 = vpack.c.b16 %v345, %v343
      %v466 = vpack.c.b16 %v346, %v344
      %v467 = vpack.c.b16 %v349, %v347
      %v468 = vpack.c.b16 %v350, %v348
      %v469 = vpack.c.b16 %v353, %v351
      %v470 = vpack.c.b16 %v354, %v352
      %v471 = vpack.c.b16 %v357, %v355
      %v472 = vpack.c.b16 %v358, %v356
      %v473 = vpack.c.b16 %v361, %v359
      %v474 = vpack.c.b16 %v362, %v360
      %v475 = vpack.c.b16 %v365, %v363
      %v476 = vpack.c.b16 %v366, %v364
      %v477 = vpack.c.b16 %v369, %v367
      %v478 = vpack.c.b16 %v370, %v368
      %v479 = vpack.c.b16 %v373, %v371
      %v480 = vpack.c.b16 %v374, %v372
      %v481 = vpack.c.b16 %v377, %v375
      %v482 = vpack.c.b16 %v378, %v376
      %v483 = vpack.c.b16 %v381, %v379
      %v484 = vpack.c.b16 %v382, %v380
      %v485 = vpack.c.b16 %v385, %v383
      %v486 = vpack.c.b16 %v386, %v384
      %v487 = vpack.c.b16 %v389, %v387
      %v488 = vpack.c.b16 %v390, %v388
      %v489 = vpack.c.b16 %v393, %v391
      %v490 = vpack.c.b16 %v394, %v392
      %v491 = vpack.c.b16 %v397, %v395
      %v492 = vpack.c.b16 %v398, %v396
      %v493 = vpack.c.b16 %v401, %v399
      %v494 = vpack.c.b16 %v402, %v400
      %v495 = vpack.c.b16 %v405, %v403
      %v496 = vpack.c.b16 %v406, %v404
      %v497 = vpack.c.b16 %v409, %v407
      %v498 = vpack.c.b16 %v410, %v408
      %v499 = vpack.c.b16 %v413, %v411
      %v500 = vpack.c.b16 %v414, %v412
      %v501 = vpack.c.b16 %v417, %v415
      %v502 = vpack.c.b16 %v418, %v416
      %v503 = vpack.c.b16 %v421, %v419
      %v504 = vpack.c.b16 %v422, %v420
      %v505 = vpack.c.b16 %v425, %v423
      %v506 = vpack.c.b16 %v426, %v424
      %v507 = vpack.c.b16 %v429, %v427
      %v508 = vpack.c.b16 %v430, %v428
      %v509 = vpack.c.b16 %v433, %v431
      %v510 = vpack.c.b16 %v434, %v432
      %v511 = vpack.c.b16 %v437, %v435
      %v512 = vpack.c.b16 %v438, %v436
      %v513 = vpack.c.b16 %v441, %v439
      %v514 = vpack.c.b16 %v442, %v440
      %v515 = vpack.c.b16 %v445, %v443
      %v516 = vpack.c.b16 %v446, %v444
      %v517 = vpack.c.b16 %v449, %v447
      %v518 = vpack.c.b16 %v450, %v448
      %v519 = vpack.c.b16 %v453, %v451
      %v520 = vpack.c.b16 %v454, %v452
      %v521 = vpack.c.b16 %v457, %v455
      %v522 = vpack.c.b16 %v458, %v456
      %v573 = vunpack.c.l.b16 %v242
      %v574 = vunpack.c.l.b16 %v243
      %v575 = vunpack.c.l.b16 %v244
      %v576 = vunpack.c.l.b16 %v245
      %v577 = vunpack.c.l.b16 %v246
      %v578 = vunpack.c.l.b16 %v247
      %v579 = vunpack.c.l.b16 %v248
      %v580 = vunpack.c.l.b16 %v249
      %v581 = vunpack.c.l.b16 %v250
      %v582 = vunpack.c.l.b16 %v251
      %v583 = vunpack.c.l.b16 %v252
      %v584 = vunpack.c.l.b16 %v253
      %v585 = vunpack.c.l.b16 %v254
      %v586 = vunpack.c.l.b16 %v255
      %v587 = vunpack.c.l.b16 %v256
      %v588 = vunpack.c.l.b16 %v257
      %v589 = vunpack.c.l.b16 %v258
      %v590 = vunpack.c.l.b16 %v259
      %v591 = vpack.c.b16 %v574, %v573
      %v592 = vpack.c.b16 %v576, %v575
      %v593 = vpack.c.b16 %v578, %v577
      %v594 = vpack.c.b16 %v580, %v579
      %v595 = vpack.c.b16 %v582, %v581
      %v596 = vpack.c.b16 %v584, %v583
      %v597 = vpack.c.b16 %v586, %v585
      %v598 = vpack.c.b16 %v588, %v587
      %v599 = vpack.c.b16 %v590, %v589
      %vm609 = vcmask 130048
      %v611 = vsel %vm609, %v460, 0
      %v614 = vsel %vm609, %v462, 0
      %v617 = vsel %vm609, %v464, 0
      %v620 = vsel %vm609, %v466, 0
      %v623 = vsel %vm609, %v468, 0
      %v626 = vsel %vm609, %v470, 0
      %v629 = vsel %vm609, %v472, 0
      %v632 = vsel %vm609, %v474, 0
      %v635 = vsel %vm609, %v476, 0
      %v638 = vsel %vm609, %v478, 0
      %v641 = vsel %vm609, %v480, 0
      %v644 = vsel %vm609, %v482, 0
      %v647 = vsel %vm609, %v484, 0
      %v650 = vsel %vm609, %v486, 0
      %v653 = vsel %vm609, %v488, 0
      %v656 = vsel %vm609, %v490, 0
      %v659 = vsel %vm609, %v492, 0
      %v662 = vsel %vm609, %v494, 0
      %v665 = vsel %vm609, %v496, 0
      %v668 = vsel %vm609, %v498, 0
      %v671 = vsel %vm609, %v500, 0
      %v674 = vsel %vm609, %v502, 0
      %v677 = vsel %vm609, %v504, 0
      %v680 = vsel %vm609, %v506, 0
      %v683 = vsel %vm609, %v508, 0
      %v686 = vsel %vm609, %v510, 0
      %v689 = vsel %vm609, %v512, 0
      %v692 = vsel %vm609, %v514, 0
      %v695 = vsel %vm609, %v516, 0
      %v698 = vsel %vm609, %v518, 0
      %v701 = vsel %vm609, %v520, 0
      %v704 = vsel %vm609, %v522, 0
      %706 = vmatprep.subr.bf16.mxu0 0
      %707 = vmatpush1.bf16.msra.mxu0 %v598
      %708 = vmatprep.subr.bf16.mxu0 0
      %709 = vmatpush1.bf16.msra.mxu0 %v597
      %710 = vmatprep.subr.bf16.mxu0 0
      %711 = vmatpush1.bf16.msra.mxu0 %v596
      %712 = vmatprep.subr.bf16.mxu0 0
      %713 = vmatpush1.bf16.msra.mxu0 %v595
      %714 = vmatprep.subr.bf16.mxu0 0
      %715 = vmatpush1.bf16.msra.mxu0 %v594
      %716 = vmatprep.subr.bf16.mxu0 0
      %717 = vmatpush1.bf16.msra.mxu0 %v593
      %718 = vmatprep.subr.bf16.mxu0 0
      %719 = vmatpush1.bf16.msra.mxu0 %v592
      %720 = vmatprep.subr.bf16.mxu0 0
      %721 = vmatpush1.bf16.msra.mxu0 %v591
      %722 = vmatprep.subr.bf16.mxu0 0
      %723 = vmatpush2.bf16.msra.mxu0 0
      %724 = vmatprep.subr.bf16.mxu0 0
      %725 = vmatpush2.bf16.msra.mxu0 0
      %726 = vmatprep.subr.bf16.mxu0 0
      %727 = vmatpush2.bf16.msra.mxu0 0
      %728 = vmatprep.subr.bf16.mxu0 0
      %729 = vmatpush2.bf16.msra.mxu0 0
      %730 = vmatprep.subr.bf16.mxu0 0
      %731 = vmatpush2.bf16.msra.mxu0 0
      %732 = vmatprep.subr.bf16.mxu0 0
      %733 = vmatpush2.bf16.msra.mxu0 0
      %734 = vmatprep.subr.bf16.mxu0 0
      %735 = vmatpush2.bf16.msra.mxu0 0
      %736 = vmatprep.subr.bf16.mxu0 0
      %737 = vmatpush2.bf16.msra.mxu0 %v599
      %738 = vmatprep.mubr.bf16.mxu0 %v611
      %739 = vmatmul.mubr.bf16.gmra.mxu0 %v459
      %v740 = vpop.f32.mrf.mxu0
      %v741 = vadd.f32 %v265, %v740
      %v742 = vpop.f32.mrf.mxu0
      %v743 = vpop.f32.mrf.mxu0
      %v744 = vadd.f32 %v265, %v743
      %v745 = vpop.f32.mrf.mxu0
      %746 = vmatprep.mubr.bf16.mxu0 %v614
      %747 = vmatmul.mubr.bf16.gmra.mxu0 %v461
      %v748 = vpop.f32.mrf.mxu0
      %v749 = vadd.f32 %v265, %v748
      %v750 = vpop.f32.mrf.mxu0
      %v751 = vpop.f32.mrf.mxu0
      %v752 = vadd.f32 %v265, %v751
      %v753 = vpop.f32.mrf.mxu0
      %754 = vmatprep.mubr.bf16.mxu0 %v617
      %755 = vmatmul.mubr.bf16.gmra.mxu0 %v463
      %v756 = vpop.f32.mrf.mxu0
      %v757 = vadd.f32 %v265, %v756
      %v758 = vpop.f32.mrf.mxu0
      %v759 = vpop.f32.mrf.mxu0
      %v760 = vadd.f32 %v265, %v759
      %v761 = vpop.f32.mrf.mxu0
      %762 = vmatprep.mubr.bf16.mxu0 %v620
      %763 = vmatmul.mubr.bf16.gmra.mxu0 %v465
      %v764 = vpop.f32.mrf.mxu0
      %v765 = vadd.f32 %v265, %v764
      %v766 = vpop.f32.mrf.mxu0
      %v767 = vpop.f32.mrf.mxu0
      %v768 = vadd.f32 %v265, %v767
      %v769 = vpop.f32.mrf.mxu0
      %770 = vmatprep.mubr.bf16.mxu0 %v623
      %771 = vmatmul.mubr.bf16.gmra.mxu0 %v467
      %v772 = vpop.f32.mrf.mxu0
      %v773 = vadd.f32 %v265, %v772
      %v774 = vpop.f32.mrf.mxu0
      %v775 = vpop.f32.mrf.mxu0
      %v776 = vadd.f32 %v265, %v775
      %v777 = vpop.f32.mrf.mxu0
      %778 = vmatprep.mubr.bf16.mxu0 %v626
      %779 = vmatmul.mubr.bf16.gmra.mxu0 %v469
      %v780 = vpop.f32.mrf.mxu0
      %v781 = vadd.f32 %v265, %v780
      %v782 = vpop.f32.mrf.mxu0
      %v783 = vpop.f32.mrf.mxu0
      %v784 = vadd.f32 %v265, %v783
      %v785 = vpop.f32.mrf.mxu0
      %786 = vmatprep.mubr.bf16.mxu0 %v629
      %787 = vmatmul.mubr.bf16.gmra.mxu0 %v471
      %v788 = vpop.f32.mrf.mxu0
      %v789 = vadd.f32 %v265, %v788
      %v790 = vpop.f32.mrf.mxu0
      %v791 = vpop.f32.mrf.mxu0
      %v792 = vadd.f32 %v265, %v791
      %v793 = vpop.f32.mrf.mxu0
      %794 = vmatprep.mubr.bf16.mxu0 %v632
      %795 = vmatmul.mubr.bf16.gmra.mxu0 %v473
      %v796 = vpop.f32.mrf.mxu0
      %v797 = vadd.f32 %v265, %v796
      %v798 = vpop.f32.mrf.mxu0
      %v799 = vpop.f32.mrf.mxu0
      %v800 = vadd.f32 %v265, %v799
      %v801 = vpop.f32.mrf.mxu0
      %802 = vmatprep.mubr.bf16.mxu0 %v635
      %803 = vmatmul.mubr.bf16.gmra.mxu0 %v475
      %v804 = vpop.f32.mrf.mxu0
      %v805 = vadd.f32 %v265, %v804
      %v806 = vpop.f32.mrf.mxu0
      %v807 = vpop.f32.mrf.mxu0
      %v808 = vadd.f32 %v265, %v807
      %v809 = vpop.f32.mrf.mxu0
      %810 = vmatprep.mubr.bf16.mxu0 %v638
      %811 = vmatmul.mubr.bf16.gmra.mxu0 %v477
      %v812 = vpop.f32.mrf.mxu0
      %v813 = vadd.f32 %v265, %v812
      %v814 = vpop.f32.mrf.mxu0
      %v815 = vpop.f32.mrf.mxu0
      %v816 = vadd.f32 %v265, %v815
      %v817 = vpop.f32.mrf.mxu0
      %818 = vmatprep.mubr.bf16.mxu0 %v641
      %819 = vmatmul.mubr.bf16.gmra.mxu0 %v479
      %v820 = vpop.f32.mrf.mxu0
      %v821 = vadd.f32 %v265, %v820
      %v822 = vpop.f32.mrf.mxu0
      %v823 = vpop.f32.mrf.mxu0
      %v824 = vadd.f32 %v265, %v823
      %v825 = vpop.f32.mrf.mxu0
      %826 = vmatprep.mubr.bf16.mxu0 %v644
      %827 = vmatmul.mubr.bf16.gmra.mxu0 %v481
      %v828 = vpop.f32.mrf.mxu0
      %v829 = vadd.f32 %v265, %v828
      %v830 = vpop.f32.mrf.mxu0
      %v831 = vpop.f32.mrf.mxu0
      %v832 = vadd.f32 %v265, %v831
      %v833 = vpop.f32.mrf.mxu0
      %834 = vmatprep.mubr.bf16.mxu0 %v647
      %835 = vmatmul.mubr.bf16.gmra.mxu0 %v483
      %v836 = vpop.f32.mrf.mxu0
      %v837 = vadd.f32 %v265, %v836
      %v838 = vpop.f32.mrf.mxu0
      %v839 = vpop.f32.mrf.mxu0
      %v840 = vadd.f32 %v265, %v839
      %v841 = vpop.f32.mrf.mxu0
      %842 = vmatprep.mubr.bf16.mxu0 %v650
      %843 = vmatmul.mubr.bf16.gmra.mxu0 %v485
      %v844 = vpop.f32.mrf.mxu0
      %v845 = vadd.f32 %v265, %v844
      %v846 = vpop.f32.mrf.mxu0
      %v847 = vpop.f32.mrf.mxu0
      %v848 = vadd.f32 %v265, %v847
      %v849 = vpop.f32.mrf.mxu0
      %850 = vmatprep.mubr.bf16.mxu0 %v653
      %851 = vmatmul.mubr.bf16.gmra.mxu0 %v487
      %v852 = vpop.f32.mrf.mxu0
      %v853 = vadd.f32 %v265, %v852
      %v854 = vpop.f32.mrf.mxu0
      %v855 = vpop.f32.mrf.mxu0
      %v856 = vadd.f32 %v265, %v855
      %v857 = vpop.f32.mrf.mxu0
      %858 = vmatprep.mubr.bf16.mxu0 %v656
      %859 = vmatmul.mubr.bf16.gmra.mxu0 %v489
      %v860 = vpop.f32.mrf.mxu0
      %v861 = vadd.f32 %v265, %v860
      %v862 = vpop.f32.mrf.mxu0
      %v863 = vpop.f32.mrf.mxu0
      %v864 = vadd.f32 %v265, %v863
      %v865 = vpop.f32.mrf.mxu0
      %866 = vmatprep.mubr.bf16.mxu0 %v659
      %867 = vmatmul.mubr.bf16.gmra.mxu0 %v491
      %v868 = vpop.f32.mrf.mxu0
      %v869 = vadd.f32 %v265, %v868
      %v870 = vpop.f32.mrf.mxu0
      %v871 = vpop.f32.mrf.mxu0
      %v872 = vadd.f32 %v265, %v871
      %v873 = vpop.f32.mrf.mxu0
      %874 = vmatprep.mubr.bf16.mxu0 %v662
      %875 = vmatmul.mubr.bf16.gmra.mxu0 %v493
      %v876 = vpop.f32.mrf.mxu0
      %v877 = vadd.f32 %v265, %v876
      %v878 = vpop.f32.mrf.mxu0
      %v879 = vpop.f32.mrf.mxu0
      %v880 = vadd.f32 %v265, %v879
      %v881 = vpop.f32.mrf.mxu0
      %882 = vmatprep.mubr.bf16.mxu0 %v665
      %883 = vmatmul.mubr.bf16.gmra.mxu0 %v495
      %v884 = vpop.f32.mrf.mxu0
      %v885 = vadd.f32 %v265, %v884
      %v886 = vpop.f32.mrf.mxu0
      %v887 = vpop.f32.mrf.mxu0
      %v888 = vadd.f32 %v265, %v887
      %v889 = vpop.f32.mrf.mxu0
      %890 = vmatprep.mubr.bf16.mxu0 %v668
      %891 = vmatmul.mubr.bf16.gmra.mxu0 %v497
      %v892 = vpop.f32.mrf.mxu0
      %v893 = vadd.f32 %v265, %v892
      %v894 = vpop.f32.mrf.mxu0
      %v895 = vpop.f32.mrf.mxu0
      %v896 = vadd.f32 %v265, %v895
      %v897 = vpop.f32.mrf.mxu0
      %898 = vmatprep.mubr.bf16.mxu0 %v671
      %899 = vmatmul.mubr.bf16.gmra.mxu0 %v499
      %v900 = vpop.f32.mrf.mxu0
      %v901 = vadd.f32 %v265, %v900
      %v902 = vpop.f32.mrf.mxu0
      %v903 = vpop.f32.mrf.mxu0
      %v904 = vadd.f32 %v265, %v903
      %v905 = vpop.f32.mrf.mxu0
      %906 = vmatprep.mubr.bf16.mxu0 %v674
      %907 = vmatmul.mubr.bf16.gmra.mxu0 %v501
      %v908 = vpop.f32.mrf.mxu0
      %v909 = vadd.f32 %v265, %v908
      %v910 = vpop.f32.mrf.mxu0
      %v911 = vpop.f32.mrf.mxu0
      %v912 = vadd.f32 %v265, %v911
      %v913 = vpop.f32.mrf.mxu0
      %914 = vmatprep.mubr.bf16.mxu0 %v677
      %915 = vmatmul.mubr.bf16.gmra.mxu0 %v503
      %v916 = vpop.f32.mrf.mxu0
      %v917 = vadd.f32 %v265, %v916
      %v918 = vpop.f32.mrf.mxu0
      %v919 = vpop.f32.mrf.mxu0
      %v920 = vadd.f32 %v265, %v919
      %v921 = vpop.f32.mrf.mxu0
      %922 = vmatprep.mubr.bf16.mxu0 %v680
      %923 = vmatmul.mubr.bf16.gmra.mxu0 %v505
      %v924 = vpop.f32.mrf.mxu0
      %v925 = vadd.f32 %v265, %v924
      %v926 = vpop.f32.mrf.mxu0
      %v927 = vpop.f32.mrf.mxu0
      %v928 = vadd.f32 %v265, %v927
      %v929 = vpop.f32.mrf.mxu0
      %930 = vmatprep.mubr.bf16.mxu0 %v683
      %931 = vmatmul.mubr.bf16.gmra.mxu0 %v507
      %v932 = vpop.f32.mrf.mxu0
      %v933 = vadd.f32 %v265, %v932
      %v934 = vpop.f32.mrf.mxu0
      %v935 = vpop.f32.mrf.mxu0
      %v936 = vadd.f32 %v265, %v935
      %v937 = vpop.f32.mrf.mxu0
      %938 = vmatprep.mubr.bf16.mxu0 %v686
      %939 = vmatmul.mubr.bf16.gmra.mxu0 %v509
      %v940 = vpop.f32.mrf.mxu0
      %v941 = vadd.f32 %v265, %v940
      %v942 = vpop.f32.mrf.mxu0
      %v943 = vpop.f32.mrf.mxu0
      %v944 = vadd.f32 %v265, %v943
      %v945 = vpop.f32.mrf.mxu0
      %946 = vmatprep.mubr.bf16.mxu0 %v689
      %947 = vmatmul.mubr.bf16.gmra.mxu0 %v511
      %v948 = vpop.f32.mrf.mxu0
      %v949 = vadd.f32 %v265, %v948
      %v950 = vpop.f32.mrf.mxu0
      %v951 = vpop.f32.mrf.mxu0
      %v952 = vadd.f32 %v265, %v951
      %v953 = vpop.f32.mrf.mxu0
      %954 = vmatprep.mubr.bf16.mxu0 %v692
      %955 = vmatmul.mubr.bf16.gmra.mxu0 %v513
      %v956 = vpop.f32.mrf.mxu0
      %v957 = vadd.f32 %v265, %v956
      %v958 = vpop.f32.mrf.mxu0
      %v959 = vpop.f32.mrf.mxu0
      %v960 = vadd.f32 %v265, %v959
      %v961 = vpop.f32.mrf.mxu0
      %962 = vmatprep.mubr.bf16.mxu0 %v695
      %963 = vmatmul.mubr.bf16.gmra.mxu0 %v515
      %v964 = vpop.f32.mrf.mxu0
      %v965 = vadd.f32 %v265, %v964
      %v966 = vpop.f32.mrf.mxu0
      %v967 = vpop.f32.mrf.mxu0
      %v968 = vadd.f32 %v265, %v967
      %v969 = vpop.f32.mrf.mxu0
      %970 = vmatprep.mubr.bf16.mxu0 %v698
      %971 = vmatmul.mubr.bf16.gmra.mxu0 %v517
      %v972 = vpop.f32.mrf.mxu0
      %v973 = vadd.f32 %v265, %v972
      %v974 = vpop.f32.mrf.mxu0
      %v975 = vpop.f32.mrf.mxu0
      %v976 = vadd.f32 %v265, %v975
      %v977 = vpop.f32.mrf.mxu0
      %978 = vmatprep.mubr.bf16.mxu0 %v701
      %979 = vmatmul.mubr.bf16.gmra.mxu0 %v519
      %v980 = vpop.f32.mrf.mxu0
      %v981 = vadd.f32 %v265, %v980
      %v982 = vpop.f32.mrf.mxu0
      %v983 = vpop.f32.mrf.mxu0
      %v984 = vadd.f32 %v265, %v983
      %v985 = vpop.f32.mrf.mxu0
      %986 = vmatprep.mubr.bf16.mxu0 %v704
      %987 = vmatmul.mubr.bf16.gmra.mxu0 %v521
      %v988 = vpop.f32.mrf.mxu0
      %v989 = vadd.f32 %v265, %v988
      %v990 = vpop.f32.mrf.mxu0
      %v991 = vpop.f32.mrf.mxu0
      %v992 = vadd.f32 %v265, %v991
      %v993 = vpop.f32.mrf.mxu0
      %994 = vdwg.mxu0
      %v995 = vxor.u32 %v741, 2147483648
      %v996 = vxor.u32 %v744, 2147483648
      %v997 = vxor.u32 %v749, 2147483648
      %v998 = vxor.u32 %v752, 2147483648
      %v999 = vxor.u32 %v757, 2147483648
      %v1000 = vxor.u32 %v760, 2147483648
      %v1001 = vxor.u32 %v765, 2147483648
      %v1002 = vxor.u32 %v768, 2147483648
      %v1003 = vxor.u32 %v773, 2147483648
      %v1004 = vxor.u32 %v776, 2147483648
      %v1005 = vxor.u32 %v781, 2147483648
      %v1006 = vxor.u32 %v784, 2147483648
      %v1007 = vxor.u32 %v789, 2147483648
      %v1008 = vxor.u32 %v792, 2147483648
      %v1009 = vxor.u32 %v797, 2147483648
      %v1010 = vxor.u32 %v800, 2147483648
      %v1011 = vxor.u32 %v805, 2147483648
      %v1012 = vxor.u32 %v808, 2147483648
      %v1013 = vxor.u32 %v813, 2147483648
      %v1014 = vxor.u32 %v816, 2147483648
      %v1015 = vxor.u32 %v821, 2147483648
      %v1016 = vxor.u32 %v824, 2147483648
      %v1017 = vxor.u32 %v829, 2147483648
      %v1018 = vxor.u32 %v832, 2147483648
      %v1019 = vxor.u32 %v837, 2147483648
      %v1020 = vxor.u32 %v840, 2147483648
      %v1021 = vxor.u32 %v845, 2147483648
      %v1022 = vxor.u32 %v848, 2147483648
      %v1023 = vxor.u32 %v853, 2147483648
      %v1024 = vxor.u32 %v856, 2147483648
      %v1025 = vxor.u32 %v861, 2147483648
      %v1026 = vxor.u32 %v864, 2147483648
      %v1027 = vxor.u32 %v869, 2147483648
      %v1028 = vxor.u32 %v872, 2147483648
      %v1029 = vxor.u32 %v877, 2147483648
      %v1030 = vxor.u32 %v880, 2147483648
      %v1031 = vxor.u32 %v885, 2147483648
      %v1032 = vxor.u32 %v888, 2147483648
      %v1033 = vxor.u32 %v893, 2147483648
      %v1034 = vxor.u32 %v896, 2147483648
      %v1035 = vxor.u32 %v901, 2147483648
      %v1036 = vxor.u32 %v904, 2147483648
      %v1037 = vxor.u32 %v909, 2147483648
      %v1038 = vxor.u32 %v912, 2147483648
      %v1039 = vxor.u32 %v917, 2147483648
      %v1040 = vxor.u32 %v920, 2147483648
      %v1041 = vxor.u32 %v925, 2147483648
      %v1042 = vxor.u32 %v928, 2147483648
      %v1043 = vxor.u32 %v933, 2147483648
      %v1044 = vxor.u32 %v936, 2147483648
      %v1045 = vxor.u32 %v941, 2147483648
      %v1046 = vxor.u32 %v944, 2147483648
      %v1047 = vxor.u32 %v949, 2147483648
      %v1048 = vxor.u32 %v952, 2147483648
      %v1049 = vxor.u32 %v957, 2147483648
      %v1050 = vxor.u32 %v960, 2147483648
      %v1051 = vxor.u32 %v965, 2147483648
      %v1052 = vxor.u32 %v968, 2147483648
      %v1053 = vxor.u32 %v973, 2147483648
      %v1054 = vxor.u32 %v976, 2147483648
      %v1055 = vxor.u32 %v981, 2147483648
      %v1056 = vxor.u32 %v984, 2147483648
      %v1057 = vxor.u32 %v989, 2147483648
      %v1058 = vxor.u32 %v992, 2147483648
      %v1059 = vmul.f32 %v995, 1.442695
      %v1060 = vpow.pop %v1059
      %v1061 = vmul.f32 %v996, 1.442695
      %v1062 = vpow.pop %v1061
      %v1063 = vmul.f32 %v997, 1.442695
      %v1064 = vpow.pop %v1063
      %v1065 = vmul.f32 %v998, 1.442695
      %v1066 = vpow.pop %v1065
      %v1067 = vmul.f32 %v999, 1.442695
      %v1068 = vpow.pop %v1067
      %v1069 = vmul.f32 %v1000, 1.442695
      %v1070 = vpow.pop %v1069
      %v1071 = vmul.f32 %v1001, 1.442695
      %v1072 = vpow.pop %v1071
      %v1073 = vmul.f32 %v1002, 1.442695
      %v1074 = vpow.pop %v1073
      %v1075 = vmul.f32 %v1003, 1.442695
      %v1076 = vpow.pop %v1075
      %v1077 = vmul.f32 %v1004, 1.442695
      %v1078 = vpow.pop %v1077
      %v1079 = vmul.f32 %v1005, 1.442695
      %v1080 = vpow.pop %v1079
      %v1081 = vmul.f32 %v1006, 1.442695
      %v1082 = vpow.pop %v1081
      %v1083 = vmul.f32 %v1007, 1.442695
      %v1084 = vpow.pop %v1083
      %v1085 = vmul.f32 %v1008, 1.442695
      %v1086 = vpow.pop %v1085
      %v1087 = vmul.f32 %v1009, 1.442695
      %v1088 = vpow.pop %v1087
      %v1089 = vmul.f32 %v1010, 1.442695
      %v1090 = vpow.pop %v1089
      %v1091 = vmul.f32 %v1011, 1.442695
      %v1092 = vpow.pop %v1091
      %v1093 = vmul.f32 %v1012, 1.442695
      %v1094 = vpow.pop %v1093
      %v1095 = vmul.f32 %v1013, 1.442695
      %v1096 = vpow.pop %v1095
      %v1097 = vmul.f32 %v1014, 1.442695
      %v1098 = vpow.pop %v1097
      %v1099 = vmul.f32 %v1015, 1.442695
      %v1100 = vpow.pop %v1099
      %v1101 = vmul.f32 %v1016, 1.442695
      %v1102 = vpow.pop %v1101
      %v1103 = vmul.f32 %v1017, 1.442695
      %v1104 = vpow.pop %v1103
      %v1105 = vmul.f32 %v1018, 1.442695
      %v1106 = vpow.pop %v1105
      %v1107 = vmul.f32 %v1019, 1.442695
      %v1108 = vpow.pop %v1107
      %v1109 = vmul.f32 %v1020, 1.442695
      %v1110 = vpow.pop %v1109
      %v1111 = vmul.f32 %v1021, 1.442695
      %v1112 = vpow.pop %v1111
      %v1113 = vmul.f32 %v1022, 1.442695
      %v1114 = vpow.pop %v1113
      %v1115 = vmul.f32 %v1023, 1.442695
      %v1116 = vpow.pop %v1115
      %v1117 = vmul.f32 %v1024, 1.442695
      %v1118 = vpow.pop %v1117
      %v1119 = vmul.f32 %v1025, 1.442695
      %v1120 = vpow.pop %v1119
      %v1121 = vmul.f32 %v1026, 1.442695
      %v1122 = vpow.pop %v1121
      %v1123 = vmul.f32 %v1027, 1.442695
      %v1124 = vpow.pop %v1123
      %v1125 = vmul.f32 %v1028, 1.442695
      %v1126 = vpow.pop %v1125
      %v1127 = vmul.f32 %v1029, 1.442695
      %v1128 = vpow.pop %v1127
      %v1129 = vmul.f32 %v1030, 1.442695
      %v1130 = vpow.pop %v1129
      %v1131 = vmul.f32 %v1031, 1.442695
      %v1132 = vpow.pop %v1131
      %v1133 = vmul.f32 %v1032, 1.442695
      %v1134 = vpow.pop %v1133
      %v1135 = vmul.f32 %v1033, 1.442695
      %v1136 = vpow.pop %v1135
      %v1137 = vmul.f32 %v1034, 1.442695
      %v1138 = vpow.pop %v1137
      %v1139 = vmul.f32 %v1035, 1.442695
      %v1140 = vpow.pop %v1139
      %v1141 = vmul.f32 %v1036, 1.442695
      %v1142 = vpow.pop %v1141
      %v1143 = vmul.f32 %v1037, 1.442695
      %v1144 = vpow.pop %v1143
      %v1145 = vmul.f32 %v1038, 1.442695
      %v1146 = vpow.pop %v1145
      %v1147 = vmul.f32 %v1039, 1.442695
      %v1148 = vpow.pop %v1147
      %v1149 = vmul.f32 %v1040, 1.442695
      %v1150 = vpow.pop %v1149
      %v1151 = vmul.f32 %v1041, 1.442695
      %v1152 = vpow.pop %v1151
      %v1153 = vmul.f32 %v1042, 1.442695
      %v1154 = vpow.pop %v1153
      %v1155 = vmul.f32 %v1043, 1.442695
      %v1156 = vpow.pop %v1155
      %v1157 = vmul.f32 %v1044, 1.442695
      %v1158 = vpow.pop %v1157
      %v1159 = vmul.f32 %v1045, 1.442695
      %v1160 = vpow.pop %v1159
      %v1161 = vmul.f32 %v1046, 1.442695
      %v1162 = vpow.pop %v1161
      %v1163 = vmul.f32 %v1047, 1.442695
      %v1164 = vpow.pop %v1163
      %v1165 = vmul.f32 %v1048, 1.442695
      %v1166 = vpow.pop %v1165
      %v1167 = vmul.f32 %v1049, 1.442695
      %v1168 = vpow.pop %v1167
      %v1169 = vmul.f32 %v1050, 1.442695
      %v1170 = vpow.pop %v1169
      %v1171 = vmul.f32 %v1051, 1.442695
      %v1172 = vpow.pop %v1171
      %v1173 = vmul.f32 %v1052, 1.442695
      %v1174 = vpow.pop %v1173
      %v1175 = vmul.f32 %v1053, 1.442695
      %v1176 = vpow.pop %v1175
      %v1177 = vmul.f32 %v1054, 1.442695
      %v1178 = vpow.pop %v1177
      %v1179 = vmul.f32 %v1055, 1.442695
      %v1180 = vpow.pop %v1179
      %v1181 = vmul.f32 %v1056, 1.442695
      %v1182 = vpow.pop %v1181
      %v1183 = vmul.f32 %v1057, 1.442695
      %v1184 = vpow.pop %v1183
      %v1185 = vmul.f32 %v1058, 1.442695
      %v1186 = vpow.pop %v1185
      %v1187 = vadd.f32 %v1060, 1.0
      %v1188 = vadd.f32 %v1062, 1.0
      %v1189 = vadd.f32 %v1064, 1.0
      %v1190 = vadd.f32 %v1066, 1.0
      %v1191 = vadd.f32 %v1068, 1.0
      %v1192 = vadd.f32 %v1070, 1.0
      %v1193 = vadd.f32 %v1072, 1.0
      %v1194 = vadd.f32 %v1074, 1.0
      %v1195 = vadd.f32 %v1076, 1.0
      %v1196 = vadd.f32 %v1078, 1.0
      %v1197 = vadd.f32 %v1080, 1.0
      %v1198 = vadd.f32 %v1082, 1.0
      %v1199 = vadd.f32 %v1084, 1.0
      %v1200 = vadd.f32 %v1086, 1.0
      %v1201 = vadd.f32 %v1088, 1.0
      %v1202 = vadd.f32 %v1090, 1.0
      %v1203 = vadd.f32 %v1092, 1.0
      %v1204 = vadd.f32 %v1094, 1.0
      %v1205 = vadd.f32 %v1096, 1.0
      %v1206 = vadd.f32 %v1098, 1.0
      %v1207 = vadd.f32 %v1100, 1.0
      %v1208 = vadd.f32 %v1102, 1.0
      %v1209 = vadd.f32 %v1104, 1.0
      %v1210 = vadd.f32 %v1106, 1.0
      %v1211 = vadd.f32 %v1108, 1.0
      %v1212 = vadd.f32 %v1110, 1.0
      %v1213 = vadd.f32 %v1112, 1.0
      %v1214 = vadd.f32 %v1114, 1.0
      %v1215 = vadd.f32 %v1116, 1.0
      %v1216 = vadd.f32 %v1118, 1.0
      %v1217 = vadd.f32 %v1120, 1.0
      %v1218 = vadd.f32 %v1122, 1.0
      %v1219 = vadd.f32 %v1124, 1.0
      %v1220 = vadd.f32 %v1126, 1.0
      %v1221 = vadd.f32 %v1128, 1.0
      %v1222 = vadd.f32 %v1130, 1.0
      %v1223 = vadd.f32 %v1132, 1.0
      %v1224 = vadd.f32 %v1134, 1.0
      %v1225 = vadd.f32 %v1136, 1.0
      %v1226 = vadd.f32 %v1138, 1.0
      %v1227 = vadd.f32 %v1140, 1.0
      %v1228 = vadd.f32 %v1142, 1.0
      %v1229 = vadd.f32 %v1144, 1.0
      %v1230 = vadd.f32 %v1146, 1.0
      %v1231 = vadd.f32 %v1148, 1.0
      %v1232 = vadd.f32 %v1150, 1.0
      %v1233 = vadd.f32 %v1152, 1.0
      %v1234 = vadd.f32 %v1154, 1.0
      %v1235 = vadd.f32 %v1156, 1.0
      %v1236 = vadd.f32 %v1158, 1.0
      %v1237 = vadd.f32 %v1160, 1.0
      %v1238 = vadd.f32 %v1162, 1.0
      %v1239 = vadd.f32 %v1164, 1.0
      %v1240 = vadd.f32 %v1166, 1.0
      %v1241 = vadd.f32 %v1168, 1.0
      %v1242 = vadd.f32 %v1170, 1.0
      %v1243 = vadd.f32 %v1172, 1.0
      %v1244 = vadd.f32 %v1174, 1.0
      %v1245 = vadd.f32 %v1176, 1.0
      %v1246 = vadd.f32 %v1178, 1.0
      %v1247 = vadd.f32 %v1180, 1.0
      %v1248 = vadd.f32 %v1182, 1.0
      %v1249 = vadd.f32 %v1184, 1.0
      %v1250 = vadd.f32 %v1186, 1.0
      %v1251 = vrcp.pop %v1187
      %v1252 = vmul.f32 1.0, %v1251
      %v1253 = vrcp.pop %v1188
      %v1254 = vmul.f32 1.0, %v1253
      %v1255 = vrcp.pop %v1189
      %v1256 = vmul.f32 1.0, %v1255
      %v1257 = vrcp.pop %v1190
      %v1258 = vmul.f32 1.0, %v1257
      %v1259 = vrcp.pop %v1191
      %v1260 = vmul.f32 1.0, %v1259
      %v1261 = vrcp.pop %v1192
      %v1262 = vmul.f32 1.0, %v1261
      %v1263 = vrcp.pop %v1193
      %v1264 = vmul.f32 1.0, %v1263
      %v1265 = vrcp.pop %v1194
      %v1266 = vmul.f32 1.0, %v1265
      %v1267 = vrcp.pop %v1195
      %v1268 = vmul.f32 1.0, %v1267
      %v1269 = vrcp.pop %v1196
      %v1270 = vmul.f32 1.0, %v1269
      %v1271 = vrcp.pop %v1197
      %v1272 = vmul.f32 1.0, %v1271
      %v1273 = vrcp.pop %v1198
      %v1274 = vmul.f32 1.0, %v1273
      %v1275 = vrcp.pop %v1199
      %v1276 = vmul.f32 1.0, %v1275
      %v1277 = vrcp.pop %v1200
      %v1278 = vmul.f32 1.0, %v1277
      %v1279 = vrcp.pop %v1201
      %v1280 = vmul.f32 1.0, %v1279
      %v1281 = vrcp.pop %v1202
      %v1282 = vmul.f32 1.0, %v1281
      %v1283 = vrcp.pop %v1203
      %v1284 = vmul.f32 1.0, %v1283
      %v1285 = vrcp.pop %v1204
      %v1286 = vmul.f32 1.0, %v1285
      %v1287 = vrcp.pop %v1205
      %v1288 = vmul.f32 1.0, %v1287
      %v1289 = vrcp.pop %v1206
      %v1290 = vmul.f32 1.0, %v1289
      %v1291 = vrcp.pop %v1207
      %v1292 = vmul.f32 1.0, %v1291
      %v1293 = vrcp.pop %v1208
      %v1294 = vmul.f32 1.0, %v1293
      %v1295 = vrcp.pop %v1209
      %v1296 = vmul.f32 1.0, %v1295
      %v1297 = vrcp.pop %v1210
      %v1298 = vmul.f32 1.0, %v1297
      %v1299 = vrcp.pop %v1211
      %v1300 = vmul.f32 1.0, %v1299
      %v1301 = vrcp.pop %v1212
      %v1302 = vmul.f32 1.0, %v1301
      %v1303 = vrcp.pop %v1213
      %v1304 = vmul.f32 1.0, %v1303
      %v1305 = vrcp.pop %v1214
      %v1306 = vmul.f32 1.0, %v1305
      %v1307 = vrcp.pop %v1215
      %v1308 = vmul.f32 1.0, %v1307
      %v1309 = vrcp.pop %v1216
      %v1310 = vmul.f32 1.0, %v1309
      %v1311 = vrcp.pop %v1217
      %v1312 = vmul.f32 1.0, %v1311
      %v1313 = vrcp.pop %v1218
      %v1314 = vmul.f32 1.0, %v1313
      %v1315 = vrcp.pop %v1219
      %v1316 = vmul.f32 1.0, %v1315
      %v1317 = vrcp.pop %v1220
      %v1318 = vmul.f32 1.0, %v1317
      %v1319 = vrcp.pop %v1221
      %v1320 = vmul.f32 1.0, %v1319
      %v1321 = vrcp.pop %v1222
      %v1322 = vmul.f32 1.0, %v1321
      %v1323 = vrcp.pop %v1223
      %v1324 = vmul.f32 1.0, %v1323
      %v1325 = vrcp.pop %v1224
      %v1326 = vmul.f32 1.0, %v1325
      %v1327 = vrcp.pop %v1225
      %v1328 = vmul.f32 1.0, %v1327
      %v1329 = vrcp.pop %v1226
      %v1330 = vmul.f32 1.0, %v1329
      %v1331 = vrcp.pop %v1227
      %v1332 = vmul.f32 1.0, %v1331
      %v1333 = vrcp.pop %v1228
      %v1334 = vmul.f32 1.0, %v1333
      %v1335 = vrcp.pop %v1229
      %v1336 = vmul.f32 1.0, %v1335
      %v1337 = vrcp.pop %v1230
      %v1338 = vmul.f32 1.0, %v1337
      %v1339 = vrcp.pop %v1231
      %v1340 = vmul.f32 1.0, %v1339
      %v1341 = vrcp.pop %v1232
      %v1342 = vmul.f32 1.0, %v1341
      %v1343 = vrcp.pop %v1233
      %v1344 = vmul.f32 1.0, %v1343
      %v1345 = vrcp.pop %v1234
      %v1346 = vmul.f32 1.0, %v1345
      %v1347 = vrcp.pop %v1235
      %v1348 = vmul.f32 1.0, %v1347
      %v1349 = vrcp.pop %v1236
      %v1350 = vmul.f32 1.0, %v1349
      %v1351 = vrcp.pop %v1237
      %v1352 = vmul.f32 1.0, %v1351
      %v1353 = vrcp.pop %v1238
      %v1354 = vmul.f32 1.0, %v1353
      %v1355 = vrcp.pop %v1239
      %v1356 = vmul.f32 1.0, %v1355
      %v1357 = vrcp.pop %v1240
      %v1358 = vmul.f32 1.0, %v1357
      %v1359 = vrcp.pop %v1241
      %v1360 = vmul.f32 1.0, %v1359
      %v1361 = vrcp.pop %v1242
      %v1362 = vmul.f32 1.0, %v1361
      %v1363 = vrcp.pop %v1243
      %v1364 = vmul.f32 1.0, %v1363
      %v1365 = vrcp.pop %v1244
      %v1366 = vmul.f32 1.0, %v1365
      %v1367 = vrcp.pop %v1245
      %v1368 = vmul.f32 1.0, %v1367
      %v1369 = vrcp.pop %v1246
      %v1370 = vmul.f32 1.0, %v1369
      %v1371 = vrcp.pop %v1247
      %v1372 = vmul.f32 1.0, %v1371
      %v1373 = vrcp.pop %v1248
      %v1374 = vmul.f32 1.0, %v1373
      %v1375 = vrcp.pop %v1249
      %v1376 = vmul.f32 1.0, %v1375
      %v1377 = vrcp.pop %v1250
      %v1378 = vmul.f32 1.0, %v1377
      %1379 = vst [vmem:[%s175] sm:$0xff] %v1252
      %1380 = vst [vmem:[%s175 + $0x8] sm:$0xff] %v1254
      %1381 = vst [vmem:[%s175 + $0x10] sm:$0xff] %v1256
      %1382 = vst [vmem:[%s175 + $0x18] sm:$0xff] %v1258
      %1383 = vst [vmem:[%s175 + $0x20] sm:$0xff] %v1260
      %1384 = vst [vmem:[%s175 + $0x28] sm:$0xff] %v1262
      %1385 = vst [vmem:[%s175 + $0x30] sm:$0xff] %v1264
      %1386 = vst [vmem:[%s175 + $0x38] sm:$0xff] %v1266
      %1387 = vst [vmem:[%s175 + $0x40] sm:$0xff] %v1268
      %1388 = vst [vmem:[%s175 + $0x48] sm:$0xff] %v1270
      %1389 = vst [vmem:[%s175 + $0x50] sm:$0xff] %v1272
      %1390 = vst [vmem:[%s175 + $0x58] sm:$0xff] %v1274
      %1391 = vst [vmem:[%s175 + $0x60] sm:$0xff] %v1276
      %1392 = vst [vmem:[%s175 + $0x68] sm:$0xff] %v1278
      %1393 = vst [vmem:[%s175 + $0x70] sm:$0xff] %v1280
      %1394 = vst [vmem:[%s175 + $0x78] sm:$0xff] %v1282
      %1395 = vst [vmem:[%s175 + $0x80] sm:$0xff] %v1284
      %1396 = vst [vmem:[%s175 + $0x88] sm:$0xff] %v1286
      %1397 = vst [vmem:[%s175 + $0x90] sm:$0xff] %v1288
      %1398 = vst [vmem:[%s175 + $0x98] sm:$0xff] %v1290
      %1399 = vst [vmem:[%s175 + $0xa0] sm:$0xff] %v1292
      %1400 = vst [vmem:[%s175 + $0xa8] sm:$0xff] %v1294
      %1401 = vst [vmem:[%s175 + $0xb0] sm:$0xff] %v1296
      %1402 = vst [vmem:[%s175 + $0xb8] sm:$0xff] %v1298
      %1403 = vst [vmem:[%s175 + $0xc0] sm:$0xff] %v1300
      %1404 = vst [vmem:[%s175 + $0xc8] sm:$0xff] %v1302
      %1405 = vst [vmem:[%s175 + $0xd0] sm:$0xff] %v1304
      %1406 = vst [vmem:[%s175 + $0xd8] sm:$0xff] %v1306
      %1407 = vst [vmem:[%s175 + $0xe0] sm:$0xff] %v1308
      %1408 = vst [vmem:[%s175 + $0xe8] sm:$0xff] %v1310
      %1409 = vst [vmem:[%s175 + $0xf0] sm:$0xff] %v1312
      %1410 = vst [vmem:[%s175 + $0xf8] sm:$0xff] %v1314
      %1411 = vst [vmem:[%s175 + $0x100] sm:$0xff] %v1316
      %1412 = vst [vmem:[%s175 + $0x108] sm:$0xff] %v1318
      %1413 = vst [vmem:[%s175 + $0x110] sm:$0xff] %v1320
      %1414 = vst [vmem:[%s175 + $0x118] sm:$0xff] %v1322
      %1415 = vst [vmem:[%s175 + $0x120] sm:$0xff] %v1324
      %1416 = vst [vmem:[%s175 + $0x128] sm:$0xff] %v1326
      %1417 = vst [vmem:[%s175 + $0x130] sm:$0xff] %v1328
      %1418 = vst [vmem:[%s175 + $0x138] sm:$0xff] %v1330
      %1419 = vst [vmem:[%s175 + $0x140] sm:$0xff] %v1332
      %1420 = vst [vmem:[%s175 + $0x148] sm:$0xff] %v1334
      %1421 = vst [vmem:[%s175 + $0x150] sm:$0xff] %v1336
      %1422 = vst [vmem:[%s175 + $0x158] sm:$0xff] %v1338
      %1423 = vst [vmem:[%s175 + $0x160] sm:$0xff] %v1340
      %1424 = vst [vmem:[%s175 + $0x168] sm:$0xff] %v1342
      %1425 = vst [vmem:[%s175 + $0x170] sm:$0xff] %v1344
      %1426 = vst [vmem:[%s175 + $0x178] sm:$0xff] %v1346
      %1427 = vst [vmem:[%s175 + $0x180] sm:$0xff] %v1348
      %1428 = vst [vmem:[%s175 + $0x188] sm:$0xff] %v1350
      %1429 = vst [vmem:[%s175 + $0x190] sm:$0xff] %v1352
      %1430 = vst [vmem:[%s175 + $0x198] sm:$0xff] %v1354
      %1431 = vst [vmem:[%s175 + $0x1a0] sm:$0xff] %v1356
      %1432 = vst [vmem:[%s175 + $0x1a8] sm:$0xff] %v1358
      %1433 = vst [vmem:[%s175 + $0x1b0] sm:$0xff] %v1360
      %1434 = vst [vmem:[%s175 + $0x1b8] sm:$0xff] %v1362
      %1435 = vst [vmem:[%s175 + $0x1c0] sm:$0xff] %v1364
      %1436 = vst [vmem:[%s175 + $0x1c8] sm:$0xff] %v1366
      %1437 = vst [vmem:[%s175 + $0x1d0] sm:$0xff] %v1368
      %1438 = vst [vmem:[%s175 + $0x1d8] sm:$0xff] %v1370
      %1439 = vst [vmem:[%s175 + $0x1e0] sm:$0xff] %v1372
      %1440 = vst [vmem:[%s175 + $0x1e8] sm:$0xff] %v1374
      %1441 = vst [vmem:[%s175 + $0x1f0] sm:$0xff] %v1376
      %1442 = vst [vmem:[%s175 + $0x1f8] sm:$0xff] %v1378
      %s1443 = smul.u32 64, %s14
      %p1444 = scmp.lt.s32.totalorder %s1443, 255
      %s1445 = scalar_select %p1444, %s1443, 255
      %s1446 = smul.addr %s1445, 8
      %s1447 = scalar_lea.vmem %s3, %s1446
      // Predicated region
      $region33: #{decoder_forward.7} parent=31 // pred_check
        %p1448 = pneg %p100
      $region34: #{decoder_forward.7} parent=31 // pred_check_branch
        %1450 = sbr.rel (%p1448) target = $region36
      $region35: #{decoder_forward.7} parent=31 // pred_region
        %s1451 = smul.u32 64, %s14
      $region36: #{decoder_forward.7} parent=31 // pred_fallthru
        _
    $region32: #{decoder_forward.7} parent=5 // pred_fallthru
      _
    %p1452 = scmp.le.s32.totalorder 2, %s9
    // Predicated region
    $region37: #{decoder_forward.7} parent=5 // pred_check
      %p1453 = pneg %p1452
    $region38: #{decoder_forward.7} parent=5 // pred_check_branch
      %1455 = sbr.rel (%p1453) target = $region40
    $region39: #{decoder_forward.7} parent=5 // pred_region
      %s1456 = ssub.s32 %s9, 2
      // Predicated region
      $region41: #{decoder_forward.7} parent=39 // pred_check
        %p1457 = pneg %p106
      $region42: #{decoder_forward.7} parent=39 // pred_check_branch
        %1459 = sbr.rel (%p1457) target = $region44
      $region43: #{decoder_forward.7} parent=39 // pred_region
        %s1460 = smul.u32 64, %s15
        %p1461 = scmp.lt.s32.totalorder %s1460, 255
        %s1462 = scalar_select %p1461, %s1460, 255
        %s1463 = smul.addr %s1462, 8
        %s1464 = scalar_lea.vmem %s3, %s1463
      $region44: #{decoder_forward.7} parent=39 // pred_fallthru
        _
    $region40: #{decoder_forward.7} parent=5 // pred_fallthru
      _
  $region6: #{decoder_forward.7} parent=0 // loop_footer
    %s13 = sadd.s32 1, %s9
  $region7: #{decoder_forward.7} parent=0 // loop_footer_branch
    %8 = sbr.rel target = $region3
  $region8: #{decoder_forward.7} parent=0 // loop_exit
    _

</llo_original>
